<compile_context>
chip_gen: v7x
topology: tpu7x:2x2x1
jax: 0.10.0
libtpu: 0.0.40
codegen_flags: <defaults>
</compile_context>

<pallas_src>
import functools

import jax
import jax.numpy as jnp
from jax import lax
from jax.experimental import pallas as pl
from jax.experimental.pallas import tpu as pltpu

_LANE = 128


def _round_up(x, m):
    return (x + m - 1) // m * m


def _pick_vmem_limit():
    """~(physical - 16 MiB): ~48 MiB on v7x, ~112 MiB on v5e/v6e."""
    try:
        cap = getattr(pltpu.get_tpu_info(), "vmem_capacity_bytes", None)
        if cap:
            return int(min(max(cap - (16 << 20), 32 << 20), 112 << 20))
    except Exception:
        pass
    return 48 << 20


def _resblock_kernel(*refs, H, W, cin_p, cout_p, identity_shortcut):
    if identity_shortcut:
        (x_ref, s1_ref, t1_ref, w1_ref, s2_ref, t2_ref, w2_ref,
         shift_ref, o_ref, act_ref, acc_ref) = refs
        wsc_ref = None
    else:
        (x_ref, s1_ref, t1_ref, w1_ref, s2_ref, t2_ref, w2_ref, wsc_ref,
         shift_ref, o_ref, act_ref, acc_ref) = refs

    f32 = jnp.float32
    HW = H * W
    cmax = act_ref.shape[-1]
    store_dtype = act_ref.dtype

    # Zero only the 2*W halo rows of each dx-variant (the interior is fully
    # overwritten below).  Done every grid step so it is megacore-safe.
    zhalo = jnp.zeros((3, W, cmax), store_dtype)
    act_ref[:, 0:W, :] = zhalo
    act_ref[:, W + HW:(H + 2) * W, :] = zhalo

    # Border-column masks for the dx = +-1 shifts (reused by both convs).
    row = lax.broadcasted_iota(jnp.int32, (HW, 1), 0)
    if (W & (W - 1)) == 0:
        xpos = row & (W - 1)
    else:
        xpos = lax.rem(row, W)          # non-power-of-two W (untested path)
    not_first = xpos != 0
    not_last = xpos != (W - 1)

    def stage(a_flat, c):
        """Store dx = -1/0/+1 shifted copies of activation a_flat (f32, (HW, c))
        into the H-halo-padded scratch.  Shifts use pltpu.roll (XLU) on the f32
        value; the single wrapped border column per shift is masked to zero.
        All stores are sublane/lane aligned when W % 8 == 0 and c % 128 == 0."""
        left = jnp.where(not_first, pltpu.roll(a_flat, 1, axis=0), 0.0)
        right = jnp.where(not_last, pltpu.roll(a_flat, HW - 1, axis=0), 0.0)
        act_ref[0, W:W + HW, :c] = left.astype(store_dtype)
        act_ref[1, W:W + HW, :c] = a_flat.astype(store_dtype)
        act_ref[2, W:W + HW, :c] = right.astype(store_dtype)

    def conv3x3(c_in, w_ref):
        """3x3 conv as nine aligned (HW, c_in) @ (c_in, cout_p) MXU matmuls,
        accumulated in f32.  Row halo is absorbed by the zeroed scratch rows,
        column halo by the masked dx-shift variants."""
        acc = jnp.zeros((HW, cout_p), f32)
        for dy0 in range(3):
            r0 = dy0 * W
            for dx0 in range(3):
                lhs = act_ref[dx0, r0:r0 + HW, :c_in]
                acc = acc + jnp.dot(lhs, w_ref[dy0 * 3 + dx0],
                                    preferred_element_type=f32)
        return acc

    x2d = x_ref[0]                       # (HW, cin_p), MXU operand dtype
    x_f32 = x2d.astype(f32)

    # ---- shortcut first (+ folded conv2/shortcut bias) into the explicit f32
    # accumulator scratch; ends x's live range before conv1. -----------------
    if identity_shortcut:
        acc_ref[...] = x_f32 + shift_ref[...]
    else:
        acc_ref[...] = (jnp.dot(x2d, wsc_ref[...], preferred_element_type=f32)
                        + shift_ref[...])

    # ---- BN1 + ReLU (f32 VPU math), conv1 -----------------------------------
    a1 = jnp.maximum(x_f32 * s1_ref[...] + t1_ref[...], 0.0)
    stage(a1, cin_p)
    h1 = conv3x3(cin_p, w1_ref)

    # ---- BN2 (conv1 bias folded into t2) + ReLU; Dropout = eval identity ----
    a2 = jnp.maximum(h1 * s2_ref[...] + t2_ref[...], 0.0)
    stage(a2, cout_p)
    c2 = conv3x3(cout_p, w2_ref)

    o_ref[0] = (acc_ref[...] + c2).astype(o_ref.dtype)


def resblock_forward_pallas(x_nchw, p, *, eps=1e-5, op_dtype=jnp.bfloat16):
    """x_nchw: (N, Cin, H, W) f32 -> (N, Cout, H, W) f32.
    op_dtype: MXU operand / activation-I/O dtype (bf16 default; f32 accumulate)."""
    N, Cin, H, W = x_nchw.shape
    Cout = p["conv1_w"].shape[0]
    identity_shortcut = "sc_w" not in p              # nn.Sequential() identity
    if identity_shortcut:
        assert Cin == Cout

    f32 = jnp.float32
    HW = H * W
    cin_p = _round_up(Cin, _LANE)
    cout_p = _round_up(Cout, _LANE)
    cmax = max(cin_p, cout_p)

    # Flat-NHWC, channels zero-padded to the lane width; activation I/O in
    # op_dtype (bf16 fast path) to halve the HBM<->VMEM DMA bytes.
    x = jnp.transpose(x_nchw, (0, 2, 3, 1)).reshape(N, HW, Cin)
    x = jnp.pad(x, ((0, 0), (0, 0), (0, cin_p - Cin))).astype(op_dtype)

    # Fold eval-mode BatchNorm into scale/shift; fold conv1 bias into the BN2
    # shift and conv2 (+ shortcut) biases into one output shift.
    s1 = p["bn1_g"] / jnp.sqrt(p["bn1_v"] + eps)
    t1 = p["bn1_b"] - p["bn1_m"] * s1
    s2 = p["bn2_g"] / jnp.sqrt(p["bn2_v"] + eps)
    t2 = p["bn2_b"] - p["bn2_m"] * s2 + s2 * p["conv1_b"]
    shift = p["conv2_b"] if identity_shortcut else p["conv2_b"] + p["sc_b"]

    def vec(v, c_p):                                 # (C,) -> (1, C_p) f32
        v = v.astype(f32)
        return jnp.pad(v, (0, c_p - v.shape[0])).reshape(1, c_p)

    # PyTorch OIHW -> (9, Ci_p, Co_p) per-tap weight slabs (zero-padded).
    def conv_slab(w_oihw, ci, ci_p, co, co_p):
        w = jnp.transpose(w_oihw, (2, 3, 1, 0)).astype(f32)      # (3,3,Ci,Co)
        w = jnp.pad(w, ((0, 0), (0, 0), (0, ci_p - ci), (0, co_p - co)))
        return w.reshape(9, ci_p, co_p).astype(op_dtype)

    w1 = conv_slab(p["conv1_w"], Cin, cin_p, Cout, cout_p)
    w2 = conv_slab(p["conv2_w"], Cout, cout_p, Cout, cout_p)

    kernel = functools.partial(
        _resblock_kernel, H=H, W=W, cin_p=cin_p, cout_p=cout_p,
        identity_shortcut=identity_shortcut)

    def const_spec(shape):                           # grid-invariant operand
        zeros = (0,) * len(shape)
        return pl.BlockSpec(shape, lambda n, _z=zeros: _z)

    in_specs = [
        pl.BlockSpec((1, HW, cin_p), lambda n: (n, 0, 0)),
        const_spec((1, cin_p)), const_spec((1, cin_p)),
        const_spec((9, cin_p, cout_p)),
        const_spec((1, cout_p)), const_spec((1, cout_p)),
        const_spec((9, cout_p, cout_p)),
    ]
    args = [x, vec(s1, cin_p), vec(t1, cin_p), w1,
            vec(s2, cout_p), vec(t2, cout_p), w2]
    if not identity_shortcut:
        wsc = jnp.pad(p["sc_w"].reshape(Cout, Cin).T.astype(f32),
                      ((0, cin_p - Cin), (0, cout_p - Cout))).astype(op_dtype)
        in_specs.append(const_spec((cin_p, cout_p)))
        args.append(wsc)
    in_specs.append(const_spec((1, cout_p)))
    args.append(vec(shift, cout_p))

    out2d = pl.pallas_call(
        kernel,
        out_shape=jax.ShapeDtypeStruct((N, HW, cout_p), f32),
        grid=(N,),
        in_specs=in_specs,
        out_specs=pl.BlockSpec((1, HW, cout_p), lambda n: (n, 0, 0)),
        scratch_shapes=[
            # 3 dx-shifted copies of the H-halo-padded activation, op_dtype.
            pltpu.VMEM((3, (H + 2) * W, cmax), op_dtype),
            # explicit f32 accumulator: shortcut (+ folded biases) + conv2.
            pltpu.VMEM((HW, cout_p), jnp.float32),
        ],
        compiler_params=pltpu.CompilerParams(
            # batch axis shards across v7x's two TensorCores; no-op on v5e/v6e.
            # (keep N even on v7x for full core utilization)
            dimension_semantics=("parallel",),
            vmem_limit_bytes=_pick_vmem_limit(),
        ),
    )(*args)

    out = out2d[:, :, :Cout].reshape(N, H, W, Cout)
    return jnp.transpose(out, (0, 3, 1, 2))                      # back to NCHW


# ---------------------------------------------------------------------------
# Pure-JAX reference (mirrors the PyTorch forward in eval mode).
# ---------------------------------------------------------------------------
def resblock_forward_ref(x, p, eps=1e-5):
    def bn(y, g, b, m, v):
        g, b, m, v = (a[None, :, None, None] for a in (g, b, m, v))
        return (y - m) / jnp.sqrt(v + eps) * g + b

    def conv(y, w, b, pad):
        out = jax.lax.conv_general_dilated(
            y, w, (1, 1), [(pad, pad), (pad, pad)],
            dimension_numbers=("NCHW", "OIHW", "NCHW"))
        return out + b[None, :, None, None]

    out = jax.nn.relu(bn(x, p["bn1_g"], p["bn1_b"], p["bn1_m"], p["bn1_v"]))
    out = conv(out, p["conv1_w"], p["conv1_b"], 1)
    out = jax.nn.relu(bn(out, p["bn2_g"], p["bn2_b"], p["bn2_m"], p["bn2_v"]))
    out = conv(out, p["conv2_w"], p["conv2_b"], 1)
    sc = conv(x, p["sc_w"], p["sc_b"], 0) if "sc_w" in p else x
    return out + sc


def make_params(key, cin, cout):
    conv_shortcut = (cin != cout)          # stride fixed at 1 in this kernel
    ks = jax.random.split(key, 12)
    u = lambda k, shape, s=0.1: s * jax.random.normal(k, shape, jnp.float32)
    p = {
        "bn1_g": 1.0 + u(ks[0], (cin,)),
        "bn1_b": u(ks[1], (cin,)),
        "bn1_m": u(ks[2], (cin,)),
        "bn1_v": 1.0 + 0.1 * jax.random.uniform(ks[3], (cin,)),
        "conv1_w": u(ks[4], (cout, cin, 3, 3), 0.2),
        "conv1_b": u(ks[5], (cout,)),
        "bn2_g": 1.0 + u(ks[6], (cout,)),
        "bn2_b": u(ks[7], (cout,)),
        "bn2_m": u(ks[8], (cout,)),
        "bn2_v": 1.0 + 0.1 * jax.random.uniform(ks[9], (cout,)),
        "conv2_w": u(ks[10], (cout, cout, 3, 3), 0.2),
        "conv2_b": u(ks[11], (cout,)),
    }
    if conv_shortcut:
        p["sc_w"] = u(jax.random.fold_in(key, 100), (cout, cin, 1, 1), 0.2)
        p["sc_b"] = u(jax.random.fold_in(key, 101), (cout,))
    return p


if __name__ == "__main__":
    key = jax.random.PRNGKey(0)

    # 1) Conv-shortcut block (Cin != Cout) with f32 operands: tight check.
    N, Cin, H, W, Cout = 2, 4, 16, 16, 8
    x = jax.random.normal(jax.random.fold_in(key, 7), (N, Cin, H, W), jnp.float32)
    params = make_params(jax.random.fold_in(key, 13), Cin, Cout)

    ref = jax.block_until_ready(resblock_forward_ref(x, params))
    out_f32 = jax.block_until_ready(
        resblock_forward_pallas(x, params, op_dtype=jnp.float32))
    assert out_f32.shape == (N, Cout, H, W), out_f32.shape
    assert jnp.allclose(out_f32, ref, rtol=1e-4, atol=1e-4), (
        float(jnp.max(jnp.abs(out_f32 - ref))))

    # 2) Default fast path: bf16 operands + activation I/O, f32 accumulation
    #    (loose tol; structural correctness proven by the f32 check above).
    out_bf16 = jax.block_until_ready(resblock_forward_pallas(x, params))
    assert jnp.allclose(out_bf16, ref, rtol=1e-1, atol=1e-1), (
        float(jnp.max(jnp.abs(out_bf16 - ref))))

    # 3) Identity-shortcut block (Cin == Cout, stride 1).
    x2 = jax.random.normal(jax.random.fold_in(key, 21), (N, Cout, H, W), jnp.float32)
    params2 = make_params(jax.random.fold_in(key, 23), Cout, Cout)
    ref2 = jax.block_until_ready(resblock_forward_ref(x2, params2))
    out2 = jax.block_until_ready(
        resblock_forward_pallas(x2, params2, op_dtype=jnp.float32))
    assert jnp.allclose(out2, ref2, rtol=1e-4, atol=1e-4), (
        float(jnp.max(jnp.abs(out2 - ref2))))

    print("KERNEL_OK")
</pallas_src>

<mosaic_0001>
module attributes {stable_mosaic.version = 11 : i64} {
  func.func @_resblock_kernel(%arg0: i32, %arg1: memref<1x256x128xf32, #tpu.memory_space<vmem>>, %arg2: memref<1x128xf32, #tpu.memory_space<vmem>>, %arg3: memref<1x128xf32, #tpu.memory_space<vmem>>, %arg4: memref<9x128x128xf32, #tpu.memory_space<vmem>>, %arg5: memref<1x128xf32, #tpu.memory_space<vmem>>, %arg6: memref<1x128xf32, #tpu.memory_space<vmem>>, %arg7: memref<9x128x128xf32, #tpu.memory_space<vmem>>, %arg8: memref<128x128xf32, #tpu.memory_space<vmem>>, %arg9: memref<1x128xf32, #tpu.memory_space<vmem>>, %arg10: memref<1x256x128xf32, #tpu.memory_space<vmem>>, %arg11: memref<3x288x128xf32, #tpu.memory_space<vmem>>, %arg12: memref<256x128xf32, #tpu.memory_space<vmem>>) attributes {dimension_semantics = [#tpu.dimension_semantics<parallel>], iteration_bounds = array<i64: 2>, scalar_prefetch = 0 : i64, scratch_operands = 2 : i64, tpu.core_type = #tpu.core_type<tc>, window_params = [{transform_indices = @transform_0, window_bounds = array<i64: 1, 256, 128>}, {pipeline_mode = #tpu.pipeline_mode<synchronous>, transform_indices = @transform_1, window_bounds = array<i64: 1, 128>}, {pipeline_mode = #tpu.pipeline_mode<synchronous>, transform_indices = @transform_2, window_bounds = array<i64: 1, 128>}, {pipeline_mode = #tpu.pipeline_mode<synchronous>, transform_indices = @transform_3, window_bounds = array<i64: 9, 128, 128>}, {pipeline_mode = #tpu.pipeline_mode<synchronous>, transform_indices = @transform_4, window_bounds = array<i64: 1, 128>}, {pipeline_mode = #tpu.pipeline_mode<synchronous>, transform_indices = @transform_5, window_bounds = array<i64: 1, 128>}, {pipeline_mode = #tpu.pipeline_mode<synchronous>, transform_indices = @transform_6, window_bounds = array<i64: 9, 128, 128>}, {pipeline_mode = #tpu.pipeline_mode<synchronous>, transform_indices = @transform_7, window_bounds = array<i64: 128, 128>}, {pipeline_mode = #tpu.pipeline_mode<synchronous>, transform_indices = @transform_8, window_bounds = array<i64: 1, 128>}, {transform_indices = @transform_9, window_bounds = array<i64: 1, 256, 128>}]} {
    %cst = arith.constant 0.000000e+00 : f32
    %0 = vector.broadcast %cst : f32 to vector<3x16x128xf32>
    %c0 = arith.constant 0 : index
    %c0_0 = arith.constant 0 : index
    %c0_1 = arith.constant 0 : index
    %1 = vector.load %arg11[%c0, %c0_0, %c0_1] : memref<3x288x128xf32, #tpu.memory_space<vmem>>, vector<3x16x128xf32>
    tpu.vector_store %arg11[%c0, %c0_0, %c0_1], %0 {strides = array<i32>} : memref<3x288x128xf32, #tpu.memory_space<vmem>>, vector<3x16x128xf32>,
    %c0_2 = arith.constant 0 : index
    %c272 = arith.constant 272 : index
    %c0_3 = arith.constant 0 : index
    %2 = vector.load %arg11[%c0_2, %c272, %c0_3] : memref<3x288x128xf32, #tpu.memory_space<vmem>>, vector<3x16x128xf32>
    tpu.vector_store %arg11[%c0_2, %c272, %c0_3], %0 {strides = array<i32>} : memref<3x288x128xf32, #tpu.memory_space<vmem>>, vector<3x16x128xf32>,
    %3 = tpu.iota {dimensions = array<i32: 0>} : vector<256x1xi32>
    %c15_i32 = arith.constant 15 : i32
    %4 = vector.broadcast %c15_i32 : i32 to vector<256x1xi32>
    %5 = arith.andi %3, %4 : vector<256x1xi32>
    %c0_i32 = arith.constant 0 : i32
    %6 = vector.broadcast %c0_i32 : i32 to vector<256x1xi32>
    %7 = arith.cmpi ne, %5, %6 : vector<256x1xi32>
    %c15_i32_4 = arith.constant 15 : i32
    %8 = vector.broadcast %c15_i32_4 : i32 to vector<256x1xi32>
    %9 = arith.cmpi ne, %5, %8 : vector<256x1xi32>
    %c0_5 = arith.constant 0 : index
    %c0_6 = arith.constant 0 : index
    %c0_7 = arith.constant 0 : index
    %10 = vector.load %arg1[%c0_5, %c0_6, %c0_7] : memref<1x256x128xf32, #tpu.memory_space<vmem>>, vector<1x256x128xf32>
    %11 = vector.shape_cast %10 : vector<1x256x128xf32> to vector<256x128xf32>
    %c0_8 = arith.constant 0 : index
    %c0_9 = arith.constant 0 : index
    %12 = vector.load %arg8[%c0_8, %c0_9] : memref<128x128xf32, #tpu.memory_space<vmem>>, vector<128x128xf32>
    %cst_10 = arith.constant dense<0.000000e+00> : vector<256x128xf32>
    %13 = tpu.matmul %11, %12, %cst_10 {dimension_numbers = #tpu.dot_dimension_numbers<[1], [0], [0], [1], [0, 0, 1, 1], [], []>} : vector<256x128xf32>, vector<128x128xf32>, vector<256x128xf32> -> vector<256x128xf32>
    %c0_11 = arith.constant 0 : index
    %c0_12 = arith.constant 0 : index
    %14 = vector.load %arg9[%c0_11, %c0_12] : memref<1x128xf32, #tpu.memory_space<vmem>>, vector<1x128xf32>
    %15 = vector.broadcast %14 : vector<1x128xf32> to vector<256x128xf32>
    %16 = arith.addf %13, %15 : vector<256x128xf32>
    %c0_13 = arith.constant 0 : index
    %c0_14 = arith.constant 0 : index
    %17 = vector.load %arg12[%c0_13, %c0_14] : memref<256x128xf32, #tpu.memory_space<vmem>>, vector<256x128xf32>
    tpu.vector_store %arg12[%c0_13, %c0_14], %16 {strides = array<i32>} : memref<256x128xf32, #tpu.memory_space<vmem>>, vector<256x128xf32>,
    %c0_15 = arith.constant 0 : index
    %c0_16 = arith.constant 0 : index
    %18 = vector.load %arg2[%c0_15, %c0_16] : memref<1x128xf32, #tpu.memory_space<vmem>>, vector<1x128xf32>
    %19 = vector.broadcast %18 : vector<1x128xf32> to vector<256x128xf32>
    %20 = arith.mulf %11, %19 : vector<256x128xf32>
    %c0_17 = arith.constant 0 : index
    %c0_18 = arith.constant 0 : index
    %21 = vector.load %arg3[%c0_17, %c0_18] : memref<1x128xf32, #tpu.memory_space<vmem>>, vector<1x128xf32>
    %22 = vector.broadcast %21 : vector<1x128xf32> to vector<256x128xf32>
    %23 = arith.addf %20, %22 : vector<256x128xf32>
    %cst_19 = arith.constant 0.000000e+00 : f32
    %24 = vector.broadcast %cst_19 : f32 to vector<256x128xf32>
    %25 = arith.maximumf %23, %24 : vector<256x128xf32>
    %c1_i32 = arith.constant 1 : i32
    %26 = tpu.dynamic_rotate %25 by %c1_i32 dim 0 : vector<256x128xf32>, i32 -> vector<256x128xf32>
    %cst_20 = arith.constant 0.000000e+00 : f32
    %27 = vector.shape_cast %7 : vector<256x1xi1> to vector<256x1xi1>
    %28 = vector.broadcast %27 : vector<256x1xi1> to vector<256x128xi1>
    %29 = vector.broadcast %cst_20 : f32 to vector<256x128xf32>
    %30 = arith.select %28, %26, %29 : vector<256x128xi1>, vector<256x128xf32>
    %c255_i32 = arith.constant 255 : i32
    %31 = tpu.dynamic_rotate %25 by %c255_i32 dim 0 : vector<256x128xf32>, i32 -> vector<256x128xf32>
    %cst_21 = arith.constant 0.000000e+00 : f32
    %32 = vector.shape_cast %9 : vector<256x1xi1> to vector<256x1xi1>
    %33 = vector.broadcast %32 : vector<256x1xi1> to vector<256x128xi1>
    %34 = vector.broadcast %cst_21 : f32 to vector<256x128xf32>
    %35 = arith.select %33, %31, %34 : vector<256x128xi1>, vector<256x128xf32>
    %c0_22 = arith.constant 0 : index
    %c16 = arith.constant 16 : index
    %c0_23 = arith.constant 0 : index
    %36 = vector.load %arg11[%c0_22, %c16, %c0_23] : memref<3x288x128xf32, #tpu.memory_space<vmem>>, vector<1x256x128xf32>
    %37 = vector.shape_cast %36 : vector<1x256x128xf32> to vector<256x128xf32>
    %38 = vector.shape_cast %30 : vector<256x128xf32> to vector<1x256x128xf32>
    tpu.vector_store %arg11[%c0_22, %c16, %c0_23], %38 {strides = array<i32>} : memref<3x288x128xf32, #tpu.memory_space<vmem>>, vector<1x256x128xf32>,
    %c1 = arith.constant 1 : index
    %c16_24 = arith.constant 16 : index
    %c0_25 = arith.constant 0 : index
    %39 = vector.load %arg11[%c1, %c16_24, %c0_25] : memref<3x288x128xf32, #tpu.memory_space<vmem>>, vector<1x256x128xf32>
    %40 = vector.shape_cast %39 : vector<1x256x128xf32> to vector<256x128xf32>
    %41 = vector.shape_cast %25 : vector<256x128xf32> to vector<1x256x128xf32>
    tpu.vector_store %arg11[%c1, %c16_24, %c0_25], %41 {strides = array<i32>} : memref<3x288x128xf32, #tpu.memory_space<vmem>>, vector<1x256x128xf32>,
    %c2 = arith.constant 2 : index
    %c16_26 = arith.constant 16 : index
    %c0_27 = arith.constant 0 : index
    %42 = vector.load %arg11[%c2, %c16_26, %c0_27] : memref<3x288x128xf32, #tpu.memory_space<vmem>>, vector<1x256x128xf32>
    %43 = vector.shape_cast %42 : vector<1x256x128xf32> to vector<256x128xf32>
    %44 = vector.shape_cast %35 : vector<256x128xf32> to vector<1x256x128xf32>
    tpu.vector_store %arg11[%c2, %c16_26, %c0_27], %44 {strides = array<i32>} : memref<3x288x128xf32, #tpu.memory_space<vmem>>, vector<1x256x128xf32>,
    %cst_28 = arith.constant 0.000000e+00 : f32
    %45 = vector.broadcast %cst_28 : f32 to vector<256x128xf32>
    %c0_29 = arith.constant 0 : index
    %c0_30 = arith.constant 0 : index
    %c0_31 = arith.constant 0 : index
    %46 = vector.load %arg11[%c0_29, %c0_30, %c0_31] : memref<3x288x128xf32, #tpu.memory_space<vmem>>, vector<1x256x128xf32>
    %47 = vector.shape_cast %46 : vector<1x256x128xf32> to vector<256x128xf32>
    %c0_32 = arith.constant 0 : index
    %c0_33 = arith.constant 0 : index
    %c0_34 = arith.constant 0 : index
    %48 = vector.load %arg4[%c0_32, %c0_33, %c0_34] : memref<9x128x128xf32, #tpu.memory_space<vmem>>, vector<1x128x128xf32>
    %49 = vector.shape_cast %48 : vector<1x128x128xf32> to vector<128x128xf32>
    %cst_35 = arith.constant dense<0.000000e+00> : vector<256x128xf32>
    %50 = tpu.matmul %47, %49, %cst_35 {dimension_numbers = #tpu.dot_dimension_numbers<[1], [0], [0], [1], [0, 0, 1, 1], [], []>} : vector<256x128xf32>, vector<128x128xf32>, vector<256x128xf32> -> vector<256x128xf32>
    %51 = arith.addf %45, %50 : vector<256x128xf32>
    %c1_36 = arith.constant 1 : index
    %c0_37 = arith.constant 0 : index
    %c0_38 = arith.constant 0 : index
    %52 = vector.load %arg11[%c1_36, %c0_37, %c0_38] : memref<3x288x128xf32, #tpu.memory_space<vmem>>, vector<1x256x128xf32>
    %53 = vector.shape_cast %52 : vector<1x256x128xf32> to vector<256x128xf32>
    %c1_39 = arith.constant 1 : index
    %c0_40 = arith.constant 0 : index
    %c0_41 = arith.constant 0 : index
    %54 = vector.load %arg4[%c1_39, %c0_40, %c0_41] : memref<9x128x128xf32, #tpu.memory_space<vmem>>, vector<1x128x128xf32>
    %55 = vector.shape_cast %54 : vector<1x128x128xf32> to vector<128x128xf32>
    %cst_42 = arith.constant dense<0.000000e+00> : vector<256x128xf32>
    %56 = tpu.matmul %53, %55, %cst_42 {dimension_numbers = #tpu.dot_dimension_numbers<[1], [0], [0], [1], [0, 0, 1, 1], [], []>} : vector<256x128xf32>, vector<128x128xf32>, vector<256x128xf32> -> vector<256x128xf32>
    %57 = arith.addf %51, %56 : vector<256x128xf32>
    %c2_43 = arith.constant 2 : index
    %c0_44 = arith.constant 0 : index
    %c0_45 = arith.constant 0 : index
    %58 = vector.load %arg11[%c2_43, %c0_44, %c0_45] : memref<3x288x128xf32, #tpu.memory_space<vmem>>, vector<1x256x128xf32>
    %59 = vector.shape_cast %58 : vector<1x256x128xf32> to vector<256x128xf32>
    %c2_46 = arith.constant 2 : index
    %c0_47 = arith.constant 0 : index
    %c0_48 = arith.constant 0 : index
    %60 = vector.load %arg4[%c2_46, %c0_47, %c0_48] : memref<9x128x128xf32, #tpu.memory_space<vmem>>, vector<1x128x128xf32>
    %61 = vector.shape_cast %60 : vector<1x128x128xf32> to vector<128x128xf32>
    %cst_49 = arith.constant dense<0.000000e+00> : vector<256x128xf32>
    %62 = tpu.matmul %59, %61, %cst_49 {dimension_numbers = #tpu.dot_dimension_numbers<[1], [0], [0], [1], [0, 0, 1, 1], [], []>} : vector<256x128xf32>, vector<128x128xf32>, vector<256x128xf32> -> vector<256x128xf32>
    %63 = arith.addf %57, %62 : vector<256x128xf32>
    %c0_50 = arith.constant 0 : index
    %c16_51 = arith.constant 16 : index
    %c0_52 = arith.constant 0 : index
    %64 = vector.load %arg11[%c0_50, %c16_51, %c0_52] : memref<3x288x128xf32, #tpu.memory_space<vmem>>, vector<1x256x128xf32>
    %65 = vector.shape_cast %64 : vector<1x256x128xf32> to vector<256x128xf32>
    %c3 = arith.constant 3 : index
    %c0_53 = arith.constant 0 : index
    %c0_54 = arith.constant 0 : index
    %66 = vector.load %arg4[%c3, %c0_53, %c0_54] : memref<9x128x128xf32, #tpu.memory_space<vmem>>, vector<1x128x128xf32>
    %67 = vector.shape_cast %66 : vector<1x128x128xf32> to vector<128x128xf32>
    %cst_55 = arith.constant dense<0.000000e+00> : vector<256x128xf32>
    %68 = tpu.matmul %65, %67, %cst_55 {dimension_numbers = #tpu.dot_dimension_numbers<[1], [0], [0], [1], [0, 0, 1, 1], [], []>} : vector<256x128xf32>, vector<128x128xf32>, vector<256x128xf32> -> vector<256x128xf32>
    %69 = arith.addf %63, %68 : vector<256x128xf32>
    %c1_56 = arith.constant 1 : index
    %c16_57 = arith.constant 16 : index
    %c0_58 = arith.constant 0 : index
    %70 = vector.load %arg11[%c1_56, %c16_57, %c0_58] : memref<3x288x128xf32, #tpu.memory_space<vmem>>, vector<1x256x128xf32>
    %71 = vector.shape_cast %70 : vector<1x256x128xf32> to vector<256x128xf32>
    %c4 = arith.constant 4 : index
    %c0_59 = arith.constant 0 : index
    %c0_60 = arith.constant 0 : index
    %72 = vector.load %arg4[%c4, %c0_59, %c0_60] : memref<9x128x128xf32, #tpu.memory_space<vmem>>, vector<1x128x128xf32>
    %73 = vector.shape_cast %72 : vector<1x128x128xf32> to vector<128x128xf32>
    %cst_61 = arith.constant dense<0.000000e+00> : vector<256x128xf32>
    %74 = tpu.matmul %71, %73, %cst_61 {dimension_numbers = #tpu.dot_dimension_numbers<[1], [0], [0], [1], [0, 0, 1, 1], [], []>} : vector<256x128xf32>, vector<128x128xf32>, vector<256x128xf32> -> vector<256x128xf32>
    %75 = arith.addf %69, %74 : vector<256x128xf32>
    %c2_62 = arith.constant 2 : index
    %c16_63 = arith.constant 16 : index
    %c0_64 = arith.constant 0 : index
    %76 = vector.load %arg11[%c2_62, %c16_63, %c0_64] : memref<3x288x128xf32, #tpu.memory_space<vmem>>, vector<1x256x128xf32>
    %77 = vector.shape_cast %76 : vector<1x256x128xf32> to vector<256x128xf32>
    %c5 = arith.constant 5 : index
    %c0_65 = arith.constant 0 : index
    %c0_66 = arith.constant 0 : index
    %78 = vector.load %arg4[%c5, %c0_65, %c0_66] : memref<9x128x128xf32, #tpu.memory_space<vmem>>, vector<1x128x128xf32>
    %79 = vector.shape_cast %78 : vector<1x128x128xf32> to vector<128x128xf32>
    %cst_67 = arith.constant dense<0.000000e+00> : vector<256x128xf32>
    %80 = tpu.matmul %77, %79, %cst_67 {dimension_numbers = #tpu.dot_dimension_numbers<[1], [0], [0], [1], [0, 0, 1, 1], [], []>} : vector<256x128xf32>, vector<128x128xf32>, vector<256x128xf32> -> vector<256x128xf32>
    %81 = arith.addf %75, %80 : vector<256x128xf32>
    %c0_68 = arith.constant 0 : index
    %c32 = arith.constant 32 : index
    %c0_69 = arith.constant 0 : index
    %82 = vector.load %arg11[%c0_68, %c32, %c0_69] : memref<3x288x128xf32, #tpu.memory_space<vmem>>, vector<1x256x128xf32>
    %83 = vector.shape_cast %82 : vector<1x256x128xf32> to vector<256x128xf32>
    %c6 = arith.constant 6 : index
    %c0_70 = arith.constant 0 : index
    %c0_71 = arith.constant 0 : index
    %84 = vector.load %arg4[%c6, %c0_70, %c0_71] : memref<9x128x128xf32, #tpu.memory_space<vmem>>, vector<1x128x128xf32>
    %85 = vector.shape_cast %84 : vector<1x128x128xf32> to vector<128x128xf32>
    %cst_72 = arith.constant dense<0.000000e+00> : vector<256x128xf32>
    %86 = tpu.matmul %83, %85, %cst_72 {dimension_numbers = #tpu.dot_dimension_numbers<[1], [0], [0], [1], [0, 0, 1, 1], [], []>} : vector<256x128xf32>, vector<128x128xf32>, vector<256x128xf32> -> vector<256x128xf32>
    %87 = arith.addf %81, %86 : vector<256x128xf32>
    %c1_73 = arith.constant 1 : index
    %c32_74 = arith.constant 32 : index
    %c0_75 = arith.constant 0 : index
    %88 = vector.load %arg11[%c1_73, %c32_74, %c0_75] : memref<3x288x128xf32, #tpu.memory_space<vmem>>, vector<1x256x128xf32>
    %89 = vector.shape_cast %88 : vector<1x256x128xf32> to vector<256x128xf32>
    %c7 = arith.constant 7 : index
    %c0_76 = arith.constant 0 : index
    %c0_77 = arith.constant 0 : index
    %90 = vector.load %arg4[%c7, %c0_76, %c0_77] : memref<9x128x128xf32, #tpu.memory_space<vmem>>, vector<1x128x128xf32>
    %91 = vector.shape_cast %90 : vector<1x128x128xf32> to vector<128x128xf32>
    %cst_78 = arith.constant dense<0.000000e+00> : vector<256x128xf32>
    %92 = tpu.matmul %89, %91, %cst_78 {dimension_numbers = #tpu.dot_dimension_numbers<[1], [0], [0], [1], [0, 0, 1, 1], [], []>} : vector<256x128xf32>, vector<128x128xf32>, vector<256x128xf32> -> vector<256x128xf32>
    %93 = arith.addf %87, %92 : vector<256x128xf32>
    %c2_79 = arith.constant 2 : index
    %c32_80 = arith.constant 32 : index
    %c0_81 = arith.constant 0 : index
    %94 = vector.load %arg11[%c2_79, %c32_80, %c0_81] : memref<3x288x128xf32, #tpu.memory_space<vmem>>, vector<1x256x128xf32>
    %95 = vector.shape_cast %94 : vector<1x256x128xf32> to vector<256x128xf32>
    %c8 = arith.constant 8 : index
    %c0_82 = arith.constant 0 : index
    %c0_83 = arith.constant 0 : index
    %96 = vector.load %arg4[%c8, %c0_82, %c0_83] : memref<9x128x128xf32, #tpu.memory_space<vmem>>, vector<1x128x128xf32>
    %97 = vector.shape_cast %96 : vector<1x128x128xf32> to vector<128x128xf32>
    %cst_84 = arith.constant dense<0.000000e+00> : vector<256x128xf32>
    %98 = tpu.matmul %95, %97, %cst_84 {dimension_numbers = #tpu.dot_dimension_numbers<[1], [0], [0], [1], [0, 0, 1, 1], [], []>} : vector<256x128xf32>, vector<128x128xf32>, vector<256x128xf32> -> vector<256x128xf32>
    %99 = arith.addf %93, %98 : vector<256x128xf32>
    %c0_85 = arith.constant 0 : index
    %c0_86 = arith.constant 0 : index
    %100 = vector.load %arg5[%c0_85, %c0_86] : memref<1x128xf32, #tpu.memory_space<vmem>>, vector<1x128xf32>
    %101 = vector.broadcast %100 : vector<1x128xf32> to vector<256x128xf32>
    %102 = arith.mulf %99, %101 : vector<256x128xf32>
    %c0_87 = arith.constant 0 : index
    %c0_88 = arith.constant 0 : index
    %103 = vector.load %arg6[%c0_87, %c0_88] : memref<1x128xf32, #tpu.memory_space<vmem>>, vector<1x128xf32>
    %104 = vector.broadcast %103 : vector<1x128xf32> to vector<256x128xf32>
    %105 = arith.addf %102, %104 : vector<256x128xf32>
    %cst_89 = arith.constant 0.000000e+00 : f32
    %106 = vector.broadcast %cst_89 : f32 to vector<256x128xf32>
    %107 = arith.maximumf %105, %106 : vector<256x128xf32>
    %c1_i32_90 = arith.constant 1 : i32
    %108 = tpu.dynamic_rotate %107 by %c1_i32_90 dim 0 : vector<256x128xf32>, i32 -> vector<256x128xf32>
    %cst_91 = arith.constant 0.000000e+00 : f32
    %109 = vector.shape_cast %7 : vector<256x1xi1> to vector<256x1xi1>
    %110 = vector.broadcast %109 : vector<256x1xi1> to vector<256x128xi1>
    %111 = vector.broadcast %cst_91 : f32 to vector<256x128xf32>
    %112 = arith.select %110, %108, %111 : vector<256x128xi1>, vector<256x128xf32>
    %c255_i32_92 = arith.constant 255 : i32
    %113 = tpu.dynamic_rotate %107 by %c255_i32_92 dim 0 : vector<256x128xf32>, i32 -> vector<256x128xf32>
    %cst_93 = arith.constant 0.000000e+00 : f32
    %114 = vector.shape_cast %9 : vector<256x1xi1> to vector<256x1xi1>
    %115 = vector.broadcast %114 : vector<256x1xi1> to vector<256x128xi1>
    %116 = vector.broadcast %cst_93 : f32 to vector<256x128xf32>
    %117 = arith.select %115, %113, %116 : vector<256x128xi1>, vector<256x128xf32>
    %c0_94 = arith.constant 0 : index
    %c16_95 = arith.constant 16 : index
    %c0_96 = arith.constant 0 : index
    %118 = vector.load %arg11[%c0_94, %c16_95, %c0_96] : memref<3x288x128xf32, #tpu.memory_space<vmem>>, vector<1x256x128xf32>
    %119 = vector.shape_cast %118 : vector<1x256x128xf32> to vector<256x128xf32>
    %120 = vector.shape_cast %112 : vector<256x128xf32> to vector<1x256x128xf32>
    tpu.vector_store %arg11[%c0_94, %c16_95, %c0_96], %120 {strides = array<i32>} : memref<3x288x128xf32, #tpu.memory_space<vmem>>, vector<1x256x128xf32>,
    %c1_97 = arith.constant 1 : index
    %c16_98 = arith.constant 16 : index
    %c0_99 = arith.constant 0 : index
    %121 = vector.load %arg11[%c1_97, %c16_98, %c0_99] : memref<3x288x128xf32, #tpu.memory_space<vmem>>, vector<1x256x128xf32>
    %122 = vector.shape_cast %121 : vector<1x256x128xf32> to vector<256x128xf32>
    %123 = vector.shape_cast %107 : vector<256x128xf32> to vector<1x256x128xf32>
    tpu.vector_store %arg11[%c1_97, %c16_98, %c0_99], %123 {strides = array<i32>} : memref<3x288x128xf32, #tpu.memory_space<vmem>>, vector<1x256x128xf32>,
    %c2_100 = arith.constant 2 : index
    %c16_101 = arith.constant 16 : index
    %c0_102 = arith.constant 0 : index
    %124 = vector.load %arg11[%c2_100, %c16_101, %c0_102] : memref<3x288x128xf32, #tpu.memory_space<vmem>>, vector<1x256x128xf32>
    %125 = vector.shape_cast %124 : vector<1x256x128xf32> to vector<256x128xf32>
    %126 = vector.shape_cast %117 : vector<256x128xf32> to vector<1x256x128xf32>
    tpu.vector_store %arg11[%c2_100, %c16_101, %c0_102], %126 {strides = array<i32>} : memref<3x288x128xf32, #tpu.memory_space<vmem>>, vector<1x256x128xf32>,
    %cst_103 = arith.constant 0.000000e+00 : f32
    %127 = vector.broadcast %cst_103 : f32 to vector<256x128xf32>
    %c0_104 = arith.constant 0 : index
    %c0_105 = arith.constant 0 : index
    %c0_106 = arith.constant 0 : index
    %128 = vector.load %arg11[%c0_104, %c0_105, %c0_106] : memref<3x288x128xf32, #tpu.memory_space<vmem>>, vector<1x256x128xf32>
    %129 = vector.shape_cast %128 : vector<1x256x128xf32> to vector<256x128xf32>
    %c0_107 = arith.constant 0 : index
    %c0_108 = arith.constant 0 : index
    %c0_109 = arith.constant 0 : index
    %130 = vector.load %arg7[%c0_107, %c0_108, %c0_109] : memref<9x128x128xf32, #tpu.memory_space<vmem>>, vector<1x128x128xf32>
    %131 = vector.shape_cast %130 : vector<1x128x128xf32> to vector<128x128xf32>
    %cst_110 = arith.constant dense<0.000000e+00> : vector<256x128xf32>
    %132 = tpu.matmul %129, %131, %cst_110 {dimension_numbers = #tpu.dot_dimension_numbers<[1], [0], [0], [1], [0, 0, 1, 1], [], []>} : vector<256x128xf32>, vector<128x128xf32>, vector<256x128xf32> -> vector<256x128xf32>
    %133 = arith.addf %127, %132 : vector<256x128xf32>
    %c1_111 = arith.constant 1 : index
    %c0_112 = arith.constant 0 : index
    %c0_113 = arith.constant 0 : index
    %134 = vector.load %arg11[%c1_111, %c0_112, %c0_113] : memref<3x288x128xf32, #tpu.memory_space<vmem>>, vector<1x256x128xf32>
    %135 = vector.shape_cast %134 : vector<1x256x128xf32> to vector<256x128xf32>
    %c1_114 = arith.constant 1 : index
    %c0_115 = arith.constant 0 : index
    %c0_116 = arith.constant 0 : index
    %136 = vector.load %arg7[%c1_114, %c0_115, %c0_116] : memref<9x128x128xf32, #tpu.memory_space<vmem>>, vector<1x128x128xf32>
    %137 = vector.shape_cast %136 : vector<1x128x128xf32> to vector<128x128xf32>
    %cst_117 = arith.constant dense<0.000000e+00> : vector<256x128xf32>
    %138 = tpu.matmul %135, %137, %cst_117 {dimension_numbers = #tpu.dot_dimension_numbers<[1], [0], [0], [1], [0, 0, 1, 1], [], []>} : vector<256x128xf32>, vector<128x128xf32>, vector<256x128xf32> -> vector<256x128xf32>
    %139 = arith.addf %133, %138 : vector<256x128xf32>
    %c2_118 = arith.constant 2 : index
    %c0_119 = arith.constant 0 : index
    %c0_120 = arith.constant 0 : index
    %140 = vector.load %arg11[%c2_118, %c0_119, %c0_120] : memref<3x288x128xf32, #tpu.memory_space<vmem>>, vector<1x256x128xf32>
    %141 = vector.shape_cast %140 : vector<1x256x128xf32> to vector<256x128xf32>
    %c2_121 = arith.constant 2 : index
    %c0_122 = arith.constant 0 : index
    %c0_123 = arith.constant 0 : index
    %142 = vector.load %arg7[%c2_121, %c0_122, %c0_123] : memref<9x128x128xf32, #tpu.memory_space<vmem>>, vector<1x128x128xf32>
    %143 = vector.shape_cast %142 : vector<1x128x128xf32> to vector<128x128xf32>
    %cst_124 = arith.constant dense<0.000000e+00> : vector<256x128xf32>
    %144 = tpu.matmul %141, %143, %cst_124 {dimension_numbers = #tpu.dot_dimension_numbers<[1], [0], [0], [1], [0, 0, 1, 1], [], []>} : vector<256x128xf32>, vector<128x128xf32>, vector<256x128xf32> -> vector<256x128xf32>
    %145 = arith.addf %139, %144 : vector<256x128xf32>
    %c0_125 = arith.constant 0 : index
    %c16_126 = arith.constant 16 : index
    %c0_127 = arith.constant 0 : index
    %146 = vector.load %arg11[%c0_125, %c16_126, %c0_127] : memref<3x288x128xf32, #tpu.memory_space<vmem>>, vector<1x256x128xf32>
    %147 = vector.shape_cast %146 : vector<1x256x128xf32> to vector<256x128xf32>
    %c3_128 = arith.constant 3 : index
    %c0_129 = arith.constant 0 : index
    %c0_130 = arith.constant 0 : index
    %148 = vector.load %arg7[%c3_128, %c0_129, %c0_130] : memref<9x128x128xf32, #tpu.memory_space<vmem>>, vector<1x128x128xf32>
    %149 = vector.shape_cast %148 : vector<1x128x128xf32> to vector<128x128xf32>
    %cst_131 = arith.constant dense<0.000000e+00> : vector<256x128xf32>
    %150 = tpu.matmul %147, %149, %cst_131 {dimension_numbers = #tpu.dot_dimension_numbers<[1], [0], [0], [1], [0, 0, 1, 1], [], []>} : vector<256x128xf32>, vector<128x128xf32>, vector<256x128xf32> -> vector<256x128xf32>
    %151 = arith.addf %145, %150 : vector<256x128xf32>
    %c1_132 = arith.constant 1 : index
    %c16_133 = arith.constant 16 : index
    %c0_134 = arith.constant 0 : index
    %152 = vector.load %arg11[%c1_132, %c16_133, %c0_134] : memref<3x288x128xf32, #tpu.memory_space<vmem>>, vector<1x256x128xf32>
    %153 = vector.shape_cast %152 : vector<1x256x128xf32> to vector<256x128xf32>
    %c4_135 = arith.constant 4 : index
    %c0_136 = arith.constant 0 : index
    %c0_137 = arith.constant 0 : index
    %154 = vector.load %arg7[%c4_135, %c0_136, %c0_137] : memref<9x128x128xf32, #tpu.memory_space<vmem>>, vector<1x128x128xf32>
    %155 = vector.shape_cast %154 : vector<1x128x128xf32> to vector<128x128xf32>
    %cst_138 = arith.constant dense<0.000000e+00> : vector<256x128xf32>
    %156 = tpu.matmul %153, %155, %cst_138 {dimension_numbers = #tpu.dot_dimension_numbers<[1], [0], [0], [1], [0, 0, 1, 1], [], []>} : vector<256x128xf32>, vector<128x128xf32>, vector<256x128xf32> -> vector<256x128xf32>
    %157 = arith.addf %151, %156 : vector<256x128xf32>
    %c2_139 = arith.constant 2 : index
    %c16_140 = arith.constant 16 : index
    %c0_141 = arith.constant 0 : index
    %158 = vector.load %arg11[%c2_139, %c16_140, %c0_141] : memref<3x288x128xf32, #tpu.memory_space<vmem>>, vector<1x256x128xf32>
    %159 = vector.shape_cast %158 : vector<1x256x128xf32> to vector<256x128xf32>
    %c5_142 = arith.constant 5 : index
    %c0_143 = arith.constant 0 : index
    %c0_144 = arith.constant 0 : index
    %160 = vector.load %arg7[%c5_142, %c0_143, %c0_144] : memref<9x128x128xf32, #tpu.memory_space<vmem>>, vector<1x128x128xf32>
    %161 = vector.shape_cast %160 : vector<1x128x128xf32> to vector<128x128xf32>
    %cst_145 = arith.constant dense<0.000000e+00> : vector<256x128xf32>
    %162 = tpu.matmul %159, %161, %cst_145 {dimension_numbers = #tpu.dot_dimension_numbers<[1], [0], [0], [1], [0, 0, 1, 1], [], []>} : vector<256x128xf32>, vector<128x128xf32>, vector<256x128xf32> -> vector<256x128xf32>
    %163 = arith.addf %157, %162 : vector<256x128xf32>
    %c0_146 = arith.constant 0 : index
    %c32_147 = arith.constant 32 : index
    %c0_148 = arith.constant 0 : index
    %164 = vector.load %arg11[%c0_146, %c32_147, %c0_148] : memref<3x288x128xf32, #tpu.memory_space<vmem>>, vector<1x256x128xf32>
    %165 = vector.shape_cast %164 : vector<1x256x128xf32> to vector<256x128xf32>
    %c6_149 = arith.constant 6 : index
    %c0_150 = arith.constant 0 : index
    %c0_151 = arith.constant 0 : index
    %166 = vector.load %arg7[%c6_149, %c0_150, %c0_151] : memref<9x128x128xf32, #tpu.memory_space<vmem>>, vector<1x128x128xf32>
    %167 = vector.shape_cast %166 : vector<1x128x128xf32> to vector<128x128xf32>
    %cst_152 = arith.constant dense<0.000000e+00> : vector<256x128xf32>
    %168 = tpu.matmul %165, %167, %cst_152 {dimension_numbers = #tpu.dot_dimension_numbers<[1], [0], [0], [1], [0, 0, 1, 1], [], []>} : vector<256x128xf32>, vector<128x128xf32>, vector<256x128xf32> -> vector<256x128xf32>
    %169 = arith.addf %163, %168 : vector<256x128xf32>
    %c1_153 = arith.constant 1 : index
    %c32_154 = arith.constant 32 : index
    %c0_155 = arith.constant 0 : index
    %170 = vector.load %arg11[%c1_153, %c32_154, %c0_155] : memref<3x288x128xf32, #tpu.memory_space<vmem>>, vector<1x256x128xf32>
    %171 = vector.shape_cast %170 : vector<1x256x128xf32> to vector<256x128xf32>
    %c7_156 = arith.constant 7 : index
    %c0_157 = arith.constant 0 : index
    %c0_158 = arith.constant 0 : index
    %172 = vector.load %arg7[%c7_156, %c0_157, %c0_158] : memref<9x128x128xf32, #tpu.memory_space<vmem>>, vector<1x128x128xf32>
    %173 = vector.shape_cast %172 : vector<1x128x128xf32> to vector<128x128xf32>
    %cst_159 = arith.constant dense<0.000000e+00> : vector<256x128xf32>
    %174 = tpu.matmul %171, %173, %cst_159 {dimension_numbers = #tpu.dot_dimension_numbers<[1], [0], [0], [1], [0, 0, 1, 1], [], []>} : vector<256x128xf32>, vector<128x128xf32>, vector<256x128xf32> -> vector<256x128xf32>
    %175 = arith.addf %169, %174 : vector<256x128xf32>
    %c2_160 = arith.constant 2 : index
    %c32_161 = arith.constant 32 : index
    %c0_162 = arith.constant 0 : index
    %176 = vector.load %arg11[%c2_160, %c32_161, %c0_162] : memref<3x288x128xf32, #tpu.memory_space<vmem>>, vector<1x256x128xf32>
    %177 = vector.shape_cast %176 : vector<1x256x128xf32> to vector<256x128xf32>
    %c8_163 = arith.constant 8 : index
    %c0_164 = arith.constant 0 : index
    %c0_165 = arith.constant 0 : index
    %178 = vector.load %arg7[%c8_163, %c0_164, %c0_165] : memref<9x128x128xf32, #tpu.memory_space<vmem>>, vector<1x128x128xf32>
    %179 = vector.shape_cast %178 : vector<1x128x128xf32> to vector<128x128xf32>
    %cst_166 = arith.constant dense<0.000000e+00> : vector<256x128xf32>
    %180 = tpu.matmul %177, %179, %cst_166 {dimension_numbers = #tpu.dot_dimension_numbers<[1], [0], [0], [1], [0, 0, 1, 1], [], []>} : vector<256x128xf32>, vector<128x128xf32>, vector<256x128xf32> -> vector<256x128xf32>
    %181 = arith.addf %175, %180 : vector<256x128xf32>
    %c0_167 = arith.constant 0 : index
    %c0_168 = arith.constant 0 : index
    %182 = vector.load %arg12[%c0_167, %c0_168] : memref<256x128xf32, #tpu.memory_space<vmem>>, vector<256x128xf32>
    %183 = arith.addf %182, %181 : vector<256x128xf32>
    %c0_169 = arith.constant 0 : index
    %c0_170 = arith.constant 0 : index
    %c0_171 = arith.constant 0 : index
    %184 = vector.load %arg10[%c0_169, %c0_170, %c0_171] : memref<1x256x128xf32, #tpu.memory_space<vmem>>, vector<1x256x128xf32>
    %185 = vector.shape_cast %184 : vector<1x256x128xf32> to vector<256x128xf32>
    %186 = vector.shape_cast %183 : vector<256x128xf32> to vector<1x256x128xf32>
    tpu.vector_store %arg10[%c0_169, %c0_170, %c0_171], %186 {strides = array<i32>} : memref<1x256x128xf32, #tpu.memory_space<vmem>>, vector<1x256x128xf32>,
    return
  }
  func.func @transform_0(%arg0: i32) -> (i32, i32, i32) {
    %c0_i32 = arith.constant 0 : i32
    %c0_i32_0 = arith.constant 0 : i32
    %c0_i32_1 = arith.constant 0 : i32
    return %arg0, %c0_i32, %c0_i32_0 : i32, i32, i32
  }
  func.func @transform_1(%arg0: i32) -> (i32, i32) {
    %c0_i32 = arith.constant 0 : i32
    %c0_i32_0 = arith.constant 0 : i32
    %c0_i32_1 = arith.constant 0 : i32
    return %c0_i32, %c0_i32_0 : i32, i32
  }
  func.func @transform_2(%arg0: i32) -> (i32, i32) {
    %c0_i32 = arith.constant 0 : i32
    %c0_i32_0 = arith.constant 0 : i32
    %c0_i32_1 = arith.constant 0 : i32
    return %c0_i32, %c0_i32_0 : i32, i32
  }
  func.func @transform_3(%arg0: i32) -> (i32, i32, i32) {
    %c0_i32 = arith.constant 0 : i32
    %c0_i32_0 = arith.constant 0 : i32
    %c0_i32_1 = arith.constant 0 : i32
    %c0_i32_2 = arith.constant 0 : i32
    return %c0_i32, %c0_i32_0, %c0_i32_1 : i32, i32, i32
  }
  func.func @transform_4(%arg0: i32) -> (i32, i32) {
    %c0_i32 = arith.constant 0 : i32
    %c0_i32_0 = arith.constant 0 : i32
    %c0_i32_1 = arith.constant 0 : i32
    return %c0_i32, %c0_i32_0 : i32, i32
  }
  func.func @transform_5(%arg0: i32) -> (i32, i32) {
    %c0_i32 = arith.constant 0 : i32
    %c0_i32_0 = arith.constant 0 : i32
    %c0_i32_1 = arith.constant 0 : i32
    return %c0_i32, %c0_i32_0 : i32, i32
  }
  func.func @transform_6(%arg0: i32) -> (i32, i32, i32) {
    %c0_i32 = arith.constant 0 : i32
    %c0_i32_0 = arith.constant 0 : i32
    %c0_i32_1 = arith.constant 0 : i32
    %c0_i32_2 = arith.constant 0 : i32
    return %c0_i32, %c0_i32_0, %c0_i32_1 : i32, i32, i32
  }
  func.func @transform_7(%arg0: i32) -> (i32, i32) {
    %c0_i32 = arith.constant 0 : i32
    %c0_i32_0 = arith.constant 0 : i32
    %c0_i32_1 = arith.constant 0 : i32
    return %c0_i32, %c0_i32_0 : i32, i32
  }
  func.func @transform_8(%arg0: i32) -> (i32, i32) {
    %c0_i32 = arith.constant 0 : i32
    %c0_i32_0 = arith.constant 0 : i32
    %c0_i32_1 = arith.constant 0 : i32
    return %c0_i32, %c0_i32_0 : i32, i32
  }
  func.func @transform_9(%arg0: i32) -> (i32, i32, i32) {
    %c0_i32 = arith.constant 0 : i32
    %c0_i32_0 = arith.constant 0 : i32
    %c0_i32_1 = arith.constant 0 : i32
    return %arg0, %c0_i32, %c0_i32_0 : i32, i32, i32
  }
}

</mosaic_0001>

<llo_original>
// kernel: tpu_custom_call.1
$region0: #{tpu_custom_call.1}
  #allocation0 [shape = 'u32[]', space=smem, size = 0x4, offset = 0x4, fixed_abs, tag = 'smem constant byte address 0x4 - core index']
  #allocation1 [shape = 'u32[144,128]{1,0:T(1,128)}', space=vmem, size = 0x12000, scoped, tag = 'internal scratch']
  #allocation2 [shape = 'f32[3,288,128]{2,1,0:T(8,128)}', space=vmem, size = 0x6c000, scoped, tag = 'scratch operand']
  #allocation3 [shape = 'f32[256,128]{1,0:T(8,128)}', space=vmem, size = 0x20000, scoped, tag = 'scratch operand']
  %s0 = inlined_call_operand.hbm [shape: f32[2,256,128], index: 0, kind: input, shape index: {}]
  %s1 = inlined_call_operand.vmem [shape: f32[1,128], index: 1, kind: input, shape index: {}]
  %s2 = inlined_call_operand.vmem [shape: f32[1,128], index: 2, kind: input, shape index: {}]
  %s3 = inlined_call_operand.hbm [shape: f32[9,128,128], index: 3, kind: input, shape index: {}]
  %s4 = inlined_call_operand.vmem [shape: f32[1,128], index: 4, kind: input, shape index: {}]
  %s5 = inlined_call_operand.vmem [shape: f32[1,128], index: 5, kind: input, shape index: {}]
  %s6 = inlined_call_operand.hbm [shape: f32[9,128,128], index: 6, kind: input, shape index: {}]
  %s7 = inlined_call_operand.hbm [shape: f32[128,128], index: 7, kind: input, shape index: {}]
  %s8 = inlined_call_operand.vmem [shape: f32[1,128], index: 8, kind: input, shape index: {}]
  %s9 = inlined_call_operand.hbm [shape: f32[2,256,128], index: 9, kind: output, shape index: {}]
  %s10 = sld [smem:[#allocation0]]
  $region85: #{tpu_custom_call.1} parent=0
    _
  %s12 = ssub.s32 1, %s10
  %s13 = scalar_select 0, %s12, %s10
  $region1: #{tpu_custom_call.1} parent=0
    #allocation4 [shape = 'u8[262144]{0}', space=vmem, size = 0x40000, scoped, tag = 'input window, operand 0']
    #allocation5 [shape = 's32[2]{0}', space=sflag, size = 0x8, scoped, tag = 'scoped memory for tpu_custom_call.1']
    #allocation6 [shape = 's32[2]{0}', space=sflag, size = 0x8, scoped, tag = 'scoped memory for tpu_custom_call.1']
    #allocation7 [shape = 'u8[589824]{0}', space=vmem, size = 0x90000, scoped, tag = 'input window, operand 3, single buffered']
    #allocation8 [shape = 's32[1]{0}', space=sflag, size = 0x4, scoped, tag = 'scoped memory for tpu_custom_call.1']
    #allocation9 [shape = 'u8[589824]{0}', space=vmem, size = 0x90000, scoped, tag = 'input window, operand 6, single buffered']
    #allocation10 [shape = 'u8[65536]{0}', space=vmem, size = 0x10000, scoped, tag = 'input window, operand 7, single buffered']
    #allocation11 [shape = 's32[1]{0}', space=sflag, size = 0x4, scoped, tag = 'scoped memory for tpu_custom_call.1']
    #allocation12 [shape = 'u8[262144]{0}', space=vmem, size = 0x40000, scoped, tag = 'output window, operand 0']
    %14 = vsyncpa [#allocation5], 0
    %s15 = scalar_lea.sflag [#allocation5], 1
    %16 = vsyncpa %s15, 0
    %17 = vsyncpa [#allocation8], 0
    %18 = vsyncpa [#allocation11], 0
    %19 = vsyncpa [#allocation6], 0
    %s20 = scalar_lea.sflag [#allocation6], 1
    %21 = vsyncpa %s20, 0
    loop: start=0, step=1, limit=4
    $region2: #{tpu_custom_call.1} parent=1 // loop_pre_header
      _
    $region3: #{tpu_custom_call.1} parent=1 // loop_header
      %s23 = sphi 0, %s27
      %p24 = scmp.ge.s32.totalorder %s23, 4
      %s33 = sphi 0, %s35
      %s36 = sphi 0, %s33
      %s37 = sphi 0, %s36
      %s53 = sphi 0, %s37
      %s57 = sphi 0, %s57
      %s59 = sphi 0, %s57
      %s60 = sphi 0, %s59
      %s74 = sphi 0, %s60
      %s78 = sphi 0, %s78
      %s80 = sphi 0, %s78
      %s81 = sphi 0, %s80
      %s95 = sphi 0, %s81
      %s99 = sphi 0, %s99
      %s101 = sphi 0, %s99
      %s102 = sphi 0, %s101
      %s116 = sphi 0, %s102
      %s120 = sphi 0, %s120
      %s122 = sphi 0, %s120
      %s123 = sphi 0, %s122
      %s137 = sphi 0, %s123
      %s141 = sphi 0, %s141
      %s143 = sphi 0, %s141
      %s144 = sphi 0, %s143
      %s158 = sphi 0, %s144
      %s162 = sphi 0, %s162
      %s164 = sphi 0, %s162
      %s165 = sphi 0, %s164
      %s179 = sphi 0, %s165
      %s183 = sphi 0, %s183
      %s185 = sphi 0, %s183
      %s186 = sphi 0, %s185
      %s200 = sphi 0, %s186
      %s204 = sphi 0, %s204
      %s206 = sphi 0, %s204
      %s207 = sphi 0, %s206
      %s221 = sphi 0, %s207
      %s227 = sphi 0, %s229
      %s230 = sphi 0, %s227
      %s231 = sphi 0, %s230
      %s247 = sphi 0, %s231
    $region4: #{tpu_custom_call.1} parent=1 // loop_header_branch
      %26 = sbr.rel (%p24) target = $region8
    $region5: #{tpu_custom_call.1} parent=1 // loop_body
      %s28 = ssub.s32 %s23, 1
      %s29 = ssub.s32 %s23, 2
      %s30 = sadd.s32 %s23, 1
      %s31 = ssub.s32 %s23, %s30
      %p32 = scmp.eq.s32.totalorder %s31, 0
      %s34 = sadd.s32 %s33, 1
      %s35 = scalar_select %p32, %s33, %s34
      %p38 = pneg %p32
      %p39 = scmp.eq.s32.totalorder %s23, 1
      %p40 = por %p38, %p39
      %p41 = scmp.ne.s32.totalorder %s33, %s36
      %p42 = scmp.eq.s32.totalorder %s23, 0
      %p43 = por %p41, %p42
      %p44 = scmp.ne.s32.totalorder %s33, %s36
      %p45 = scmp.eq.s32.totalorder %s28, 1
      %p46 = por %p44, %p45
      %p47 = scmp.ne.s32.totalorder %s36, %s37
      %p48 = scmp.eq.s32.totalorder %s28, 0
      %p49 = por %p47, %p48
      %p50 = scmp.ne.s32.totalorder %s36, %s37
      %p51 = scmp.eq.s32.totalorder %s29, 1
      %p52 = por %p50, %p51
      %p54 = scmp.ne.s32.totalorder %s37, %s53
      %p55 = scmp.eq.s32.totalorder %s29, 0
      %p56 = por %p54, %p55
      %s58 = sadd.s32 %s57, 1
      %p61 = scmp.eq.s32.totalorder %s23, 1
      %p62 = scmp.ne.s32.totalorder %s57, %s59
      %p63 = scmp.eq.s32.totalorder %s23, 0
      %p64 = por %p62, %p63
      %p65 = scmp.ne.s32.totalorder %s57, %s59
      %p66 = scmp.eq.s32.totalorder %s28, 1
      %p67 = por %p65, %p66
      %p68 = scmp.ne.s32.totalorder %s59, %s60
      %p69 = scmp.eq.s32.totalorder %s28, 0
      %p70 = por %p68, %p69
      %p71 = scmp.ne.s32.totalorder %s59, %s60
      %p72 = scmp.eq.s32.totalorder %s29, 1
      %p73 = por %p71, %p72
      %p75 = scmp.ne.s32.totalorder %s60, %s74
      %p76 = scmp.eq.s32.totalorder %s29, 0
      %p77 = por %p75, %p76
      %s79 = sadd.s32 %s78, 1
      %p82 = scmp.eq.s32.totalorder %s23, 1
      %p83 = scmp.ne.s32.totalorder %s78, %s80
      %p84 = scmp.eq.s32.totalorder %s23, 0
      %p85 = por %p83, %p84
      %p86 = scmp.ne.s32.totalorder %s78, %s80
      %p87 = scmp.eq.s32.totalorder %s28, 1
      %p88 = por %p86, %p87
      %p89 = scmp.ne.s32.totalorder %s80, %s81
      %p90 = scmp.eq.s32.totalorder %s28, 0
      %p91 = por %p89, %p90
      %p92 = scmp.ne.s32.totalorder %s80, %s81
      %p93 = scmp.eq.s32.totalorder %s29, 1
      %p94 = por %p92, %p93
      %p96 = scmp.ne.s32.totalorder %s81, %s95
      %p97 = scmp.eq.s32.totalorder %s29, 0
      %p98 = por %p96, %p97
      %s100 = sadd.s32 %s99, 1
      %p103 = scmp.eq.s32.totalorder %s23, 1
      %p104 = scmp.ne.s32.totalorder %s99, %s101
      %p105 = scmp.eq.s32.totalorder %s23, 0
      %p106 = por %p104, %p105
      %p107 = scmp.ne.s32.totalorder %s99, %s101
      %p108 = scmp.eq.s32.totalorder %s28, 1
      %p109 = por %p107, %p108
      %p110 = scmp.ne.s32.totalorder %s101, %s102
      %p111 = scmp.eq.s32.totalorder %s28, 0
      %p112 = por %p110, %p111
      %p113 = scmp.ne.s32.totalorder %s101, %s102
      %p114 = scmp.eq.s32.totalorder %s29, 1
      %p115 = por %p113, %p114
      %p117 = scmp.ne.s32.totalorder %s102, %s116
      %p118 = scmp.eq.s32.totalorder %s29, 0
      %p119 = por %p117, %p118
      %s121 = sadd.s32 %s120, 1
      %p124 = scmp.eq.s32.totalorder %s23, 1
      %p125 = scmp.ne.s32.totalorder %s120, %s122
      %p126 = scmp.eq.s32.totalorder %s23, 0
      %p127 = por %p125, %p126
      %p128 = scmp.ne.s32.totalorder %s120, %s122
      %p129 = scmp.eq.s32.totalorder %s28, 1
      %p130 = por %p128, %p129
      %p131 = scmp.ne.s32.totalorder %s122, %s123
      %p132 = scmp.eq.s32.totalorder %s28, 0
      %p133 = por %p131, %p132
      %p134 = scmp.ne.s32.totalorder %s122, %s123
      %p135 = scmp.eq.s32.totalorder %s29, 1
      %p136 = por %p134, %p135
      %p138 = scmp.ne.s32.totalorder %s123, %s137
      %p139 = scmp.eq.s32.totalorder %s29, 0
      %p140 = por %p138, %p139
      %s142 = sadd.s32 %s141, 1
      %p145 = scmp.eq.s32.totalorder %s23, 1
      %p146 = scmp.ne.s32.totalorder %s141, %s143
      %p147 = scmp.eq.s32.totalorder %s23, 0
      %p148 = por %p146, %p147
      %p149 = scmp.ne.s32.totalorder %s141, %s143
      %p150 = scmp.eq.s32.totalorder %s28, 1
      %p151 = por %p149, %p150
      %p152 = scmp.ne.s32.totalorder %s143, %s144
      %p153 = scmp.eq.s32.totalorder %s28, 0
      %p154 = por %p152, %p153
      %p155 = scmp.ne.s32.totalorder %s143, %s144
      %p156 = scmp.eq.s32.totalorder %s29, 1
      %p157 = por %p155, %p156
      %p159 = scmp.ne.s32.totalorder %s144, %s158
      %p160 = scmp.eq.s32.totalorder %s29, 0
      %p161 = por %p159, %p160
      %s163 = sadd.s32 %s162, 1
      %p166 = scmp.eq.s32.totalorder %s23, 1
      %p167 = scmp.ne.s32.totalorder %s162, %s164
      %p168 = scmp.eq.s32.totalorder %s23, 0
      %p169 = por %p167, %p168
      %p170 = scmp.ne.s32.totalorder %s162, %s164
      %p171 = scmp.eq.s32.totalorder %s28, 1
      %p172 = por %p170, %p171
      %p173 = scmp.ne.s32.totalorder %s164, %s165
      %p174 = scmp.eq.s32.totalorder %s28, 0
      %p175 = por %p173, %p174
      %p176 = scmp.ne.s32.totalorder %s164, %s165
      %p177 = scmp.eq.s32.totalorder %s29, 1
      %p178 = por %p176, %p177
      %p180 = scmp.ne.s32.totalorder %s165, %s179
      %p181 = scmp.eq.s32.totalorder %s29, 0
      %p182 = por %p180, %p181
      %s184 = sadd.s32 %s183, 1
      %p187 = scmp.eq.s32.totalorder %s23, 1
      %p188 = scmp.ne.s32.totalorder %s183, %s185
      %p189 = scmp.eq.s32.totalorder %s23, 0
      %p190 = por %p188, %p189
      %p191 = scmp.ne.s32.totalorder %s183, %s185
      %p192 = scmp.eq.s32.totalorder %s28, 1
      %p193 = por %p191, %p192
      %p194 = scmp.ne.s32.totalorder %s185, %s186
      %p195 = scmp.eq.s32.totalorder %s28, 0
      %p196 = por %p194, %p195
      %p197 = scmp.ne.s32.totalorder %s185, %s186
      %p198 = scmp.eq.s32.totalorder %s29, 1
      %p199 = por %p197, %p198
      %p201 = scmp.ne.s32.totalorder %s186, %s200
      %p202 = scmp.eq.s32.totalorder %s29, 0
      %p203 = por %p201, %p202
      %s205 = sadd.s32 %s204, 1
      %p208 = scmp.eq.s32.totalorder %s23, 1
      %p209 = scmp.ne.s32.totalorder %s204, %s206
      %p210 = scmp.eq.s32.totalorder %s23, 0
      %p211 = por %p209, %p210
      %p212 = scmp.ne.s32.totalorder %s204, %s206
      %p213 = scmp.eq.s32.totalorder %s28, 1
      %p214 = por %p212, %p213
      %p215 = scmp.ne.s32.totalorder %s206, %s207
      %p216 = scmp.eq.s32.totalorder %s28, 0
      %p217 = por %p215, %p216
      %p218 = scmp.ne.s32.totalorder %s206, %s207
      %p219 = scmp.eq.s32.totalorder %s29, 1
      %p220 = por %p218, %p219
      %p222 = scmp.ne.s32.totalorder %s207, %s221
      %p223 = scmp.eq.s32.totalorder %s29, 0
      %p224 = por %p222, %p223
      %s225 = ssub.s32 %s23, %s30
      %p226 = scmp.eq.s32.totalorder %s225, 0
      %s228 = sadd.s32 %s227, 1
      %s229 = scalar_select %p226, %s227, %s228
      %p232 = pneg %p226
      %p233 = scmp.eq.s32.totalorder %s23, 1
      %p234 = por %p232, %p233
      %p235 = scmp.ne.s32.totalorder %s227, %s230
      %p236 = scmp.eq.s32.totalorder %s23, 0
      %p237 = por %p235, %p236
      %p238 = scmp.ne.s32.totalorder %s227, %s230
      %p239 = scmp.eq.s32.totalorder %s28, 1
      %p240 = por %p238, %p239
      %p241 = scmp.ne.s32.totalorder %s230, %s231
      %p242 = scmp.eq.s32.totalorder %s28, 0
      %p243 = por %p241, %p242
      %p244 = scmp.ne.s32.totalorder %s230, %s231
      %p245 = scmp.eq.s32.totalorder %s29, 1
      %p246 = por %p244, %p245
      %p248 = scmp.ne.s32.totalorder %s231, %s247
      %p249 = scmp.eq.s32.totalorder %s29, 0
      %p250 = por %p248, %p249
      %p251 = scmp.le.s32.totalorder 1, %s23
      %p252 = scmp.lt.s32.totalorder %s23, 3
      %p253 = pnand %p251, %p252
      %p254 = pneg %p253
      // Predicated region
      $region9: #{tpu_custom_call.1} parent=5 // pred_check
        _
      $region10: #{tpu_custom_call.1} parent=5 // pred_check_branch
        %256 = sbr.rel (%p253) target = $region12
      $region11: #{tpu_custom_call.1} parent=5 // pred_region
        %s257 = ssub.s32 %s23, 1
        // Predicated region
        $region13: #{tpu_custom_call.1} parent=11 // pred_check
          %p258 = pneg %p70
        $region14: #{tpu_custom_call.1} parent=11 // pred_check_branch
          %260 = sbr.rel (%p258) target = $region16
        $region15: #{tpu_custom_call.1} parent=11 // pred_region
          _
        $region16: #{tpu_custom_call.1} parent=11 // pred_fallthru
          _
        // Predicated region
        $region17: #{tpu_custom_call.1} parent=11 // pred_check
          %p261 = pneg %p91
        $region18: #{tpu_custom_call.1} parent=11 // pred_check_branch
          %263 = sbr.rel (%p261) target = $region20
        $region19: #{tpu_custom_call.1} parent=11 // pred_region
          _
        $region20: #{tpu_custom_call.1} parent=11 // pred_fallthru
          _
        // Predicated region
        $region21: #{tpu_custom_call.1} parent=11 // pred_check
          %p264 = pneg %p112
        $region22: #{tpu_custom_call.1} parent=11 // pred_check_branch
          %266 = sbr.rel (%p264) target = $region24
        $region23: #{tpu_custom_call.1} parent=11 // pred_region
          %s268 = ssub.s32 18432, 18432
          %269 = vsyncadd [#allocation8], %s268
          %s270 = sshll.u32 [#allocation7], 4
          %s271 = int_to_ptr.vmem [resolvable:$true] %s270
          %276 = dma.hbm_to_vmem [thread:$0]  %s3, 18432, %s271, [#allocation8], 128, 128, 8
        $region24: #{tpu_custom_call.1} parent=11 // pred_fallthru
          _
        // Predicated region
        $region25: #{tpu_custom_call.1} parent=11 // pred_check
          %p277 = pneg %p133
        $region26: #{tpu_custom_call.1} parent=11 // pred_check_branch
          %279 = sbr.rel (%p277) target = $region28
        $region27: #{tpu_custom_call.1} parent=11 // pred_region
          _
        $region28: #{tpu_custom_call.1} parent=11 // pred_fallthru
          _
        // Predicated region
        $region29: #{tpu_custom_call.1} parent=11 // pred_check
          %p280 = pneg %p154
        $region30: #{tpu_custom_call.1} parent=11 // pred_check_branch
          %282 = sbr.rel (%p280) target = $region32
        $region31: #{tpu_custom_call.1} parent=11 // pred_region
          _
        $region32: #{tpu_custom_call.1} parent=11 // pred_fallthru
          _
        // Predicated region
        $region33: #{tpu_custom_call.1} parent=11 // pred_check
          %p283 = pneg %p175
        $region34: #{tpu_custom_call.1} parent=11 // pred_check_branch
          %285 = sbr.rel (%p283) target = $region36
        $region35: #{tpu_custom_call.1} parent=11 // pred_region
          %s287 = ssub.s32 18432, 18432
          %288 = vsyncadd [#allocation8], %s287
          %s289 = sshll.u32 [#allocation9], 4
          %s290 = int_to_ptr.vmem [resolvable:$true] %s289
          %295 = dma.hbm_to_vmem [thread:$0]  %s6, 18432, %s290, [#allocation8], 128, 128, 8
        $region36: #{tpu_custom_call.1} parent=11 // pred_fallthru
          _
        // Predicated region
        $region37: #{tpu_custom_call.1} parent=11 // pred_check
          %p296 = pneg %p196
        $region38: #{tpu_custom_call.1} parent=11 // pred_check_branch
          %298 = sbr.rel (%p296) target = $region40
        $region39: #{tpu_custom_call.1} parent=11 // pred_region
          %s300 = ssub.s32 2048, 2048
          %301 = vsyncadd [#allocation11], %s300
          %s302 = sshll.u32 [#allocation10], 4
          %s303 = int_to_ptr.vmem [resolvable:$true] %s302
          %308 = dma.hbm_to_vmem [thread:$0]  %s7, 2048, %s303, [#allocation11], 128, 128, 8
        $region40: #{tpu_custom_call.1} parent=11 // pred_fallthru
          _
        // Predicated region
        $region41: #{tpu_custom_call.1} parent=11 // pred_check
          %p309 = pneg %p217
        $region42: #{tpu_custom_call.1} parent=11 // pred_check_branch
          %311 = sbr.rel (%p309) target = $region44
        $region43: #{tpu_custom_call.1} parent=11 // pred_region
          _
        $region44: #{tpu_custom_call.1} parent=11 // pred_fallthru
          _
      $region12: #{tpu_custom_call.1} parent=5 // pred_fallthru
        _
      %p312 = scmp.lt.s32.totalorder %s23, 2
      // Predicated region
      $region45: #{tpu_custom_call.1} parent=5 // pred_check
        %p313 = pneg %p312
      $region46: #{tpu_custom_call.1} parent=5 // pred_check_branch
        %315 = sbr.rel (%p313) target = $region48
      $region47: #{tpu_custom_call.1} parent=5 // pred_region
        // Predicated region
        $region49: #{tpu_custom_call.1} parent=47 // pred_check
          %p316 = pneg %p43
        $region50: #{tpu_custom_call.1} parent=47 // pred_check_branch
          %318 = sbr.rel (%p316) target = $region52
        $region51: #{tpu_custom_call.1} parent=47 // pred_region
          %s319 = sand.u32 %s33, 1
          %s320 = scalar_lea.sflag [#allocation5], %s319
          %s321 = sand.u32 %s33, 1
          %s322 = smul.addr %s321, 256
          %s323 = scalar_lea.vmem [#allocation4], %s322
          %s325 = ssub.s32 4096, 4096
          %326 = vsyncadd %s320, %s325
          %s327 = smul.addr %s23, 32
          %s328 = smul.addr %s327, 128
          %s329 = scalar_lea.hbm %s0, %s328
          %s330 = sshll.u32 %s323, 4
          %s331 = int_to_ptr.vmem [resolvable:$true] %s330
          %336 = dma.hbm_to_vmem [thread:$0]  %s329, 4096, %s331, %s320, 128, 128, 8
        $region52: #{tpu_custom_call.1} parent=47 // pred_fallthru
          _
      $region48: #{tpu_custom_call.1} parent=5 // pred_fallthru
        _
      %p337 = scmp.le.s32.totalorder 1, %s23
      %p338 = scmp.lt.s32.totalorder %s23, 3
      %p339 = pnand %p337, %p338
      %p340 = pneg %p339
      // Predicated region
      $region53: #{tpu_custom_call.1} parent=5 // pred_check
        _
      $region54: #{tpu_custom_call.1} parent=5 // pred_check_branch
        %342 = sbr.rel (%p339) target = $region56
      $region55: #{tpu_custom_call.1} parent=5 // pred_region
        %s343 = ssub.s32 %s23, 1
        %s344 = sand.u32 %s36, 1
        %s345 = scalar_lea.sflag [#allocation5], %s344
        %s346 = sand.u32 %s36, 1
        %s347 = smul.addr %s346, 256
        %s348 = scalar_lea.vmem [#allocation4], %s347
        // Predicated region
        $region57: #{tpu_custom_call.1} parent=55 // pred_check
          %p349 = pneg %p49
        $region58: #{tpu_custom_call.1} parent=55 // pred_check_branch
          %351 = sbr.rel (%p349) target = $region60
        $region59: #{tpu_custom_call.1} parent=55 // pred_region
          %352 = dma.done %s345, 4096
        $region60: #{tpu_custom_call.1} parent=55 // pred_fallthru
          _
        // Predicated region
        $region61: #{tpu_custom_call.1} parent=55 // pred_check
          %p353 = pneg %p112
        $region62: #{tpu_custom_call.1} parent=55 // pred_check_branch
          %355 = sbr.rel (%p353) target = $region64
        $region63: #{tpu_custom_call.1} parent=55 // pred_region
          %356 = dma.done [#allocation8], 18432
        $region64: #{tpu_custom_call.1} parent=55 // pred_fallthru
          _
        // Predicated region
        $region65: #{tpu_custom_call.1} parent=55 // pred_check
          %p357 = pneg %p175
        $region66: #{tpu_custom_call.1} parent=55 // pred_check_branch
          %359 = sbr.rel (%p357) target = $region68
        $region67: #{tpu_custom_call.1} parent=55 // pred_region
          %360 = dma.done [#allocation8], 18432
        $region68: #{tpu_custom_call.1} parent=55 // pred_fallthru
          _
        // Predicated region
        $region69: #{tpu_custom_call.1} parent=55 // pred_check
          %p361 = pneg %p196
        $region70: #{tpu_custom_call.1} parent=55 // pred_check_branch
          %363 = sbr.rel (%p361) target = $region72
        $region71: #{tpu_custom_call.1} parent=55 // pred_region
          %364 = dma.done [#allocation11], 2048
        $region72: #{tpu_custom_call.1} parent=55 // pred_fallthru
          _
        %s365 = sand.u32 %s36, 1
        %s366 = scalar_lea.sflag [#allocation5], %s365
        %s367 = sand.u32 %s36, 1
        %s368 = smul.addr %s367, 256
        %s369 = scalar_lea.vmem [#allocation4], %s368
        %p370 = pneg %p49
        %p371 = pneg %p46
        %p372 = pneg %p70
        %p373 = pneg %p67
        %p374 = pneg %p91
        %p375 = pneg %p88
        %p376 = pneg %p112
        %p377 = pneg %p109
        %p378 = pneg %p133
        %p379 = pneg %p130
        %p380 = pneg %p154
        %p381 = pneg %p151
        %p382 = pneg %p175
        %p383 = pneg %p172
        %p384 = pneg %p196
        %p385 = pneg %p193
        %p386 = pneg %p217
        %p387 = pneg %p214
        %p388 = pneg %p243
        %p389 = pneg %p240
        %s390 = sand.u32 %s230, 1
        %s391 = scalar_lea.sflag [#allocation6], %s390
        %s392 = sand.u32 %s230, 1
        %s393 = smul.addr %s392, 256
        %s394 = scalar_lea.vmem [#allocation12], %s393
        %395 = vst [vmem:[#allocation2] sm:$0xff] 0.0
        %396 = vst [vmem:[#allocation2 + $0x8] sm:$0xff] 0.0
        %397 = vst [vmem:[#allocation2 + $0x120] sm:$0xff] 0.0
        %398 = vst [vmem:[#allocation2 + $0x128] sm:$0xff] 0.0
        %399 = vst [vmem:[#allocation2 + $0x240] sm:$0xff] 0.0
        %400 = vst [vmem:[#allocation2 + $0x248] sm:$0xff] 0.0
        %401 = vst [vmem:[#allocation2 + $0x110] sm:$0xff] 0.0
        %402 = vst [vmem:[#allocation2 + $0x118] sm:$0xff] 0.0
        %403 = vst [vmem:[#allocation2 + $0x230] sm:$0xff] 0.0
        %404 = vst [vmem:[#allocation2 + $0x238] sm:$0xff] 0.0
        %405 = vst [vmem:[#allocation2 + $0x350] sm:$0xff] 0.0
        %406 = vst [vmem:[#allocation2 + $0x358] sm:$0xff] 0.0
        %v407 = vlaneseq
        %v408 = vshrl.u32 %v407, 7
        %v409 = vadd.s32 %v408, 8
        %v410 = vadd.s32 %v408, 16
        %v411 = vadd.s32 %v408, 24
        %v412 = vadd.s32 %v408, 32
        %v413 = vadd.s32 %v408, 40
        %v414 = vadd.s32 %v408, 48
        %v415 = vadd.s32 %v408, 56
        %v416 = vadd.s32 %v408, 64
        %v417 = vadd.s32 %v408, 72
        %v418 = vadd.s32 %v408, 80
        %v419 = vadd.s32 %v408, 88
        %v420 = vadd.s32 %v408, 96
        %v421 = vadd.s32 %v408, 104
        %v422 = vadd.s32 %v408, 112
        %v423 = vadd.s32 %v408, 120
        %v424 = vadd.s32 %v408, 128
        %v425 = vadd.s32 %v408, 136
        %v426 = vadd.s32 %v408, 144
        %v427 = vadd.s32 %v408, 152
        %v428 = vadd.s32 %v408, 160
        %v429 = vadd.s32 %v408, 168
        %v430 = vadd.s32 %v408, 176
        %v431 = vadd.s32 %v408, 184
        %v432 = vadd.s32 %v408, 192
        %v433 = vadd.s32 %v408, 200
        %v434 = vadd.s32 %v408, 208
        %v435 = vadd.s32 %v408, 216
        %v436 = vadd.s32 %v408, 224
        %v437 = vadd.s32 %v408, 232
        %v438 = vadd.s32 %v408, 240
        %v439 = vadd.s32 %v408, 248
        %v440 = vand.u32 %v408, 15
        %v441 = vand.u32 %v409, 15
        %v442 = vand.u32 %v410, 15
        %v443 = vand.u32 %v411, 15
        %v444 = vand.u32 %v412, 15
        %v445 = vand.u32 %v413, 15
        %v446 = vand.u32 %v414, 15
        %v447 = vand.u32 %v415, 15
        %v448 = vand.u32 %v416, 15
        %v449 = vand.u32 %v417, 15
        %v450 = vand.u32 %v418, 15
        %v451 = vand.u32 %v419, 15
        %v452 = vand.u32 %v420, 15
        %v453 = vand.u32 %v421, 15
        %v454 = vand.u32 %v422, 15
        %v455 = vand.u32 %v423, 15
        %v456 = vand.u32 %v424, 15
        %v457 = vand.u32 %v425, 15
        %v458 = vand.u32 %v426, 15
        %v459 = vand.u32 %v427, 15
        %v460 = vand.u32 %v428, 15
        %v461 = vand.u32 %v429, 15
        %v462 = vand.u32 %v430, 15
        %v463 = vand.u32 %v431, 15
        %v464 = vand.u32 %v432, 15
        %v465 = vand.u32 %v433, 15
        %v466 = vand.u32 %v434, 15
        %v467 = vand.u32 %v435, 15
        %v468 = vand.u32 %v436, 15
        %v469 = vand.u32 %v437, 15
        %v470 = vand.u32 %v438, 15
        %v471 = vand.u32 %v439, 15
        %vm472 = vcmp.ne.s32.totalorder %v440, 0
        %vm473 = vcmp.ne.s32.totalorder %v441, 0
        %vm474 = vcmp.ne.s32.totalorder %v442, 0
        %vm475 = vcmp.ne.s32.totalorder %v443, 0
        %vm476 = vcmp.ne.s32.totalorder %v444, 0
        %vm477 = vcmp.ne.s32.totalorder %v445, 0
        %vm478 = vcmp.ne.s32.totalorder %v446, 0
        %vm479 = vcmp.ne.s32.totalorder %v447, 0
        %vm480 = vcmp.ne.s32.totalorder %v448, 0
        %vm481 = vcmp.ne.s32.totalorder %v449, 0
        %vm482 = vcmp.ne.s32.totalorder %v450, 0
        %vm483 = vcmp.ne.s32.totalorder %v451, 0
        %vm484 = vcmp.ne.s32.totalorder %v452, 0
        %vm485 = vcmp.ne.s32.totalorder %v453, 0
        %vm486 = vcmp.ne.s32.totalorder %v454, 0
        %vm487 = vcmp.ne.s32.totalorder %v455, 0
        %vm488 = vcmp.ne.s32.totalorder %v456, 0
        %vm489 = vcmp.ne.s32.totalorder %v457, 0
        %vm490 = vcmp.ne.s32.totalorder %v458, 0
        %vm491 = vcmp.ne.s32.totalorder %v459, 0
        %vm492 = vcmp.ne.s32.totalorder %v460, 0
        %vm493 = vcmp.ne.s32.totalorder %v461, 0
        %vm494 = vcmp.ne.s32.totalorder %v462, 0
        %vm495 = vcmp.ne.s32.totalorder %v463, 0
        %vm496 = vcmp.ne.s32.totalorder %v464, 0
        %vm497 = vcmp.ne.s32.totalorder %v465, 0
        %vm498 = vcmp.ne.s32.totalorder %v466, 0
        %vm499 = vcmp.ne.s32.totalorder %v467, 0
        %vm500 = vcmp.ne.s32.totalorder %v468, 0
        %vm501 = vcmp.ne.s32.totalorder %v469, 0
        %vm502 = vcmp.ne.s32.totalorder %v470, 0
        %vm503 = vcmp.ne.s32.totalorder %v471, 0
        %vm504 = vcmp.ne.s32.totalorder %v440, 15
        %vm505 = vcmp.ne.s32.totalorder %v441, 15
        %vm506 = vcmp.ne.s32.totalorder %v442, 15
        %vm507 = vcmp.ne.s32.totalorder %v443, 15
        %vm508 = vcmp.ne.s32.totalorder %v444, 15
        %vm509 = vcmp.ne.s32.totalorder %v445, 15
        %vm510 = vcmp.ne.s32.totalorder %v446, 15
        %vm511 = vcmp.ne.s32.totalorder %v447, 15
        %vm512 = vcmp.ne.s32.totalorder %v448, 15
        %vm513 = vcmp.ne.s32.totalorder %v449, 15
        %vm514 = vcmp.ne.s32.totalorder %v450, 15
        %vm515 = vcmp.ne.s32.totalorder %v451, 15
        %vm516 = vcmp.ne.s32.totalorder %v452, 15
        %vm517 = vcmp.ne.s32.totalorder %v453, 15
        %vm518 = vcmp.ne.s32.totalorder %v454, 15
        %vm519 = vcmp.ne.s32.totalorder %v455, 15
        %vm520 = vcmp.ne.s32.totalorder %v456, 15
        %vm521 = vcmp.ne.s32.totalorder %v457, 15
        %vm522 = vcmp.ne.s32.totalorder %v458, 15
        %vm523 = vcmp.ne.s32.totalorder %v459, 15
        %vm524 = vcmp.ne.s32.totalorder %v460, 15
        %vm525 = vcmp.ne.s32.totalorder %v461, 15
        %vm526 = vcmp.ne.s32.totalorder %v462, 15
        %vm527 = vcmp.ne.s32.totalorder %v463, 15
        %vm528 = vcmp.ne.s32.totalorder %v464, 15
        %vm529 = vcmp.ne.s32.totalorder %v465, 15
        %vm530 = vcmp.ne.s32.totalorder %v466, 15
        %vm531 = vcmp.ne.s32.totalorder %v467, 15
        %vm532 = vcmp.ne.s32.totalorder %v468, 15
        %vm533 = vcmp.ne.s32.totalorder %v469, 15
        %vm534 = vcmp.ne.s32.totalorder %v470, 15
        %vm535 = vcmp.ne.s32.totalorder %v471, 15
        %v536 = vld [vmem:[%s348] sm:$0xff]
        %v537 = vld [vmem:[%s348 + $0x8] sm:$0xff]
        %v538 = vld [vmem:[%s348 + $0x10] sm:$0xff]
        %v539 = vld [vmem:[%s348 + $0x18] sm:$0xff]
        %v540 = vld [vmem:[%s348 + $0x20] sm:$0xff]
        %v541 = vld [vmem:[%s348 + $0x28] sm:$0xff]
        %v542 = vld [vmem:[%s348 + $0x30] sm:$0xff]
        %v543 = vld [vmem:[%s348 + $0x38] sm:$0xff]
        %v544 = vld [vmem:[%s348 + $0x40] sm:$0xff]
        %v545 = vld [vmem:[%s348 + $0x48] sm:$0xff]
        %v546 = vld [vmem:[%s348 + $0x50] sm:$0xff]
        %v547 = vld [vmem:[%s348 + $0x58] sm:$0xff]
        %v548 = vld [vmem:[%s348 + $0x60] sm:$0xff]
        %v549 = vld [vmem:[%s348 + $0x68] sm:$0xff]
        %v550 = vld [vmem:[%s348 + $0x70] sm:$0xff]
        %v551 = vld [vmem:[%s348 + $0x78] sm:$0xff]
        %v552 = vld [vmem:[%s348 + $0x80] sm:$0xff]
        %v553 = vld [vmem:[%s348 + $0x88] sm:$0xff]
        %v554 = vld [vmem:[%s348 + $0x90] sm:$0xff]
        %v555 = vld [vmem:[%s348 + $0x98] sm:$0xff]
        %v556 = vld [vmem:[%s348 + $0xa0] sm:$0xff]
        %v557 = vld [vmem:[%s348 + $0xa8] sm:$0xff]
        %v558 = vld [vmem:[%s348 + $0xb0] sm:$0xff]
        %v559 = vld [vmem:[%s348 + $0xb8] sm:$0xff]
        %v560 = vld [vmem:[%s348 + $0xc0] sm:$0xff]
        %v561 = vld [vmem:[%s348 + $0xc8] sm:$0xff]
        %v562 = vld [vmem:[%s348 + $0xd0] sm:$0xff]
        %v563 = vld [vmem:[%s348 + $0xd8] sm:$0xff]
        %v564 = vld [vmem:[%s348 + $0xe0] sm:$0xff]
        %v565 = vld [vmem:[%s348 + $0xe8] sm:$0xff]
        %v566 = vld [vmem:[%s348 + $0xf0] sm:$0xff]
        %v567 = vld [vmem:[%s348 + $0xf8] sm:$0xff]
        %v568 = vld [vmem:[#allocation10] sm:$0xff]
        %v569 = vld [vmem:[#allocation10 + $0x8] sm:$0xff]
        %v570 = vld [vmem:[#allocation10 + $0x10] sm:$0xff]
        %v571 = vld [vmem:[#allocation10 + $0x18] sm:$0xff]
        %v572 = vld [vmem:[#allocation10 + $0x20] sm:$0xff]
        %v573 = vld [vmem:[#allocation10 + $0x28] sm:$0xff]
        %v574 = vld [vmem:[#allocation10 + $0x30] sm:$0xff]
        %v575 = vld [vmem:[#allocation10 + $0x38] sm:$0xff]
        %v576 = vld [vmem:[#allocation10 + $0x40] sm:$0xff]
        %v577 = vld [vmem:[#allocation10 + $0x48] sm:$0xff]
        %v578 = vld [vmem:[#allocation10 + $0x50] sm:$0xff]
        %v579 = vld [vmem:[#allocation10 + $0x58] sm:$0xff]
        %v580 = vld [vmem:[#allocation10 + $0x60] sm:$0xff]
        %v581 = vld [vmem:[#allocation10 + $0x68] sm:$0xff]
        %v582 = vld [vmem:[#allocation10 + $0x70] sm:$0xff]
        %v583 = vld [vmem:[#allocation10 + $0x78] sm:$0xff]
        %v584 = vld [vmem:[%s8] sm:$0x1]
        %v586 = vlaneseq
        %v587 = vshrl.u32 %v586, 7
        %v588 = vsub.s32 0, %v587
        %v589 = vrot.slane %v584, %v588
        %591 = vmatprep.subr.mxu0 0.0
        %592 = vmatpush1.msra.mxu0 %v568
        %593 = vmatprep.subr.mxu0 0.0
        %594 = vmatpush1.msra.mxu0 %v569
        %595 = vmatprep.subr.mxu0 0.0
        %596 = vmatpush1.msra.mxu0 %v570
        %597 = vmatprep.subr.mxu0 0.0
        %598 = vmatpush1.msra.mxu0 %v571
        %599 = vmatprep.subr.mxu0 0.0
        %600 = vmatpush1.msra.mxu0 %v572
        %601 = vmatprep.subr.mxu0 0.0
        %602 = vmatpush1.msra.mxu0 %v573
        %603 = vmatprep.subr.mxu0 0.0
        %604 = vmatpush1.msra.mxu0 %v574
        %605 = vmatprep.subr.mxu0 0.0
        %606 = vmatpush1.msra.mxu0 %v575
        %607 = vmatprep.subr.mxu0 0.0
        %608 = vmatpush1.msra.mxu0 %v576
        %609 = vmatprep.subr.mxu0 0.0
        %610 = vmatpush1.msra.mxu0 %v577
        %611 = vmatprep.subr.mxu0 0.0
        %612 = vmatpush1.msra.mxu0 %v578
        %613 = vmatprep.subr.mxu0 0.0
        %614 = vmatpush1.msra.mxu0 %v579
        %615 = vmatprep.subr.mxu0 0.0
        %616 = vmatpush1.msra.mxu0 %v580
        %617 = vmatprep.subr.mxu0 0.0
        %618 = vmatpush1.msra.mxu0 %v581
        %619 = vmatprep.subr.mxu0 0.0
        %620 = vmatpush1.msra.mxu0 %v582
        %621 = vmatprep.subr.mxu0 0.0
        %622 = vmatpush1.msra.mxu0 %v583
        %623 = vmatprep.subr.mxu0 0.0
        %624 = vmatpush1.msra.mxu0 0.0
        %625 = vmatprep.subr.mxu0 0.0
        %626 = vmatpush1.msra.mxu0 0.0
        %627 = vmatprep.subr.mxu0 0.0
        %628 = vmatpush1.msra.mxu0 0.0
        %629 = vmatprep.subr.mxu0 0.0
        %630 = vmatpush1.msra.mxu0 0.0
        %631 = vmatprep.subr.mxu0 0.0
        %632 = vmatpush1.msra.mxu0 0.0
        %633 = vmatprep.subr.mxu0 0.0
        %634 = vmatpush1.msra.mxu0 0.0
        %635 = vmatprep.subr.mxu0 0.0
        %636 = vmatpush1.msra.mxu0 0.0
        %637 = vmatprep.subr.mxu0 0.0
        %638 = vmatpush1.msra.mxu0 0.0
        %639 = vmatprep.subr.mxu0 0.0
        %640 = vmatpush1.msra.mxu0 0.0
        %641 = vmatprep.subr.mxu0 0.0
        %642 = vmatpush1.msra.mxu0 0.0
        %643 = vmatprep.subr.mxu0 0.0
        %644 = vmatpush1.msra.mxu0 0.0
        %645 = vmatprep.subr.mxu0 0.0
        %646 = vmatpush1.msra.mxu0 0.0
        %647 = vmatprep.subr.mxu0 0.0
        %648 = vmatpush1.msra.mxu0 0.0
        %649 = vmatprep.subr.mxu0 0.0
        %650 = vmatpush1.msra.mxu0 0.0
        %651 = vmatprep.subr.mxu0 0.0
        %652 = vmatpush1.msra.mxu0 0.0
        %653 = vmatprep.subr.mxu0 0.0
        %654 = vmatpush1.msra.mxu0 0.0
        %655 = vmatprep.mubr.f32.mxu0 0.0
        %656 = vmatmul.mubr.f32.gmra.mrb[0].mxu0 %v536
        %v657 = vpop.f32.mrb[0].mxu0
        %v658 = vadd.f32 %v589, %v657
        %v659 = vpop.f32.mrb[0].mxu0
        %660 = vmatprep.mubr.f32.mxu0 0.0
        %661 = vmatmul.mubr.f32.gmra.mrb[0].mxu0 %v537
        %v662 = vpop.f32.mrb[0].mxu0
        %v663 = vadd.f32 %v589, %v662
        %v664 = vpop.f32.mrb[0].mxu0
        %665 = vmatprep.mubr.f32.mxu0 0.0
        %666 = vmatmul.mubr.f32.gmra.mrb[0].mxu0 %v538
        %v667 = vpop.f32.mrb[0].mxu0
        %v668 = vadd.f32 %v589, %v667
        %v669 = vpop.f32.mrb[0].mxu0
        %670 = vmatprep.mubr.f32.mxu0 0.0
        %671 = vmatmul.mubr.f32.gmra.mrb[0].mxu0 %v539
        %v672 = vpop.f32.mrb[0].mxu0
        %v673 = vadd.f32 %v589, %v672
        %v674 = vpop.f32.mrb[0].mxu0
        %675 = vmatprep.mubr.f32.mxu0 0.0
        %676 = vmatmul.mubr.f32.gmra.mrb[0].mxu0 %v540
        %v677 = vpop.f32.mrb[0].mxu0
        %v678 = vadd.f32 %v589, %v677
        %v679 = vpop.f32.mrb[0].mxu0
        %680 = vmatprep.mubr.f32.mxu0 0.0
        %681 = vmatmul.mubr.f32.gmra.mrb[0].mxu0 %v541
        %v682 = vpop.f32.mrb[0].mxu0
        %v683 = vadd.f32 %v589, %v682
        %v684 = vpop.f32.mrb[0].mxu0
        %685 = vmatprep.mubr.f32.mxu0 0.0
        %686 = vmatmul.mubr.f32.gmra.mrb[0].mxu0 %v542
        %v687 = vpop.f32.mrb[0].mxu0
        %v688 = vadd.f32 %v589, %v687
        %v689 = vpop.f32.mrb[0].mxu0
        %690 = vmatprep.mubr.f32.mxu0 0.0
        %691 = vmatmul.mubr.f32.gmra.mrb[0].mxu0 %v543
        %v692 = vpop.f32.mrb[0].mxu0
        %v693 = vadd.f32 %v589, %v692
        %v694 = vpop.f32.mrb[0].mxu0
        %695 = vmatprep.mubr.f32.mxu0 0.0
        %696 = vmatmul.mubr.f32.gmra.mrb[0].mxu0 %v544
        %v697 = vpop.f32.mrb[0].mxu0
        %v698 = vadd.f32 %v589, %v697
        %v699 = vpop.f32.mrb[0].mxu0
        %700 = vmatprep.mubr.f32.mxu0 0.0
        %701 = vmatmul.mubr.f32.gmra.mrb[0].mxu0 %v545
        %v702 = vpop.f32.mrb[0].mxu0
        %v703 = vadd.f32 %v589, %v702
        %v704 = vpop.f32.mrb[0].mxu0
        %705 = vmatprep.mubr.f32.mxu0 0.0
        %706 = vmatmul.mubr.f32.gmra.mrb[0].mxu0 %v546
        %v707 = vpop.f32.mrb[0].mxu0
        %v708 = vadd.f32 %v589, %v707
        %v709 = vpop.f32.mrb[0].mxu0
        %710 = vmatprep.mubr.f32.mxu0 0.0
        %711 = vmatmul.mubr.f32.gmra.mrb[0].mxu0 %v547
        %v712 = vpop.f32.mrb[0].mxu0
        %v713 = vadd.f32 %v589, %v712
        %v714 = vpop.f32.mrb[0].mxu0
        %715 = vmatprep.mubr.f32.mxu0 0.0
        %716 = vmatmul.mubr.f32.gmra.mrb[0].mxu0 %v548
        %v717 = vpop.f32.mrb[0].mxu0
        %v718 = vadd.f32 %v589, %v717
        %v719 = vpop.f32.mrb[0].mxu0
        %720 = vmatprep.mubr.f32.mxu0 0.0
        %721 = vmatmul.mubr.f32.gmra.mrb[0].mxu0 %v549
        %v722 = vpop.f32.mrb[0].mxu0
        %v723 = vadd.f32 %v589, %v722
        %v724 = vpop.f32.mrb[0].mxu0
        %725 = vmatprep.mubr.f32.mxu0 0.0
        %726 = vmatmul.mubr.f32.gmra.mrb[0].mxu0 %v550
        %v727 = vpop.f32.mrb[0].mxu0
        %v728 = vadd.f32 %v589, %v727
        %v729 = vpop.f32.mrb[0].mxu0
        %730 = vmatprep.mubr.f32.mxu0 0.0
        %731 = vmatmul.mubr.f32.gmra.mrb[0].mxu0 %v551
        %v732 = vpop.f32.mrb[0].mxu0
        %v733 = vadd.f32 %v589, %v732
        %v734 = vpop.f32.mrb[0].mxu0
        %735 = vmatprep.mubr.f32.mxu0 0.0
        %736 = vmatmul.mubr.f32.gmra.mrb[0].mxu0 %v552
        %v737 = vpop.f32.mrb[0].mxu0
        %v738 = vadd.f32 %v589, %v737
        %v739 = vpop.f32.mrb[0].mxu0
        %740 = vmatprep.mubr.f32.mxu0 0.0
        %741 = vmatmul.mubr.f32.gmra.mrb[0].mxu0 %v553
        %v742 = vpop.f32.mrb[0].mxu0
        %v743 = vadd.f32 %v589, %v742
        %v744 = vpop.f32.mrb[0].mxu0
        %745 = vmatprep.mubr.f32.mxu0 0.0
        %746 = vmatmul.mubr.f32.gmra.mrb[0].mxu0 %v554
        %v747 = vpop.f32.mrb[0].mxu0
        %v748 = vadd.f32 %v589, %v747
        %v749 = vpop.f32.mrb[0].mxu0
        %750 = vmatprep.mubr.f32.mxu0 0.0
        %751 = vmatmul.mubr.f32.gmra.mrb[0].mxu0 %v555
        %v752 = vpop.f32.mrb[0].mxu0
        %v753 = vadd.f32 %v589, %v752
        %v754 = vpop.f32.mrb[0].mxu0
        %755 = vmatprep.mubr.f32.mxu0 0.0
        %756 = vmatmul.mubr.f32.gmra.mrb[0].mxu0 %v556
        %v757 = vpop.f32.mrb[0].mxu0
        %v758 = vadd.f32 %v589, %v757
        %v759 = vpop.f32.mrb[0].mxu0
        %760 = vmatprep.mubr.f32.mxu0 0.0
        %761 = vmatmul.mubr.f32.gmra.mrb[0].mxu0 %v557
        %v762 = vpop.f32.mrb[0].mxu0
        %v763 = vadd.f32 %v589, %v762
        %v764 = vpop.f32.mrb[0].mxu0
        %765 = vmatprep.mubr.f32.mxu0 0.0
        %766 = vmatmul.mubr.f32.gmra.mrb[0].mxu0 %v558
        %v767 = vpop.f32.mrb[0].mxu0
        %v768 = vadd.f32 %v589, %v767
        %v769 = vpop.f32.mrb[0].mxu0
        %770 = vmatprep.mubr.f32.mxu0 0.0
        %771 = vmatmul.mubr.f32.gmra.mrb[0].mxu0 %v559
        %v772 = vpop.f32.mrb[0].mxu0
        %v773 = vadd.f32 %v589, %v772
        %v774 = vpop.f32.mrb[0].mxu0
        %775 = vmatprep.mubr.f32.mxu0 0.0
        %776 = vmatmul.mubr.f32.gmra.mrb[0].mxu0 %v560
        %v777 = vpop.f32.mrb[0].mxu0
        %v778 = vadd.f32 %v589, %v777
        %v779 = vpop.f32.mrb[0].mxu0
        %780 = vmatprep.mubr.f32.mxu0 0.0
        %781 = vmatmul.mubr.f32.gmra.mrb[0].mxu0 %v561
        %v782 = vpop.f32.mrb[0].mxu0
        %v783 = vadd.f32 %v589, %v782
        %v784 = vpop.f32.mrb[0].mxu0
        %785 = vmatprep.mubr.f32.mxu0 0.0
        %786 = vmatmul.mubr.f32.gmra.mrb[0].mxu0 %v562
        %v787 = vpop.f32.mrb[0].mxu0
        %v788 = vadd.f32 %v589, %v787
        %v789 = vpop.f32.mrb[0].mxu0
        %790 = vmatprep.mubr.f32.mxu0 0.0
        %791 = vmatmul.mubr.f32.gmra.mrb[0].mxu0 %v563
        %v792 = vpop.f32.mrb[0].mxu0
        %v793 = vadd.f32 %v589, %v792
        %v794 = vpop.f32.mrb[0].mxu0
        %795 = vmatprep.mubr.f32.mxu0 0.0
        %796 = vmatmul.mubr.f32.gmra.mrb[0].mxu0 %v564
        %v797 = vpop.f32.mrb[0].mxu0
        %v798 = vadd.f32 %v589, %v797
        %v799 = vpop.f32.mrb[0].mxu0
        %800 = vmatprep.mubr.f32.mxu0 0.0
        %801 = vmatmul.mubr.f32.gmra.mrb[0].mxu0 %v565
        %v802 = vpop.f32.mrb[0].mxu0
        %v803 = vadd.f32 %v589, %v802
        %v804 = vpop.f32.mrb[0].mxu0
        %805 = vmatprep.mubr.f32.mxu0 0.0
        %806 = vmatmul.mubr.f32.gmra.mrb[0].mxu0 %v566
        %v807 = vpop.f32.mrb[0].mxu0
        %v808 = vadd.f32 %v589, %v807
        %v809 = vpop.f32.mrb[0].mxu0
        %810 = vmatprep.mubr.f32.mxu0 0.0
        %811 = vmatmul.mubr.f32.gmra.mrb[0].mxu0 %v567
        %v812 = vpop.f32.mrb[0].mxu0
        %v813 = vadd.f32 %v589, %v812
        %v814 = vpop.f32.mrb[0].mxu0
        %815 = vdwg.mxu0
        %816 = vst [vmem:[#allocation3] sm:$0xff] %v658
        %817 = vst [vmem:[#allocation3 + $0x8] sm:$0xff] %v663
        %818 = vst [vmem:[#allocation3 + $0x10] sm:$0xff] %v668
        %819 = vst [vmem:[#allocation3 + $0x18] sm:$0xff] %v673
        %820 = vst [vmem:[#allocation3 + $0x20] sm:$0xff] %v678
        %821 = vst [vmem:[#allocation3 + $0x28] sm:$0xff] %v683
        %822 = vst [vmem:[#allocation3 + $0x30] sm:$0xff] %v688
        %823 = vst [vmem:[#allocation3 + $0x38] sm:$0xff] %v693
        %824 = vst [vmem:[#allocation3 + $0x40] sm:$0xff] %v698
        %825 = vst [vmem:[#allocation3 + $0x48] sm:$0xff] %v703
        %826 = vst [vmem:[#allocation3 + $0x50] sm:$0xff] %v708
        %827 = vst [vmem:[#allocation3 + $0x58] sm:$0xff] %v713
        %828 = vst [vmem:[#allocation3 + $0x60] sm:$0xff] %v718
        %829 = vst [vmem:[#allocation3 + $0x68] sm:$0xff] %v723
        %830 = vst [vmem:[#allocation3 + $0x70] sm:$0xff] %v728
        %831 = vst [vmem:[#allocation3 + $0x78] sm:$0xff] %v733
        %832 = vst [vmem:[#allocation3 + $0x80] sm:$0xff] %v738
        %833 = vst [vmem:[#allocation3 + $0x88] sm:$0xff] %v743
        %834 = vst [vmem:[#allocation3 + $0x90] sm:$0xff] %v748
        %835 = vst [vmem:[#allocation3 + $0x98] sm:$0xff] %v753
        %836 = vst [vmem:[#allocation3 + $0xa0] sm:$0xff] %v758
        %837 = vst [vmem:[#allocation3 + $0xa8] sm:$0xff] %v763
        %838 = vst [vmem:[#allocation3 + $0xb0] sm:$0xff] %v768
        %839 = vst [vmem:[#allocation3 + $0xb8] sm:$0xff] %v773
        %840 = vst [vmem:[#allocation3 + $0xc0] sm:$0xff] %v778
        %841 = vst [vmem:[#allocation3 + $0xc8] sm:$0xff] %v783
        %842 = vst [vmem:[#allocation3 + $0xd0] sm:$0xff] %v788
        %843 = vst [vmem:[#allocation3 + $0xd8] sm:$0xff] %v793
        %844 = vst [vmem:[#allocation3 + $0xe0] sm:$0xff] %v798
        %845 = vst [vmem:[#allocation3 + $0xe8] sm:$0xff] %v803
        %846 = vst [vmem:[#allocation3 + $0xf0] sm:$0xff] %v808
        %847 = vst [vmem:[#allocation3 + $0xf8] sm:$0xff] %v813
        %v848 = vld [vmem:[%s1] sm:$0x1]
        %v850 = vlaneseq
        %v851 = vshrl.u32 %v850, 7
        %v852 = vsub.s32 0, %v851
        %v853 = vrot.slane %v848, %v852
        %v855 = vmul.f32 %v536, %v853
        %v856 = vmul.f32 %v537, %v853
        %v857 = vmul.f32 %v538, %v853
        %v858 = vmul.f32 %v539, %v853
        %v859 = vmul.f32 %v540, %v853
        %v860 = vmul.f32 %v541, %v853
        %v861 = vmul.f32 %v542, %v853
        %v862 = vmul.f32 %v543, %v853
        %v863 = vmul.f32 %v544, %v853
        %v864 = vmul.f32 %v545, %v853
        %v865 = vmul.f32 %v546, %v853
        %v866 = vmul.f32 %v547, %v853
        %v867 = vmul.f32 %v548, %v853
        %v868 = vmul.f32 %v549, %v853
        %v869 = vmul.f32 %v550, %v853
        %v870 = vmul.f32 %v551, %v853
        %v871 = vmul.f32 %v552, %v853
        %v872 = vmul.f32 %v553, %v853
        %v873 = vmul.f32 %v554, %v853
        %v874 = vmul.f32 %v555, %v853
        %v875 = vmul.f32 %v556, %v853
        %v876 = vmul.f32 %v557, %v853
        %v877 = vmul.f32 %v558, %v853
        %v878 = vmul.f32 %v559, %v853
        %v879 = vmul.f32 %v560, %v853
        %v880 = vmul.f32 %v561, %v853
        %v881 = vmul.f32 %v562, %v853
        %v882 = vmul.f32 %v563, %v853
        %v883 = vmul.f32 %v564, %v853
        %v884 = vmul.f32 %v565, %v853
        %v885 = vmul.f32 %v566, %v853
        %v886 = vmul.f32 %v567, %v853
        %v887 = vld [vmem:[%s2] sm:$0x1]
        %v889 = vlaneseq
        %v890 = vshrl.u32 %v889, 7
        %v891 = vsub.s32 0, %v890
        %v892 = vrot.slane %v887, %v891
        %v894 = vadd.f32 %v855, %v892
        %v895 = vadd.f32 %v856, %v892
        %v896 = vadd.f32 %v857, %v892
        %v897 = vadd.f32 %v858, %v892
        %v898 = vadd.f32 %v859, %v892
        %v899 = vadd.f32 %v860, %v892
        %v900 = vadd.f32 %v861, %v892
        %v901 = vadd.f32 %v862, %v892
        %v902 = vadd.f32 %v863, %v892
        %v903 = vadd.f32 %v864, %v892
        %v904 = vadd.f32 %v865, %v892
        %v905 = vadd.f32 %v866, %v892
        %v906 = vadd.f32 %v867, %v892
        %v907 = vadd.f32 %v868, %v892
        %v908 = vadd.f32 %v869, %v892
        %v909 = vadd.f32 %v870, %v892
        %v910 = vadd.f32 %v871, %v892
        %v911 = vadd.f32 %v872, %v892
        %v912 = vadd.f32 %v873, %v892
        %v913 = vadd.f32 %v874, %v892
        %v914 = vadd.f32 %v875, %v892
        %v915 = vadd.f32 %v876, %v892
        %v916 = vadd.f32 %v877, %v892
        %v917 = vadd.f32 %v878, %v892
        %v918 = vadd.f32 %v879, %v892
        %v919 = vadd.f32 %v880, %v892
        %v920 = vadd.f32 %v881, %v892
        %v921 = vadd.f32 %v882, %v892
        %v922 = vadd.f32 %v883, %v892
        %v923 = vadd.f32 %v884, %v892
        %v924 = vadd.f32 %v885, %v892
        %v925 = vadd.f32 %v886, %v892
        %v926 = vmax.f32 %v894, 0.0
        %v927 = vmax.f32 %v895, 0.0
        %v928 = vmax.f32 %v896, 0.0
        %v929 = vmax.f32 %v897, 0.0
        %v930 = vmax.f32 %v898, 0.0
        %v931 = vmax.f32 %v899, 0.0
        %v932 = vmax.f32 %v900, 0.0
        %v933 = vmax.f32 %v901, 0.0
        %v934 = vmax.f32 %v902, 0.0
        %v935 = vmax.f32 %v903, 0.0
        %v936 = vmax.f32 %v904, 0.0
        %v937 = vmax.f32 %v905, 0.0
        %v938 = vmax.f32 %v906, 0.0
        %v939 = vmax.f32 %v907, 0.0
        %v940 = vmax.f32 %v908, 0.0
        %v941 = vmax.f32 %v909, 0.0
        %v942 = vmax.f32 %v910, 0.0
        %v943 = vmax.f32 %v911, 0.0
        %v944 = vmax.f32 %v912, 0.0
        %v945 = vmax.f32 %v913, 0.0
        %v946 = vmax.f32 %v914, 0.0
        %v947 = vmax.f32 %v915, 0.0
        %v948 = vmax.f32 %v916, 0.0
        %v949 = vmax.f32 %v917, 0.0
        %v950 = vmax.f32 %v918, 0.0
        %v951 = vmax.f32 %v919, 0.0
        %v952 = vmax.f32 %v920, 0.0
        %v953 = vmax.f32 %v921, 0.0
        %v954 = vmax.f32 %v922, 0.0
        %v955 = vmax.f32 %v923, 0.0
        %v956 = vmax.f32 %v924, 0.0
        %v957 = vmax.f32 %v925, 0.0
        %v958 = vrot.slane %v926, 7
        %v959 = vrot.slane %v927, 7
        %v960 = vrot.slane %v928, 7
        %v961 = vrot.slane %v929, 7
        %v962 = vrot.slane %v930, 7
        %v963 = vrot.slane %v931, 7
        %v964 = vrot.slane %v932, 7
        %v965 = vrot.slane %v933, 7
        %v966 = vrot.slane %v934, 7
        %v967 = vrot.slane %v935, 7
        %v968 = vrot.slane %v936, 7
        %v969 = vrot.slane %v937, 7
        %v970 = vrot.slane %v938, 7
        %v971 = vrot.slane %v939, 7
        %v972 = vrot.slane %v940, 7
        %v973 = vrot.slane %v941, 7
        %v974 = vrot.slane %v942, 7
        %v975 = vrot.slane %v943, 7
        %v976 = vrot.slane %v944, 7
        %v977 = vrot.slane %v945, 7
        %v978 = vrot.slane %v946, 7
        %v979 = vrot.slane %v947, 7
        %v980 = vrot.slane %v948, 7
        %v981 = vrot.slane %v949, 7
        %v982 = vrot.slane %v950, 7
        %v983 = vrot.slane %v951, 7
        %v984 = vrot.slane %v952, 7
        %v985 = vrot.slane %v953, 7
        %v986 = vrot.slane %v954, 7
        %v987 = vrot.slane %v955, 7
        %v988 = vrot.slane %v956, 7
        %v989 = vrot.slane %v957, 7
        %vm990 = vcmp.lt.s32.totalorder %v408, 1
        %v991 = vsel %vm990, %v988, %v989
        %v992 = vsel %vm990, %v987, %v988
        %v993 = vsel %vm990, %v986, %v987
        %v994 = vsel %vm990, %v985, %v986
        %v995 = vsel %vm990, %v984, %v985
        %v996 = vsel %vm990, %v983, %v984
        %v997 = vsel %vm990, %v982, %v983
        %v998 = vsel %vm990, %v981, %v982
        %v999 = vsel %vm990, %v980, %v981
        %v1000 = vsel %vm990, %v979, %v980
        %v1001 = vsel %vm990, %v978, %v979
        %v1002 = vsel %vm990, %v977, %v978
        %v1003 = vsel %vm990, %v976, %v977
        %v1004 = vsel %vm990, %v975, %v976
        %v1005 = vsel %vm990, %v974, %v975
        %v1006 = vsel %vm990, %v973, %v974
        %v1007 = vsel %vm990, %v972, %v973
        %v1008 = vsel %vm990, %v971, %v972
        %v1009 = vsel %vm990, %v970, %v971
        %v1010 = vsel %vm990, %v969, %v970
        %v1011 = vsel %vm990, %v968, %v969
        %v1012 = vsel %vm990, %v967, %v968
        %v1013 = vsel %vm990, %v966, %v967
        %v1014 = vsel %vm990, %v965, %v966
        %v1015 = vsel %vm990, %v964, %v965
        %v1016 = vsel %vm990, %v963, %v964
        %v1017 = vsel %vm990, %v962, %v963
        %v1018 = vsel %vm990, %v961, %v962
        %v1019 = vsel %vm990, %v960, %v961
        %v1020 = vsel %vm990, %v959, %v960
        %v1021 = vsel %vm990, %v958, %v959
        %v1022 = vsel %vm990, %v989, %v958
        %v1023 = vsel %vm472, 1, 0
        %v1024 = vsel %vm473, 1, 0
        %v1025 = vsel %vm474, 1, 0
        %v1026 = vsel %vm475, 1, 0
        %v1027 = vsel %vm476, 1, 0
        %v1028 = vsel %vm477, 1, 0
        %v1029 = vsel %vm478, 1, 0
        %v1030 = vsel %vm479, 1, 0
        %v1031 = vsel %vm480, 1, 0
        %v1032 = vsel %vm481, 1, 0
        %v1033 = vsel %vm482, 1, 0
        %v1034 = vsel %vm483, 1, 0
        %v1035 = vsel %vm484, 1, 0
        %v1036 = vsel %vm485, 1, 0
        %v1037 = vsel %vm486, 1, 0
        %v1038 = vsel %vm487, 1, 0
        %v1039 = vsel %vm488, 1, 0
        %v1040 = vsel %vm489, 1, 0
        %v1041 = vsel %vm490, 1, 0
        %v1042 = vsel %vm491, 1, 0
        %v1043 = vsel %vm492, 1, 0
        %v1044 = vsel %vm493, 1, 0
        %v1045 = vsel %vm494, 1, 0
        %v1046 = vsel %vm495, 1, 0
        %v1047 = vsel %vm496, 1, 0
        %v1048 = vsel %vm497, 1, 0
        %v1049 = vsel %vm498, 1, 0
        %v1050 = vsel %vm499, 1, 0
        %v1051 = vsel %vm500, 1, 0
        %v1052 = vsel %vm501, 1, 0
        %v1053 = vsel %vm502, 1, 0
        %v1054 = vsel %vm503, 1, 0
        %vm1055 = vcmp.eq.s32.totalorder %v1023, 1
        %vm1056 = vcmp.eq.s32.totalorder %v1024, 1
        %vm1057 = vcmp.eq.s32.totalorder %v1025, 1
        %vm1058 = vcmp.eq.s32.totalorder %v1026, 1
        %vm1059 = vcmp.eq.s32.totalorder %v1027, 1
        %vm1060 = vcmp.eq.s32.totalorder %v1028, 1
        %vm1061 = vcmp.eq.s32.totalorder %v1029, 1
        %vm1062 = vcmp.eq.s32.totalorder %v1030, 1
        %vm1063 = vcmp.eq.s32.totalorder %v1031, 1
        %vm1064 = vcmp.eq.s32.totalorder %v1032, 1
        %vm1065 = vcmp.eq.s32.totalorder %v1033, 1
        %vm1066 = vcmp.eq.s32.totalorder %v1034, 1
        %vm1067 = vcmp.eq.s32.totalorder %v1035, 1
        %vm1068 = vcmp.eq.s32.totalorder %v1036, 1
        %vm1069 = vcmp.eq.s32.totalorder %v1037, 1
        %vm1070 = vcmp.eq.s32.totalorder %v1038, 1
        %vm1071 = vcmp.eq.s32.totalorder %v1039, 1
        %vm1072 = vcmp.eq.s32.totalorder %v1040, 1
        %vm1073 = vcmp.eq.s32.totalorder %v1041, 1
        %vm1074 = vcmp.eq.s32.totalorder %v1042, 1
        %vm1075 = vcmp.eq.s32.totalorder %v1043, 1
        %vm1076 = vcmp.eq.s32.totalorder %v1044, 1
        %vm1077 = vcmp.eq.s32.totalorder %v1045, 1
        %vm1078 = vcmp.eq.s32.totalorder %v1046, 1
        %vm1079 = vcmp.eq.s32.totalorder %v1047, 1
        %vm1080 = vcmp.eq.s32.totalorder %v1048, 1
        %vm1081 = vcmp.eq.s32.totalorder %v1049, 1
        %vm1082 = vcmp.eq.s32.totalorder %v1050, 1
        %vm1083 = vcmp.eq.s32.totalorder %v1051, 1
        %vm1084 = vcmp.eq.s32.totalorder %v1052, 1
        %vm1085 = vcmp.eq.s32.totalorder %v1053, 1
        %vm1086 = vcmp.eq.s32.totalorder %v1054, 1
        %v1087 = vsel %vm1055, %v1022, 0.0
        %v1088 = vsel %vm1056, %v1021, 0.0
        %v1089 = vsel %vm1057, %v1020, 0.0
        %v1090 = vsel %vm1058, %v1019, 0.0
        %v1091 = vsel %vm1059, %v1018, 0.0
        %v1092 = vsel %vm1060, %v1017, 0.0
        %v1093 = vsel %vm1061, %v1016, 0.0
        %v1094 = vsel %vm1062, %v1015, 0.0
        %v1095 = vsel %vm1063, %v1014, 0.0
        %v1096 = vsel %vm1064, %v1013, 0.0
        %v1097 = vsel %vm1065, %v1012, 0.0
        %v1098 = vsel %vm1066, %v1011, 0.0
        %v1099 = vsel %vm1067, %v1010, 0.0
        %v1100 = vsel %vm1068, %v1009, 0.0
        %v1101 = vsel %vm1069, %v1008, 0.0
        %v1102 = vsel %vm1070, %v1007, 0.0
        %v1103 = vsel %vm1071, %v1006, 0.0
        %v1104 = vsel %vm1072, %v1005, 0.0
        %v1105 = vsel %vm1073, %v1004, 0.0
        %v1106 = vsel %vm1074, %v1003, 0.0
        %v1107 = vsel %vm1075, %v1002, 0.0
        %v1108 = vsel %vm1076, %v1001, 0.0
        %v1109 = vsel %vm1077, %v1000, 0.0
        %v1110 = vsel %vm1078, %v999, 0.0
        %v1111 = vsel %vm1079, %v998, 0.0
        %v1112 = vsel %vm1080, %v997, 0.0
        %v1113 = vsel %vm1081, %v996, 0.0
        %v1114 = vsel %vm1082, %v995, 0.0
        %v1115 = vsel %vm1083, %v994, 0.0
        %v1116 = vsel %vm1084, %v993, 0.0
        %v1117 = vsel %vm1085, %v992, 0.0
        %v1118 = vsel %vm1086, %v991, 0.0
        %v1119 = vrot.slane %v926, 1
        %v1120 = vrot.slane %v927, 1
        %v1121 = vrot.slane %v928, 1
        %v1122 = vrot.slane %v929, 1
        %v1123 = vrot.slane %v930, 1
        %v1124 = vrot.slane %v931, 1
        %v1125 = vrot.slane %v932, 1
        %v1126 = vrot.slane %v933, 1
        %v1127 = vrot.slane %v934, 1
        %v1128 = vrot.slane %v935, 1
        %v1129 = vrot.slane %v936, 1
        %v1130 = vrot.slane %v937, 1
        %v1131 = vrot.slane %v938, 1
        %v1132 = vrot.slane %v939, 1
        %v1133 = vrot.slane %v940, 1
        %v1134 = vrot.slane %v941, 1
        %v1135 = vrot.slane %v942, 1
        %v1136 = vrot.slane %v943, 1
        %v1137 = vrot.slane %v944, 1
        %v1138 = vrot.slane %v945, 1
        %v1139 = vrot.slane %v946, 1
        %v1140 = vrot.slane %v947, 1
        %v1141 = vrot.slane %v948, 1
        %v1142 = vrot.slane %v949, 1
        %v1143 = vrot.slane %v950, 1
        %v1144 = vrot.slane %v951, 1
        %v1145 = vrot.slane %v952, 1
        %v1146 = vrot.slane %v953, 1
        %v1147 = vrot.slane %v954, 1
        %v1148 = vrot.slane %v955, 1
        %v1149 = vrot.slane %v956, 1
        %v1150 = vrot.slane %v957, 1
        %vm1151 = vcmp.lt.s32.totalorder %v408, 7
        %v1152 = vsel %vm1151, %v1149, %v1150
        %v1153 = vsel %vm1151, %v1148, %v1149
        %v1154 = vsel %vm1151, %v1147, %v1148
        %v1155 = vsel %vm1151, %v1146, %v1147
        %v1156 = vsel %vm1151, %v1145, %v1146
        %v1157 = vsel %vm1151, %v1144, %v1145
        %v1158 = vsel %vm1151, %v1143, %v1144
        %v1159 = vsel %vm1151, %v1142, %v1143
        %v1160 = vsel %vm1151, %v1141, %v1142
        %v1161 = vsel %vm1151, %v1140, %v1141
        %v1162 = vsel %vm1151, %v1139, %v1140
        %v1163 = vsel %vm1151, %v1138, %v1139
        %v1164 = vsel %vm1151, %v1137, %v1138
        %v1165 = vsel %vm1151, %v1136, %v1137
        %v1166 = vsel %vm1151, %v1135, %v1136
        %v1167 = vsel %vm1151, %v1134, %v1135
        %v1168 = vsel %vm1151, %v1133, %v1134
        %v1169 = vsel %vm1151, %v1132, %v1133
        %v1170 = vsel %vm1151, %v1131, %v1132
        %v1171 = vsel %vm1151, %v1130, %v1131
        %v1172 = vsel %vm1151, %v1129, %v1130
        %v1173 = vsel %vm1151, %v1128, %v1129
        %v1174 = vsel %vm1151, %v1127, %v1128
        %v1175 = vsel %vm1151, %v1126, %v1127
        %v1176 = vsel %vm1151, %v1125, %v1126
        %v1177 = vsel %vm1151, %v1124, %v1125
        %v1178 = vsel %vm1151, %v1123, %v1124
        %v1179 = vsel %vm1151, %v1122, %v1123
        %v1180 = vsel %vm1151, %v1121, %v1122
        %v1181 = vsel %vm1151, %v1120, %v1121
        %v1182 = vsel %vm1151, %v1119, %v1120
        %v1183 = vsel %vm1151, %v1150, %v1119
        %v1184 = vsel %vm504, 1, 0
        %v1185 = vsel %vm505, 1, 0
        %v1186 = vsel %vm506, 1, 0
        %v1187 = vsel %vm507, 1, 0
        %v1188 = vsel %vm508, 1, 0
        %v1189 = vsel %vm509, 1, 0
        %v1190 = vsel %vm510, 1, 0
        %v1191 = vsel %vm511, 1, 0
        %v1192 = vsel %vm512, 1, 0
        %v1193 = vsel %vm513, 1, 0
        %v1194 = vsel %vm514, 1, 0
        %v1195 = vsel %vm515, 1, 0
        %v1196 = vsel %vm516, 1, 0
        %v1197 = vsel %vm517, 1, 0
        %v1198 = vsel %vm518, 1, 0
        %v1199 = vsel %vm519, 1, 0
        %v1200 = vsel %vm520, 1, 0
        %v1201 = vsel %vm521, 1, 0
        %v1202 = vsel %vm522, 1, 0
        %v1203 = vsel %vm523, 1, 0
        %v1204 = vsel %vm524, 1, 0
        %v1205 = vsel %vm525, 1, 0
        %v1206 = vsel %vm526, 1, 0
        %v1207 = vsel %vm527, 1, 0
        %v1208 = vsel %vm528, 1, 0
        %v1209 = vsel %vm529, 1, 0
        %v1210 = vsel %vm530, 1, 0
        %v1211 = vsel %vm531, 1, 0
        %v1212 = vsel %vm532, 1, 0
        %v1213 = vsel %vm533, 1, 0
        %v1214 = vsel %vm534, 1, 0
        %v1215 = vsel %vm535, 1, 0
        %vm1216 = vcmp.eq.s32.totalorder %v1184, 1
        %vm1217 = vcmp.eq.s32.totalorder %v1185, 1
        %vm1218 = vcmp.eq.s32.totalorder %v1186, 1
        %vm1219 = vcmp.eq.s32.totalorder %v1187, 1
        %vm1220 = vcmp.eq.s32.totalorder %v1188, 1
        %vm1221 = vcmp.eq.s32.totalorder %v1189, 1
        %vm1222 = vcmp.eq.s32.totalorder %v1190, 1
        %vm1223 = vcmp.eq.s32.totalorder %v1191, 1
        %vm1224 = vcmp.eq.s32.totalorder %v1192, 1
        %vm1225 = vcmp.eq.s32.totalorder %v1193, 1
        %vm1226 = vcmp.eq.s32.totalorder %v1194, 1
        %vm1227 = vcmp.eq.s32.totalorder %v1195, 1
        %vm1228 = vcmp.eq.s32.totalorder %v1196, 1
        %vm1229 = vcmp.eq.s32.totalorder %v1197, 1
        %vm1230 = vcmp.eq.s32.totalorder %v1198, 1
        %vm1231 = vcmp.eq.s32.totalorder %v1199, 1
        %vm1232 = vcmp.eq.s32.totalorder %v1200, 1
        %vm1233 = vcmp.eq.s32.totalorder %v1201, 1
        %vm1234 = vcmp.eq.s32.totalorder %v1202, 1
        %vm1235 = vcmp.eq.s32.totalorder %v1203, 1
        %vm1236 = vcmp.eq.s32.totalorder %v1204, 1
        %vm1237 = vcmp.eq.s32.totalorder %v1205, 1
        %vm1238 = vcmp.eq.s32.totalorder %v1206, 1
        %vm1239 = vcmp.eq.s32.totalorder %v1207, 1
        %vm1240 = vcmp.eq.s32.totalorder %v1208, 1
        %vm1241 = vcmp.eq.s32.totalorder %v1209, 1
        %vm1242 = vcmp.eq.s32.totalorder %v1210, 1
        %vm1243 = vcmp.eq.s32.totalorder %v1211, 1
        %vm1244 = vcmp.eq.s32.totalorder %v1212, 1
        %vm1245 = vcmp.eq.s32.totalorder %v1213, 1
        %vm1246 = vcmp.eq.s32.totalorder %v1214, 1
        %vm1247 = vcmp.eq.s32.totalorder %v1215, 1
        %v1248 = vsel %vm1216, %v1182, 0.0
        %v1249 = vsel %vm1217, %v1181, 0.0
        %v1250 = vsel %vm1218, %v1180, 0.0
        %v1251 = vsel %vm1219, %v1179, 0.0
        %v1252 = vsel %vm1220, %v1178, 0.0
        %v1253 = vsel %vm1221, %v1177, 0.0
        %v1254 = vsel %vm1222, %v1176, 0.0
        %v1255 = vsel %vm1223, %v1175, 0.0
        %v1256 = vsel %vm1224, %v1174, 0.0
        %v1257 = vsel %vm1225, %v1173, 0.0
        %v1258 = vsel %vm1226, %v1172, 0.0
        %v1259 = vsel %vm1227, %v1171, 0.0
        %v1260 = vsel %vm1228, %v1170, 0.0
        %v1261 = vsel %vm1229, %v1169, 0.0
        %v1262 = vsel %vm1230, %v1168, 0.0
        %v1263 = vsel %vm1231, %v1167, 0.0
        %v1264 = vsel %vm1232, %v1166, 0.0
        %v1265 = vsel %vm1233, %v1165, 0.0
        %v1266 = vsel %vm1234, %v1164, 0.0
        %v1267 = vsel %vm1235, %v1163, 0.0
        %v1268 = vsel %vm1236, %v1162, 0.0
        %v1269 = vsel %vm1237, %v1161, 0.0
        %v1270 = vsel %vm1238, %v1160, 0.0
        %v1271 = vsel %vm1239, %v1159, 0.0
        %v1272 = vsel %vm1240, %v1158, 0.0
        %v1273 = vsel %vm1241, %v1157, 0.0
        %v1274 = vsel %vm1242, %v1156, 0.0
        %v1275 = vsel %vm1243, %v1155, 0.0
        %v1276 = vsel %vm1244, %v1154, 0.0
        %v1277 = vsel %vm1245, %v1153, 0.0
        %v1278 = vsel %vm1246, %v1152, 0.0
        %v1279 = vsel %vm1247, %v1183, 0.0
        %1280 = vst [vmem:[#allocation2 + $0x10] sm:$0xff] %v1087
        %1281 = vst [vmem:[#allocation2 + $0x18] sm:$0xff] %v1088
        %1282 = vst [vmem:[#allocation2 + $0x20] sm:$0xff] %v1089
        %1283 = vst [vmem:[#allocation2 + $0x28] sm:$0xff] %v1090
        %1284 = vst [vmem:[#allocation2 + $0x30] sm:$0xff] %v1091
        %1285 = vst [vmem:[#allocation2 + $0x38] sm:$0xff] %v1092
        %1286 = vst [vmem:[#allocation2 + $0x40] sm:$0xff] %v1093
        %1287 = vst [vmem:[#allocation2 + $0x48] sm:$0xff] %v1094
        %1288 = vst [vmem:[#allocation2 + $0x50] sm:$0xff] %v1095
        %1289 = vst [vmem:[#allocation2 + $0x58] sm:$0xff] %v1096
        %1290 = vst [vmem:[#allocation2 + $0x60] sm:$0xff] %v1097
        %1291 = vst [vmem:[#allocation2 + $0x68] sm:$0xff] %v1098
        %1292 = vst [vmem:[#allocation2 + $0x70] sm:$0xff] %v1099
        %1293 = vst [vmem:[#allocation2 + $0x78] sm:$0xff] %v1100
        %1294 = vst [vmem:[#allocation2 + $0x80] sm:$0xff] %v1101
        %1295 = vst [vmem:[#allocation2 + $0x88] sm:$0xff] %v1102
        %1296 = vst [vmem:[#allocation2 + $0x90] sm:$0xff] %v1103
        %1297 = vst [vmem:[#allocation2 + $0x98] sm:$0xff] %v1104
        %1298 = vst [vmem:[#allocation2 + $0xa0] sm:$0xff] %v1105
        %1299 = vst [vmem:[#allocation2 + $0xa8] sm:$0xff] %v1106
        %1300 = vst [vmem:[#allocation2 + $0xb0] sm:$0xff] %v1107
        %1301 = vst [vmem:[#allocation2 + $0xb8] sm:$0xff] %v1108
        %1302 = vst [vmem:[#allocation2 + $0xc0] sm:$0xff] %v1109
        %1303 = vst [vmem:[#allocation2 + $0xc8] sm:$0xff] %v1110
        %1304 = vst [vmem:[#allocation2 + $0xd0] sm:$0xff] %v1111
        %1305 = vst [vmem:[#allocation2 + $0xd8] sm:$0xff] %v1112
        %1306 = vst [vmem:[#allocation2 + $0xe0] sm:$0xff] %v1113
        %1307 = vst [vmem:[#allocation2 + $0xe8] sm:$0xff] %v1114
        %1308 = vst [vmem:[#allocation2 + $0xf0] sm:$0xff] %v1115
        %1309 = vst [vmem:[#allocation2 + $0xf8] sm:$0xff] %v1116
        %1310 = vst [vmem:[#allocation2 + $0x100] sm:$0xff] %v1117
        %1311 = vst [vmem:[#allocation2 + $0x108] sm:$0xff] %v1118
        %s1312 = scalar_lea.vmem [#allocation2], 288
        %1313 = vst [vmem:[%s1312 + $0x10] sm:$0xff] %v926
        %1314 = vst [vmem:[%s1312 + $0x18] sm:$0xff] %v927
        %1315 = vst [vmem:[%s1312 + $0x20] sm:$0xff] %v928
        %1316 = vst [vmem:[%s1312 + $0x28] sm:$0xff] %v929
        %1317 = vst [vmem:[%s1312 + $0x30] sm:$0xff] %v930
        %1318 = vst [vmem:[%s1312 + $0x38] sm:$0xff] %v931
        %1319 = vst [vmem:[%s1312 + $0x40] sm:$0xff] %v932
        %1320 = vst [vmem:[%s1312 + $0x48] sm:$0xff] %v933
        %1321 = vst [vmem:[%s1312 + $0x50] sm:$0xff] %v934
        %1322 = vst [vmem:[%s1312 + $0x58] sm:$0xff] %v935
        %1323 = vst [vmem:[%s1312 + $0x60] sm:$0xff] %v936
        %1324 = vst [vmem:[%s1312 + $0x68] sm:$0xff] %v937
        %1325 = vst [vmem:[%s1312 + $0x70] sm:$0xff] %v938
        %1326 = vst [vmem:[%s1312 + $0x78] sm:$0xff] %v939
        %1327 = vst [vmem:[%s1312 + $0x80] sm:$0xff] %v940
        %1328 = vst [vmem:[%s1312 + $0x88] sm:$0xff] %v941
        %1329 = vst [vmem:[%s1312 + $0x90] sm:$0xff] %v942
        %1330 = vst [vmem:[%s1312 + $0x98] sm:$0xff] %v943
        %1331 = vst [vmem:[%s1312 + $0xa0] sm:$0xff] %v944
        %1332 = vst [vmem:[%s1312 + $0xa8] sm:$0xff] %v945
        %1333 = vst [vmem:[%s1312 + $0xb0] sm:$0xff] %v946
        %1334 = vst [vmem:[%s1312 + $0xb8] sm:$0xff] %v947
        %1335 = vst [vmem:[%s1312 + $0xc0] sm:$0xff] %v948
        %1336 = vst [vmem:[%s1312 + $0xc8] sm:$0xff] %v949
        %1337 = vst [vmem:[%s1312 + $0xd0] sm:$0xff] %v950
        %1338 = vst [vmem:[%s1312 + $0xd8] sm:$0xff] %v951
        %1339 = vst [vmem:[%s1312 + $0xe0] sm:$0xff] %v952
        %1340 = vst [vmem:[%s1312 + $0xe8] sm:$0xff] %v953
        %1341 = vst [vmem:[%s1312 + $0xf0] sm:$0xff] %v954
        %1342 = vst [vmem:[%s1312 + $0xf8] sm:$0xff] %v955
        %1343 = vst [vmem:[%s1312 + $0x100] sm:$0xff] %v956
        %1344 = vst [vmem:[%s1312 + $0x108] sm:$0xff] %v957
        %s1345 = scalar_lea.vmem [#allocation2], 576
        %1346 = vst [vmem:[%s1345 + $0x10] sm:$0xff] %v1248
        %1347 = vst [vmem:[%s1345 + $0x18] sm:$0xff] %v1249
        %1348 = vst [vmem:[%s1345 + $0x20] sm:$0xff] %v1250
        %1349 = vst [vmem:[%s1345 + $0x28] sm:$0xff] %v1251
        %1350 = vst [vmem:[%s1345 + $0x30] sm:$0xff] %v1252
        %1351 = vst [vmem:[%s1345 + $0x38] sm:$0xff] %v1253
        %1352 = vst [vmem:[%s1345 + $0x40] sm:$0xff] %v1254
        %1353 = vst [vmem:[%s1345 + $0x48] sm:$0xff] %v1255
        %1354 = vst [vmem:[%s1345 + $0x50] sm:$0xff] %v1256
        %1355 = vst [vmem:[%s1345 + $0x58] sm:$0xff] %v1257
        %1356 = vst [vmem:[%s1345 + $0x60] sm:$0xff] %v1258
        %1357 = vst [vmem:[%s1345 + $0x68] sm:$0xff] %v1259
        %1358 = vst [vmem:[%s1345 + $0x70] sm:$0xff] %v1260
        %1359 = vst [vmem:[%s1345 + $0x78] sm:$0xff] %v1261
        %1360 = vst [vmem:[%s1345 + $0x80] sm:$0xff] %v1262
        %1361 = vst [vmem:[%s1345 + $0x88] sm:$0xff] %v1263
        %1362 = vst [vmem:[%s1345 + $0x90] sm:$0xff] %v1264
        %1363 = vst [vmem:[%s1345 + $0x98] sm:$0xff] %v1265
        %1364 = vst [vmem:[%s1345 + $0xa0] sm:$0xff] %v1266
        %1365 = vst [vmem:[%s1345 + $0xa8] sm:$0xff] %v1267
        %1366 = vst [vmem:[%s1345 + $0xb0] sm:$0xff] %v1268
        %1367 = vst [vmem:[%s1345 + $0xb8] sm:$0xff] %v1269
        %1368 = vst [vmem:[%s1345 + $0xc0] sm:$0xff] %v1270
        %1369 = vst [vmem:[%s1345 + $0xc8] sm:$0xff] %v1271
        %1370 = vst [vmem:[%s1345 + $0xd0] sm:$0xff] %v1272
        %1371 = vst [vmem:[%s1345 + $0xd8] sm:$0xff] %v1273
        %1372 = vst [vmem:[%s1345 + $0xe0] sm:$0xff] %v1274
        %1373 = vst [vmem:[%s1345 + $0xe8] sm:$0xff] %v1275
        %1374 = vst [vmem:[%s1345 + $0xf0] sm:$0xff] %v1276
        %1375 = vst [vmem:[%s1345 + $0xf8] sm:$0xff] %v1277
        %1376 = vst [vmem:[%s1345 + $0x100] sm:$0xff] %v1278
        %1377 = vst [vmem:[%s1345 + $0x108] sm:$0xff] %v1279
        %v1378 = vld [vmem:[#allocation2] sm:$0xff]
        %v1379 = vld [vmem:[#allocation2 + $0x8] sm:$0xff]
        %v1380 = vld [vmem:[#allocation2 + $0x10] sm:$0xff]
        %v1381 = vld [vmem:[#allocation2 + $0x18] sm:$0xff]
        %v1382 = vld [vmem:[#allocation2 + $0x20] sm:$0xff]
        %v1383 = vld [vmem:[#allocation2 + $0x28] sm:$0xff]
        %v1384 = vld [vmem:[#allocation2 + $0x30] sm:$0xff]
        %v1385 = vld [vmem:[#allocation2 + $0x38] sm:$0xff]
        %v1386 = vld [vmem:[#allocation2 + $0x40] sm:$0xff]
        %v1387 = vld [vmem:[#allocation2 + $0x48] sm:$0xff]
        %v1388 = vld [vmem:[#allocation2 + $0x50] sm:$0xff]
        %v1389 = vld [vmem:[#allocation2 + $0x58] sm:$0xff]
        %v1390 = vld [vmem:[#allocation2 + $0x60] sm:$0xff]
        %v1391 = vld [vmem:[#allocation2 + $0x68] sm:$0xff]
        %v1392 = vld [vmem:[#allocation2 + $0x70] sm:$0xff]
        %v1393 = vld [vmem:[#allocation2 + $0x78] sm:$0xff]
        %v1394 = vld [vmem:[#allocation2 + $0x80] sm:$0xff]
        %v1395 = vld [vmem:[#allocation2 + $0x88] sm:$0xff]
        %v1396 = vld [vmem:[#allocation2 + $0x90] sm:$0xff]
        %v1397 = vld [vmem:[#allocation2 + $0x98] sm:$0xff]
        %v1398 = vld [vmem:[#allocation2 + $0xa0] sm:$0xff]
        %v1399 = vld [vmem:[#allocation2 + $0xa8] sm:$0xff]
        %v1400 = vld [vmem:[#allocation2 + $0xb0] sm:$0xff]
        %v1401 = vld [vmem:[#allocation2 + $0xb8] sm:$0xff]
        %v1402 = vld [vmem:[#allocation2 + $0xc0] sm:$0xff]
        %v1403 = vld [vmem:[#allocation2 + $0xc8] sm:$0xff]
        %v1404 = vld [vmem:[#allocation2 + $0xd0] sm:$0xff]
        %v1405 = vld [vmem:[#allocation2 + $0xd8] sm:$0xff]
        %v1406 = vld [vmem:[#allocation2 + $0xe0] sm:$0xff]
        %v1407 = vld [vmem:[#allocation2 + $0xe8] sm:$0xff]
        %v1408 = vld [vmem:[#allocation2 + $0xf0] sm:$0xff]
        %v1409 = vld [vmem:[#allocation2 + $0xf8] sm:$0xff]
        %v1410 = vld [vmem:[#allocation7] sm:$0xff]
        %v1411 = vld [vmem:[#allocation7 + $0x8] sm:$0xff]
        %v1412 = vld [vmem:[#allocation7 + $0x10] sm:$0xff]
        %v1413 = vld [vmem:[#allocation7 + $0x18] sm:$0xff]
        %v1414 = vld [vmem:[#allocation7 + $0x20] sm:$0xff]
        %v1415 = vld [vmem:[#allocation7 + $0x28] sm:$0xff]
        %v1416 = vld [vmem:[#allocation7 + $0x30] sm:$0xff]
        %v1417 = vld [vmem:[#allocation7 + $0x38] sm:$0xff]
        %v1418 = vld [vmem:[#allocation7 + $0x40] sm:$0xff]
        %v1419 = vld [vmem:[#allocation7 + $0x48] sm:$0xff]
        %v1420 = vld [vmem:[#allocation7 + $0x50] sm:$0xff]
        %v1421 = vld [vmem:[#allocation7 + $0x58] sm:$0xff]
        %v1422 = vld [vmem:[#allocation7 + $0x60] sm:$0xff]
        %v1423 = vld [vmem:[#allocation7 + $0x68] sm:$0xff]
        %v1424 = vld [vmem:[#allocation7 + $0x70] sm:$0xff]
        %v1425 = vld [vmem:[#allocation7 + $0x78] sm:$0xff]
        %v1426 = vld [vmem:[%s1312] sm:$0xff]
        %v1427 = vld [vmem:[%s1312 + $0x8] sm:$0xff]
        %v1428 = vld [vmem:[%s1312 + $0x10] sm:$0xff]
        %v1429 = vld [vmem:[%s1312 + $0x18] sm:$0xff]
        %v1430 = vld [vmem:[%s1312 + $0x20] sm:$0xff]
        %v1431 = vld [vmem:[%s1312 + $0x28] sm:$0xff]
        %v1432 = vld [vmem:[%s1312 + $0x30] sm:$0xff]
        %v1433 = vld [vmem:[%s1312 + $0x38] sm:$0xff]
        %v1434 = vld [vmem:[%s1312 + $0x40] sm:$0xff]
        %v1435 = vld [vmem:[%s1312 + $0x48] sm:$0xff]
        %v1436 = vld [vmem:[%s1312 + $0x50] sm:$0xff]
        %v1437 = vld [vmem:[%s1312 + $0x58] sm:$0xff]
        %v1438 = vld [vmem:[%s1312 + $0x60] sm:$0xff]
        %v1439 = vld [vmem:[%s1312 + $0x68] sm:$0xff]
        %v1440 = vld [vmem:[%s1312 + $0x70] sm:$0xff]
        %v1441 = vld [vmem:[%s1312 + $0x78] sm:$0xff]
        %v1442 = vld [vmem:[%s1312 + $0x80] sm:$0xff]
        %v1443 = vld [vmem:[%s1312 + $0x88] sm:$0xff]
        %v1444 = vld [vmem:[%s1312 + $0x90] sm:$0xff]
        %v1445 = vld [vmem:[%s1312 + $0x98] sm:$0xff]
        %v1446 = vld [vmem:[%s1312 + $0xa0] sm:$0xff]
        %v1447 = vld [vmem:[%s1312 + $0xa8] sm:$0xff]
        %v1448 = vld [vmem:[%s1312 + $0xb0] sm:$0xff]
        %v1449 = vld [vmem:[%s1312 + $0xb8] sm:$0xff]
        %v1450 = vld [vmem:[%s1312 + $0xc0] sm:$0xff]
        %v1451 = vld [vmem:[%s1312 + $0xc8] sm:$0xff]
        %v1452 = vld [vmem:[%s1312 + $0xd0] sm:$0xff]
        %v1453 = vld [vmem:[%s1312 + $0xd8] sm:$0xff]
        %v1454 = vld [vmem:[%s1312 + $0xe0] sm:$0xff]
        %v1455 = vld [vmem:[%s1312 + $0xe8] sm:$0xff]
        %v1456 = vld [vmem:[%s1312 + $0xf0] sm:$0xff]
        %v1457 = vld [vmem:[%s1312 + $0xf8] sm:$0xff]
        %s1458 = scalar_lea.vmem [#allocation7], 128
        %v1459 = vld [vmem:[%s1458] sm:$0xff]
        %v1460 = vld [vmem:[%s1458 + $0x8] sm:$0xff]
        %v1461 = vld [vmem:[%s1458 + $0x10] sm:$0xff]
        %v1462 = vld [vmem:[%s1458 + $0x18] sm:$0xff]
        %v1463 = vld [vmem:[%s1458 + $0x20] sm:$0xff]
        %v1464 = vld [vmem:[%s1458 + $0x28] sm:$0xff]
        %v1465 = vld [vmem:[%s1458 + $0x30] sm:$0xff]
        %v1466 = vld [vmem:[%s1458 + $0x38] sm:$0xff]
        %v1467 = vld [vmem:[%s1458 + $0x40] sm:$0xff]
        %v1468 = vld [vmem:[%s1458 + $0x48] sm:$0xff]
        %v1469 = vld [vmem:[%s1458 + $0x50] sm:$0xff]
        %v1470 = vld [vmem:[%s1458 + $0x58] sm:$0xff]
        %v1471 = vld [vmem:[%s1458 + $0x60] sm:$0xff]
        %v1472 = vld [vmem:[%s1458 + $0x68] sm:$0xff]
        %v1473 = vld [vmem:[%s1458 + $0x70] sm:$0xff]
        %v1474 = vld [vmem:[%s1458 + $0x78] sm:$0xff]
        %1475 = vmatprep.subr.mxu0 0.0
        %1476 = vmatpush1.msra.mxu0 %v1459
        %1477 = vmatprep.subr.mxu0 0.0
        %1478 = vmatpush1.msra.mxu0 %v1460
        %1479 = vmatprep.subr.mxu0 0.0
        %1480 = vmatpush1.msra.mxu0 %v1461
        %1481 = vmatprep.subr.mxu0 0.0
        %1482 = vmatpush1.msra.mxu0 %v1462
        %1483 = vmatprep.subr.mxu0 0.0
        %1484 = vmatpush1.msra.mxu0 %v1463
        %1485 = vmatprep.subr.mxu0 0.0
        %1486 = vmatpush1.msra.mxu0 %v1464
        %1487 = vmatprep.subr.mxu0 0.0
        %1488 = vmatpush1.msra.mxu0 %v1465
        %1489 = vmatprep.subr.mxu0 0.0
        %1490 = vmatpush1.msra.mxu0 %v1466
        %1491 = vmatprep.subr.mxu0 0.0
        %1492 = vmatpush1.msra.mxu0 %v1467
        %1493 = vmatprep.subr.mxu0 0.0
        %1494 = vmatpush1.msra.mxu0 %v1468
        %1495 = vmatprep.subr.mxu0 0.0
        %1496 = vmatpush1.msra.mxu0 %v1469
        %1497 = vmatprep.subr.mxu0 0.0
        %1498 = vmatpush1.msra.mxu0 %v1470
        %1499 = vmatprep.subr.mxu0 0.0
        %1500 = vmatpush1.msra.mxu0 %v1471
        %1501 = vmatprep.subr.mxu0 0.0
        %1502 = vmatpush1.msra.mxu0 %v1472
        %1503 = vmatprep.subr.mxu0 0.0
        %1504 = vmatpush1.msra.mxu0 %v1473
        %1505 = vmatprep.subr.mxu0 0.0
        %1506 = vmatpush1.msra.mxu0 %v1474
        %1507 = vmatprep.subr.mxu0 0.0
        %1508 = vmatpush1.msra.mxu0 0.0
        %1509 = vmatprep.subr.mxu0 0.0
        %1510 = vmatpush1.msra.mxu0 0.0
        %1511 = vmatprep.subr.mxu0 0.0
        %1512 = vmatpush1.msra.mxu0 0.0
        %1513 = vmatprep.subr.mxu0 0.0
        %1514 = vmatpush1.msra.mxu0 0.0
        %1515 = vmatprep.subr.mxu0 0.0
        %1516 = vmatpush1.msra.mxu0 0.0
        %1517 = vmatprep.subr.mxu0 0.0
        %1518 = vmatpush1.msra.mxu0 0.0
        %1519 = vmatprep.subr.mxu0 0.0
        %1520 = vmatpush1.msra.mxu0 0.0
        %1521 = vmatprep.subr.mxu0 0.0
        %1522 = vmatpush1.msra.mxu0 0.0
        %1523 = vmatprep.subr.mxu0 0.0
        %1524 = vmatpush1.msra.mxu0 0.0
        %1525 = vmatprep.subr.mxu0 0.0
        %1526 = vmatpush1.msra.mxu0 0.0
        %1527 = vmatprep.subr.mxu0 0.0
        %1528 = vmatpush1.msra.mxu0 0.0
        %1529 = vmatprep.subr.mxu0 0.0
        %1530 = vmatpush1.msra.mxu0 0.0
        %1531 = vmatprep.subr.mxu0 0.0
        %1532 = vmatpush1.msra.mxu0 0.0
        %1533 = vmatprep.subr.mxu0 0.0
        %1534 = vmatpush1.msra.mxu0 0.0
        %1535 = vmatprep.subr.mxu0 0.0
        %1536 = vmatpush1.msra.mxu0 0.0
        %1537 = vmatprep.subr.mxu0 0.0
        %1538 = vmatpush1.msra.mxu0 0.0
        %1539 = vmatprep.mubr.f32.mxu0 0.0
        %1540 = vmatmul.mubr.f32.gmra.mrb[0].mxu0 %v1426
        %v1541 = vpop.f32.mrb[0].mxu0
        %v1542 = vadd.f32 0.0, %v1541
        %v1543 = vpop.f32.mrb[0].mxu0
        %1544 = vmatprep.mubr.f32.mxu0 0.0
        %1545 = vmatmul.mubr.f32.gmra.mrb[0].mxu0 %v1427
        %v1546 = vpop.f32.mrb[0].mxu0
        %v1547 = vadd.f32 0.0, %v1546
        %v1548 = vpop.f32.mrb[0].mxu0
        %1549 = vmatprep.mubr.f32.mxu0 0.0
        %1550 = vmatmul.mubr.f32.gmra.mrb[0].mxu0 %v1428
        %v1551 = vpop.f32.mrb[0].mxu0
        %v1552 = vadd.f32 0.0, %v1551
        %v1553 = vpop.f32.mrb[0].mxu0
        %1554 = vmatprep.mubr.f32.mxu0 0.0
        %1555 = vmatmul.mubr.f32.gmra.mrb[0].mxu0 %v1429
        %v1556 = vpop.f32.mrb[0].mxu0
        %v1557 = vadd.f32 0.0, %v1556
        %v1558 = vpop.f32.mrb[0].mxu0
        %1559 = vmatprep.mubr.f32.mxu0 0.0
        %1560 = vmatmul.mubr.f32.gmra.mrb[0].mxu0 %v1430
        %v1561 = vpop.f32.mrb[0].mxu0
        %v1562 = vadd.f32 0.0, %v1561
        %v1563 = vpop.f32.mrb[0].mxu0
        %1564 = vmatprep.mubr.f32.mxu0 0.0
        %1565 = vmatmul.mubr.f32.gmra.mrb[0].mxu0 %v1431
        %v1566 = vpop.f32.mrb[0].mxu0
        %v1567 = vadd.f32 0.0, %v1566
        %v1568 = vpop.f32.mrb[0].mxu0
        %1569 = vmatprep.mubr.f32.mxu0 0.0
        %1570 = vmatmul.mubr.f32.gmra.mrb[0].mxu0 %v1432
        %v1571 = vpop.f32.mrb[0].mxu0
        %v1572 = vadd.f32 0.0, %v1571
        %v1573 = vpop.f32.mrb[0].mxu0
        %1574 = vmatprep.mubr.f32.mxu0 0.0
        %1575 = vmatmul.mubr.f32.gmra.mrb[0].mxu0 %v1433
        %v1576 = vpop.f32.mrb[0].mxu0
        %v1577 = vadd.f32 0.0, %v1576
        %v1578 = vpop.f32.mrb[0].mxu0
        %1579 = vmatprep.mubr.f32.mxu0 0.0
        %1580 = vmatmul.mubr.f32.gmra.mrb[0].mxu0 %v1434
        %v1581 = vpop.f32.mrb[0].mxu0
        %v1582 = vadd.f32 0.0, %v1581
        %v1583 = vpop.f32.mrb[0].mxu0
        %1584 = vmatprep.mubr.f32.mxu0 0.0
        %1585 = vmatmul.mubr.f32.gmra.mrb[0].mxu0 %v1435
        %v1586 = vpop.f32.mrb[0].mxu0
        %v1587 = vadd.f32 0.0, %v1586
        %v1588 = vpop.f32.mrb[0].mxu0
        %1589 = vmatprep.mubr.f32.mxu0 0.0
        %1590 = vmatmul.mubr.f32.gmra.mrb[0].mxu0 %v1436
        %v1591 = vpop.f32.mrb[0].mxu0
        %v1592 = vadd.f32 0.0, %v1591
        %v1593 = vpop.f32.mrb[0].mxu0
        %1594 = vmatprep.mubr.f32.mxu0 0.0
        %1595 = vmatmul.mubr.f32.gmra.mrb[0].mxu0 %v1437
        %v1596 = vpop.f32.mrb[0].mxu0
        %v1597 = vadd.f32 0.0, %v1596
        %v1598 = vpop.f32.mrb[0].mxu0
        %1599 = vmatprep.mubr.f32.mxu0 0.0
        %1600 = vmatmul.mubr.f32.gmra.mrb[0].mxu0 %v1438
        %v1601 = vpop.f32.mrb[0].mxu0
        %v1602 = vadd.f32 0.0, %v1601
        %v1603 = vpop.f32.mrb[0].mxu0
        %1604 = vmatprep.mubr.f32.mxu0 0.0
        %1605 = vmatmul.mubr.f32.gmra.mrb[0].mxu0 %v1439
        %v1606 = vpop.f32.mrb[0].mxu0
        %v1607 = vadd.f32 0.0, %v1606
        %v1608 = vpop.f32.mrb[0].mxu0
        %1609 = vmatprep.mubr.f32.mxu0 0.0
        %1610 = vmatmul.mubr.f32.gmra.mrb[0].mxu0 %v1440
        %v1611 = vpop.f32.mrb[0].mxu0
        %v1612 = vadd.f32 0.0, %v1611
        %v1613 = vpop.f32.mrb[0].mxu0
        %1614 = vmatprep.mubr.f32.mxu0 0.0
        %1615 = vmatmul.mubr.f32.gmra.mrb[0].mxu0 %v1441
        %v1616 = vpop.f32.mrb[0].mxu0
        %v1617 = vadd.f32 0.0, %v1616
        %v1618 = vpop.f32.mrb[0].mxu0
        %1619 = vmatprep.mubr.f32.mxu0 0.0
        %1620 = vmatmul.mubr.f32.gmra.mrb[0].mxu0 %v1442
        %v1621 = vpop.f32.mrb[0].mxu0
        %v1622 = vadd.f32 0.0, %v1621
        %v1623 = vpop.f32.mrb[0].mxu0
        %1624 = vmatprep.mubr.f32.mxu0 0.0
        %1625 = vmatmul.mubr.f32.gmra.mrb[0].mxu0 %v1443
        %v1626 = vpop.f32.mrb[0].mxu0
        %v1627 = vadd.f32 0.0, %v1626
        %v1628 = vpop.f32.mrb[0].mxu0
        %1629 = vmatprep.mubr.f32.mxu0 0.0
        %1630 = vmatmul.mubr.f32.gmra.mrb[0].mxu0 %v1444
        %v1631 = vpop.f32.mrb[0].mxu0
        %v1632 = vadd.f32 0.0, %v1631
        %v1633 = vpop.f32.mrb[0].mxu0
        %1634 = vmatprep.mubr.f32.mxu0 0.0
        %1635 = vmatmul.mubr.f32.gmra.mrb[0].mxu0 %v1445
        %v1636 = vpop.f32.mrb[0].mxu0
        %v1637 = vadd.f32 0.0, %v1636
        %v1638 = vpop.f32.mrb[0].mxu0
        %1639 = vmatprep.mubr.f32.mxu0 0.0
        %1640 = vmatmul.mubr.f32.gmra.mrb[0].mxu0 %v1446
        %v1641 = vpop.f32.mrb[0].mxu0
        %v1642 = vadd.f32 0.0, %v1641
        %v1643 = vpop.f32.mrb[0].mxu0
        %1644 = vmatprep.mubr.f32.mxu0 0.0
        %1645 = vmatmul.mubr.f32.gmra.mrb[0].mxu0 %v1447
        %v1646 = vpop.f32.mrb[0].mxu0
        %v1647 = vadd.f32 0.0, %v1646
        %v1648 = vpop.f32.mrb[0].mxu0
        %1649 = vmatprep.mubr.f32.mxu0 0.0
        %1650 = vmatmul.mubr.f32.gmra.mrb[0].mxu0 %v1448
        %v1651 = vpop.f32.mrb[0].mxu0
        %v1652 = vadd.f32 0.0, %v1651
        %v1653 = vpop.f32.mrb[0].mxu0
        %1654 = vmatprep.mubr.f32.mxu0 0.0
        %1655 = vmatmul.mubr.f32.gmra.mrb[0].mxu0 %v1449
        %v1656 = vpop.f32.mrb[0].mxu0
        %v1657 = vadd.f32 0.0, %v1656
        %v1658 = vpop.f32.mrb[0].mxu0
        %1659 = vmatprep.mubr.f32.mxu0 0.0
        %1660 = vmatmul.mubr.f32.gmra.mrb[0].mxu0 %v1450
        %v1661 = vpop.f32.mrb[0].mxu0
        %v1662 = vadd.f32 0.0, %v1661
        %v1663 = vpop.f32.mrb[0].mxu0
        %1664 = vmatprep.mubr.f32.mxu0 0.0
        %1665 = vmatmul.mubr.f32.gmra.mrb[0].mxu0 %v1451
        %v1666 = vpop.f32.mrb[0].mxu0
        %v1667 = vadd.f32 0.0, %v1666
        %v1668 = vpop.f32.mrb[0].mxu0
        %1669 = vmatprep.mubr.f32.mxu0 0.0
        %1670 = vmatmul.mubr.f32.gmra.mrb[0].mxu0 %v1452
        %v1671 = vpop.f32.mrb[0].mxu0
        %v1672 = vadd.f32 0.0, %v1671
        %v1673 = vpop.f32.mrb[0].mxu0
        %1674 = vmatprep.mubr.f32.mxu0 0.0
        %1675 = vmatmul.mubr.f32.gmra.mrb[0].mxu0 %v1453
        %v1676 = vpop.f32.mrb[0].mxu0
        %v1677 = vadd.f32 0.0, %v1676
        %v1678 = vpop.f32.mrb[0].mxu0
        %1679 = vmatprep.mubr.f32.mxu0 0.0
        %1680 = vmatmul.mubr.f32.gmra.mrb[0].mxu0 %v1454
        %v1681 = vpop.f32.mrb[0].mxu0
        %v1682 = vadd.f32 0.0, %v1681
        %v1683 = vpop.f32.mrb[0].mxu0
        %1684 = vmatprep.mubr.f32.mxu0 0.0
        %1685 = vmatmul.mubr.f32.gmra.mrb[0].mxu0 %v1455
        %v1686 = vpop.f32.mrb[0].mxu0
        %v1687 = vadd.f32 0.0, %v1686
        %v1688 = vpop.f32.mrb[0].mxu0
        %1689 = vmatprep.mubr.f32.mxu0 0.0
        %1690 = vmatmul.mubr.f32.gmra.mrb[0].mxu0 %v1456
        %v1691 = vpop.f32.mrb[0].mxu0
        %v1692 = vadd.f32 0.0, %v1691
        %v1693 = vpop.f32.mrb[0].mxu0
        %1694 = vmatprep.mubr.f32.mxu0 0.0
        %1695 = vmatmul.mubr.f32.gmra.mrb[0].mxu0 %v1457
        %v1696 = vpop.f32.mrb[0].mxu0
        %v1697 = vadd.f32 0.0, %v1696
        %v1698 = vpop.f32.mrb[0].mxu0
        %1699 = vdwg.mxu0
        %1700 = vmatprep.subr.mxu0 0.0
        %1701 = vmatpush1.msra.mxu0 %v1410
        %1702 = vmatprep.subr.mxu0 0.0
        %1703 = vmatpush1.msra.mxu0 %v1411
        %1704 = vmatprep.subr.mxu0 0.0
        %1705 = vmatpush1.msra.mxu0 %v1412
        %1706 = vmatprep.subr.mxu0 0.0
        %1707 = vmatpush1.msra.mxu0 %v1413
        %1708 = vmatprep.subr.mxu0 0.0
        %1709 = vmatpush1.msra.mxu0 %v1414
        %1710 = vmatprep.subr.mxu0 0.0
        %1711 = vmatpush1.msra.mxu0 %v1415
        %1712 = vmatprep.subr.mxu0 0.0
        %1713 = vmatpush1.msra.mxu0 %v1416
        %1714 = vmatprep.subr.mxu0 0.0
        %1715 = vmatpush1.msra.mxu0 %v1417
        %1716 = vmatprep.subr.mxu0 0.0
        %1717 = vmatpush1.msra.mxu0 %v1418
        %1718 = vmatprep.subr.mxu0 0.0
        %1719 = vmatpush1.msra.mxu0 %v1419
        %1720 = vmatprep.subr.mxu0 0.0
        %1721 = vmatpush1.msra.mxu0 %v1420
        %1722 = vmatprep.subr.mxu0 0.0
        %1723 = vmatpush1.msra.mxu0 %v1421
        %1724 = vmatprep.subr.mxu0 0.0
        %1725 = vmatpush1.msra.mxu0 %v1422
        %1726 = vmatprep.subr.mxu0 0.0
        %1727 = vmatpush1.msra.mxu0 %v1423
        %1728 = vmatprep.subr.mxu0 0.0
        %1729 = vmatpush1.msra.mxu0 %v1424
        %1730 = vmatprep.subr.mxu0 0.0
        %1731 = vmatpush1.msra.mxu0 %v1425
        %1732 = vmatprep.subr.mxu0 0.0
        %1733 = vmatpush1.msra.mxu0 0.0
        %1734 = vmatprep.subr.mxu0 0.0
        %1735 = vmatpush1.msra.mxu0 0.0
        %1736 = vmatprep.subr.mxu0 0.0
        %1737 = vmatpush1.msra.mxu0 0.0
        %1738 = vmatprep.subr.mxu0 0.0
        %1739 = vmatpush1.msra.mxu0 0.0
        %1740 = vmatprep.subr.mxu0 0.0
        %1741 = vmatpush1.msra.mxu0 0.0
        %1742 = vmatprep.subr.mxu0 0.0
        %1743 = vmatpush1.msra.mxu0 0.0
        %1744 = vmatprep.subr.mxu0 0.0
        %1745 = vmatpush1.msra.mxu0 0.0
        %1746 = vmatprep.subr.mxu0 0.0
        %1747 = vmatpush1.msra.mxu0 0.0
        %1748 = vmatprep.subr.mxu0 0.0
        %1749 = vmatpush1.msra.mxu0 0.0
        %1750 = vmatprep.subr.mxu0 0.0
        %1751 = vmatpush1.msra.mxu0 0.0
        %1752 = vmatprep.subr.mxu0 0.0
        %1753 = vmatpush1.msra.mxu0 0.0
        %1754 = vmatprep.subr.mxu0 0.0
        %1755 = vmatpush1.msra.mxu0 0.0
        %1756 = vmatprep.subr.mxu0 0.0
        %1757 = vmatpush1.msra.mxu0 0.0
        %1758 = vmatprep.subr.mxu0 0.0
        %1759 = vmatpush1.msra.mxu0 0.0
        %1760 = vmatprep.subr.mxu0 0.0
        %1761 = vmatpush1.msra.mxu0 0.0
        %1762 = vmatprep.subr.mxu0 0.0
        %1763 = vmatpush1.msra.mxu0 0.0
        %1764 = vmatprep.mubr.f32.mxu0 0.0
        %1765 = vmatmul.mubr.f32.gmra.mrb[0].mxu0 %v1378
        %v1766 = vpop.f32.mrb[0].mxu0
        %v1767 = vadd.f32 %v1542, %v1766
        %v1768 = vpop.f32.mrb[0].mxu0
        %1769 = vmatprep.mubr.f32.mxu0 0.0
        %1770 = vmatmul.mubr.f32.gmra.mrb[0].mxu0 %v1379
        %v1771 = vpop.f32.mrb[0].mxu0
        %v1772 = vadd.f32 %v1547, %v1771
        %v1773 = vpop.f32.mrb[0].mxu0
        %1774 = vmatprep.mubr.f32.mxu0 0.0
        %1775 = vmatmul.mubr.f32.gmra.mrb[0].mxu0 %v1380
        %v1776 = vpop.f32.mrb[0].mxu0
        %v1777 = vadd.f32 %v1552, %v1776
        %v1778 = vpop.f32.mrb[0].mxu0
        %1779 = vmatprep.mubr.f32.mxu0 0.0
        %1780 = vmatmul.mubr.f32.gmra.mrb[0].mxu0 %v1381
        %v1781 = vpop.f32.mrb[0].mxu0
        %v1782 = vadd.f32 %v1557, %v1781
        %v1783 = vpop.f32.mrb[0].mxu0
        %1784 = vmatprep.mubr.f32.mxu0 0.0
        %1785 = vmatmul.mubr.f32.gmra.mrb[0].mxu0 %v1382
        %v1786 = vpop.f32.mrb[0].mxu0
        %v1787 = vadd.f32 %v1562, %v1786
        %v1788 = vpop.f32.mrb[0].mxu0
        %1789 = vmatprep.mubr.f32.mxu0 0.0
        %1790 = vmatmul.mubr.f32.gmra.mrb[0].mxu0 %v1383
        %v1791 = vpop.f32.mrb[0].mxu0
        %v1792 = vadd.f32 %v1567, %v1791
        %v1793 = vpop.f32.mrb[0].mxu0
        %1794 = vmatprep.mubr.f32.mxu0 0.0
        %1795 = vmatmul.mubr.f32.gmra.mrb[0].mxu0 %v1384
        %v1796 = vpop.f32.mrb[0].mxu0
        %v1797 = vadd.f32 %v1572, %v1796
        %v1798 = vpop.f32.mrb[0].mxu0
        %1799 = vmatprep.mubr.f32.mxu0 0.0
        %1800 = vmatmul.mubr.f32.gmra.mrb[0].mxu0 %v1385
        %v1801 = vpop.f32.mrb[0].mxu0
        %v1802 = vadd.f32 %v1577, %v1801
        %v1803 = vpop.f32.mrb[0].mxu0
        %1804 = vmatprep.mubr.f32.mxu0 0.0
        %1805 = vmatmul.mubr.f32.gmra.mrb[0].mxu0 %v1386
        %v1806 = vpop.f32.mrb[0].mxu0
        %v1807 = vadd.f32 %v1582, %v1806
        %v1808 = vpop.f32.mrb[0].mxu0
        %1809 = vmatprep.mubr.f32.mxu0 0.0
        %1810 = vmatmul.mubr.f32.gmra.mrb[0].mxu0 %v1387
        %v1811 = vpop.f32.mrb[0].mxu0
        %v1812 = vadd.f32 %v1587, %v1811
        %v1813 = vpop.f32.mrb[0].mxu0
        %1814 = vmatprep.mubr.f32.mxu0 0.0
        %1815 = vmatmul.mubr.f32.gmra.mrb[0].mxu0 %v1388
        %v1816 = vpop.f32.mrb[0].mxu0
        %v1817 = vadd.f32 %v1592, %v1816
        %v1818 = vpop.f32.mrb[0].mxu0
        %1819 = vmatprep.mubr.f32.mxu0 0.0
        %1820 = vmatmul.mubr.f32.gmra.mrb[0].mxu0 %v1389
        %v1821 = vpop.f32.mrb[0].mxu0
        %v1822 = vadd.f32 %v1597, %v1821
        %v1823 = vpop.f32.mrb[0].mxu0
        %1824 = vmatprep.mubr.f32.mxu0 0.0
        %1825 = vmatmul.mubr.f32.gmra.mrb[0].mxu0 %v1390
        %v1826 = vpop.f32.mrb[0].mxu0
        %v1827 = vadd.f32 %v1602, %v1826
        %v1828 = vpop.f32.mrb[0].mxu0
        %1829 = vmatprep.mubr.f32.mxu0 0.0
        %1830 = vmatmul.mubr.f32.gmra.mrb[0].mxu0 %v1391
        %v1831 = vpop.f32.mrb[0].mxu0
        %v1832 = vadd.f32 %v1607, %v1831
        %v1833 = vpop.f32.mrb[0].mxu0
        %1834 = vmatprep.mubr.f32.mxu0 0.0
        %1835 = vmatmul.mubr.f32.gmra.mrb[0].mxu0 %v1392
        %v1836 = vpop.f32.mrb[0].mxu0
        %v1837 = vadd.f32 %v1612, %v1836
        %v1838 = vpop.f32.mrb[0].mxu0
        %1839 = vmatprep.mubr.f32.mxu0 0.0
        %1840 = vmatmul.mubr.f32.gmra.mrb[0].mxu0 %v1393
        %v1841 = vpop.f32.mrb[0].mxu0
        %v1842 = vadd.f32 %v1617, %v1841
        %v1843 = vpop.f32.mrb[0].mxu0
        %1844 = vmatprep.mubr.f32.mxu0 0.0
        %1845 = vmatmul.mubr.f32.gmra.mrb[0].mxu0 %v1394
        %v1846 = vpop.f32.mrb[0].mxu0
        %v1847 = vadd.f32 %v1622, %v1846
        %v1848 = vpop.f32.mrb[0].mxu0
        %1849 = vmatprep.mubr.f32.mxu0 0.0
        %1850 = vmatmul.mubr.f32.gmra.mrb[0].mxu0 %v1395
        %v1851 = vpop.f32.mrb[0].mxu0
        %v1852 = vadd.f32 %v1627, %v1851
        %v1853 = vpop.f32.mrb[0].mxu0
        %1854 = vmatprep.mubr.f32.mxu0 0.0
        %1855 = vmatmul.mubr.f32.gmra.mrb[0].mxu0 %v1396
        %v1856 = vpop.f32.mrb[0].mxu0
        %v1857 = vadd.f32 %v1632, %v1856
        %v1858 = vpop.f32.mrb[0].mxu0
        %1859 = vmatprep.mubr.f32.mxu0 0.0
        %1860 = vmatmul.mubr.f32.gmra.mrb[0].mxu0 %v1397
        %v1861 = vpop.f32.mrb[0].mxu0
        %v1862 = vadd.f32 %v1637, %v1861
        %v1863 = vpop.f32.mrb[0].mxu0
        %1864 = vmatprep.mubr.f32.mxu0 0.0
        %1865 = vmatmul.mubr.f32.gmra.mrb[0].mxu0 %v1398
        %v1866 = vpop.f32.mrb[0].mxu0
        %v1867 = vadd.f32 %v1642, %v1866
        %v1868 = vpop.f32.mrb[0].mxu0
        %1869 = vmatprep.mubr.f32.mxu0 0.0
        %1870 = vmatmul.mubr.f32.gmra.mrb[0].mxu0 %v1399
        %v1871 = vpop.f32.mrb[0].mxu0
        %v1872 = vadd.f32 %v1647, %v1871
        %v1873 = vpop.f32.mrb[0].mxu0
        %1874 = vmatprep.mubr.f32.mxu0 0.0
        %1875 = vmatmul.mubr.f32.gmra.mrb[0].mxu0 %v1400
        %v1876 = vpop.f32.mrb[0].mxu0
        %v1877 = vadd.f32 %v1652, %v1876
        %v1878 = vpop.f32.mrb[0].mxu0
        %1879 = vmatprep.mubr.f32.mxu0 0.0
        %1880 = vmatmul.mubr.f32.gmra.mrb[0].mxu0 %v1401
        %v1881 = vpop.f32.mrb[0].mxu0
        %v1882 = vadd.f32 %v1657, %v1881
        %v1883 = vpop.f32.mrb[0].mxu0
        %1884 = vmatprep.mubr.f32.mxu0 0.0
        %1885 = vmatmul.mubr.f32.gmra.mrb[0].mxu0 %v1402
        %v1886 = vpop.f32.mrb[0].mxu0
        %v1887 = vadd.f32 %v1662, %v1886
        %v1888 = vpop.f32.mrb[0].mxu0
        %1889 = vmatprep.mubr.f32.mxu0 0.0
        %1890 = vmatmul.mubr.f32.gmra.mrb[0].mxu0 %v1403
        %v1891 = vpop.f32.mrb[0].mxu0
        %v1892 = vadd.f32 %v1667, %v1891
        %v1893 = vpop.f32.mrb[0].mxu0
        %1894 = vmatprep.mubr.f32.mxu0 0.0
        %1895 = vmatmul.mubr.f32.gmra.mrb[0].mxu0 %v1404
        %v1896 = vpop.f32.mrb[0].mxu0
        %v1897 = vadd.f32 %v1672, %v1896
        %v1898 = vpop.f32.mrb[0].mxu0
        %1899 = vmatprep.mubr.f32.mxu0 0.0
        %1900 = vmatmul.mubr.f32.gmra.mrb[0].mxu0 %v1405
        %v1901 = vpop.f32.mrb[0].mxu0
        %v1902 = vadd.f32 %v1677, %v1901
        %v1903 = vpop.f32.mrb[0].mxu0
        %1904 = vmatprep.mubr.f32.mxu0 0.0
        %1905 = vmatmul.mubr.f32.gmra.mrb[0].mxu0 %v1406
        %v1906 = vpop.f32.mrb[0].mxu0
        %v1907 = vadd.f32 %v1682, %v1906
        %v1908 = vpop.f32.mrb[0].mxu0
        %1909 = vmatprep.mubr.f32.mxu0 0.0
        %1910 = vmatmul.mubr.f32.gmra.mrb[0].mxu0 %v1407
        %v1911 = vpop.f32.mrb[0].mxu0
        %v1912 = vadd.f32 %v1687, %v1911
        %v1913 = vpop.f32.mrb[0].mxu0
        %1914 = vmatprep.mubr.f32.mxu0 0.0
        %1915 = vmatmul.mubr.f32.gmra.mrb[0].mxu0 %v1408
        %v1916 = vpop.f32.mrb[0].mxu0
        %v1917 = vadd.f32 %v1692, %v1916
        %v1918 = vpop.f32.mrb[0].mxu0
        %1919 = vmatprep.mubr.f32.mxu0 0.0
        %1920 = vmatmul.mubr.f32.gmra.mrb[0].mxu0 %v1409
        %v1921 = vpop.f32.mrb[0].mxu0
        %v1922 = vadd.f32 %v1697, %v1921
        %v1923 = vpop.f32.mrb[0].mxu0
        %1924 = vdwg.mxu0
        %v1925 = vld [vmem:[%s1345] sm:$0xff]
        %v1926 = vld [vmem:[%s1345 + $0x8] sm:$0xff]
        %v1927 = vld [vmem:[%s1345 + $0x10] sm:$0xff]
        %v1928 = vld [vmem:[%s1345 + $0x18] sm:$0xff]
        %v1929 = vld [vmem:[%s1345 + $0x20] sm:$0xff]
        %v1930 = vld [vmem:[%s1345 + $0x28] sm:$0xff]
        %v1931 = vld [vmem:[%s1345 + $0x30] sm:$0xff]
        %v1932 = vld [vmem:[%s1345 + $0x38] sm:$0xff]
        %v1933 = vld [vmem:[%s1345 + $0x40] sm:$0xff]
        %v1934 = vld [vmem:[%s1345 + $0x48] sm:$0xff]
        %v1935 = vld [vmem:[%s1345 + $0x50] sm:$0xff]
        %v1936 = vld [vmem:[%s1345 + $0x58] sm:$0xff]
        %v1937 = vld [vmem:[%s1345 + $0x60] sm:$0xff]
        %v1938 = vld [vmem:[%s1345 + $0x68] sm:$0xff]
        %v1939 = vld [vmem:[%s1345 + $0x70] sm:$0xff]
        %v1940 = vld [vmem:[%s1345 + $0x78] sm:$0xff]
        %v1941 = vld [vmem:[%s1345 + $0x80] sm:$0xff]
        %v1942 = vld [vmem:[%s1345 + $0x88] sm:$0xff]
        %v1943 = vld [vmem:[%s1345 + $0x90] sm:$0xff]
        %v1944 = vld [vmem:[%s1345 + $0x98] sm:$0xff]
        %v1945 = vld [vmem:[%s1345 + $0xa0] sm:$0xff]
        %v1946 = vld [vmem:[%s1345 + $0xa8] sm:$0xff]
        %v1947 = vld [vmem:[%s1345 + $0xb0] sm:$0xff]
        %v1948 = vld [vmem:[%s1345 + $0xb8] sm:$0xff]
        %v1949 = vld [vmem:[%s1345 + $0xc0] sm:$0xff]
        %v1950 = vld [vmem:[%s1345 + $0xc8] sm:$0xff]
        %v1951 = vld [vmem:[%s1345 + $0xd0] sm:$0xff]
        %v1952 = vld [vmem:[%s1345 + $0xd8] sm:$0xff]
        %v1953 = vld [vmem:[%s1345 + $0xe0] sm:$0xff]
        %v1954 = vld [vmem:[%s1345 + $0xe8] sm:$0xff]
        %v1955 = vld [vmem:[%s1345 + $0xf0] sm:$0xff]
        %v1956 = vld [vmem:[%s1345 + $0xf8] sm:$0xff]
        %s1957 = scalar_lea.vmem [#allocation7], 256
        %v1958 = vld [vmem:[%s1957] sm:$0xff]
        %v1959 = vld [vmem:[%s1957 + $0x8] sm:$0xff]
        %v1960 = vld [vmem:[%s1957 + $0x10] sm:$0xff]
        %v1961 = vld [vmem:[%s1957 + $0x18] sm:$0xff]
        %v1962 = vld [vmem:[%s1957 + $0x20] sm:$0xff]
        %v1963 = vld [vmem:[%s1957 + $0x28] sm:$0xff]
        %v1964 = vld [vmem:[%s1957 + $0x30] sm:$0xff]
        %v1965 = vld [vmem:[%s1957 + $0x38] sm:$0xff]
        %v1966 = vld [vmem:[%s1957 + $0x40] sm:$0xff]
        %v1967 = vld [vmem:[%s1957 + $0x48] sm:$0xff]
        %v1968 = vld [vmem:[%s1957 + $0x50] sm:$0xff]
        %v1969 = vld [vmem:[%s1957 + $0x58] sm:$0xff]
        %v1970 = vld [vmem:[%s1957 + $0x60] sm:$0xff]
        %v1971 = vld [vmem:[%s1957 + $0x68] sm:$0xff]
        %v1972 = vld [vmem:[%s1957 + $0x70] sm:$0xff]
        %v1973 = vld [vmem:[%s1957 + $0x78] sm:$0xff]
        %1974 = vmatprep.subr.mxu0 0.0
        %1975 = vmatpush1.msra.mxu0 %v1958
        %1976 = vmatprep.subr.mxu0 0.0
        %1977 = vmatpush1.msra.mxu0 %v1959
        %1978 = vmatprep.subr.mxu0 0.0
        %1979 = vmatpush1.msra.mxu0 %v1960
        %1980 = vmatprep.subr.mxu0 0.0
        %1981 = vmatpush1.msra.mxu0 %v1961
        %1982 = vmatprep.subr.mxu0 0.0
        %1983 = vmatpush1.msra.mxu0 %v1962
        %1984 = vmatprep.subr.mxu0 0.0
        %1985 = vmatpush1.msra.mxu0 %v1963
        %1986 = vmatprep.subr.mxu0 0.0
        %1987 = vmatpush1.msra.mxu0 %v1964
        %1988 = vmatprep.subr.mxu0 0.0
        %1989 = vmatpush1.msra.mxu0 %v1965
        %1990 = vmatprep.subr.mxu0 0.0
        %1991 = vmatpush1.msra.mxu0 %v1966
        %1992 = vmatprep.subr.mxu0 0.0
        %1993 = vmatpush1.msra.mxu0 %v1967
        %1994 = vmatprep.subr.mxu0 0.0
        %1995 = vmatpush1.msra.mxu0 %v1968
        %1996 = vmatprep.subr.mxu0 0.0
        %1997 = vmatpush1.msra.mxu0 %v1969
        %1998 = vmatprep.subr.mxu0 0.0
        %1999 = vmatpush1.msra.mxu0 %v1970
        %2000 = vmatprep.subr.mxu0 0.0
        %2001 = vmatpush1.msra.mxu0 %v1971
        %2002 = vmatprep.subr.mxu0 0.0
        %2003 = vmatpush1.msra.mxu0 %v1972
        %2004 = vmatprep.subr.mxu0 0.0
        %2005 = vmatpush1.msra.mxu0 %v1973
        %2006 = vmatprep.subr.mxu0 0.0
        %2007 = vmatpush1.msra.mxu0 0.0
        %2008 = vmatprep.subr.mxu0 0.0
        %2009 = vmatpush1.msra.mxu0 0.0
        %2010 = vmatprep.subr.mxu0 0.0
        %2011 = vmatpush1.msra.mxu0 0.0
        %2012 = vmatprep.subr.mxu0 0.0
        %2013 = vmatpush1.msra.mxu0 0.0
        %2014 = vmatprep.subr.mxu0 0.0
        %2015 = vmatpush1.msra.mxu0 0.0
        %2016 = vmatprep.subr.mxu0 0.0
        %2017 = vmatpush1.msra.mxu0 0.0
        %2018 = vmatprep.subr.mxu0 0.0
        %2019 = vmatpush1.msra.mxu0 0.0
        %2020 = vmatprep.subr.mxu0 0.0
        %2021 = vmatpush1.msra.mxu0 0.0
        %2022 = vmatprep.subr.mxu0 0.0
        %2023 = vmatpush1.msra.mxu0 0.0
        %2024 = vmatprep.subr.mxu0 0.0
        %2025 = vmatpush1.msra.mxu0 0.0
        %2026 = vmatprep.subr.mxu0 0.0
        %2027 = vmatpush1.msra.mxu0 0.0
        %2028 = vmatprep.subr.mxu0 0.0
        %2029 = vmatpush1.msra.mxu0 0.0
        %2030 = vmatprep.subr.mxu0 0.0
        %2031 = vmatpush1.msra.mxu0 0.0
        %2032 = vmatprep.subr.mxu0 0.0
        %2033 = vmatpush1.msra.mxu0 0.0
        %2034 = vmatprep.subr.mxu0 0.0
        %2035 = vmatpush1.msra.mxu0 0.0
        %2036 = vmatprep.subr.mxu0 0.0
        %2037 = vmatpush1.msra.mxu0 0.0
        %2038 = vmatprep.mubr.f32.mxu0 0.0
        %2039 = vmatmul.mubr.f32.gmra.mrb[0].mxu0 %v1925
        %v2040 = vpop.f32.mrb[0].mxu0
        %v2041 = vadd.f32 0.0, %v2040
        %v2042 = vpop.f32.mrb[0].mxu0
        %2043 = vmatprep.mubr.f32.mxu0 0.0
        %2044 = vmatmul.mubr.f32.gmra.mrb[0].mxu0 %v1926
        %v2045 = vpop.f32.mrb[0].mxu0
        %v2046 = vadd.f32 0.0, %v2045
        %v2047 = vpop.f32.mrb[0].mxu0
        %2048 = vmatprep.mubr.f32.mxu0 0.0
        %2049 = vmatmul.mubr.f32.gmra.mrb[0].mxu0 %v1927
        %v2050 = vpop.f32.mrb[0].mxu0
        %v2051 = vadd.f32 0.0, %v2050
        %v2052 = vpop.f32.mrb[0].mxu0
        %2053 = vmatprep.mubr.f32.mxu0 0.0
        %2054 = vmatmul.mubr.f32.gmra.mrb[0].mxu0 %v1928
        %v2055 = vpop.f32.mrb[0].mxu0
        %v2056 = vadd.f32 0.0, %v2055
        %v2057 = vpop.f32.mrb[0].mxu0
        %2058 = vmatprep.mubr.f32.mxu0 0.0
        %2059 = vmatmul.mubr.f32.gmra.mrb[0].mxu0 %v1929
        %v2060 = vpop.f32.mrb[0].mxu0
        %v2061 = vadd.f32 0.0, %v2060
        %v2062 = vpop.f32.mrb[0].mxu0
        %2063 = vmatprep.mubr.f32.mxu0 0.0
        %2064 = vmatmul.mubr.f32.gmra.mrb[0].mxu0 %v1930
        %v2065 = vpop.f32.mrb[0].mxu0
        %v2066 = vadd.f32 0.0, %v2065
        %v2067 = vpop.f32.mrb[0].mxu0
        %2068 = vmatprep.mubr.f32.mxu0 0.0
        %2069 = vmatmul.mubr.f32.gmra.mrb[0].mxu0 %v1931
        %v2070 = vpop.f32.mrb[0].mxu0
        %v2071 = vadd.f32 0.0, %v2070
        %v2072 = vpop.f32.mrb[0].mxu0
        %2073 = vmatprep.mubr.f32.mxu0 0.0
        %2074 = vmatmul.mubr.f32.gmra.mrb[0].mxu0 %v1932
        %v2075 = vpop.f32.mrb[0].mxu0
        %v2076 = vadd.f32 0.0, %v2075
        %v2077 = vpop.f32.mrb[0].mxu0
        %2078 = vmatprep.mubr.f32.mxu0 0.0
        %2079 = vmatmul.mubr.f32.gmra.mrb[0].mxu0 %v1933
        %v2080 = vpop.f32.mrb[0].mxu0
        %v2081 = vadd.f32 0.0, %v2080
        %v2082 = vpop.f32.mrb[0].mxu0
        %2083 = vmatprep.mubr.f32.mxu0 0.0
        %2084 = vmatmul.mubr.f32.gmra.mrb[0].mxu0 %v1934
        %v2085 = vpop.f32.mrb[0].mxu0
        %v2086 = vadd.f32 0.0, %v2085
        %v2087 = vpop.f32.mrb[0].mxu0
        %2088 = vmatprep.mubr.f32.mxu0 0.0
        %2089 = vmatmul.mubr.f32.gmra.mrb[0].mxu0 %v1935
        %v2090 = vpop.f32.mrb[0].mxu0
        %v2091 = vadd.f32 0.0, %v2090
        %v2092 = vpop.f32.mrb[0].mxu0
        %2093 = vmatprep.mubr.f32.mxu0 0.0
        %2094 = vmatmul.mubr.f32.gmra.mrb[0].mxu0 %v1936
        %v2095 = vpop.f32.mrb[0].mxu0
        %v2096 = vadd.f32 0.0, %v2095
        %v2097 = vpop.f32.mrb[0].mxu0
        %2098 = vmatprep.mubr.f32.mxu0 0.0
        %2099 = vmatmul.mubr.f32.gmra.mrb[0].mxu0 %v1937
        %v2100 = vpop.f32.mrb[0].mxu0
        %v2101 = vadd.f32 0.0, %v2100
        %v2102 = vpop.f32.mrb[0].mxu0
        %2103 = vmatprep.mubr.f32.mxu0 0.0
        %2104 = vmatmul.mubr.f32.gmra.mrb[0].mxu0 %v1938
        %v2105 = vpop.f32.mrb[0].mxu0
        %v2106 = vadd.f32 0.0, %v2105
        %v2107 = vpop.f32.mrb[0].mxu0
        %2108 = vmatprep.mubr.f32.mxu0 0.0
        %2109 = vmatmul.mubr.f32.gmra.mrb[0].mxu0 %v1939
        %v2110 = vpop.f32.mrb[0].mxu0
        %v2111 = vadd.f32 0.0, %v2110
        %v2112 = vpop.f32.mrb[0].mxu0
        %2113 = vmatprep.mubr.f32.mxu0 0.0
        %2114 = vmatmul.mubr.f32.gmra.mrb[0].mxu0 %v1940
        %v2115 = vpop.f32.mrb[0].mxu0
        %v2116 = vadd.f32 0.0, %v2115
        %v2117 = vpop.f32.mrb[0].mxu0
        %2118 = vmatprep.mubr.f32.mxu0 0.0
        %2119 = vmatmul.mubr.f32.gmra.mrb[0].mxu0 %v1941
        %v2120 = vpop.f32.mrb[0].mxu0
        %v2121 = vadd.f32 0.0, %v2120
        %v2122 = vpop.f32.mrb[0].mxu0
        %2123 = vmatprep.mubr.f32.mxu0 0.0
        %2124 = vmatmul.mubr.f32.gmra.mrb[0].mxu0 %v1942
        %v2125 = vpop.f32.mrb[0].mxu0
        %v2126 = vadd.f32 0.0, %v2125
        %v2127 = vpop.f32.mrb[0].mxu0
        %2128 = vmatprep.mubr.f32.mxu0 0.0
        %2129 = vmatmul.mubr.f32.gmra.mrb[0].mxu0 %v1943
        %v2130 = vpop.f32.mrb[0].mxu0
        %v2131 = vadd.f32 0.0, %v2130
        %v2132 = vpop.f32.mrb[0].mxu0
        %2133 = vmatprep.mubr.f32.mxu0 0.0
        %2134 = vmatmul.mubr.f32.gmra.mrb[0].mxu0 %v1944
        %v2135 = vpop.f32.mrb[0].mxu0
        %v2136 = vadd.f32 0.0, %v2135
        %v2137 = vpop.f32.mrb[0].mxu0
        %2138 = vmatprep.mubr.f32.mxu0 0.0
        %2139 = vmatmul.mubr.f32.gmra.mrb[0].mxu0 %v1945
        %v2140 = vpop.f32.mrb[0].mxu0
        %v2141 = vadd.f32 0.0, %v2140
        %v2142 = vpop.f32.mrb[0].mxu0
        %2143 = vmatprep.mubr.f32.mxu0 0.0
        %2144 = vmatmul.mubr.f32.gmra.mrb[0].mxu0 %v1946
        %v2145 = vpop.f32.mrb[0].mxu0
        %v2146 = vadd.f32 0.0, %v2145
        %v2147 = vpop.f32.mrb[0].mxu0
        %2148 = vmatprep.mubr.f32.mxu0 0.0
        %2149 = vmatmul.mubr.f32.gmra.mrb[0].mxu0 %v1947
        %v2150 = vpop.f32.mrb[0].mxu0
        %v2151 = vadd.f32 0.0, %v2150
        %v2152 = vpop.f32.mrb[0].mxu0
        %2153 = vmatprep.mubr.f32.mxu0 0.0
        %2154 = vmatmul.mubr.f32.gmra.mrb[0].mxu0 %v1948
        %v2155 = vpop.f32.mrb[0].mxu0
        %v2156 = vadd.f32 0.0, %v2155
        %v2157 = vpop.f32.mrb[0].mxu0
        %2158 = vmatprep.mubr.f32.mxu0 0.0
        %2159 = vmatmul.mubr.f32.gmra.mrb[0].mxu0 %v1949
        %v2160 = vpop.f32.mrb[0].mxu0
        %v2161 = vadd.f32 0.0, %v2160
        %v2162 = vpop.f32.mrb[0].mxu0
        %2163 = vmatprep.mubr.f32.mxu0 0.0
        %2164 = vmatmul.mubr.f32.gmra.mrb[0].mxu0 %v1950
        %v2165 = vpop.f32.mrb[0].mxu0
        %v2166 = vadd.f32 0.0, %v2165
        %v2167 = vpop.f32.mrb[0].mxu0
        %2168 = vmatprep.mubr.f32.mxu0 0.0
        %2169 = vmatmul.mubr.f32.gmra.mrb[0].mxu0 %v1951
        %v2170 = vpop.f32.mrb[0].mxu0
        %v2171 = vadd.f32 0.0, %v2170
        %v2172 = vpop.f32.mrb[0].mxu0
        %2173 = vmatprep.mubr.f32.mxu0 0.0
        %2174 = vmatmul.mubr.f32.gmra.mrb[0].mxu0 %v1952
        %v2175 = vpop.f32.mrb[0].mxu0
        %v2176 = vadd.f32 0.0, %v2175
        %v2177 = vpop.f32.mrb[0].mxu0
        %2178 = vmatprep.mubr.f32.mxu0 0.0
        %2179 = vmatmul.mubr.f32.gmra.mrb[0].mxu0 %v1953
        %v2180 = vpop.f32.mrb[0].mxu0
        %v2181 = vadd.f32 0.0, %v2180
        %v2182 = vpop.f32.mrb[0].mxu0
        %2183 = vmatprep.mubr.f32.mxu0 0.0
        %2184 = vmatmul.mubr.f32.gmra.mrb[0].mxu0 %v1954
        %v2185 = vpop.f32.mrb[0].mxu0
        %v2186 = vadd.f32 0.0, %v2185
        %v2187 = vpop.f32.mrb[0].mxu0
        %2188 = vmatprep.mubr.f32.mxu0 0.0
        %2189 = vmatmul.mubr.f32.gmra.mrb[0].mxu0 %v1955
        %v2190 = vpop.f32.mrb[0].mxu0
        %v2191 = vadd.f32 0.0, %v2190
        %v2192 = vpop.f32.mrb[0].mxu0
        %2193 = vmatprep.mubr.f32.mxu0 0.0
        %2194 = vmatmul.mubr.f32.gmra.mrb[0].mxu0 %v1956
        %v2195 = vpop.f32.mrb[0].mxu0
        %v2196 = vadd.f32 0.0, %v2195
        %v2197 = vpop.f32.mrb[0].mxu0
        %2198 = vdwg.mxu0
        %v2199 = vadd.f32 %v1767, %v2041
        %v2200 = vadd.f32 %v1772, %v2046
        %v2201 = vadd.f32 %v1777, %v2051
        %v2202 = vadd.f32 %v1782, %v2056
        %v2203 = vadd.f32 %v1787, %v2061
        %v2204 = vadd.f32 %v1792, %v2066
        %v2205 = vadd.f32 %v1797, %v2071
        %v2206 = vadd.f32 %v1802, %v2076
        %v2207 = vadd.f32 %v1807, %v2081
        %v2208 = vadd.f32 %v1812, %v2086
        %v2209 = vadd.f32 %v1817, %v2091
        %v2210 = vadd.f32 %v1822, %v2096
        %v2211 = vadd.f32 %v1827, %v2101
        %v2212 = vadd.f32 %v1832, %v2106
        %v2213 = vadd.f32 %v1837, %v2111
        %v2214 = vadd.f32 %v1842, %v2116
        %v2215 = vadd.f32 %v1847, %v2121
        %v2216 = vadd.f32 %v1852, %v2126
        %v2217 = vadd.f32 %v1857, %v2131
        %v2218 = vadd.f32 %v1862, %v2136
        %v2219 = vadd.f32 %v1867, %v2141
        %v2220 = vadd.f32 %v1872, %v2146
        %v2221 = vadd.f32 %v1877, %v2151
        %v2222 = vadd.f32 %v1882, %v2156
        %v2223 = vadd.f32 %v1887, %v2161
        %v2224 = vadd.f32 %v1892, %v2166
        %v2225 = vadd.f32 %v1897, %v2171
        %v2226 = vadd.f32 %v1902, %v2176
        %v2227 = vadd.f32 %v1907, %v2181
        %v2228 = vadd.f32 %v1912, %v2186
        %v2229 = vadd.f32 %v1917, %v2191
        %v2230 = vadd.f32 %v1922, %v2196
        %v2231 = vld [vmem:[#allocation2 + $0x10] sm:$0xff]
        %v2232 = vld [vmem:[#allocation2 + $0x18] sm:$0xff]
        %v2233 = vld [vmem:[#allocation2 + $0x20] sm:$0xff]
        %v2234 = vld [vmem:[#allocation2 + $0x28] sm:$0xff]
        %v2235 = vld [vmem:[#allocation2 + $0x30] sm:$0xff]
        %v2236 = vld [vmem:[#allocation2 + $0x38] sm:$0xff]
        %v2237 = vld [vmem:[#allocation2 + $0x40] sm:$0xff]
        %v2238 = vld [vmem:[#allocation2 + $0x48] sm:$0xff]
        %v2239 = vld [vmem:[#allocation2 + $0x50] sm:$0xff]
        %v2240 = vld [vmem:[#allocation2 + $0x58] sm:$0xff]
        %v2241 = vld [vmem:[#allocation2 + $0x60] sm:$0xff]
        %v2242 = vld [vmem:[#allocation2 + $0x68] sm:$0xff]
        %v2243 = vld [vmem:[#allocation2 + $0x70] sm:$0xff]
        %v2244 = vld [vmem:[#allocation2 + $0x78] sm:$0xff]
        %v2245 = vld [vmem:[#allocation2 + $0x80] sm:$0xff]
        %v2246 = vld [vmem:[#allocation2 + $0x88] sm:$0xff]
        %v2247 = vld [vmem:[#allocation2 + $0x90] sm:$0xff]
        %v2248 = vld [vmem:[#allocation2 + $0x98] sm:$0xff]
        %v2249 = vld [vmem:[#allocation2 + $0xa0] sm:$0xff]
        %v2250 = vld [vmem:[#allocation2 + $0xa8] sm:$0xff]
        %v2251 = vld [vmem:[#allocation2 + $0xb0] sm:$0xff]
        %v2252 = vld [vmem:[#allocation2 + $0xb8] sm:$0xff]
        %v2253 = vld [vmem:[#allocation2 + $0xc0] sm:$0xff]
        %v2254 = vld [vmem:[#allocation2 + $0xc8] sm:$0xff]
        %v2255 = vld [vmem:[#allocation2 + $0xd0] sm:$0xff]
        %v2256 = vld [vmem:[#allocation2 + $0xd8] sm:$0xff]
        %v2257 = vld [vmem:[#allocation2 + $0xe0] sm:$0xff]
        %v2258 = vld [vmem:[#allocation2 + $0xe8] sm:$0xff]
        %v2259 = vld [vmem:[#allocation2 + $0xf0] sm:$0xff]
        %v2260 = vld [vmem:[#allocation2 + $0xf8] sm:$0xff]
        %v2261 = vld [vmem:[#allocation2 + $0x100] sm:$0xff]
        %v2262 = vld [vmem:[#allocation2 + $0x108] sm:$0xff]
        %s2263 = scalar_lea.vmem [#allocation7], 384
        %v2264 = vld [vmem:[%s2263] sm:$0xff]
        %v2265 = vld [vmem:[%s2263 + $0x8] sm:$0xff]
        %v2266 = vld [vmem:[%s2263 + $0x10] sm:$0xff]
        %v2267 = vld [vmem:[%s2263 + $0x18] sm:$0xff]
        %v2268 = vld [vmem:[%s2263 + $0x20] sm:$0xff]
        %v2269 = vld [vmem:[%s2263 + $0x28] sm:$0xff]
        %v2270 = vld [vmem:[%s2263 + $0x30] sm:$0xff]
        %v2271 = vld [vmem:[%s2263 + $0x38] sm:$0xff]
        %v2272 = vld [vmem:[%s2263 + $0x40] sm:$0xff]
        %v2273 = vld [vmem:[%s2263 + $0x48] sm:$0xff]
        %v2274 = vld [vmem:[%s2263 + $0x50] sm:$0xff]
        %v2275 = vld [vmem:[%s2263 + $0x58] sm:$0xff]
        %v2276 = vld [vmem:[%s2263 + $0x60] sm:$0xff]
        %v2277 = vld [vmem:[%s2263 + $0x68] sm:$0xff]
        %v2278 = vld [vmem:[%s2263 + $0x70] sm:$0xff]
        %v2279 = vld [vmem:[%s2263 + $0x78] sm:$0xff]
        %2280 = vmatprep.subr.mxu0 0.0
        %2281 = vmatpush1.msra.mxu0 %v2264
        %2282 = vmatprep.subr.mxu0 0.0
        %2283 = vmatpush1.msra.mxu0 %v2265
        %2284 = vmatprep.subr.mxu0 0.0
        %2285 = vmatpush1.msra.mxu0 %v2266
        %2286 = vmatprep.subr.mxu0 0.0
        %2287 = vmatpush1.msra.mxu0 %v2267
        %2288 = vmatprep.subr.mxu0 0.0
        %2289 = vmatpush1.msra.mxu0 %v2268
        %2290 = vmatprep.subr.mxu0 0.0
        %2291 = vmatpush1.msra.mxu0 %v2269
        %2292 = vmatprep.subr.mxu0 0.0
        %2293 = vmatpush1.msra.mxu0 %v2270
        %2294 = vmatprep.subr.mxu0 0.0
        %2295 = vmatpush1.msra.mxu0 %v2271
        %2296 = vmatprep.subr.mxu0 0.0
        %2297 = vmatpush1.msra.mxu0 %v2272
        %2298 = vmatprep.subr.mxu0 0.0
        %2299 = vmatpush1.msra.mxu0 %v2273
        %2300 = vmatprep.subr.mxu0 0.0
        %2301 = vmatpush1.msra.mxu0 %v2274
        %2302 = vmatprep.subr.mxu0 0.0
        %2303 = vmatpush1.msra.mxu0 %v2275
        %2304 = vmatprep.subr.mxu0 0.0
        %2305 = vmatpush1.msra.mxu0 %v2276
        %2306 = vmatprep.subr.mxu0 0.0
        %2307 = vmatpush1.msra.mxu0 %v2277
        %2308 = vmatprep.subr.mxu0 0.0
        %2309 = vmatpush1.msra.mxu0 %v2278
        %2310 = vmatprep.subr.mxu0 0.0
        %2311 = vmatpush1.msra.mxu0 %v2279
        %2312 = vmatprep.subr.mxu0 0.0
        %2313 = vmatpush1.msra.mxu0 0.0
        %2314 = vmatprep.subr.mxu0 0.0
        %2315 = vmatpush1.msra.mxu0 0.0
        %2316 = vmatprep.subr.mxu0 0.0
        %2317 = vmatpush1.msra.mxu0 0.0
        %2318 = vmatprep.subr.mxu0 0.0
        %2319 = vmatpush1.msra.mxu0 0.0
        %2320 = vmatprep.subr.mxu0 0.0
        %2321 = vmatpush1.msra.mxu0 0.0
        %2322 = vmatprep.subr.mxu0 0.0
        %2323 = vmatpush1.msra.mxu0 0.0
        %2324 = vmatprep.subr.mxu0 0.0
        %2325 = vmatpush1.msra.mxu0 0.0
        %2326 = vmatprep.subr.mxu0 0.0
        %2327 = vmatpush1.msra.mxu0 0.0
        %2328 = vmatprep.subr.mxu0 0.0
        %2329 = vmatpush1.msra.mxu0 0.0
        %2330 = vmatprep.subr.mxu0 0.0
        %2331 = vmatpush1.msra.mxu0 0.0
        %2332 = vmatprep.subr.mxu0 0.0
        %2333 = vmatpush1.msra.mxu0 0.0
        %2334 = vmatprep.subr.mxu0 0.0
        %2335 = vmatpush1.msra.mxu0 0.0
        %2336 = vmatprep.subr.mxu0 0.0
        %2337 = vmatpush1.msra.mxu0 0.0
        %2338 = vmatprep.subr.mxu0 0.0
        %2339 = vmatpush1.msra.mxu0 0.0
        %2340 = vmatprep.subr.mxu0 0.0
        %2341 = vmatpush1.msra.mxu0 0.0
        %2342 = vmatprep.subr.mxu0 0.0
        %2343 = vmatpush1.msra.mxu0 0.0
        %2344 = vmatprep.mubr.f32.mxu0 0.0
        %2345 = vmatmul.mubr.f32.gmra.mrb[0].mxu0 %v2231
        %v2346 = vpop.f32.mrb[0].mxu0
        %v2347 = vadd.f32 0.0, %v2346
        %v2348 = vpop.f32.mrb[0].mxu0
        %2349 = vmatprep.mubr.f32.mxu0 0.0
        %2350 = vmatmul.mubr.f32.gmra.mrb[0].mxu0 %v2232
        %v2351 = vpop.f32.mrb[0].mxu0
        %v2352 = vadd.f32 0.0, %v2351
        %v2353 = vpop.f32.mrb[0].mxu0
        %2354 = vmatprep.mubr.f32.mxu0 0.0
        %2355 = vmatmul.mubr.f32.gmra.mrb[0].mxu0 %v2233
        %v2356 = vpop.f32.mrb[0].mxu0
        %v2357 = vadd.f32 0.0, %v2356
        %v2358 = vpop.f32.mrb[0].mxu0
        %2359 = vmatprep.mubr.f32.mxu0 0.0
        %2360 = vmatmul.mubr.f32.gmra.mrb[0].mxu0 %v2234
        %v2361 = vpop.f32.mrb[0].mxu0
        %v2362 = vadd.f32 0.0, %v2361
        %v2363 = vpop.f32.mrb[0].mxu0
        %2364 = vmatprep.mubr.f32.mxu0 0.0
        %2365 = vmatmul.mubr.f32.gmra.mrb[0].mxu0 %v2235
        %v2366 = vpop.f32.mrb[0].mxu0
        %v2367 = vadd.f32 0.0, %v2366
        %v2368 = vpop.f32.mrb[0].mxu0
        %2369 = vmatprep.mubr.f32.mxu0 0.0
        %2370 = vmatmul.mubr.f32.gmra.mrb[0].mxu0 %v2236
        %v2371 = vpop.f32.mrb[0].mxu0
        %v2372 = vadd.f32 0.0, %v2371
        %v2373 = vpop.f32.mrb[0].mxu0
        %2374 = vmatprep.mubr.f32.mxu0 0.0
        %2375 = vmatmul.mubr.f32.gmra.mrb[0].mxu0 %v2237
        %v2376 = vpop.f32.mrb[0].mxu0
        %v2377 = vadd.f32 0.0, %v2376
        %v2378 = vpop.f32.mrb[0].mxu0
        %2379 = vmatprep.mubr.f32.mxu0 0.0
        %2380 = vmatmul.mubr.f32.gmra.mrb[0].mxu0 %v2238
        %v2381 = vpop.f32.mrb[0].mxu0
        %v2382 = vadd.f32 0.0, %v2381
        %v2383 = vpop.f32.mrb[0].mxu0
        %2384 = vmatprep.mubr.f32.mxu0 0.0
        %2385 = vmatmul.mubr.f32.gmra.mrb[0].mxu0 %v2239
        %v2386 = vpop.f32.mrb[0].mxu0
        %v2387 = vadd.f32 0.0, %v2386
        %v2388 = vpop.f32.mrb[0].mxu0
        %2389 = vmatprep.mubr.f32.mxu0 0.0
        %2390 = vmatmul.mubr.f32.gmra.mrb[0].mxu0 %v2240
        %v2391 = vpop.f32.mrb[0].mxu0
        %v2392 = vadd.f32 0.0, %v2391
        %v2393 = vpop.f32.mrb[0].mxu0
        %2394 = vmatprep.mubr.f32.mxu0 0.0
        %2395 = vmatmul.mubr.f32.gmra.mrb[0].mxu0 %v2241
        %v2396 = vpop.f32.mrb[0].mxu0
        %v2397 = vadd.f32 0.0, %v2396
        %v2398 = vpop.f32.mrb[0].mxu0
        %2399 = vmatprep.mubr.f32.mxu0 0.0
        %2400 = vmatmul.mubr.f32.gmra.mrb[0].mxu0 %v2242
        %v2401 = vpop.f32.mrb[0].mxu0
        %v2402 = vadd.f32 0.0, %v2401
        %v2403 = vpop.f32.mrb[0].mxu0
        %2404 = vmatprep.mubr.f32.mxu0 0.0
        %2405 = vmatmul.mubr.f32.gmra.mrb[0].mxu0 %v2243
        %v2406 = vpop.f32.mrb[0].mxu0
        %v2407 = vadd.f32 0.0, %v2406
        %v2408 = vpop.f32.mrb[0].mxu0
        %2409 = vmatprep.mubr.f32.mxu0 0.0
        %2410 = vmatmul.mubr.f32.gmra.mrb[0].mxu0 %v2244
        %v2411 = vpop.f32.mrb[0].mxu0
        %v2412 = vadd.f32 0.0, %v2411
        %v2413 = vpop.f32.mrb[0].mxu0
        %2414 = vmatprep.mubr.f32.mxu0 0.0
        %2415 = vmatmul.mubr.f32.gmra.mrb[0].mxu0 %v2245
        %v2416 = vpop.f32.mrb[0].mxu0
        %v2417 = vadd.f32 0.0, %v2416
        %v2418 = vpop.f32.mrb[0].mxu0
        %2419 = vmatprep.mubr.f32.mxu0 0.0
        %2420 = vmatmul.mubr.f32.gmra.mrb[0].mxu0 %v2246
        %v2421 = vpop.f32.mrb[0].mxu0
        %v2422 = vadd.f32 0.0, %v2421
        %v2423 = vpop.f32.mrb[0].mxu0
        %2424 = vmatprep.mubr.f32.mxu0 0.0
        %2425 = vmatmul.mubr.f32.gmra.mrb[0].mxu0 %v2247
        %v2426 = vpop.f32.mrb[0].mxu0
        %v2427 = vadd.f32 0.0, %v2426
        %v2428 = vpop.f32.mrb[0].mxu0
        %2429 = vmatprep.mubr.f32.mxu0 0.0
        %2430 = vmatmul.mubr.f32.gmra.mrb[0].mxu0 %v2248
        %v2431 = vpop.f32.mrb[0].mxu0
        %v2432 = vadd.f32 0.0, %v2431
        %v2433 = vpop.f32.mrb[0].mxu0
        %2434 = vmatprep.mubr.f32.mxu0 0.0
        %2435 = vmatmul.mubr.f32.gmra.mrb[0].mxu0 %v2249
        %v2436 = vpop.f32.mrb[0].mxu0
        %v2437 = vadd.f32 0.0, %v2436
        %v2438 = vpop.f32.mrb[0].mxu0
        %2439 = vmatprep.mubr.f32.mxu0 0.0
        %2440 = vmatmul.mubr.f32.gmra.mrb[0].mxu0 %v2250
        %v2441 = vpop.f32.mrb[0].mxu0
        %v2442 = vadd.f32 0.0, %v2441
        %v2443 = vpop.f32.mrb[0].mxu0
        %2444 = vmatprep.mubr.f32.mxu0 0.0
        %2445 = vmatmul.mubr.f32.gmra.mrb[0].mxu0 %v2251
        %v2446 = vpop.f32.mrb[0].mxu0
        %v2447 = vadd.f32 0.0, %v2446
        %v2448 = vpop.f32.mrb[0].mxu0
        %2449 = vmatprep.mubr.f32.mxu0 0.0
        %2450 = vmatmul.mubr.f32.gmra.mrb[0].mxu0 %v2252
        %v2451 = vpop.f32.mrb[0].mxu0
        %v2452 = vadd.f32 0.0, %v2451
        %v2453 = vpop.f32.mrb[0].mxu0
        %2454 = vmatprep.mubr.f32.mxu0 0.0
        %2455 = vmatmul.mubr.f32.gmra.mrb[0].mxu0 %v2253
        %v2456 = vpop.f32.mrb[0].mxu0
        %v2457 = vadd.f32 0.0, %v2456
        %v2458 = vpop.f32.mrb[0].mxu0
        %2459 = vmatprep.mubr.f32.mxu0 0.0
        %2460 = vmatmul.mubr.f32.gmra.mrb[0].mxu0 %v2254
        %v2461 = vpop.f32.mrb[0].mxu0
        %v2462 = vadd.f32 0.0, %v2461
        %v2463 = vpop.f32.mrb[0].mxu0
        %2464 = vmatprep.mubr.f32.mxu0 0.0
        %2465 = vmatmul.mubr.f32.gmra.mrb[0].mxu0 %v2255
        %v2466 = vpop.f32.mrb[0].mxu0
        %v2467 = vadd.f32 0.0, %v2466
        %v2468 = vpop.f32.mrb[0].mxu0
        %2469 = vmatprep.mubr.f32.mxu0 0.0
        %2470 = vmatmul.mubr.f32.gmra.mrb[0].mxu0 %v2256
        %v2471 = vpop.f32.mrb[0].mxu0
        %v2472 = vadd.f32 0.0, %v2471
        %v2473 = vpop.f32.mrb[0].mxu0
        %2474 = vmatprep.mubr.f32.mxu0 0.0
        %2475 = vmatmul.mubr.f32.gmra.mrb[0].mxu0 %v2257
        %v2476 = vpop.f32.mrb[0].mxu0
        %v2477 = vadd.f32 0.0, %v2476
        %v2478 = vpop.f32.mrb[0].mxu0
        %2479 = vmatprep.mubr.f32.mxu0 0.0
        %2480 = vmatmul.mubr.f32.gmra.mrb[0].mxu0 %v2258
        %v2481 = vpop.f32.mrb[0].mxu0
        %v2482 = vadd.f32 0.0, %v2481
        %v2483 = vpop.f32.mrb[0].mxu0
        %2484 = vmatprep.mubr.f32.mxu0 0.0
        %2485 = vmatmul.mubr.f32.gmra.mrb[0].mxu0 %v2259
        %v2486 = vpop.f32.mrb[0].mxu0
        %v2487 = vadd.f32 0.0, %v2486
        %v2488 = vpop.f32.mrb[0].mxu0
        %2489 = vmatprep.mubr.f32.mxu0 0.0
        %2490 = vmatmul.mubr.f32.gmra.mrb[0].mxu0 %v2260
        %v2491 = vpop.f32.mrb[0].mxu0
        %v2492 = vadd.f32 0.0, %v2491
        %v2493 = vpop.f32.mrb[0].mxu0
        %2494 = vmatprep.mubr.f32.mxu0 0.0
        %2495 = vmatmul.mubr.f32.gmra.mrb[0].mxu0 %v2261
        %v2496 = vpop.f32.mrb[0].mxu0
        %v2497 = vadd.f32 0.0, %v2496
        %v2498 = vpop.f32.mrb[0].mxu0
        %2499 = vmatprep.mubr.f32.mxu0 0.0
        %2500 = vmatmul.mubr.f32.gmra.mrb[0].mxu0 %v2262
        %v2501 = vpop.f32.mrb[0].mxu0
        %v2502 = vadd.f32 0.0, %v2501
        %v2503 = vpop.f32.mrb[0].mxu0
        %2504 = vdwg.mxu0
        %v2505 = vadd.f32 %v2199, %v2347
        %v2506 = vadd.f32 %v2200, %v2352
        %v2507 = vadd.f32 %v2201, %v2357
        %v2508 = vadd.f32 %v2202, %v2362
        %v2509 = vadd.f32 %v2203, %v2367
        %v2510 = vadd.f32 %v2204, %v2372
        %v2511 = vadd.f32 %v2205, %v2377
        %v2512 = vadd.f32 %v2206, %v2382
        %v2513 = vadd.f32 %v2207, %v2387
        %v2514 = vadd.f32 %v2208, %v2392
        %v2515 = vadd.f32 %v2209, %v2397
        %v2516 = vadd.f32 %v2210, %v2402
        %v2517 = vadd.f32 %v2211, %v2407
        %v2518 = vadd.f32 %v2212, %v2412
        %v2519 = vadd.f32 %v2213, %v2417
        %v2520 = vadd.f32 %v2214, %v2422
        %v2521 = vadd.f32 %v2215, %v2427
        %v2522 = vadd.f32 %v2216, %v2432
        %v2523 = vadd.f32 %v2217, %v2437
        %v2524 = vadd.f32 %v2218, %v2442
        %v2525 = vadd.f32 %v2219, %v2447
        %v2526 = vadd.f32 %v2220, %v2452
        %v2527 = vadd.f32 %v2221, %v2457
        %v2528 = vadd.f32 %v2222, %v2462
        %v2529 = vadd.f32 %v2223, %v2467
        %v2530 = vadd.f32 %v2224, %v2472
        %v2531 = vadd.f32 %v2225, %v2477
        %v2532 = vadd.f32 %v2226, %v2482
        %v2533 = vadd.f32 %v2227, %v2487
        %v2534 = vadd.f32 %v2228, %v2492
        %v2535 = vadd.f32 %v2229, %v2497
        %v2536 = vadd.f32 %v2230, %v2502
        %v2537 = vld [vmem:[%s1312 + $0x10] sm:$0xff]
        %v2538 = vld [vmem:[%s1312 + $0x18] sm:$0xff]
        %v2539 = vld [vmem:[%s1312 + $0x20] sm:$0xff]
        %v2540 = vld [vmem:[%s1312 + $0x28] sm:$0xff]
        %v2541 = vld [vmem:[%s1312 + $0x30] sm:$0xff]
        %v2542 = vld [vmem:[%s1312 + $0x38] sm:$0xff]
        %v2543 = vld [vmem:[%s1312 + $0x40] sm:$0xff]
        %v2544 = vld [vmem:[%s1312 + $0x48] sm:$0xff]
        %v2545 = vld [vmem:[%s1312 + $0x50] sm:$0xff]
        %v2546 = vld [vmem:[%s1312 + $0x58] sm:$0xff]
        %v2547 = vld [vmem:[%s1312 + $0x60] sm:$0xff]
        %v2548 = vld [vmem:[%s1312 + $0x68] sm:$0xff]
        %v2549 = vld [vmem:[%s1312 + $0x70] sm:$0xff]
        %v2550 = vld [vmem:[%s1312 + $0x78] sm:$0xff]
        %v2551 = vld [vmem:[%s1312 + $0x80] sm:$0xff]
        %v2552 = vld [vmem:[%s1312 + $0x88] sm:$0xff]
        %v2553 = vld [vmem:[%s1312 + $0x90] sm:$0xff]
        %v2554 = vld [vmem:[%s1312 + $0x98] sm:$0xff]
        %v2555 = vld [vmem:[%s1312 + $0xa0] sm:$0xff]
        %v2556 = vld [vmem:[%s1312 + $0xa8] sm:$0xff]
        %v2557 = vld [vmem:[%s1312 + $0xb0] sm:$0xff]
        %v2558 = vld [vmem:[%s1312 + $0xb8] sm:$0xff]
        %v2559 = vld [vmem:[%s1312 + $0xc0] sm:$0xff]
        %v2560 = vld [vmem:[%s1312 + $0xc8] sm:$0xff]
        %v2561 = vld [vmem:[%s1312 + $0xd0] sm:$0xff]
        %v2562 = vld [vmem:[%s1312 + $0xd8] sm:$0xff]
        %v2563 = vld [vmem:[%s1312 + $0xe0] sm:$0xff]
        %v2564 = vld [vmem:[%s1312 + $0xe8] sm:$0xff]
        %v2565 = vld [vmem:[%s1312 + $0xf0] sm:$0xff]
        %v2566 = vld [vmem:[%s1312 + $0xf8] sm:$0xff]
        %v2567 = vld [vmem:[%s1312 + $0x100] sm:$0xff]
        %v2568 = vld [vmem:[%s1312 + $0x108] sm:$0xff]
        %s2569 = scalar_lea.vmem [#allocation7], 512
        %v2570 = vld [vmem:[%s2569] sm:$0xff]
        %v2571 = vld [vmem:[%s2569 + $0x8] sm:$0xff]
        %v2572 = vld [vmem:[%s2569 + $0x10] sm:$0xff]
        %v2573 = vld [vmem:[%s2569 + $0x18] sm:$0xff]
        %v2574 = vld [vmem:[%s2569 + $0x20] sm:$0xff]
        %v2575 = vld [vmem:[%s2569 + $0x28] sm:$0xff]
        %v2576 = vld [vmem:[%s2569 + $0x30] sm:$0xff]
        %v2577 = vld [vmem:[%s2569 + $0x38] sm:$0xff]
        %v2578 = vld [vmem:[%s2569 + $0x40] sm:$0xff]
        %v2579 = vld [vmem:[%s2569 + $0x48] sm:$0xff]
        %v2580 = vld [vmem:[%s2569 + $0x50] sm:$0xff]
        %v2581 = vld [vmem:[%s2569 + $0x58] sm:$0xff]
        %v2582 = vld [vmem:[%s2569 + $0x60] sm:$0xff]
        %v2583 = vld [vmem:[%s2569 + $0x68] sm:$0xff]
        %v2584 = vld [vmem:[%s2569 + $0x70] sm:$0xff]
        %v2585 = vld [vmem:[%s2569 + $0x78] sm:$0xff]
        %2586 = vmatprep.subr.mxu0 0.0
        %2587 = vmatpush1.msra.mxu0 %v2570
        %2588 = vmatprep.subr.mxu0 0.0
        %2589 = vmatpush1.msra.mxu0 %v2571
        %2590 = vmatprep.subr.mxu0 0.0
        %2591 = vmatpush1.msra.mxu0 %v2572
        %2592 = vmatprep.subr.mxu0 0.0
        %2593 = vmatpush1.msra.mxu0 %v2573
        %2594 = vmatprep.subr.mxu0 0.0
        %2595 = vmatpush1.msra.mxu0 %v2574
        %2596 = vmatprep.subr.mxu0 0.0
        %2597 = vmatpush1.msra.mxu0 %v2575
        %2598 = vmatprep.subr.mxu0 0.0
        %2599 = vmatpush1.msra.mxu0 %v2576
        %2600 = vmatprep.subr.mxu0 0.0
        %2601 = vmatpush1.msra.mxu0 %v2577
        %2602 = vmatprep.subr.mxu0 0.0
        %2603 = vmatpush1.msra.mxu0 %v2578
        %2604 = vmatprep.subr.mxu0 0.0
        %2605 = vmatpush1.msra.mxu0 %v2579
        %2606 = vmatprep.subr.mxu0 0.0
        %2607 = vmatpush1.msra.mxu0 %v2580
        %2608 = vmatprep.subr.mxu0 0.0
        %2609 = vmatpush1.msra.mxu0 %v2581
        %2610 = vmatprep.subr.mxu0 0.0
        %2611 = vmatpush1.msra.mxu0 %v2582
        %2612 = vmatprep.subr.mxu0 0.0
        %2613 = vmatpush1.msra.mxu0 %v2583
        %2614 = vmatprep.subr.mxu0 0.0
        %2615 = vmatpush1.msra.mxu0 %v2584
        %2616 = vmatprep.subr.mxu0 0.0
        %2617 = vmatpush1.msra.mxu0 %v2585
        %2618 = vmatprep.subr.mxu0 0.0
        %2619 = vmatpush1.msra.mxu0 0.0
        %2620 = vmatprep.subr.mxu0 0.0
        %2621 = vmatpush1.msra.mxu0 0.0
        %2622 = vmatprep.subr.mxu0 0.0
        %2623 = vmatpush1.msra.mxu0 0.0
        %2624 = vmatprep.subr.mxu0 0.0
        %2625 = vmatpush1.msra.mxu0 0.0
        %2626 = vmatprep.subr.mxu0 0.0
        %2627 = vmatpush1.msra.mxu0 0.0
        %2628 = vmatprep.subr.mxu0 0.0
        %2629 = vmatpush1.msra.mxu0 0.0
        %2630 = vmatprep.subr.mxu0 0.0
        %2631 = vmatpush1.msra.mxu0 0.0
        %2632 = vmatprep.subr.mxu0 0.0
        %2633 = vmatpush1.msra.mxu0 0.0
        %2634 = vmatprep.subr.mxu0 0.0
        %2635 = vmatpush1.msra.mxu0 0.0
        %2636 = vmatprep.subr.mxu0 0.0
        %2637 = vmatpush1.msra.mxu0 0.0
        %2638 = vmatprep.subr.mxu0 0.0
        %2639 = vmatpush1.msra.mxu0 0.0
        %2640 = vmatprep.subr.mxu0 0.0
        %2641 = vmatpush1.msra.mxu0 0.0
        %2642 = vmatprep.subr.mxu0 0.0
        %2643 = vmatpush1.msra.mxu0 0.0
        %2644 = vmatprep.subr.mxu0 0.0
        %2645 = vmatpush1.msra.mxu0 0.0
        %2646 = vmatprep.subr.mxu0 0.0
        %2647 = vmatpush1.msra.mxu0 0.0
        %2648 = vmatprep.subr.mxu0 0.0
        %2649 = vmatpush1.msra.mxu0 0.0
        %2650 = vmatprep.mubr.f32.mxu0 0.0
        %2651 = vmatmul.mubr.f32.gmra.mrb[0].mxu0 %v2537
        %v2652 = vpop.f32.mrb[0].mxu0
        %v2653 = vadd.f32 0.0, %v2652
        %v2654 = vpop.f32.mrb[0].mxu0
        %2655 = vmatprep.mubr.f32.mxu0 0.0
        %2656 = vmatmul.mubr.f32.gmra.mrb[0].mxu0 %v2538
        %v2657 = vpop.f32.mrb[0].mxu0
        %v2658 = vadd.f32 0.0, %v2657
        %v2659 = vpop.f32.mrb[0].mxu0
        %2660 = vmatprep.mubr.f32.mxu0 0.0
        %2661 = vmatmul.mubr.f32.gmra.mrb[0].mxu0 %v2539
        %v2662 = vpop.f32.mrb[0].mxu0
        %v2663 = vadd.f32 0.0, %v2662
        %v2664 = vpop.f32.mrb[0].mxu0
        %2665 = vmatprep.mubr.f32.mxu0 0.0
        %2666 = vmatmul.mubr.f32.gmra.mrb[0].mxu0 %v2540
        %v2667 = vpop.f32.mrb[0].mxu0
        %v2668 = vadd.f32 0.0, %v2667
        %v2669 = vpop.f32.mrb[0].mxu0
        %2670 = vmatprep.mubr.f32.mxu0 0.0
        %2671 = vmatmul.mubr.f32.gmra.mrb[0].mxu0 %v2541
        %v2672 = vpop.f32.mrb[0].mxu0
        %v2673 = vadd.f32 0.0, %v2672
        %v2674 = vpop.f32.mrb[0].mxu0
        %2675 = vmatprep.mubr.f32.mxu0 0.0
        %2676 = vmatmul.mubr.f32.gmra.mrb[0].mxu0 %v2542
        %v2677 = vpop.f32.mrb[0].mxu0
        %v2678 = vadd.f32 0.0, %v2677
        %v2679 = vpop.f32.mrb[0].mxu0
        %2680 = vmatprep.mubr.f32.mxu0 0.0
        %2681 = vmatmul.mubr.f32.gmra.mrb[0].mxu0 %v2543
        %v2682 = vpop.f32.mrb[0].mxu0
        %v2683 = vadd.f32 0.0, %v2682
        %v2684 = vpop.f32.mrb[0].mxu0
        %2685 = vmatprep.mubr.f32.mxu0 0.0
        %2686 = vmatmul.mubr.f32.gmra.mrb[0].mxu0 %v2544
        %v2687 = vpop.f32.mrb[0].mxu0
        %v2688 = vadd.f32 0.0, %v2687
        %v2689 = vpop.f32.mrb[0].mxu0
        %2690 = vmatprep.mubr.f32.mxu0 0.0
        %2691 = vmatmul.mubr.f32.gmra.mrb[0].mxu0 %v2545
        %v2692 = vpop.f32.mrb[0].mxu0
        %v2693 = vadd.f32 0.0, %v2692
        %v2694 = vpop.f32.mrb[0].mxu0
        %2695 = vmatprep.mubr.f32.mxu0 0.0
        %2696 = vmatmul.mubr.f32.gmra.mrb[0].mxu0 %v2546
        %v2697 = vpop.f32.mrb[0].mxu0
        %v2698 = vadd.f32 0.0, %v2697
        %v2699 = vpop.f32.mrb[0].mxu0
        %2700 = vmatprep.mubr.f32.mxu0 0.0
        %2701 = vmatmul.mubr.f32.gmra.mrb[0].mxu0 %v2547
        %v2702 = vpop.f32.mrb[0].mxu0
        %v2703 = vadd.f32 0.0, %v2702
        %v2704 = vpop.f32.mrb[0].mxu0
        %2705 = vmatprep.mubr.f32.mxu0 0.0
        %2706 = vmatmul.mubr.f32.gmra.mrb[0].mxu0 %v2548
        %v2707 = vpop.f32.mrb[0].mxu0
        %v2708 = vadd.f32 0.0, %v2707
        %v2709 = vpop.f32.mrb[0].mxu0
        %2710 = vmatprep.mubr.f32.mxu0 0.0
        %2711 = vmatmul.mubr.f32.gmra.mrb[0].mxu0 %v2549
        %v2712 = vpop.f32.mrb[0].mxu0
        %v2713 = vadd.f32 0.0, %v2712
        %v2714 = vpop.f32.mrb[0].mxu0
        %2715 = vmatprep.mubr.f32.mxu0 0.0
        %2716 = vmatmul.mubr.f32.gmra.mrb[0].mxu0 %v2550
        %v2717 = vpop.f32.mrb[0].mxu0
        %v2718 = vadd.f32 0.0, %v2717
        %v2719 = vpop.f32.mrb[0].mxu0
        %2720 = vmatprep.mubr.f32.mxu0 0.0
        %2721 = vmatmul.mubr.f32.gmra.mrb[0].mxu0 %v2551
        %v2722 = vpop.f32.mrb[0].mxu0
        %v2723 = vadd.f32 0.0, %v2722
        %v2724 = vpop.f32.mrb[0].mxu0
        %2725 = vmatprep.mubr.f32.mxu0 0.0
        %2726 = vmatmul.mubr.f32.gmra.mrb[0].mxu0 %v2552
        %v2727 = vpop.f32.mrb[0].mxu0
        %v2728 = vadd.f32 0.0, %v2727
        %v2729 = vpop.f32.mrb[0].mxu0
        %2730 = vmatprep.mubr.f32.mxu0 0.0
        %2731 = vmatmul.mubr.f32.gmra.mrb[0].mxu0 %v2553
        %v2732 = vpop.f32.mrb[0].mxu0
        %v2733 = vadd.f32 0.0, %v2732
        %v2734 = vpop.f32.mrb[0].mxu0
        %2735 = vmatprep.mubr.f32.mxu0 0.0
        %2736 = vmatmul.mubr.f32.gmra.mrb[0].mxu0 %v2554
        %v2737 = vpop.f32.mrb[0].mxu0
        %v2738 = vadd.f32 0.0, %v2737
        %v2739 = vpop.f32.mrb[0].mxu0
        %2740 = vmatprep.mubr.f32.mxu0 0.0
        %2741 = vmatmul.mubr.f32.gmra.mrb[0].mxu0 %v2555
        %v2742 = vpop.f32.mrb[0].mxu0
        %v2743 = vadd.f32 0.0, %v2742
        %v2744 = vpop.f32.mrb[0].mxu0
        %2745 = vmatprep.mubr.f32.mxu0 0.0
        %2746 = vmatmul.mubr.f32.gmra.mrb[0].mxu0 %v2556
        %v2747 = vpop.f32.mrb[0].mxu0
        %v2748 = vadd.f32 0.0, %v2747
        %v2749 = vpop.f32.mrb[0].mxu0
        %2750 = vmatprep.mubr.f32.mxu0 0.0
        %2751 = vmatmul.mubr.f32.gmra.mrb[0].mxu0 %v2557
        %v2752 = vpop.f32.mrb[0].mxu0
        %v2753 = vadd.f32 0.0, %v2752
        %v2754 = vpop.f32.mrb[0].mxu0
        %2755 = vmatprep.mubr.f32.mxu0 0.0
        %2756 = vmatmul.mubr.f32.gmra.mrb[0].mxu0 %v2558
        %v2757 = vpop.f32.mrb[0].mxu0
        %v2758 = vadd.f32 0.0, %v2757
        %v2759 = vpop.f32.mrb[0].mxu0
        %2760 = vmatprep.mubr.f32.mxu0 0.0
        %2761 = vmatmul.mubr.f32.gmra.mrb[0].mxu0 %v2559
        %v2762 = vpop.f32.mrb[0].mxu0
        %v2763 = vadd.f32 0.0, %v2762
        %v2764 = vpop.f32.mrb[0].mxu0
        %2765 = vmatprep.mubr.f32.mxu0 0.0
        %2766 = vmatmul.mubr.f32.gmra.mrb[0].mxu0 %v2560
        %v2767 = vpop.f32.mrb[0].mxu0
        %v2768 = vadd.f32 0.0, %v2767
        %v2769 = vpop.f32.mrb[0].mxu0
        %2770 = vmatprep.mubr.f32.mxu0 0.0
        %2771 = vmatmul.mubr.f32.gmra.mrb[0].mxu0 %v2561
        %v2772 = vpop.f32.mrb[0].mxu0
        %v2773 = vadd.f32 0.0, %v2772
        %v2774 = vpop.f32.mrb[0].mxu0
        %2775 = vmatprep.mubr.f32.mxu0 0.0
        %2776 = vmatmul.mubr.f32.gmra.mrb[0].mxu0 %v2562
        %v2777 = vpop.f32.mrb[0].mxu0
        %v2778 = vadd.f32 0.0, %v2777
        %v2779 = vpop.f32.mrb[0].mxu0
        %2780 = vmatprep.mubr.f32.mxu0 0.0
        %2781 = vmatmul.mubr.f32.gmra.mrb[0].mxu0 %v2563
        %v2782 = vpop.f32.mrb[0].mxu0
        %v2783 = vadd.f32 0.0, %v2782
        %v2784 = vpop.f32.mrb[0].mxu0
        %2785 = vmatprep.mubr.f32.mxu0 0.0
        %2786 = vmatmul.mubr.f32.gmra.mrb[0].mxu0 %v2564
        %v2787 = vpop.f32.mrb[0].mxu0
        %v2788 = vadd.f32 0.0, %v2787
        %v2789 = vpop.f32.mrb[0].mxu0
        %2790 = vmatprep.mubr.f32.mxu0 0.0
        %2791 = vmatmul.mubr.f32.gmra.mrb[0].mxu0 %v2565
        %v2792 = vpop.f32.mrb[0].mxu0
        %v2793 = vadd.f32 0.0, %v2792
        %v2794 = vpop.f32.mrb[0].mxu0
        %2795 = vmatprep.mubr.f32.mxu0 0.0
        %2796 = vmatmul.mubr.f32.gmra.mrb[0].mxu0 %v2566
        %v2797 = vpop.f32.mrb[0].mxu0
        %v2798 = vadd.f32 0.0, %v2797
        %v2799 = vpop.f32.mrb[0].mxu0
        %2800 = vmatprep.mubr.f32.mxu0 0.0
        %2801 = vmatmul.mubr.f32.gmra.mrb[0].mxu0 %v2567
        %v2802 = vpop.f32.mrb[0].mxu0
        %v2803 = vadd.f32 0.0, %v2802
        %v2804 = vpop.f32.mrb[0].mxu0
        %2805 = vmatprep.mubr.f32.mxu0 0.0
        %2806 = vmatmul.mubr.f32.gmra.mrb[0].mxu0 %v2568
        %v2807 = vpop.f32.mrb[0].mxu0
        %v2808 = vadd.f32 0.0, %v2807
        %v2809 = vpop.f32.mrb[0].mxu0
        %2810 = vdwg.mxu0
        %v2811 = vadd.f32 %v2505, %v2653
        %v2812 = vadd.f32 %v2506, %v2658
        %v2813 = vadd.f32 %v2507, %v2663
        %v2814 = vadd.f32 %v2508, %v2668
        %v2815 = vadd.f32 %v2509, %v2673
        %v2816 = vadd.f32 %v2510, %v2678
        %v2817 = vadd.f32 %v2511, %v2683
        %v2818 = vadd.f32 %v2512, %v2688
        %v2819 = vadd.f32 %v2513, %v2693
        %v2820 = vadd.f32 %v2514, %v2698
        %v2821 = vadd.f32 %v2515, %v2703
        %v2822 = vadd.f32 %v2516, %v2708
        %v2823 = vadd.f32 %v2517, %v2713
        %v2824 = vadd.f32 %v2518, %v2718
        %v2825 = vadd.f32 %v2519, %v2723
        %v2826 = vadd.f32 %v2520, %v2728
        %v2827 = vadd.f32 %v2521, %v2733
        %v2828 = vadd.f32 %v2522, %v2738
        %v2829 = vadd.f32 %v2523, %v2743
        %v2830 = vadd.f32 %v2524, %v2748
        %v2831 = vadd.f32 %v2525, %v2753
        %v2832 = vadd.f32 %v2526, %v2758
        %v2833 = vadd.f32 %v2527, %v2763
        %v2834 = vadd.f32 %v2528, %v2768
        %v2835 = vadd.f32 %v2529, %v2773
        %v2836 = vadd.f32 %v2530, %v2778
        %v2837 = vadd.f32 %v2531, %v2783
        %v2838 = vadd.f32 %v2532, %v2788
        %v2839 = vadd.f32 %v2533, %v2793
        %v2840 = vadd.f32 %v2534, %v2798
        %v2841 = vadd.f32 %v2535, %v2803
        %v2842 = vadd.f32 %v2536, %v2808
        %v2843 = vld [vmem:[%s1345 + $0x10] sm:$0xff]
        %v2844 = vld [vmem:[%s1345 + $0x18] sm:$0xff]
        %v2845 = vld [vmem:[%s1345 + $0x20] sm:$0xff]
        %v2846 = vld [vmem:[%s1345 + $0x28] sm:$0xff]
        %v2847 = vld [vmem:[%s1345 + $0x30] sm:$0xff]
        %v2848 = vld [vmem:[%s1345 + $0x38] sm:$0xff]
        %v2849 = vld [vmem:[%s1345 + $0x40] sm:$0xff]
        %v2850 = vld [vmem:[%s1345 + $0x48] sm:$0xff]
        %v2851 = vld [vmem:[%s1345 + $0x50] sm:$0xff]
        %v2852 = vld [vmem:[%s1345 + $0x58] sm:$0xff]
        %v2853 = vld [vmem:[%s1345 + $0x60] sm:$0xff]
        %v2854 = vld [vmem:[%s1345 + $0x68] sm:$0xff]
        %v2855 = vld [vmem:[%s1345 + $0x70] sm:$0xff]
        %v2856 = vld [vmem:[%s1345 + $0x78] sm:$0xff]
        %v2857 = vld [vmem:[%s1345 + $0x80] sm:$0xff]
        %v2858 = vld [vmem:[%s1345 + $0x88] sm:$0xff]
        %v2859 = vld [vmem:[%s1345 + $0x90] sm:$0xff]
        %v2860 = vld [vmem:[%s1345 + $0x98] sm:$0xff]
        %v2861 = vld [vmem:[%s1345 + $0xa0] sm:$0xff]
        %v2862 = vld [vmem:[%s1345 + $0xa8] sm:$0xff]
        %v2863 = vld [vmem:[%s1345 + $0xb0] sm:$0xff]
        %v2864 = vld [vmem:[%s1345 + $0xb8] sm:$0xff]
        %v2865 = vld [vmem:[%s1345 + $0xc0] sm:$0xff]
        %v2866 = vld [vmem:[%s1345 + $0xc8] sm:$0xff]
        %v2867 = vld [vmem:[%s1345 + $0xd0] sm:$0xff]
        %v2868 = vld [vmem:[%s1345 + $0xd8] sm:$0xff]
        %v2869 = vld [vmem:[%s1345 + $0xe0] sm:$0xff]
        %v2870 = vld [vmem:[%s1345 + $0xe8] sm:$0xff]
        %v2871 = vld [vmem:[%s1345 + $0xf0] sm:$0xff]
        %v2872 = vld [vmem:[%s1345 + $0xf8] sm:$0xff]
        %v2873 = vld [vmem:[%s1345 + $0x100] sm:$0xff]
        %v2874 = vld [vmem:[%s1345 + $0x108] sm:$0xff]
        %s2875 = scalar_lea.vmem [#allocation7], 640
        %v2876 = vld [vmem:[%s2875] sm:$0xff]
        %v2877 = vld [vmem:[%s2875 + $0x8] sm:$0xff]
        %v2878 = vld [vmem:[%s2875 + $0x10] sm:$0xff]
        %v2879 = vld [vmem:[%s2875 + $0x18] sm:$0xff]
        %v2880 = vld [vmem:[%s2875 + $0x20] sm:$0xff]
        %v2881 = vld [vmem:[%s2875 + $0x28] sm:$0xff]
        %v2882 = vld [vmem:[%s2875 + $0x30] sm:$0xff]
        %v2883 = vld [vmem:[%s2875 + $0x38] sm:$0xff]
        %v2884 = vld [vmem:[%s2875 + $0x40] sm:$0xff]
        %v2885 = vld [vmem:[%s2875 + $0x48] sm:$0xff]
        %v2886 = vld [vmem:[%s2875 + $0x50] sm:$0xff]
        %v2887 = vld [vmem:[%s2875 + $0x58] sm:$0xff]
        %v2888 = vld [vmem:[%s2875 + $0x60] sm:$0xff]
        %v2889 = vld [vmem:[%s2875 + $0x68] sm:$0xff]
        %v2890 = vld [vmem:[%s2875 + $0x70] sm:$0xff]
        %v2891 = vld [vmem:[%s2875 + $0x78] sm:$0xff]
        %2892 = vmatprep.subr.mxu0 0.0
        %2893 = vmatpush1.msra.mxu0 %v2876
        %2894 = vmatprep.subr.mxu0 0.0
        %2895 = vmatpush1.msra.mxu0 %v2877
        %2896 = vmatprep.subr.mxu0 0.0
        %2897 = vmatpush1.msra.mxu0 %v2878
        %2898 = vmatprep.subr.mxu0 0.0
        %2899 = vmatpush1.msra.mxu0 %v2879
        %2900 = vmatprep.subr.mxu0 0.0
        %2901 = vmatpush1.msra.mxu0 %v2880
        %2902 = vmatprep.subr.mxu0 0.0
        %2903 = vmatpush1.msra.mxu0 %v2881
        %2904 = vmatprep.subr.mxu0 0.0
        %2905 = vmatpush1.msra.mxu0 %v2882
        %2906 = vmatprep.subr.mxu0 0.0
        %2907 = vmatpush1.msra.mxu0 %v2883
        %2908 = vmatprep.subr.mxu0 0.0
        %2909 = vmatpush1.msra.mxu0 %v2884
        %2910 = vmatprep.subr.mxu0 0.0
        %2911 = vmatpush1.msra.mxu0 %v2885
        %2912 = vmatprep.subr.mxu0 0.0
        %2913 = vmatpush1.msra.mxu0 %v2886
        %2914 = vmatprep.subr.mxu0 0.0
        %2915 = vmatpush1.msra.mxu0 %v2887
        %2916 = vmatprep.subr.mxu0 0.0
        %2917 = vmatpush1.msra.mxu0 %v2888
        %2918 = vmatprep.subr.mxu0 0.0
        %2919 = vmatpush1.msra.mxu0 %v2889
        %2920 = vmatprep.subr.mxu0 0.0
        %2921 = vmatpush1.msra.mxu0 %v2890
        %2922 = vmatprep.subr.mxu0 0.0
        %2923 = vmatpush1.msra.mxu0 %v2891
        %2924 = vmatprep.subr.mxu0 0.0
        %2925 = vmatpush1.msra.mxu0 0.0
        %2926 = vmatprep.subr.mxu0 0.0
        %2927 = vmatpush1.msra.mxu0 0.0
        %2928 = vmatprep.subr.mxu0 0.0
        %2929 = vmatpush1.msra.mxu0 0.0
        %2930 = vmatprep.subr.mxu0 0.0
        %2931 = vmatpush1.msra.mxu0 0.0
        %2932 = vmatprep.subr.mxu0 0.0
        %2933 = vmatpush1.msra.mxu0 0.0
        %2934 = vmatprep.subr.mxu0 0.0
        %2935 = vmatpush1.msra.mxu0 0.0
        %2936 = vmatprep.subr.mxu0 0.0
        %2937 = vmatpush1.msra.mxu0 0.0
        %2938 = vmatprep.subr.mxu0 0.0
        %2939 = vmatpush1.msra.mxu0 0.0
        %2940 = vmatprep.subr.mxu0 0.0
        %2941 = vmatpush1.msra.mxu0 0.0
        %2942 = vmatprep.subr.mxu0 0.0
        %2943 = vmatpush1.msra.mxu0 0.0
        %2944 = vmatprep.subr.mxu0 0.0
        %2945 = vmatpush1.msra.mxu0 0.0
        %2946 = vmatprep.subr.mxu0 0.0
        %2947 = vmatpush1.msra.mxu0 0.0
        %2948 = vmatprep.subr.mxu0 0.0
        %2949 = vmatpush1.msra.mxu0 0.0
        %2950 = vmatprep.subr.mxu0 0.0
        %2951 = vmatpush1.msra.mxu0 0.0
        %2952 = vmatprep.subr.mxu0 0.0
        %2953 = vmatpush1.msra.mxu0 0.0
        %2954 = vmatprep.subr.mxu0 0.0
        %2955 = vmatpush1.msra.mxu0 0.0
        %2956 = vmatprep.mubr.f32.mxu0 0.0
        %2957 = vmatmul.mubr.f32.gmra.mrb[0].mxu0 %v2843
        %v2958 = vpop.f32.mrb[0].mxu0
        %v2959 = vadd.f32 0.0, %v2958
        %v2960 = vpop.f32.mrb[0].mxu0
        %2961 = vmatprep.mubr.f32.mxu0 0.0
        %2962 = vmatmul.mubr.f32.gmra.mrb[0].mxu0 %v2844
        %v2963 = vpop.f32.mrb[0].mxu0
        %v2964 = vadd.f32 0.0, %v2963
        %v2965 = vpop.f32.mrb[0].mxu0
        %2966 = vmatprep.mubr.f32.mxu0 0.0
        %2967 = vmatmul.mubr.f32.gmra.mrb[0].mxu0 %v2845
        %v2968 = vpop.f32.mrb[0].mxu0
        %v2969 = vadd.f32 0.0, %v2968
        %v2970 = vpop.f32.mrb[0].mxu0
        %2971 = vmatprep.mubr.f32.mxu0 0.0
        %2972 = vmatmul.mubr.f32.gmra.mrb[0].mxu0 %v2846
        %v2973 = vpop.f32.mrb[0].mxu0
        %v2974 = vadd.f32 0.0, %v2973
        %v2975 = vpop.f32.mrb[0].mxu0
        %2976 = vmatprep.mubr.f32.mxu0 0.0
        %2977 = vmatmul.mubr.f32.gmra.mrb[0].mxu0 %v2847
        %v2978 = vpop.f32.mrb[0].mxu0
        %v2979 = vadd.f32 0.0, %v2978
        %v2980 = vpop.f32.mrb[0].mxu0
        %2981 = vmatprep.mubr.f32.mxu0 0.0
        %2982 = vmatmul.mubr.f32.gmra.mrb[0].mxu0 %v2848
        %v2983 = vpop.f32.mrb[0].mxu0
        %v2984 = vadd.f32 0.0, %v2983
        %v2985 = vpop.f32.mrb[0].mxu0
        %2986 = vmatprep.mubr.f32.mxu0 0.0
        %2987 = vmatmul.mubr.f32.gmra.mrb[0].mxu0 %v2849
        %v2988 = vpop.f32.mrb[0].mxu0
        %v2989 = vadd.f32 0.0, %v2988
        %v2990 = vpop.f32.mrb[0].mxu0
        %2991 = vmatprep.mubr.f32.mxu0 0.0
        %2992 = vmatmul.mubr.f32.gmra.mrb[0].mxu0 %v2850
        %v2993 = vpop.f32.mrb[0].mxu0
        %v2994 = vadd.f32 0.0, %v2993
        %v2995 = vpop.f32.mrb[0].mxu0
        %2996 = vmatprep.mubr.f32.mxu0 0.0
        %2997 = vmatmul.mubr.f32.gmra.mrb[0].mxu0 %v2851
        %v2998 = vpop.f32.mrb[0].mxu0
        %v2999 = vadd.f32 0.0, %v2998
        %v3000 = vpop.f32.mrb[0].mxu0
        %3001 = vmatprep.mubr.f32.mxu0 0.0
        %3002 = vmatmul.mubr.f32.gmra.mrb[0].mxu0 %v2852
        %v3003 = vpop.f32.mrb[0].mxu0
        %v3004 = vadd.f32 0.0, %v3003
        %v3005 = vpop.f32.mrb[0].mxu0
        %3006 = vmatprep.mubr.f32.mxu0 0.0
        %3007 = vmatmul.mubr.f32.gmra.mrb[0].mxu0 %v2853
        %v3008 = vpop.f32.mrb[0].mxu0
        %v3009 = vadd.f32 0.0, %v3008
        %v3010 = vpop.f32.mrb[0].mxu0
        %3011 = vmatprep.mubr.f32.mxu0 0.0
        %3012 = vmatmul.mubr.f32.gmra.mrb[0].mxu0 %v2854
        %v3013 = vpop.f32.mrb[0].mxu0
        %v3014 = vadd.f32 0.0, %v3013
        %v3015 = vpop.f32.mrb[0].mxu0
        %3016 = vmatprep.mubr.f32.mxu0 0.0
        %3017 = vmatmul.mubr.f32.gmra.mrb[0].mxu0 %v2855
        %v3018 = vpop.f32.mrb[0].mxu0
        %v3019 = vadd.f32 0.0, %v3018
        %v3020 = vpop.f32.mrb[0].mxu0
        %3021 = vmatprep.mubr.f32.mxu0 0.0
        %3022 = vmatmul.mubr.f32.gmra.mrb[0].mxu0 %v2856
        %v3023 = vpop.f32.mrb[0].mxu0
        %v3024 = vadd.f32 0.0, %v3023
        %v3025 = vpop.f32.mrb[0].mxu0
        %3026 = vmatprep.mubr.f32.mxu0 0.0
        %3027 = vmatmul.mubr.f32.gmra.mrb[0].mxu0 %v2857
        %v3028 = vpop.f32.mrb[0].mxu0
        %v3029 = vadd.f32 0.0, %v3028
        %v3030 = vpop.f32.mrb[0].mxu0
        %3031 = vmatprep.mubr.f32.mxu0 0.0
        %3032 = vmatmul.mubr.f32.gmra.mrb[0].mxu0 %v2858
        %v3033 = vpop.f32.mrb[0].mxu0
        %v3034 = vadd.f32 0.0, %v3033
        %v3035 = vpop.f32.mrb[0].mxu0
        %3036 = vmatprep.mubr.f32.mxu0 0.0
        %3037 = vmatmul.mubr.f32.gmra.mrb[0].mxu0 %v2859
        %v3038 = vpop.f32.mrb[0].mxu0
        %v3039 = vadd.f32 0.0, %v3038
        %v3040 = vpop.f32.mrb[0].mxu0
        %3041 = vmatprep.mubr.f32.mxu0 0.0
        %3042 = vmatmul.mubr.f32.gmra.mrb[0].mxu0 %v2860
        %v3043 = vpop.f32.mrb[0].mxu0
        %v3044 = vadd.f32 0.0, %v3043
        %v3045 = vpop.f32.mrb[0].mxu0
        %3046 = vmatprep.mubr.f32.mxu0 0.0
        %3047 = vmatmul.mubr.f32.gmra.mrb[0].mxu0 %v2861
        %v3048 = vpop.f32.mrb[0].mxu0
        %v3049 = vadd.f32 0.0, %v3048
        %v3050 = vpop.f32.mrb[0].mxu0
        %3051 = vmatprep.mubr.f32.mxu0 0.0
        %3052 = vmatmul.mubr.f32.gmra.mrb[0].mxu0 %v2862
        %v3053 = vpop.f32.mrb[0].mxu0
        %v3054 = vadd.f32 0.0, %v3053
        %v3055 = vpop.f32.mrb[0].mxu0
        %3056 = vmatprep.mubr.f32.mxu0 0.0
        %3057 = vmatmul.mubr.f32.gmra.mrb[0].mxu0 %v2863
        %v3058 = vpop.f32.mrb[0].mxu0
        %v3059 = vadd.f32 0.0, %v3058
        %v3060 = vpop.f32.mrb[0].mxu0
        %3061 = vmatprep.mubr.f32.mxu0 0.0
        %3062 = vmatmul.mubr.f32.gmra.mrb[0].mxu0 %v2864
        %v3063 = vpop.f32.mrb[0].mxu0
        %v3064 = vadd.f32 0.0, %v3063
        %v3065 = vpop.f32.mrb[0].mxu0
        %3066 = vmatprep.mubr.f32.mxu0 0.0
        %3067 = vmatmul.mubr.f32.gmra.mrb[0].mxu0 %v2865
        %v3068 = vpop.f32.mrb[0].mxu0
        %v3069 = vadd.f32 0.0, %v3068
        %v3070 = vpop.f32.mrb[0].mxu0
        %3071 = vmatprep.mubr.f32.mxu0 0.0
        %3072 = vmatmul.mubr.f32.gmra.mrb[0].mxu0 %v2866
        %v3073 = vpop.f32.mrb[0].mxu0
        %v3074 = vadd.f32 0.0, %v3073
        %v3075 = vpop.f32.mrb[0].mxu0
        %3076 = vmatprep.mubr.f32.mxu0 0.0
        %3077 = vmatmul.mubr.f32.gmra.mrb[0].mxu0 %v2867
        %v3078 = vpop.f32.mrb[0].mxu0
        %v3079 = vadd.f32 0.0, %v3078
        %v3080 = vpop.f32.mrb[0].mxu0
        %3081 = vmatprep.mubr.f32.mxu0 0.0
        %3082 = vmatmul.mubr.f32.gmra.mrb[0].mxu0 %v2868
        %v3083 = vpop.f32.mrb[0].mxu0
        %v3084 = vadd.f32 0.0, %v3083
        %v3085 = vpop.f32.mrb[0].mxu0
        %3086 = vmatprep.mubr.f32.mxu0 0.0
        %3087 = vmatmul.mubr.f32.gmra.mrb[0].mxu0 %v2869
        %v3088 = vpop.f32.mrb[0].mxu0
        %v3089 = vadd.f32 0.0, %v3088
        %v3090 = vpop.f32.mrb[0].mxu0
        %3091 = vmatprep.mubr.f32.mxu0 0.0
        %3092 = vmatmul.mubr.f32.gmra.mrb[0].mxu0 %v2870
        %v3093 = vpop.f32.mrb[0].mxu0
        %v3094 = vadd.f32 0.0, %v3093
        %v3095 = vpop.f32.mrb[0].mxu0
        %3096 = vmatprep.mubr.f32.mxu0 0.0
        %3097 = vmatmul.mubr.f32.gmra.mrb[0].mxu0 %v2871
        %v3098 = vpop.f32.mrb[0].mxu0
        %v3099 = vadd.f32 0.0, %v3098
        %v3100 = vpop.f32.mrb[0].mxu0
        %3101 = vmatprep.mubr.f32.mxu0 0.0
        %3102 = vmatmul.mubr.f32.gmra.mrb[0].mxu0 %v2872
        %v3103 = vpop.f32.mrb[0].mxu0
        %v3104 = vadd.f32 0.0, %v3103
        %v3105 = vpop.f32.mrb[0].mxu0
        %3106 = vmatprep.mubr.f32.mxu0 0.0
        %3107 = vmatmul.mubr.f32.gmra.mrb[0].mxu0 %v2873
        %v3108 = vpop.f32.mrb[0].mxu0
        %v3109 = vadd.f32 0.0, %v3108
        %v3110 = vpop.f32.mrb[0].mxu0
        %3111 = vmatprep.mubr.f32.mxu0 0.0
        %3112 = vmatmul.mubr.f32.gmra.mrb[0].mxu0 %v2874
        %v3113 = vpop.f32.mrb[0].mxu0
        %v3114 = vadd.f32 0.0, %v3113
        %v3115 = vpop.f32.mrb[0].mxu0
        %3116 = vdwg.mxu0
        %v3117 = vadd.f32 %v2811, %v2959
        %v3118 = vadd.f32 %v2812, %v2964
        %v3119 = vadd.f32 %v2813, %v2969
        %v3120 = vadd.f32 %v2814, %v2974
        %v3121 = vadd.f32 %v2815, %v2979
        %v3122 = vadd.f32 %v2816, %v2984
        %v3123 = vadd.f32 %v2817, %v2989
        %v3124 = vadd.f32 %v2818, %v2994
        %v3125 = vadd.f32 %v2819, %v2999
        %v3126 = vadd.f32 %v2820, %v3004
        %v3127 = vadd.f32 %v2821, %v3009
        %v3128 = vadd.f32 %v2822, %v3014
        %v3129 = vadd.f32 %v2823, %v3019
        %v3130 = vadd.f32 %v2824, %v3024
        %v3131 = vadd.f32 %v2825, %v3029
        %v3132 = vadd.f32 %v2826, %v3034
        %v3133 = vadd.f32 %v2827, %v3039
        %v3134 = vadd.f32 %v2828, %v3044
        %v3135 = vadd.f32 %v2829, %v3049
        %v3136 = vadd.f32 %v2830, %v3054
        %v3137 = vadd.f32 %v2831, %v3059
        %v3138 = vadd.f32 %v2832, %v3064
        %v3139 = vadd.f32 %v2833, %v3069
        %v3140 = vadd.f32 %v2834, %v3074
        %v3141 = vadd.f32 %v2835, %v3079
        %v3142 = vadd.f32 %v2836, %v3084
        %v3143 = vadd.f32 %v2837, %v3089
        %v3144 = vadd.f32 %v2838, %v3094
        %v3145 = vadd.f32 %v2839, %v3099
        %v3146 = vadd.f32 %v2840, %v3104
        %v3147 = vadd.f32 %v2841, %v3109
        %v3148 = vadd.f32 %v2842, %v3114
        %v3149 = vld [vmem:[#allocation2 + $0x20] sm:$0xff]
        %v3150 = vld [vmem:[#allocation2 + $0x28] sm:$0xff]
        %v3151 = vld [vmem:[#allocation2 + $0x30] sm:$0xff]
        %v3152 = vld [vmem:[#allocation2 + $0x38] sm:$0xff]
        %v3153 = vld [vmem:[#allocation2 + $0x40] sm:$0xff]
        %v3154 = vld [vmem:[#allocation2 + $0x48] sm:$0xff]
        %v3155 = vld [vmem:[#allocation2 + $0x50] sm:$0xff]
        %v3156 = vld [vmem:[#allocation2 + $0x58] sm:$0xff]
        %v3157 = vld [vmem:[#allocation2 + $0x60] sm:$0xff]
        %v3158 = vld [vmem:[#allocation2 + $0x68] sm:$0xff]
        %v3159 = vld [vmem:[#allocation2 + $0x70] sm:$0xff]
        %v3160 = vld [vmem:[#allocation2 + $0x78] sm:$0xff]
        %v3161 = vld [vmem:[#allocation2 + $0x80] sm:$0xff]
        %v3162 = vld [vmem:[#allocation2 + $0x88] sm:$0xff]
        %v3163 = vld [vmem:[#allocation2 + $0x90] sm:$0xff]
        %v3164 = vld [vmem:[#allocation2 + $0x98] sm:$0xff]
        %v3165 = vld [vmem:[#allocation2 + $0xa0] sm:$0xff]
        %v3166 = vld [vmem:[#allocation2 + $0xa8] sm:$0xff]
        %v3167 = vld [vmem:[#allocation2 + $0xb0] sm:$0xff]
        %v3168 = vld [vmem:[#allocation2 + $0xb8] sm:$0xff]
        %v3169 = vld [vmem:[#allocation2 + $0xc0] sm:$0xff]
        %v3170 = vld [vmem:[#allocation2 + $0xc8] sm:$0xff]
        %v3171 = vld [vmem:[#allocation2 + $0xd0] sm:$0xff]
        %v3172 = vld [vmem:[#allocation2 + $0xd8] sm:$0xff]
        %v3173 = vld [vmem:[#allocation2 + $0xe0] sm:$0xff]
        %v3174 = vld [vmem:[#allocation2 + $0xe8] sm:$0xff]
        %v3175 = vld [vmem:[#allocation2 + $0xf0] sm:$0xff]
        %v3176 = vld [vmem:[#allocation2 + $0xf8] sm:$0xff]
        %v3177 = vld [vmem:[#allocation2 + $0x100] sm:$0xff]
        %v3178 = vld [vmem:[#allocation2 + $0x108] sm:$0xff]
        %v3179 = vld [vmem:[#allocation2 + $0x110] sm:$0xff]
        %v3180 = vld [vmem:[#allocation2 + $0x118] sm:$0xff]
        %s3181 = scalar_lea.vmem [#allocation7], 768
        %v3182 = vld [vmem:[%s3181] sm:$0xff]
        %v3183 = vld [vmem:[%s3181 + $0x8] sm:$0xff]
        %v3184 = vld [vmem:[%s3181 + $0x10] sm:$0xff]
        %v3185 = vld [vmem:[%s3181 + $0x18] sm:$0xff]
        %v3186 = vld [vmem:[%s3181 + $0x20] sm:$0xff]
        %v3187 = vld [vmem:[%s3181 + $0x28] sm:$0xff]
        %v3188 = vld [vmem:[%s3181 + $0x30] sm:$0xff]
        %v3189 = vld [vmem:[%s3181 + $0x38] sm:$0xff]
        %v3190 = vld [vmem:[%s3181 + $0x40] sm:$0xff]
        %v3191 = vld [vmem:[%s3181 + $0x48] sm:$0xff]
        %v3192 = vld [vmem:[%s3181 + $0x50] sm:$0xff]
        %v3193 = vld [vmem:[%s3181 + $0x58] sm:$0xff]
        %v3194 = vld [vmem:[%s3181 + $0x60] sm:$0xff]
        %v3195 = vld [vmem:[%s3181 + $0x68] sm:$0xff]
        %v3196 = vld [vmem:[%s3181 + $0x70] sm:$0xff]
        %v3197 = vld [vmem:[%s3181 + $0x78] sm:$0xff]
        %3198 = vmatprep.subr.mxu0 0.0
        %3199 = vmatpush1.msra.mxu0 %v3182
        %3200 = vmatprep.subr.mxu0 0.0
        %3201 = vmatpush1.msra.mxu0 %v3183
        %3202 = vmatprep.subr.mxu0 0.0
        %3203 = vmatpush1.msra.mxu0 %v3184
        %3204 = vmatprep.subr.mxu0 0.0
        %3205 = vmatpush1.msra.mxu0 %v3185
        %3206 = vmatprep.subr.mxu0 0.0
        %3207 = vmatpush1.msra.mxu0 %v3186
        %3208 = vmatprep.subr.mxu0 0.0
        %3209 = vmatpush1.msra.mxu0 %v3187
        %3210 = vmatprep.subr.mxu0 0.0
        %3211 = vmatpush1.msra.mxu0 %v3188
        %3212 = vmatprep.subr.mxu0 0.0
        %3213 = vmatpush1.msra.mxu0 %v3189
        %3214 = vmatprep.subr.mxu0 0.0
        %3215 = vmatpush1.msra.mxu0 %v3190
        %3216 = vmatprep.subr.mxu0 0.0
        %3217 = vmatpush1.msra.mxu0 %v3191
        %3218 = vmatprep.subr.mxu0 0.0
        %3219 = vmatpush1.msra.mxu0 %v3192
        %3220 = vmatprep.subr.mxu0 0.0
        %3221 = vmatpush1.msra.mxu0 %v3193
        %3222 = vmatprep.subr.mxu0 0.0
        %3223 = vmatpush1.msra.mxu0 %v3194
        %3224 = vmatprep.subr.mxu0 0.0
        %3225 = vmatpush1.msra.mxu0 %v3195
        %3226 = vmatprep.subr.mxu0 0.0
        %3227 = vmatpush1.msra.mxu0 %v3196
        %3228 = vmatprep.subr.mxu0 0.0
        %3229 = vmatpush1.msra.mxu0 %v3197
        %3230 = vmatprep.subr.mxu0 0.0
        %3231 = vmatpush1.msra.mxu0 0.0
        %3232 = vmatprep.subr.mxu0 0.0
        %3233 = vmatpush1.msra.mxu0 0.0
        %3234 = vmatprep.subr.mxu0 0.0
        %3235 = vmatpush1.msra.mxu0 0.0
        %3236 = vmatprep.subr.mxu0 0.0
        %3237 = vmatpush1.msra.mxu0 0.0
        %3238 = vmatprep.subr.mxu0 0.0
        %3239 = vmatpush1.msra.mxu0 0.0
        %3240 = vmatprep.subr.mxu0 0.0
        %3241 = vmatpush1.msra.mxu0 0.0
        %3242 = vmatprep.subr.mxu0 0.0
        %3243 = vmatpush1.msra.mxu0 0.0
        %3244 = vmatprep.subr.mxu0 0.0
        %3245 = vmatpush1.msra.mxu0 0.0
        %3246 = vmatprep.subr.mxu0 0.0
        %3247 = vmatpush1.msra.mxu0 0.0
        %3248 = vmatprep.subr.mxu0 0.0
        %3249 = vmatpush1.msra.mxu0 0.0
        %3250 = vmatprep.subr.mxu0 0.0
        %3251 = vmatpush1.msra.mxu0 0.0
        %3252 = vmatprep.subr.mxu0 0.0
        %3253 = vmatpush1.msra.mxu0 0.0
        %3254 = vmatprep.subr.mxu0 0.0
        %3255 = vmatpush1.msra.mxu0 0.0
        %3256 = vmatprep.subr.mxu0 0.0
        %3257 = vmatpush1.msra.mxu0 0.0
        %3258 = vmatprep.subr.mxu0 0.0
        %3259 = vmatpush1.msra.mxu0 0.0
        %3260 = vmatprep.subr.mxu0 0.0
        %3261 = vmatpush1.msra.mxu0 0.0
        %3262 = vmatprep.mubr.f32.mxu0 0.0
        %3263 = vmatmul.mubr.f32.gmra.mrb[0].mxu0 %v3149
        %v3264 = vpop.f32.mrb[0].mxu0
        %v3265 = vadd.f32 0.0, %v3264
        %v3266 = vpop.f32.mrb[0].mxu0
        %3267 = vmatprep.mubr.f32.mxu0 0.0
        %3268 = vmatmul.mubr.f32.gmra.mrb[0].mxu0 %v3150
        %v3269 = vpop.f32.mrb[0].mxu0
        %v3270 = vadd.f32 0.0, %v3269
        %v3271 = vpop.f32.mrb[0].mxu0
        %3272 = vmatprep.mubr.f32.mxu0 0.0
        %3273 = vmatmul.mubr.f32.gmra.mrb[0].mxu0 %v3151
        %v3274 = vpop.f32.mrb[0].mxu0
        %v3275 = vadd.f32 0.0, %v3274
        %v3276 = vpop.f32.mrb[0].mxu0
        %3277 = vmatprep.mubr.f32.mxu0 0.0
        %3278 = vmatmul.mubr.f32.gmra.mrb[0].mxu0 %v3152
        %v3279 = vpop.f32.mrb[0].mxu0
        %v3280 = vadd.f32 0.0, %v3279
        %v3281 = vpop.f32.mrb[0].mxu0
        %3282 = vmatprep.mubr.f32.mxu0 0.0
        %3283 = vmatmul.mubr.f32.gmra.mrb[0].mxu0 %v3153
        %v3284 = vpop.f32.mrb[0].mxu0
        %v3285 = vadd.f32 0.0, %v3284
        %v3286 = vpop.f32.mrb[0].mxu0
        %3287 = vmatprep.mubr.f32.mxu0 0.0
        %3288 = vmatmul.mubr.f32.gmra.mrb[0].mxu0 %v3154
        %v3289 = vpop.f32.mrb[0].mxu0
        %v3290 = vadd.f32 0.0, %v3289
        %v3291 = vpop.f32.mrb[0].mxu0
        %3292 = vmatprep.mubr.f32.mxu0 0.0
        %3293 = vmatmul.mubr.f32.gmra.mrb[0].mxu0 %v3155
        %v3294 = vpop.f32.mrb[0].mxu0
        %v3295 = vadd.f32 0.0, %v3294
        %v3296 = vpop.f32.mrb[0].mxu0
        %3297 = vmatprep.mubr.f32.mxu0 0.0
        %3298 = vmatmul.mubr.f32.gmra.mrb[0].mxu0 %v3156
        %v3299 = vpop.f32.mrb[0].mxu0
        %v3300 = vadd.f32 0.0, %v3299
        %v3301 = vpop.f32.mrb[0].mxu0
        %3302 = vmatprep.mubr.f32.mxu0 0.0
        %3303 = vmatmul.mubr.f32.gmra.mrb[0].mxu0 %v3157
        %v3304 = vpop.f32.mrb[0].mxu0
        %v3305 = vadd.f32 0.0, %v3304
        %v3306 = vpop.f32.mrb[0].mxu0
        %3307 = vmatprep.mubr.f32.mxu0 0.0
        %3308 = vmatmul.mubr.f32.gmra.mrb[0].mxu0 %v3158
        %v3309 = vpop.f32.mrb[0].mxu0
        %v3310 = vadd.f32 0.0, %v3309
        %v3311 = vpop.f32.mrb[0].mxu0
        %3312 = vmatprep.mubr.f32.mxu0 0.0
        %3313 = vmatmul.mubr.f32.gmra.mrb[0].mxu0 %v3159
        %v3314 = vpop.f32.mrb[0].mxu0
        %v3315 = vadd.f32 0.0, %v3314
        %v3316 = vpop.f32.mrb[0].mxu0
        %3317 = vmatprep.mubr.f32.mxu0 0.0
        %3318 = vmatmul.mubr.f32.gmra.mrb[0].mxu0 %v3160
        %v3319 = vpop.f32.mrb[0].mxu0
        %v3320 = vadd.f32 0.0, %v3319
        %v3321 = vpop.f32.mrb[0].mxu0
        %3322 = vmatprep.mubr.f32.mxu0 0.0
        %3323 = vmatmul.mubr.f32.gmra.mrb[0].mxu0 %v3161
        %v3324 = vpop.f32.mrb[0].mxu0
        %v3325 = vadd.f32 0.0, %v3324
        %v3326 = vpop.f32.mrb[0].mxu0
        %3327 = vmatprep.mubr.f32.mxu0 0.0
        %3328 = vmatmul.mubr.f32.gmra.mrb[0].mxu0 %v3162
        %v3329 = vpop.f32.mrb[0].mxu0
        %v3330 = vadd.f32 0.0, %v3329
        %v3331 = vpop.f32.mrb[0].mxu0
        %3332 = vmatprep.mubr.f32.mxu0 0.0
        %3333 = vmatmul.mubr.f32.gmra.mrb[0].mxu0 %v3163
        %v3334 = vpop.f32.mrb[0].mxu0
        %v3335 = vadd.f32 0.0, %v3334
        %v3336 = vpop.f32.mrb[0].mxu0
        %3337 = vmatprep.mubr.f32.mxu0 0.0
        %3338 = vmatmul.mubr.f32.gmra.mrb[0].mxu0 %v3164
        %v3339 = vpop.f32.mrb[0].mxu0
        %v3340 = vadd.f32 0.0, %v3339
        %v3341 = vpop.f32.mrb[0].mxu0
        %3342 = vmatprep.mubr.f32.mxu0 0.0
        %3343 = vmatmul.mubr.f32.gmra.mrb[0].mxu0 %v3165
        %v3344 = vpop.f32.mrb[0].mxu0
        %v3345 = vadd.f32 0.0, %v3344
        %v3346 = vpop.f32.mrb[0].mxu0
        %3347 = vmatprep.mubr.f32.mxu0 0.0
        %3348 = vmatmul.mubr.f32.gmra.mrb[0].mxu0 %v3166
        %v3349 = vpop.f32.mrb[0].mxu0
        %v3350 = vadd.f32 0.0, %v3349
        %v3351 = vpop.f32.mrb[0].mxu0
        %3352 = vmatprep.mubr.f32.mxu0 0.0
        %3353 = vmatmul.mubr.f32.gmra.mrb[0].mxu0 %v3167
        %v3354 = vpop.f32.mrb[0].mxu0
        %v3355 = vadd.f32 0.0, %v3354
        %v3356 = vpop.f32.mrb[0].mxu0
        %3357 = vmatprep.mubr.f32.mxu0 0.0
        %3358 = vmatmul.mubr.f32.gmra.mrb[0].mxu0 %v3168
        %v3359 = vpop.f32.mrb[0].mxu0
        %v3360 = vadd.f32 0.0, %v3359
        %v3361 = vpop.f32.mrb[0].mxu0
        %3362 = vmatprep.mubr.f32.mxu0 0.0
        %3363 = vmatmul.mubr.f32.gmra.mrb[0].mxu0 %v3169
        %v3364 = vpop.f32.mrb[0].mxu0
        %v3365 = vadd.f32 0.0, %v3364
        %v3366 = vpop.f32.mrb[0].mxu0
        %3367 = vmatprep.mubr.f32.mxu0 0.0
        %3368 = vmatmul.mubr.f32.gmra.mrb[0].mxu0 %v3170
        %v3369 = vpop.f32.mrb[0].mxu0
        %v3370 = vadd.f32 0.0, %v3369
        %v3371 = vpop.f32.mrb[0].mxu0
        %3372 = vmatprep.mubr.f32.mxu0 0.0
        %3373 = vmatmul.mubr.f32.gmra.mrb[0].mxu0 %v3171
        %v3374 = vpop.f32.mrb[0].mxu0
        %v3375 = vadd.f32 0.0, %v3374
        %v3376 = vpop.f32.mrb[0].mxu0
        %3377 = vmatprep.mubr.f32.mxu0 0.0
        %3378 = vmatmul.mubr.f32.gmra.mrb[0].mxu0 %v3172
        %v3379 = vpop.f32.mrb[0].mxu0
        %v3380 = vadd.f32 0.0, %v3379
        %v3381 = vpop.f32.mrb[0].mxu0
        %3382 = vmatprep.mubr.f32.mxu0 0.0
        %3383 = vmatmul.mubr.f32.gmra.mrb[0].mxu0 %v3173
        %v3384 = vpop.f32.mrb[0].mxu0
        %v3385 = vadd.f32 0.0, %v3384
        %v3386 = vpop.f32.mrb[0].mxu0
        %3387 = vmatprep.mubr.f32.mxu0 0.0
        %3388 = vmatmul.mubr.f32.gmra.mrb[0].mxu0 %v3174
        %v3389 = vpop.f32.mrb[0].mxu0
        %v3390 = vadd.f32 0.0, %v3389
        %v3391 = vpop.f32.mrb[0].mxu0
        %3392 = vmatprep.mubr.f32.mxu0 0.0
        %3393 = vmatmul.mubr.f32.gmra.mrb[0].mxu0 %v3175
        %v3394 = vpop.f32.mrb[0].mxu0
        %v3395 = vadd.f32 0.0, %v3394
        %v3396 = vpop.f32.mrb[0].mxu0
        %3397 = vmatprep.mubr.f32.mxu0 0.0
        %3398 = vmatmul.mubr.f32.gmra.mrb[0].mxu0 %v3176
        %v3399 = vpop.f32.mrb[0].mxu0
        %v3400 = vadd.f32 0.0, %v3399
        %v3401 = vpop.f32.mrb[0].mxu0
        %3402 = vmatprep.mubr.f32.mxu0 0.0
        %3403 = vmatmul.mubr.f32.gmra.mrb[0].mxu0 %v3177
        %v3404 = vpop.f32.mrb[0].mxu0
        %v3405 = vadd.f32 0.0, %v3404
        %v3406 = vpop.f32.mrb[0].mxu0
        %3407 = vmatprep.mubr.f32.mxu0 0.0
        %3408 = vmatmul.mubr.f32.gmra.mrb[0].mxu0 %v3178
        %v3409 = vpop.f32.mrb[0].mxu0
        %v3410 = vadd.f32 0.0, %v3409
        %v3411 = vpop.f32.mrb[0].mxu0
        %3412 = vmatprep.mubr.f32.mxu0 0.0
        %3413 = vmatmul.mubr.f32.gmra.mrb[0].mxu0 %v3179
        %v3414 = vpop.f32.mrb[0].mxu0
        %v3415 = vadd.f32 0.0, %v3414
        %v3416 = vpop.f32.mrb[0].mxu0
        %3417 = vmatprep.mubr.f32.mxu0 0.0
        %3418 = vmatmul.mubr.f32.gmra.mrb[0].mxu0 %v3180
        %v3419 = vpop.f32.mrb[0].mxu0
        %v3420 = vadd.f32 0.0, %v3419
        %v3421 = vpop.f32.mrb[0].mxu0
        %3422 = vdwg.mxu0
        %v3423 = vadd.f32 %v3117, %v3265
        %v3424 = vadd.f32 %v3118, %v3270
        %v3425 = vadd.f32 %v3119, %v3275
        %v3426 = vadd.f32 %v3120, %v3280
        %v3427 = vadd.f32 %v3121, %v3285
        %v3428 = vadd.f32 %v3122, %v3290
        %v3429 = vadd.f32 %v3123, %v3295
        %v3430 = vadd.f32 %v3124, %v3300
        %v3431 = vadd.f32 %v3125, %v3305
        %v3432 = vadd.f32 %v3126, %v3310
        %v3433 = vadd.f32 %v3127, %v3315
        %v3434 = vadd.f32 %v3128, %v3320
        %v3435 = vadd.f32 %v3129, %v3325
        %v3436 = vadd.f32 %v3130, %v3330
        %v3437 = vadd.f32 %v3131, %v3335
        %v3438 = vadd.f32 %v3132, %v3340
        %v3439 = vadd.f32 %v3133, %v3345
        %v3440 = vadd.f32 %v3134, %v3350
        %v3441 = vadd.f32 %v3135, %v3355
        %v3442 = vadd.f32 %v3136, %v3360
        %v3443 = vadd.f32 %v3137, %v3365
        %v3444 = vadd.f32 %v3138, %v3370
        %v3445 = vadd.f32 %v3139, %v3375
        %v3446 = vadd.f32 %v3140, %v3380
        %v3447 = vadd.f32 %v3141, %v3385
        %v3448 = vadd.f32 %v3142, %v3390
        %v3449 = vadd.f32 %v3143, %v3395
        %v3450 = vadd.f32 %v3144, %v3400
        %v3451 = vadd.f32 %v3145, %v3405
        %v3452 = vadd.f32 %v3146, %v3410
        %v3453 = vadd.f32 %v3147, %v3415
        %v3454 = vadd.f32 %v3148, %v3420
        %v3455 = vld [vmem:[%s1312 + $0x20] sm:$0xff]
        %v3456 = vld [vmem:[%s1312 + $0x28] sm:$0xff]
        %v3457 = vld [vmem:[%s1312 + $0x30] sm:$0xff]
        %v3458 = vld [vmem:[%s1312 + $0x38] sm:$0xff]
        %v3459 = vld [vmem:[%s1312 + $0x40] sm:$0xff]
        %v3460 = vld [vmem:[%s1312 + $0x48] sm:$0xff]
        %v3461 = vld [vmem:[%s1312 + $0x50] sm:$0xff]
        %v3462 = vld [vmem:[%s1312 + $0x58] sm:$0xff]
        %v3463 = vld [vmem:[%s1312 + $0x60] sm:$0xff]
        %v3464 = vld [vmem:[%s1312 + $0x68] sm:$0xff]
        %v3465 = vld [vmem:[%s1312 + $0x70] sm:$0xff]
        %v3466 = vld [vmem:[%s1312 + $0x78] sm:$0xff]
        %v3467 = vld [vmem:[%s1312 + $0x80] sm:$0xff]
        %v3468 = vld [vmem:[%s1312 + $0x88] sm:$0xff]
        %v3469 = vld [vmem:[%s1312 + $0x90] sm:$0xff]
        %v3470 = vld [vmem:[%s1312 + $0x98] sm:$0xff]
        %v3471 = vld [vmem:[%s1312 + $0xa0] sm:$0xff]
        %v3472 = vld [vmem:[%s1312 + $0xa8] sm:$0xff]
        %v3473 = vld [vmem:[%s1312 + $0xb0] sm:$0xff]
        %v3474 = vld [vmem:[%s1312 + $0xb8] sm:$0xff]
        %v3475 = vld [vmem:[%s1312 + $0xc0] sm:$0xff]
        %v3476 = vld [vmem:[%s1312 + $0xc8] sm:$0xff]
        %v3477 = vld [vmem:[%s1312 + $0xd0] sm:$0xff]
        %v3478 = vld [vmem:[%s1312 + $0xd8] sm:$0xff]
        %v3479 = vld [vmem:[%s1312 + $0xe0] sm:$0xff]
        %v3480 = vld [vmem:[%s1312 + $0xe8] sm:$0xff]
        %v3481 = vld [vmem:[%s1312 + $0xf0] sm:$0xff]
        %v3482 = vld [vmem:[%s1312 + $0xf8] sm:$0xff]
        %v3483 = vld [vmem:[%s1312 + $0x100] sm:$0xff]
        %v3484 = vld [vmem:[%s1312 + $0x108] sm:$0xff]
        %v3485 = vld [vmem:[%s1312 + $0x110] sm:$0xff]
        %v3486 = vld [vmem:[%s1312 + $0x118] sm:$0xff]
        %s3487 = scalar_lea.vmem [#allocation7], 896
        %v3488 = vld [vmem:[%s3487] sm:$0xff]
        %v3489 = vld [vmem:[%s3487 + $0x8] sm:$0xff]
        %v3490 = vld [vmem:[%s3487 + $0x10] sm:$0xff]
        %v3491 = vld [vmem:[%s3487 + $0x18] sm:$0xff]
        %v3492 = vld [vmem:[%s3487 + $0x20] sm:$0xff]
        %v3493 = vld [vmem:[%s3487 + $0x28] sm:$0xff]
        %v3494 = vld [vmem:[%s3487 + $0x30] sm:$0xff]
        %v3495 = vld [vmem:[%s3487 + $0x38] sm:$0xff]
        %v3496 = vld [vmem:[%s3487 + $0x40] sm:$0xff]
        %v3497 = vld [vmem:[%s3487 + $0x48] sm:$0xff]
        %v3498 = vld [vmem:[%s3487 + $0x50] sm:$0xff]
        %v3499 = vld [vmem:[%s3487 + $0x58] sm:$0xff]
        %v3500 = vld [vmem:[%s3487 + $0x60] sm:$0xff]
        %v3501 = vld [vmem:[%s3487 + $0x68] sm:$0xff]
        %v3502 = vld [vmem:[%s3487 + $0x70] sm:$0xff]
        %v3503 = vld [vmem:[%s3487 + $0x78] sm:$0xff]
        %3504 = vmatprep.subr.mxu0 0.0
        %3505 = vmatpush1.msra.mxu0 %v3488
        %3506 = vmatprep.subr.mxu0 0.0
        %3507 = vmatpush1.msra.mxu0 %v3489
        %3508 = vmatprep.subr.mxu0 0.0
        %3509 = vmatpush1.msra.mxu0 %v3490
        %3510 = vmatprep.subr.mxu0 0.0
        %3511 = vmatpush1.msra.mxu0 %v3491
        %3512 = vmatprep.subr.mxu0 0.0
        %3513 = vmatpush1.msra.mxu0 %v3492
        %3514 = vmatprep.subr.mxu0 0.0
        %3515 = vmatpush1.msra.mxu0 %v3493
        %3516 = vmatprep.subr.mxu0 0.0
        %3517 = vmatpush1.msra.mxu0 %v3494
        %3518 = vmatprep.subr.mxu0 0.0
        %3519 = vmatpush1.msra.mxu0 %v3495
        %3520 = vmatprep.subr.mxu0 0.0
        %3521 = vmatpush1.msra.mxu0 %v3496
        %3522 = vmatprep.subr.mxu0 0.0
        %3523 = vmatpush1.msra.mxu0 %v3497
        %3524 = vmatprep.subr.mxu0 0.0
        %3525 = vmatpush1.msra.mxu0 %v3498
        %3526 = vmatprep.subr.mxu0 0.0
        %3527 = vmatpush1.msra.mxu0 %v3499
        %3528 = vmatprep.subr.mxu0 0.0
        %3529 = vmatpush1.msra.mxu0 %v3500
        %3530 = vmatprep.subr.mxu0 0.0
        %3531 = vmatpush1.msra.mxu0 %v3501
        %3532 = vmatprep.subr.mxu0 0.0
        %3533 = vmatpush1.msra.mxu0 %v3502
        %3534 = vmatprep.subr.mxu0 0.0
        %3535 = vmatpush1.msra.mxu0 %v3503
        %3536 = vmatprep.subr.mxu0 0.0
        %3537 = vmatpush1.msra.mxu0 0.0
        %3538 = vmatprep.subr.mxu0 0.0
        %3539 = vmatpush1.msra.mxu0 0.0
        %3540 = vmatprep.subr.mxu0 0.0
        %3541 = vmatpush1.msra.mxu0 0.0
        %3542 = vmatprep.subr.mxu0 0.0
        %3543 = vmatpush1.msra.mxu0 0.0
        %3544 = vmatprep.subr.mxu0 0.0
        %3545 = vmatpush1.msra.mxu0 0.0
        %3546 = vmatprep.subr.mxu0 0.0
        %3547 = vmatpush1.msra.mxu0 0.0
        %3548 = vmatprep.subr.mxu0 0.0
        %3549 = vmatpush1.msra.mxu0 0.0
        %3550 = vmatprep.subr.mxu0 0.0
        %3551 = vmatpush1.msra.mxu0 0.0
        %3552 = vmatprep.subr.mxu0 0.0
        %3553 = vmatpush1.msra.mxu0 0.0
        %3554 = vmatprep.subr.mxu0 0.0
        %3555 = vmatpush1.msra.mxu0 0.0
        %3556 = vmatprep.subr.mxu0 0.0
        %3557 = vmatpush1.msra.mxu0 0.0
        %3558 = vmatprep.subr.mxu0 0.0
        %3559 = vmatpush1.msra.mxu0 0.0
        %3560 = vmatprep.subr.mxu0 0.0
        %3561 = vmatpush1.msra.mxu0 0.0
        %3562 = vmatprep.subr.mxu0 0.0
        %3563 = vmatpush1.msra.mxu0 0.0
        %3564 = vmatprep.subr.mxu0 0.0
        %3565 = vmatpush1.msra.mxu0 0.0
        %3566 = vmatprep.subr.mxu0 0.0
        %3567 = vmatpush1.msra.mxu0 0.0
        %3568 = vmatprep.mubr.f32.mxu0 0.0
        %3569 = vmatmul.mubr.f32.gmra.mrb[0].mxu0 %v3455
        %v3570 = vpop.f32.mrb[0].mxu0
        %v3571 = vadd.f32 0.0, %v3570
        %v3572 = vpop.f32.mrb[0].mxu0
        %3573 = vmatprep.mubr.f32.mxu0 0.0
        %3574 = vmatmul.mubr.f32.gmra.mrb[0].mxu0 %v3456
        %v3575 = vpop.f32.mrb[0].mxu0
        %v3576 = vadd.f32 0.0, %v3575
        %v3577 = vpop.f32.mrb[0].mxu0
        %3578 = vmatprep.mubr.f32.mxu0 0.0
        %3579 = vmatmul.mubr.f32.gmra.mrb[0].mxu0 %v3457
        %v3580 = vpop.f32.mrb[0].mxu0
        %v3581 = vadd.f32 0.0, %v3580
        %v3582 = vpop.f32.mrb[0].mxu0
        %3583 = vmatprep.mubr.f32.mxu0 0.0
        %3584 = vmatmul.mubr.f32.gmra.mrb[0].mxu0 %v3458
        %v3585 = vpop.f32.mrb[0].mxu0
        %v3586 = vadd.f32 0.0, %v3585
        %v3587 = vpop.f32.mrb[0].mxu0
        %3588 = vmatprep.mubr.f32.mxu0 0.0
        %3589 = vmatmul.mubr.f32.gmra.mrb[0].mxu0 %v3459
        %v3590 = vpop.f32.mrb[0].mxu0
        %v3591 = vadd.f32 0.0, %v3590
        %v3592 = vpop.f32.mrb[0].mxu0
        %3593 = vmatprep.mubr.f32.mxu0 0.0
        %3594 = vmatmul.mubr.f32.gmra.mrb[0].mxu0 %v3460
        %v3595 = vpop.f32.mrb[0].mxu0
        %v3596 = vadd.f32 0.0, %v3595
        %v3597 = vpop.f32.mrb[0].mxu0
        %3598 = vmatprep.mubr.f32.mxu0 0.0
        %3599 = vmatmul.mubr.f32.gmra.mrb[0].mxu0 %v3461
        %v3600 = vpop.f32.mrb[0].mxu0
        %v3601 = vadd.f32 0.0, %v3600
        %v3602 = vpop.f32.mrb[0].mxu0
        %3603 = vmatprep.mubr.f32.mxu0 0.0
        %3604 = vmatmul.mubr.f32.gmra.mrb[0].mxu0 %v3462
        %v3605 = vpop.f32.mrb[0].mxu0
        %v3606 = vadd.f32 0.0, %v3605
        %v3607 = vpop.f32.mrb[0].mxu0
        %3608 = vmatprep.mubr.f32.mxu0 0.0
        %3609 = vmatmul.mubr.f32.gmra.mrb[0].mxu0 %v3463
        %v3610 = vpop.f32.mrb[0].mxu0
        %v3611 = vadd.f32 0.0, %v3610
        %v3612 = vpop.f32.mrb[0].mxu0
        %3613 = vmatprep.mubr.f32.mxu0 0.0
        %3614 = vmatmul.mubr.f32.gmra.mrb[0].mxu0 %v3464
        %v3615 = vpop.f32.mrb[0].mxu0
        %v3616 = vadd.f32 0.0, %v3615
        %v3617 = vpop.f32.mrb[0].mxu0
        %3618 = vmatprep.mubr.f32.mxu0 0.0
        %3619 = vmatmul.mubr.f32.gmra.mrb[0].mxu0 %v3465
        %v3620 = vpop.f32.mrb[0].mxu0
        %v3621 = vadd.f32 0.0, %v3620
        %v3622 = vpop.f32.mrb[0].mxu0
        %3623 = vmatprep.mubr.f32.mxu0 0.0
        %3624 = vmatmul.mubr.f32.gmra.mrb[0].mxu0 %v3466
        %v3625 = vpop.f32.mrb[0].mxu0
        %v3626 = vadd.f32 0.0, %v3625
        %v3627 = vpop.f32.mrb[0].mxu0
        %3628 = vmatprep.mubr.f32.mxu0 0.0
        %3629 = vmatmul.mubr.f32.gmra.mrb[0].mxu0 %v3467
        %v3630 = vpop.f32.mrb[0].mxu0
        %v3631 = vadd.f32 0.0, %v3630
        %v3632 = vpop.f32.mrb[0].mxu0
        %3633 = vmatprep.mubr.f32.mxu0 0.0
        %3634 = vmatmul.mubr.f32.gmra.mrb[0].mxu0 %v3468
        %v3635 = vpop.f32.mrb[0].mxu0
        %v3636 = vadd.f32 0.0, %v3635
        %v3637 = vpop.f32.mrb[0].mxu0
        %3638 = vmatprep.mubr.f32.mxu0 0.0
        %3639 = vmatmul.mubr.f32.gmra.mrb[0].mxu0 %v3469
        %v3640 = vpop.f32.mrb[0].mxu0
        %v3641 = vadd.f32 0.0, %v3640
        %v3642 = vpop.f32.mrb[0].mxu0
        %3643 = vmatprep.mubr.f32.mxu0 0.0
        %3644 = vmatmul.mubr.f32.gmra.mrb[0].mxu0 %v3470
        %v3645 = vpop.f32.mrb[0].mxu0
        %v3646 = vadd.f32 0.0, %v3645
        %v3647 = vpop.f32.mrb[0].mxu0
        %3648 = vmatprep.mubr.f32.mxu0 0.0
        %3649 = vmatmul.mubr.f32.gmra.mrb[0].mxu0 %v3471
        %v3650 = vpop.f32.mrb[0].mxu0
        %v3651 = vadd.f32 0.0, %v3650
        %v3652 = vpop.f32.mrb[0].mxu0
        %3653 = vmatprep.mubr.f32.mxu0 0.0
        %3654 = vmatmul.mubr.f32.gmra.mrb[0].mxu0 %v3472
        %v3655 = vpop.f32.mrb[0].mxu0
        %v3656 = vadd.f32 0.0, %v3655
        %v3657 = vpop.f32.mrb[0].mxu0
        %3658 = vmatprep.mubr.f32.mxu0 0.0
        %3659 = vmatmul.mubr.f32.gmra.mrb[0].mxu0 %v3473
        %v3660 = vpop.f32.mrb[0].mxu0
        %v3661 = vadd.f32 0.0, %v3660
        %v3662 = vpop.f32.mrb[0].mxu0
        %3663 = vmatprep.mubr.f32.mxu0 0.0
        %3664 = vmatmul.mubr.f32.gmra.mrb[0].mxu0 %v3474
        %v3665 = vpop.f32.mrb[0].mxu0
        %v3666 = vadd.f32 0.0, %v3665
        %v3667 = vpop.f32.mrb[0].mxu0
        %3668 = vmatprep.mubr.f32.mxu0 0.0
        %3669 = vmatmul.mubr.f32.gmra.mrb[0].mxu0 %v3475
        %v3670 = vpop.f32.mrb[0].mxu0
        %v3671 = vadd.f32 0.0, %v3670
        %v3672 = vpop.f32.mrb[0].mxu0
        %3673 = vmatprep.mubr.f32.mxu0 0.0
        %3674 = vmatmul.mubr.f32.gmra.mrb[0].mxu0 %v3476
        %v3675 = vpop.f32.mrb[0].mxu0
        %v3676 = vadd.f32 0.0, %v3675
        %v3677 = vpop.f32.mrb[0].mxu0
        %3678 = vmatprep.mubr.f32.mxu0 0.0
        %3679 = vmatmul.mubr.f32.gmra.mrb[0].mxu0 %v3477
        %v3680 = vpop.f32.mrb[0].mxu0
        %v3681 = vadd.f32 0.0, %v3680
        %v3682 = vpop.f32.mrb[0].mxu0
        %3683 = vmatprep.mubr.f32.mxu0 0.0
        %3684 = vmatmul.mubr.f32.gmra.mrb[0].mxu0 %v3478
        %v3685 = vpop.f32.mrb[0].mxu0
        %v3686 = vadd.f32 0.0, %v3685
        %v3687 = vpop.f32.mrb[0].mxu0
        %3688 = vmatprep.mubr.f32.mxu0 0.0
        %3689 = vmatmul.mubr.f32.gmra.mrb[0].mxu0 %v3479
        %v3690 = vpop.f32.mrb[0].mxu0
        %v3691 = vadd.f32 0.0, %v3690
        %v3692 = vpop.f32.mrb[0].mxu0
        %3693 = vmatprep.mubr.f32.mxu0 0.0
        %3694 = vmatmul.mubr.f32.gmra.mrb[0].mxu0 %v3480
        %v3695 = vpop.f32.mrb[0].mxu0
        %v3696 = vadd.f32 0.0, %v3695
        %v3697 = vpop.f32.mrb[0].mxu0
        %3698 = vmatprep.mubr.f32.mxu0 0.0
        %3699 = vmatmul.mubr.f32.gmra.mrb[0].mxu0 %v3481
        %v3700 = vpop.f32.mrb[0].mxu0
        %v3701 = vadd.f32 0.0, %v3700
        %v3702 = vpop.f32.mrb[0].mxu0
        %3703 = vmatprep.mubr.f32.mxu0 0.0
        %3704 = vmatmul.mubr.f32.gmra.mrb[0].mxu0 %v3482
        %v3705 = vpop.f32.mrb[0].mxu0
        %v3706 = vadd.f32 0.0, %v3705
        %v3707 = vpop.f32.mrb[0].mxu0
        %3708 = vmatprep.mubr.f32.mxu0 0.0
        %3709 = vmatmul.mubr.f32.gmra.mrb[0].mxu0 %v3483
        %v3710 = vpop.f32.mrb[0].mxu0
        %v3711 = vadd.f32 0.0, %v3710
        %v3712 = vpop.f32.mrb[0].mxu0
        %3713 = vmatprep.mubr.f32.mxu0 0.0
        %3714 = vmatmul.mubr.f32.gmra.mrb[0].mxu0 %v3484
        %v3715 = vpop.f32.mrb[0].mxu0
        %v3716 = vadd.f32 0.0, %v3715
        %v3717 = vpop.f32.mrb[0].mxu0
        %3718 = vmatprep.mubr.f32.mxu0 0.0
        %3719 = vmatmul.mubr.f32.gmra.mrb[0].mxu0 %v3485
        %v3720 = vpop.f32.mrb[0].mxu0
        %v3721 = vadd.f32 0.0, %v3720
        %v3722 = vpop.f32.mrb[0].mxu0
        %3723 = vmatprep.mubr.f32.mxu0 0.0
        %3724 = vmatmul.mubr.f32.gmra.mrb[0].mxu0 %v3486
        %v3725 = vpop.f32.mrb[0].mxu0
        %v3726 = vadd.f32 0.0, %v3725
        %v3727 = vpop.f32.mrb[0].mxu0
        %3728 = vdwg.mxu0
        %v3729 = vadd.f32 %v3423, %v3571
        %v3730 = vadd.f32 %v3424, %v3576
        %v3731 = vadd.f32 %v3425, %v3581
        %v3732 = vadd.f32 %v3426, %v3586
        %v3733 = vadd.f32 %v3427, %v3591
        %v3734 = vadd.f32 %v3428, %v3596
        %v3735 = vadd.f32 %v3429, %v3601
        %v3736 = vadd.f32 %v3430, %v3606
        %v3737 = vadd.f32 %v3431, %v3611
        %v3738 = vadd.f32 %v3432, %v3616
        %v3739 = vadd.f32 %v3433, %v3621
        %v3740 = vadd.f32 %v3434, %v3626
        %v3741 = vadd.f32 %v3435, %v3631
        %v3742 = vadd.f32 %v3436, %v3636
        %v3743 = vadd.f32 %v3437, %v3641
        %v3744 = vadd.f32 %v3438, %v3646
        %v3745 = vadd.f32 %v3439, %v3651
        %v3746 = vadd.f32 %v3440, %v3656
        %v3747 = vadd.f32 %v3441, %v3661
        %v3748 = vadd.f32 %v3442, %v3666
        %v3749 = vadd.f32 %v3443, %v3671
        %v3750 = vadd.f32 %v3444, %v3676
        %v3751 = vadd.f32 %v3445, %v3681
        %v3752 = vadd.f32 %v3446, %v3686
        %v3753 = vadd.f32 %v3447, %v3691
        %v3754 = vadd.f32 %v3448, %v3696
        %v3755 = vadd.f32 %v3449, %v3701
        %v3756 = vadd.f32 %v3450, %v3706
        %v3757 = vadd.f32 %v3451, %v3711
        %v3758 = vadd.f32 %v3452, %v3716
        %v3759 = vadd.f32 %v3453, %v3721
        %v3760 = vadd.f32 %v3454, %v3726
        %v3761 = vld [vmem:[%s1345 + $0x20] sm:$0xff]
        %v3762 = vld [vmem:[%s1345 + $0x28] sm:$0xff]
        %v3763 = vld [vmem:[%s1345 + $0x30] sm:$0xff]
        %v3764 = vld [vmem:[%s1345 + $0x38] sm:$0xff]
        %v3765 = vld [vmem:[%s1345 + $0x40] sm:$0xff]
        %v3766 = vld [vmem:[%s1345 + $0x48] sm:$0xff]
        %v3767 = vld [vmem:[%s1345 + $0x50] sm:$0xff]
        %v3768 = vld [vmem:[%s1345 + $0x58] sm:$0xff]
        %v3769 = vld [vmem:[%s1345 + $0x60] sm:$0xff]
        %v3770 = vld [vmem:[%s1345 + $0x68] sm:$0xff]
        %v3771 = vld [vmem:[%s1345 + $0x70] sm:$0xff]
        %v3772 = vld [vmem:[%s1345 + $0x78] sm:$0xff]
        %v3773 = vld [vmem:[%s1345 + $0x80] sm:$0xff]
        %v3774 = vld [vmem:[%s1345 + $0x88] sm:$0xff]
        %v3775 = vld [vmem:[%s1345 + $0x90] sm:$0xff]
        %v3776 = vld [vmem:[%s1345 + $0x98] sm:$0xff]
        %v3777 = vld [vmem:[%s1345 + $0xa0] sm:$0xff]
        %v3778 = vld [vmem:[%s1345 + $0xa8] sm:$0xff]
        %v3779 = vld [vmem:[%s1345 + $0xb0] sm:$0xff]
        %v3780 = vld [vmem:[%s1345 + $0xb8] sm:$0xff]
        %v3781 = vld [vmem:[%s1345 + $0xc0] sm:$0xff]
        %v3782 = vld [vmem:[%s1345 + $0xc8] sm:$0xff]
        %v3783 = vld [vmem:[%s1345 + $0xd0] sm:$0xff]
        %v3784 = vld [vmem:[%s1345 + $0xd8] sm:$0xff]
        %v3785 = vld [vmem:[%s1345 + $0xe0] sm:$0xff]
        %v3786 = vld [vmem:[%s1345 + $0xe8] sm:$0xff]
        %v3787 = vld [vmem:[%s1345 + $0xf0] sm:$0xff]
        %v3788 = vld [vmem:[%s1345 + $0xf8] sm:$0xff]
        %v3789 = vld [vmem:[%s1345 + $0x100] sm:$0xff]
        %v3790 = vld [vmem:[%s1345 + $0x108] sm:$0xff]
        %v3791 = vld [vmem:[%s1345 + $0x110] sm:$0xff]
        %v3792 = vld [vmem:[%s1345 + $0x118] sm:$0xff]
        %s3793 = scalar_lea.vmem [#allocation7], 1024
        %v3794 = vld [vmem:[%s3793] sm:$0xff]
        %v3795 = vld [vmem:[%s3793 + $0x8] sm:$0xff]
        %v3796 = vld [vmem:[%s3793 + $0x10] sm:$0xff]
        %v3797 = vld [vmem:[%s3793 + $0x18] sm:$0xff]
        %v3798 = vld [vmem:[%s3793 + $0x20] sm:$0xff]
        %v3799 = vld [vmem:[%s3793 + $0x28] sm:$0xff]
        %v3800 = vld [vmem:[%s3793 + $0x30] sm:$0xff]
        %v3801 = vld [vmem:[%s3793 + $0x38] sm:$0xff]
        %v3802 = vld [vmem:[%s3793 + $0x40] sm:$0xff]
        %v3803 = vld [vmem:[%s3793 + $0x48] sm:$0xff]
        %v3804 = vld [vmem:[%s3793 + $0x50] sm:$0xff]
        %v3805 = vld [vmem:[%s3793 + $0x58] sm:$0xff]
        %v3806 = vld [vmem:[%s3793 + $0x60] sm:$0xff]
        %v3807 = vld [vmem:[%s3793 + $0x68] sm:$0xff]
        %v3808 = vld [vmem:[%s3793 + $0x70] sm:$0xff]
        %v3809 = vld [vmem:[%s3793 + $0x78] sm:$0xff]
        %3810 = vmatprep.subr.mxu0 0.0
        %3811 = vmatpush1.msra.mxu0 %v3794
        %3812 = vmatprep.subr.mxu0 0.0
        %3813 = vmatpush1.msra.mxu0 %v3795
        %3814 = vmatprep.subr.mxu0 0.0
        %3815 = vmatpush1.msra.mxu0 %v3796
        %3816 = vmatprep.subr.mxu0 0.0
        %3817 = vmatpush1.msra.mxu0 %v3797
        %3818 = vmatprep.subr.mxu0 0.0
        %3819 = vmatpush1.msra.mxu0 %v3798
        %3820 = vmatprep.subr.mxu0 0.0
        %3821 = vmatpush1.msra.mxu0 %v3799
        %3822 = vmatprep.subr.mxu0 0.0
        %3823 = vmatpush1.msra.mxu0 %v3800
        %3824 = vmatprep.subr.mxu0 0.0
        %3825 = vmatpush1.msra.mxu0 %v3801
        %3826 = vmatprep.subr.mxu0 0.0
        %3827 = vmatpush1.msra.mxu0 %v3802
        %3828 = vmatprep.subr.mxu0 0.0
        %3829 = vmatpush1.msra.mxu0 %v3803
        %3830 = vmatprep.subr.mxu0 0.0
        %3831 = vmatpush1.msra.mxu0 %v3804
        %3832 = vmatprep.subr.mxu0 0.0
        %3833 = vmatpush1.msra.mxu0 %v3805
        %3834 = vmatprep.subr.mxu0 0.0
        %3835 = vmatpush1.msra.mxu0 %v3806
        %3836 = vmatprep.subr.mxu0 0.0
        %3837 = vmatpush1.msra.mxu0 %v3807
        %3838 = vmatprep.subr.mxu0 0.0
        %3839 = vmatpush1.msra.mxu0 %v3808
        %3840 = vmatprep.subr.mxu0 0.0
        %3841 = vmatpush1.msra.mxu0 %v3809
        %3842 = vmatprep.subr.mxu0 0.0
        %3843 = vmatpush1.msra.mxu0 0.0
        %3844 = vmatprep.subr.mxu0 0.0
        %3845 = vmatpush1.msra.mxu0 0.0
        %3846 = vmatprep.subr.mxu0 0.0
        %3847 = vmatpush1.msra.mxu0 0.0
        %3848 = vmatprep.subr.mxu0 0.0
        %3849 = vmatpush1.msra.mxu0 0.0
        %3850 = vmatprep.subr.mxu0 0.0
        %3851 = vmatpush1.msra.mxu0 0.0
        %3852 = vmatprep.subr.mxu0 0.0
        %3853 = vmatpush1.msra.mxu0 0.0
        %3854 = vmatprep.subr.mxu0 0.0
        %3855 = vmatpush1.msra.mxu0 0.0
        %3856 = vmatprep.subr.mxu0 0.0
        %3857 = vmatpush1.msra.mxu0 0.0
        %3858 = vmatprep.subr.mxu0 0.0
        %3859 = vmatpush1.msra.mxu0 0.0
        %3860 = vmatprep.subr.mxu0 0.0
        %3861 = vmatpush1.msra.mxu0 0.0
        %3862 = vmatprep.subr.mxu0 0.0
        %3863 = vmatpush1.msra.mxu0 0.0
        %3864 = vmatprep.subr.mxu0 0.0
        %3865 = vmatpush1.msra.mxu0 0.0
        %3866 = vmatprep.subr.mxu0 0.0
        %3867 = vmatpush1.msra.mxu0 0.0
        %3868 = vmatprep.subr.mxu0 0.0
        %3869 = vmatpush1.msra.mxu0 0.0
        %3870 = vmatprep.subr.mxu0 0.0
        %3871 = vmatpush1.msra.mxu0 0.0
        %3872 = vmatprep.subr.mxu0 0.0
        %3873 = vmatpush1.msra.mxu0 0.0
        %3874 = vmatprep.mubr.f32.mxu0 0.0
        %3875 = vmatmul.mubr.f32.gmra.mrb[0].mxu0 %v3761
        %v3876 = vpop.f32.mrb[0].mxu0
        %v3877 = vadd.f32 0.0, %v3876
        %v3878 = vpop.f32.mrb[0].mxu0
        %3879 = vmatprep.mubr.f32.mxu0 0.0
        %3880 = vmatmul.mubr.f32.gmra.mrb[0].mxu0 %v3762
        %v3881 = vpop.f32.mrb[0].mxu0
        %v3882 = vadd.f32 0.0, %v3881
        %v3883 = vpop.f32.mrb[0].mxu0
        %3884 = vmatprep.mubr.f32.mxu0 0.0
        %3885 = vmatmul.mubr.f32.gmra.mrb[0].mxu0 %v3763
        %v3886 = vpop.f32.mrb[0].mxu0
        %v3887 = vadd.f32 0.0, %v3886
        %v3888 = vpop.f32.mrb[0].mxu0
        %3889 = vmatprep.mubr.f32.mxu0 0.0
        %3890 = vmatmul.mubr.f32.gmra.mrb[0].mxu0 %v3764
        %v3891 = vpop.f32.mrb[0].mxu0
        %v3892 = vadd.f32 0.0, %v3891
        %v3893 = vpop.f32.mrb[0].mxu0
        %3894 = vmatprep.mubr.f32.mxu0 0.0
        %3895 = vmatmul.mubr.f32.gmra.mrb[0].mxu0 %v3765
        %v3896 = vpop.f32.mrb[0].mxu0
        %v3897 = vadd.f32 0.0, %v3896
        %v3898 = vpop.f32.mrb[0].mxu0
        %3899 = vmatprep.mubr.f32.mxu0 0.0
        %3900 = vmatmul.mubr.f32.gmra.mrb[0].mxu0 %v3766
        %v3901 = vpop.f32.mrb[0].mxu0
        %v3902 = vadd.f32 0.0, %v3901
        %v3903 = vpop.f32.mrb[0].mxu0
        %3904 = vmatprep.mubr.f32.mxu0 0.0
        %3905 = vmatmul.mubr.f32.gmra.mrb[0].mxu0 %v3767
        %v3906 = vpop.f32.mrb[0].mxu0
        %v3907 = vadd.f32 0.0, %v3906
        %v3908 = vpop.f32.mrb[0].mxu0
        %3909 = vmatprep.mubr.f32.mxu0 0.0
        %3910 = vmatmul.mubr.f32.gmra.mrb[0].mxu0 %v3768
        %v3911 = vpop.f32.mrb[0].mxu0
        %v3912 = vadd.f32 0.0, %v3911
        %v3913 = vpop.f32.mrb[0].mxu0
        %3914 = vmatprep.mubr.f32.mxu0 0.0
        %3915 = vmatmul.mubr.f32.gmra.mrb[0].mxu0 %v3769
        %v3916 = vpop.f32.mrb[0].mxu0
        %v3917 = vadd.f32 0.0, %v3916
        %v3918 = vpop.f32.mrb[0].mxu0
        %3919 = vmatprep.mubr.f32.mxu0 0.0
        %3920 = vmatmul.mubr.f32.gmra.mrb[0].mxu0 %v3770
        %v3921 = vpop.f32.mrb[0].mxu0
        %v3922 = vadd.f32 0.0, %v3921
        %v3923 = vpop.f32.mrb[0].mxu0
        %3924 = vmatprep.mubr.f32.mxu0 0.0
        %3925 = vmatmul.mubr.f32.gmra.mrb[0].mxu0 %v3771
        %v3926 = vpop.f32.mrb[0].mxu0
        %v3927 = vadd.f32 0.0, %v3926
        %v3928 = vpop.f32.mrb[0].mxu0
        %3929 = vmatprep.mubr.f32.mxu0 0.0
        %3930 = vmatmul.mubr.f32.gmra.mrb[0].mxu0 %v3772
        %v3931 = vpop.f32.mrb[0].mxu0
        %v3932 = vadd.f32 0.0, %v3931
        %v3933 = vpop.f32.mrb[0].mxu0
        %3934 = vmatprep.mubr.f32.mxu0 0.0
        %3935 = vmatmul.mubr.f32.gmra.mrb[0].mxu0 %v3773
        %v3936 = vpop.f32.mrb[0].mxu0
        %v3937 = vadd.f32 0.0, %v3936
        %v3938 = vpop.f32.mrb[0].mxu0
        %3939 = vmatprep.mubr.f32.mxu0 0.0
        %3940 = vmatmul.mubr.f32.gmra.mrb[0].mxu0 %v3774
        %v3941 = vpop.f32.mrb[0].mxu0
        %v3942 = vadd.f32 0.0, %v3941
        %v3943 = vpop.f32.mrb[0].mxu0
        %3944 = vmatprep.mubr.f32.mxu0 0.0
        %3945 = vmatmul.mubr.f32.gmra.mrb[0].mxu0 %v3775
        %v3946 = vpop.f32.mrb[0].mxu0
        %v3947 = vadd.f32 0.0, %v3946
        %v3948 = vpop.f32.mrb[0].mxu0
        %3949 = vmatprep.mubr.f32.mxu0 0.0
        %3950 = vmatmul.mubr.f32.gmra.mrb[0].mxu0 %v3776
        %v3951 = vpop.f32.mrb[0].mxu0
        %v3952 = vadd.f32 0.0, %v3951
        %v3953 = vpop.f32.mrb[0].mxu0
        %3954 = vmatprep.mubr.f32.mxu0 0.0
        %3955 = vmatmul.mubr.f32.gmra.mrb[0].mxu0 %v3777
        %v3956 = vpop.f32.mrb[0].mxu0
        %v3957 = vadd.f32 0.0, %v3956
        %v3958 = vpop.f32.mrb[0].mxu0
        %3959 = vmatprep.mubr.f32.mxu0 0.0
        %3960 = vmatmul.mubr.f32.gmra.mrb[0].mxu0 %v3778
        %v3961 = vpop.f32.mrb[0].mxu0
        %v3962 = vadd.f32 0.0, %v3961
        %v3963 = vpop.f32.mrb[0].mxu0
        %3964 = vmatprep.mubr.f32.mxu0 0.0
        %3965 = vmatmul.mubr.f32.gmra.mrb[0].mxu0 %v3779
        %v3966 = vpop.f32.mrb[0].mxu0
        %v3967 = vadd.f32 0.0, %v3966
        %v3968 = vpop.f32.mrb[0].mxu0
        %3969 = vmatprep.mubr.f32.mxu0 0.0
        %3970 = vmatmul.mubr.f32.gmra.mrb[0].mxu0 %v3780
        %v3971 = vpop.f32.mrb[0].mxu0
        %v3972 = vadd.f32 0.0, %v3971
        %v3973 = vpop.f32.mrb[0].mxu0
        %3974 = vmatprep.mubr.f32.mxu0 0.0
        %3975 = vmatmul.mubr.f32.gmra.mrb[0].mxu0 %v3781
        %v3976 = vpop.f32.mrb[0].mxu0
        %v3977 = vadd.f32 0.0, %v3976
        %v3978 = vpop.f32.mrb[0].mxu0
        %3979 = vmatprep.mubr.f32.mxu0 0.0
        %3980 = vmatmul.mubr.f32.gmra.mrb[0].mxu0 %v3782
        %v3981 = vpop.f32.mrb[0].mxu0
        %v3982 = vadd.f32 0.0, %v3981
        %v3983 = vpop.f32.mrb[0].mxu0
        %3984 = vmatprep.mubr.f32.mxu0 0.0
        %3985 = vmatmul.mubr.f32.gmra.mrb[0].mxu0 %v3783
        %v3986 = vpop.f32.mrb[0].mxu0
        %v3987 = vadd.f32 0.0, %v3986
        %v3988 = vpop.f32.mrb[0].mxu0
        %3989 = vmatprep.mubr.f32.mxu0 0.0
        %3990 = vmatmul.mubr.f32.gmra.mrb[0].mxu0 %v3784
        %v3991 = vpop.f32.mrb[0].mxu0
        %v3992 = vadd.f32 0.0, %v3991
        %v3993 = vpop.f32.mrb[0].mxu0
        %3994 = vmatprep.mubr.f32.mxu0 0.0
        %3995 = vmatmul.mubr.f32.gmra.mrb[0].mxu0 %v3785
        %v3996 = vpop.f32.mrb[0].mxu0
        %v3997 = vadd.f32 0.0, %v3996
        %v3998 = vpop.f32.mrb[0].mxu0
        %3999 = vmatprep.mubr.f32.mxu0 0.0
        %4000 = vmatmul.mubr.f32.gmra.mrb[0].mxu0 %v3786
        %v4001 = vpop.f32.mrb[0].mxu0
        %v4002 = vadd.f32 0.0, %v4001
        %v4003 = vpop.f32.mrb[0].mxu0
        %4004 = vmatprep.mubr.f32.mxu0 0.0
        %4005 = vmatmul.mubr.f32.gmra.mrb[0].mxu0 %v3787
        %v4006 = vpop.f32.mrb[0].mxu0
        %v4007 = vadd.f32 0.0, %v4006
        %v4008 = vpop.f32.mrb[0].mxu0
        %4009 = vmatprep.mubr.f32.mxu0 0.0
        %4010 = vmatmul.mubr.f32.gmra.mrb[0].mxu0 %v3788
        %v4011 = vpop.f32.mrb[0].mxu0
        %v4012 = vadd.f32 0.0, %v4011
        %v4013 = vpop.f32.mrb[0].mxu0
        %4014 = vmatprep.mubr.f32.mxu0 0.0
        %4015 = vmatmul.mubr.f32.gmra.mrb[0].mxu0 %v3789
        %v4016 = vpop.f32.mrb[0].mxu0
        %v4017 = vadd.f32 0.0, %v4016
        %v4018 = vpop.f32.mrb[0].mxu0
        %4019 = vmatprep.mubr.f32.mxu0 0.0
        %4020 = vmatmul.mubr.f32.gmra.mrb[0].mxu0 %v3790
        %v4021 = vpop.f32.mrb[0].mxu0
        %v4022 = vadd.f32 0.0, %v4021
        %v4023 = vpop.f32.mrb[0].mxu0
        %4024 = vmatprep.mubr.f32.mxu0 0.0
        %4025 = vmatmul.mubr.f32.gmra.mrb[0].mxu0 %v3791
        %v4026 = vpop.f32.mrb[0].mxu0
        %v4027 = vadd.f32 0.0, %v4026
        %v4028 = vpop.f32.mrb[0].mxu0
        %4029 = vmatprep.mubr.f32.mxu0 0.0
        %4030 = vmatmul.mubr.f32.gmra.mrb[0].mxu0 %v3792
        %v4031 = vpop.f32.mrb[0].mxu0
        %v4032 = vadd.f32 0.0, %v4031
        %v4033 = vpop.f32.mrb[0].mxu0
        %4034 = vdwg.mxu0
        %v4035 = vadd.f32 %v3729, %v3877
        %v4036 = vadd.f32 %v3730, %v3882
        %v4037 = vadd.f32 %v3731, %v3887
        %v4038 = vadd.f32 %v3732, %v3892
        %v4039 = vadd.f32 %v3733, %v3897
        %v4040 = vadd.f32 %v3734, %v3902
        %v4041 = vadd.f32 %v3735, %v3907
        %v4042 = vadd.f32 %v3736, %v3912
        %v4043 = vadd.f32 %v3737, %v3917
        %v4044 = vadd.f32 %v3738, %v3922
        %v4045 = vadd.f32 %v3739, %v3927
        %v4046 = vadd.f32 %v3740, %v3932
        %v4047 = vadd.f32 %v3741, %v3937
        %v4048 = vadd.f32 %v3742, %v3942
        %v4049 = vadd.f32 %v3743, %v3947
        %v4050 = vadd.f32 %v3744, %v3952
        %v4051 = vadd.f32 %v3745, %v3957
        %v4052 = vadd.f32 %v3746, %v3962
        %v4053 = vadd.f32 %v3747, %v3967
        %v4054 = vadd.f32 %v3748, %v3972
        %v4055 = vadd.f32 %v3749, %v3977
        %v4056 = vadd.f32 %v3750, %v3982
        %v4057 = vadd.f32 %v3751, %v3987
        %v4058 = vadd.f32 %v3752, %v3992
        %v4059 = vadd.f32 %v3753, %v3997
        %v4060 = vadd.f32 %v3754, %v4002
        %v4061 = vadd.f32 %v3755, %v4007
        %v4062 = vadd.f32 %v3756, %v4012
        %v4063 = vadd.f32 %v3757, %v4017
        %v4064 = vadd.f32 %v3758, %v4022
        %v4065 = vadd.f32 %v3759, %v4027
        %v4066 = vadd.f32 %v3760, %v4032
        %v4067 = vld [vmem:[%s4] sm:$0x1]
        %v4069 = vlaneseq
        %v4070 = vshrl.u32 %v4069, 7
        %v4071 = vsub.s32 0, %v4070
        %v4072 = vrot.slane %v4067, %v4071
        %v4074 = vmul.f32 %v4035, %v4072
        %v4075 = vmul.f32 %v4036, %v4072
        %v4076 = vmul.f32 %v4037, %v4072
        %v4077 = vmul.f32 %v4038, %v4072
        %v4078 = vmul.f32 %v4039, %v4072
        %v4079 = vmul.f32 %v4040, %v4072
        %v4080 = vmul.f32 %v4041, %v4072
        %v4081 = vmul.f32 %v4042, %v4072
        %v4082 = vmul.f32 %v4043, %v4072
        %v4083 = vmul.f32 %v4044, %v4072
        %v4084 = vmul.f32 %v4045, %v4072
        %v4085 = vmul.f32 %v4046, %v4072
        %v4086 = vmul.f32 %v4047, %v4072
        %v4087 = vmul.f32 %v4048, %v4072
        %v4088 = vmul.f32 %v4049, %v4072
        %v4089 = vmul.f32 %v4050, %v4072
        %v4090 = vmul.f32 %v4051, %v4072
        %v4091 = vmul.f32 %v4052, %v4072
        %v4092 = vmul.f32 %v4053, %v4072
        %v4093 = vmul.f32 %v4054, %v4072
        %v4094 = vmul.f32 %v4055, %v4072
        %v4095 = vmul.f32 %v4056, %v4072
        %v4096 = vmul.f32 %v4057, %v4072
        %v4097 = vmul.f32 %v4058, %v4072
        %v4098 = vmul.f32 %v4059, %v4072
        %v4099 = vmul.f32 %v4060, %v4072
        %v4100 = vmul.f32 %v4061, %v4072
        %v4101 = vmul.f32 %v4062, %v4072
        %v4102 = vmul.f32 %v4063, %v4072
        %v4103 = vmul.f32 %v4064, %v4072
        %v4104 = vmul.f32 %v4065, %v4072
        %v4105 = vmul.f32 %v4066, %v4072
        %v4106 = vld [vmem:[%s5] sm:$0x1]
        %v4108 = vlaneseq
        %v4109 = vshrl.u32 %v4108, 7
        %v4110 = vsub.s32 0, %v4109
        %v4111 = vrot.slane %v4106, %v4110
        %v4113 = vadd.f32 %v4074, %v4111
        %v4114 = vadd.f32 %v4075, %v4111
        %v4115 = vadd.f32 %v4076, %v4111
        %v4116 = vadd.f32 %v4077, %v4111
        %v4117 = vadd.f32 %v4078, %v4111
        %v4118 = vadd.f32 %v4079, %v4111
        %v4119 = vadd.f32 %v4080, %v4111
        %v4120 = vadd.f32 %v4081, %v4111
        %v4121 = vadd.f32 %v4082, %v4111
        %v4122 = vadd.f32 %v4083, %v4111
        %v4123 = vadd.f32 %v4084, %v4111
        %v4124 = vadd.f32 %v4085, %v4111
        %v4125 = vadd.f32 %v4086, %v4111
        %v4126 = vadd.f32 %v4087, %v4111
        %v4127 = vadd.f32 %v4088, %v4111
        %v4128 = vadd.f32 %v4089, %v4111
        %v4129 = vadd.f32 %v4090, %v4111
        %v4130 = vadd.f32 %v4091, %v4111
        %v4131 = vadd.f32 %v4092, %v4111
        %v4132 = vadd.f32 %v4093, %v4111
        %v4133 = vadd.f32 %v4094, %v4111
        %v4134 = vadd.f32 %v4095, %v4111
        %v4135 = vadd.f32 %v4096, %v4111
        %v4136 = vadd.f32 %v4097, %v4111
        %v4137 = vadd.f32 %v4098, %v4111
        %v4138 = vadd.f32 %v4099, %v4111
        %v4139 = vadd.f32 %v4100, %v4111
        %v4140 = vadd.f32 %v4101, %v4111
        %v4141 = vadd.f32 %v4102, %v4111
        %v4142 = vadd.f32 %v4103, %v4111
        %v4143 = vadd.f32 %v4104, %v4111
        %v4144 = vadd.f32 %v4105, %v4111
        %v4145 = vmax.f32 %v4113, 0.0
        %v4146 = vmax.f32 %v4114, 0.0
        %v4147 = vmax.f32 %v4115, 0.0
        %v4148 = vmax.f32 %v4116, 0.0
        %v4149 = vmax.f32 %v4117, 0.0
        %v4150 = vmax.f32 %v4118, 0.0
        %v4151 = vmax.f32 %v4119, 0.0
        %v4152 = vmax.f32 %v4120, 0.0
        %v4153 = vmax.f32 %v4121, 0.0
        %v4154 = vmax.f32 %v4122, 0.0
        %v4155 = vmax.f32 %v4123, 0.0
        %v4156 = vmax.f32 %v4124, 0.0
        %v4157 = vmax.f32 %v4125, 0.0
        %v4158 = vmax.f32 %v4126, 0.0
        %v4159 = vmax.f32 %v4127, 0.0
        %v4160 = vmax.f32 %v4128, 0.0
        %v4161 = vmax.f32 %v4129, 0.0
        %v4162 = vmax.f32 %v4130, 0.0
        %v4163 = vmax.f32 %v4131, 0.0
        %v4164 = vmax.f32 %v4132, 0.0
        %v4165 = vmax.f32 %v4133, 0.0
        %v4166 = vmax.f32 %v4134, 0.0
        %v4167 = vmax.f32 %v4135, 0.0
        %v4168 = vmax.f32 %v4136, 0.0
        %v4169 = vmax.f32 %v4137, 0.0
        %v4170 = vmax.f32 %v4138, 0.0
        %v4171 = vmax.f32 %v4139, 0.0
        %v4172 = vmax.f32 %v4140, 0.0
        %v4173 = vmax.f32 %v4141, 0.0
        %v4174 = vmax.f32 %v4142, 0.0
        %v4175 = vmax.f32 %v4143, 0.0
        %v4176 = vmax.f32 %v4144, 0.0
        %v4177 = vrot.slane %v4145, 7
        %v4178 = vrot.slane %v4146, 7
        %v4179 = vrot.slane %v4147, 7
        %v4180 = vrot.slane %v4148, 7
        %v4181 = vrot.slane %v4149, 7
        %v4182 = vrot.slane %v4150, 7
        %v4183 = vrot.slane %v4151, 7
        %v4184 = vrot.slane %v4152, 7
        %v4185 = vrot.slane %v4153, 7
        %v4186 = vrot.slane %v4154, 7
        %v4187 = vrot.slane %v4155, 7
        %v4188 = vrot.slane %v4156, 7
        %v4189 = vrot.slane %v4157, 7
        %v4190 = vrot.slane %v4158, 7
        %v4191 = vrot.slane %v4159, 7
        %v4192 = vrot.slane %v4160, 7
        %v4193 = vrot.slane %v4161, 7
        %v4194 = vrot.slane %v4162, 7
        %v4195 = vrot.slane %v4163, 7
        %v4196 = vrot.slane %v4164, 7
        %v4197 = vrot.slane %v4165, 7
        %v4198 = vrot.slane %v4166, 7
        %v4199 = vrot.slane %v4167, 7
        %v4200 = vrot.slane %v4168, 7
        %v4201 = vrot.slane %v4169, 7
        %v4202 = vrot.slane %v4170, 7
        %v4203 = vrot.slane %v4171, 7
        %v4204 = vrot.slane %v4172, 7
        %v4205 = vrot.slane %v4173, 7
        %v4206 = vrot.slane %v4174, 7
        %v4207 = vrot.slane %v4175, 7
        %v4208 = vrot.slane %v4176, 7
        %v4209 = vsel %vm990, %v4207, %v4208
        %v4210 = vsel %vm990, %v4206, %v4207
        %v4211 = vsel %vm990, %v4205, %v4206
        %v4212 = vsel %vm990, %v4204, %v4205
        %v4213 = vsel %vm990, %v4203, %v4204
        %v4214 = vsel %vm990, %v4202, %v4203
        %v4215 = vsel %vm990, %v4201, %v4202
        %v4216 = vsel %vm990, %v4200, %v4201
        %v4217 = vsel %vm990, %v4199, %v4200
        %v4218 = vsel %vm990, %v4198, %v4199
        %v4219 = vsel %vm990, %v4197, %v4198
        %v4220 = vsel %vm990, %v4196, %v4197
        %v4221 = vsel %vm990, %v4195, %v4196
        %v4222 = vsel %vm990, %v4194, %v4195
        %v4223 = vsel %vm990, %v4193, %v4194
        %v4224 = vsel %vm990, %v4192, %v4193
        %v4225 = vsel %vm990, %v4191, %v4192
        %v4226 = vsel %vm990, %v4190, %v4191
        %v4227 = vsel %vm990, %v4189, %v4190
        %v4228 = vsel %vm990, %v4188, %v4189
        %v4229 = vsel %vm990, %v4187, %v4188
        %v4230 = vsel %vm990, %v4186, %v4187
        %v4231 = vsel %vm990, %v4185, %v4186
        %v4232 = vsel %vm990, %v4184, %v4185
        %v4233 = vsel %vm990, %v4183, %v4184
        %v4234 = vsel %vm990, %v4182, %v4183
        %v4235 = vsel %vm990, %v4181, %v4182
        %v4236 = vsel %vm990, %v4180, %v4181
        %v4237 = vsel %vm990, %v4179, %v4180
        %v4238 = vsel %vm990, %v4178, %v4179
        %v4239 = vsel %vm990, %v4177, %v4178
        %v4240 = vsel %vm990, %v4208, %v4177
        %v4241 = vsel %vm1055, %v4240, 0.0
        %v4242 = vsel %vm1056, %v4239, 0.0
        %v4243 = vsel %vm1057, %v4238, 0.0
        %v4244 = vsel %vm1058, %v4237, 0.0
        %v4245 = vsel %vm1059, %v4236, 0.0
        %v4246 = vsel %vm1060, %v4235, 0.0
        %v4247 = vsel %vm1061, %v4234, 0.0
        %v4248 = vsel %vm1062, %v4233, 0.0
        %v4249 = vsel %vm1063, %v4232, 0.0
        %v4250 = vsel %vm1064, %v4231, 0.0
        %v4251 = vsel %vm1065, %v4230, 0.0
        %v4252 = vsel %vm1066, %v4229, 0.0
        %v4253 = vsel %vm1067, %v4228, 0.0
        %v4254 = vsel %vm1068, %v4227, 0.0
        %v4255 = vsel %vm1069, %v4226, 0.0
        %v4256 = vsel %vm1070, %v4225, 0.0
        %v4257 = vsel %vm1071, %v4224, 0.0
        %v4258 = vsel %vm1072, %v4223, 0.0
        %v4259 = vsel %vm1073, %v4222, 0.0
        %v4260 = vsel %vm1074, %v4221, 0.0
        %v4261 = vsel %vm1075, %v4220, 0.0
        %v4262 = vsel %vm1076, %v4219, 0.0
        %v4263 = vsel %vm1077, %v4218, 0.0
        %v4264 = vsel %vm1078, %v4217, 0.0
        %v4265 = vsel %vm1079, %v4216, 0.0
        %v4266 = vsel %vm1080, %v4215, 0.0
        %v4267 = vsel %vm1081, %v4214, 0.0
        %v4268 = vsel %vm1082, %v4213, 0.0
        %v4269 = vsel %vm1083, %v4212, 0.0
        %v4270 = vsel %vm1084, %v4211, 0.0
        %v4271 = vsel %vm1085, %v4210, 0.0
        %v4272 = vsel %vm1086, %v4209, 0.0
        %v4273 = vrot.slane %v4145, 1
        %v4274 = vrot.slane %v4146, 1
        %v4275 = vrot.slane %v4147, 1
        %v4276 = vrot.slane %v4148, 1
        %v4277 = vrot.slane %v4149, 1
        %v4278 = vrot.slane %v4150, 1
        %v4279 = vrot.slane %v4151, 1
        %v4280 = vrot.slane %v4152, 1
        %v4281 = vrot.slane %v4153, 1
        %v4282 = vrot.slane %v4154, 1
        %v4283 = vrot.slane %v4155, 1
        %v4284 = vrot.slane %v4156, 1
        %v4285 = vrot.slane %v4157, 1
        %v4286 = vrot.slane %v4158, 1
        %v4287 = vrot.slane %v4159, 1
        %v4288 = vrot.slane %v4160, 1
        %v4289 = vrot.slane %v4161, 1
        %v4290 = vrot.slane %v4162, 1
        %v4291 = vrot.slane %v4163, 1
        %v4292 = vrot.slane %v4164, 1
        %v4293 = vrot.slane %v4165, 1
        %v4294 = vrot.slane %v4166, 1
        %v4295 = vrot.slane %v4167, 1
        %v4296 = vrot.slane %v4168, 1
        %v4297 = vrot.slane %v4169, 1
        %v4298 = vrot.slane %v4170, 1
        %v4299 = vrot.slane %v4171, 1
        %v4300 = vrot.slane %v4172, 1
        %v4301 = vrot.slane %v4173, 1
        %v4302 = vrot.slane %v4174, 1
        %v4303 = vrot.slane %v4175, 1
        %v4304 = vrot.slane %v4176, 1
        %v4305 = vsel %vm1151, %v4303, %v4304
        %v4306 = vsel %vm1151, %v4302, %v4303
        %v4307 = vsel %vm1151, %v4301, %v4302
        %v4308 = vsel %vm1151, %v4300, %v4301
        %v4309 = vsel %vm1151, %v4299, %v4300
        %v4310 = vsel %vm1151, %v4298, %v4299
        %v4311 = vsel %vm1151, %v4297, %v4298
        %v4312 = vsel %vm1151, %v4296, %v4297
        %v4313 = vsel %vm1151, %v4295, %v4296
        %v4314 = vsel %vm1151, %v4294, %v4295
        %v4315 = vsel %vm1151, %v4293, %v4294
        %v4316 = vsel %vm1151, %v4292, %v4293
        %v4317 = vsel %vm1151, %v4291, %v4292
        %v4318 = vsel %vm1151, %v4290, %v4291
        %v4319 = vsel %vm1151, %v4289, %v4290
        %v4320 = vsel %vm1151, %v4288, %v4289
        %v4321 = vsel %vm1151, %v4287, %v4288
        %v4322 = vsel %vm1151, %v4286, %v4287
        %v4323 = vsel %vm1151, %v4285, %v4286
        %v4324 = vsel %vm1151, %v4284, %v4285
        %v4325 = vsel %vm1151, %v4283, %v4284
        %v4326 = vsel %vm1151, %v4282, %v4283
        %v4327 = vsel %vm1151, %v4281, %v4282
        %v4328 = vsel %vm1151, %v4280, %v4281
        %v4329 = vsel %vm1151, %v4279, %v4280
        %v4330 = vsel %vm1151, %v4278, %v4279
        %v4331 = vsel %vm1151, %v4277, %v4278
        %v4332 = vsel %vm1151, %v4276, %v4277
        %v4333 = vsel %vm1151, %v4275, %v4276
        %v4334 = vsel %vm1151, %v4274, %v4275
        %v4335 = vsel %vm1151, %v4273, %v4274
        %v4336 = vsel %vm1151, %v4304, %v4273
        %v4337 = vsel %vm1216, %v4335, 0.0
        %v4338 = vsel %vm1217, %v4334, 0.0
        %v4339 = vsel %vm1218, %v4333, 0.0
        %v4340 = vsel %vm1219, %v4332, 0.0
        %v4341 = vsel %vm1220, %v4331, 0.0
        %v4342 = vsel %vm1221, %v4330, 0.0
        %v4343 = vsel %vm1222, %v4329, 0.0
        %v4344 = vsel %vm1223, %v4328, 0.0
        %v4345 = vsel %vm1224, %v4327, 0.0
        %v4346 = vsel %vm1225, %v4326, 0.0
        %v4347 = vsel %vm1226, %v4325, 0.0
        %v4348 = vsel %vm1227, %v4324, 0.0
        %v4349 = vsel %vm1228, %v4323, 0.0
        %v4350 = vsel %vm1229, %v4322, 0.0
        %v4351 = vsel %vm1230, %v4321, 0.0
        %v4352 = vsel %vm1231, %v4320, 0.0
        %v4353 = vsel %vm1232, %v4319, 0.0
        %v4354 = vsel %vm1233, %v4318, 0.0
        %v4355 = vsel %vm1234, %v4317, 0.0
        %v4356 = vsel %vm1235, %v4316, 0.0
        %v4357 = vsel %vm1236, %v4315, 0.0
        %v4358 = vsel %vm1237, %v4314, 0.0
        %v4359 = vsel %vm1238, %v4313, 0.0
        %v4360 = vsel %vm1239, %v4312, 0.0
        %v4361 = vsel %vm1240, %v4311, 0.0
        %v4362 = vsel %vm1241, %v4310, 0.0
        %v4363 = vsel %vm1242, %v4309, 0.0
        %v4364 = vsel %vm1243, %v4308, 0.0
        %v4365 = vsel %vm1244, %v4307, 0.0
        %v4366 = vsel %vm1245, %v4306, 0.0
        %v4367 = vsel %vm1246, %v4305, 0.0
        %v4368 = vsel %vm1247, %v4336, 0.0
        %4369 = vst [vmem:[#allocation2 + $0x10] sm:$0xff] %v4241
        %4370 = vst [vmem:[#allocation2 + $0x18] sm:$0xff] %v4242
        %4371 = vst [vmem:[#allocation2 + $0x20] sm:$0xff] %v4243
        %4372 = vst [vmem:[#allocation2 + $0x28] sm:$0xff] %v4244
        %4373 = vst [vmem:[#allocation2 + $0x30] sm:$0xff] %v4245
        %4374 = vst [vmem:[#allocation2 + $0x38] sm:$0xff] %v4246
        %4375 = vst [vmem:[#allocation2 + $0x40] sm:$0xff] %v4247
        %4376 = vst [vmem:[#allocation2 + $0x48] sm:$0xff] %v4248
        %4377 = vst [vmem:[#allocation2 + $0x50] sm:$0xff] %v4249
        %4378 = vst [vmem:[#allocation2 + $0x58] sm:$0xff] %v4250
        %4379 = vst [vmem:[#allocation2 + $0x60] sm:$0xff] %v4251
        %4380 = vst [vmem:[#allocation2 + $0x68] sm:$0xff] %v4252
        %4381 = vst [vmem:[#allocation2 + $0x70] sm:$0xff] %v4253
        %4382 = vst [vmem:[#allocation2 + $0x78] sm:$0xff] %v4254
        %4383 = vst [vmem:[#allocation2 + $0x80] sm:$0xff] %v4255
        %4384 = vst [vmem:[#allocation2 + $0x88] sm:$0xff] %v4256
        %4385 = vst [vmem:[#allocation2 + $0x90] sm:$0xff] %v4257
        %4386 = vst [vmem:[#allocation2 + $0x98] sm:$0xff] %v4258
        %4387 = vst [vmem:[#allocation2 + $0xa0] sm:$0xff] %v4259
        %4388 = vst [vmem:[#allocation2 + $0xa8] sm:$0xff] %v4260
        %4389 = vst [vmem:[#allocation2 + $0xb0] sm:$0xff] %v4261
        %4390 = vst [vmem:[#allocation2 + $0xb8] sm:$0xff] %v4262
        %4391 = vst [vmem:[#allocation2 + $0xc0] sm:$0xff] %v4263
        %4392 = vst [vmem:[#allocation2 + $0xc8] sm:$0xff] %v4264
        %4393 = vst [vmem:[#allocation2 + $0xd0] sm:$0xff] %v4265
        %4394 = vst [vmem:[#allocation2 + $0xd8] sm:$0xff] %v4266
        %4395 = vst [vmem:[#allocation2 + $0xe0] sm:$0xff] %v4267
        %4396 = vst [vmem:[#allocation2 + $0xe8] sm:$0xff] %v4268
        %4397 = vst [vmem:[#allocation2 + $0xf0] sm:$0xff] %v4269
        %4398 = vst [vmem:[#allocation2 + $0xf8] sm:$0xff] %v4270
        %4399 = vst [vmem:[#allocation2 + $0x100] sm:$0xff] %v4271
        %4400 = vst [vmem:[#allocation2 + $0x108] sm:$0xff] %v4272
        %4401 = vst [vmem:[%s1312 + $0x10] sm:$0xff] %v4145
        %4402 = vst [vmem:[%s1312 + $0x18] sm:$0xff] %v4146
        %4403 = vst [vmem:[%s1312 + $0x20] sm:$0xff] %v4147
        %4404 = vst [vmem:[%s1312 + $0x28] sm:$0xff] %v4148
        %4405 = vst [vmem:[%s1312 + $0x30] sm:$0xff] %v4149
        %4406 = vst [vmem:[%s1312 + $0x38] sm:$0xff] %v4150
        %4407 = vst [vmem:[%s1312 + $0x40] sm:$0xff] %v4151
        %4408 = vst [vmem:[%s1312 + $0x48] sm:$0xff] %v4152
        %4409 = vst [vmem:[%s1312 + $0x50] sm:$0xff] %v4153
        %4410 = vst [vmem:[%s1312 + $0x58] sm:$0xff] %v4154
        %4411 = vst [vmem:[%s1312 + $0x60] sm:$0xff] %v4155
        %4412 = vst [vmem:[%s1312 + $0x68] sm:$0xff] %v4156
        %4413 = vst [vmem:[%s1312 + $0x70] sm:$0xff] %v4157
        %4414 = vst [vmem:[%s1312 + $0x78] sm:$0xff] %v4158
        %4415 = vst [vmem:[%s1312 + $0x80] sm:$0xff] %v4159
        %4416 = vst [vmem:[%s1312 + $0x88] sm:$0xff] %v4160
        %4417 = vst [vmem:[%s1312 + $0x90] sm:$0xff] %v4161
        %4418 = vst [vmem:[%s1312 + $0x98] sm:$0xff] %v4162
        %4419 = vst [vmem:[%s1312 + $0xa0] sm:$0xff] %v4163
        %4420 = vst [vmem:[%s1312 + $0xa8] sm:$0xff] %v4164
        %4421 = vst [vmem:[%s1312 + $0xb0] sm:$0xff] %v4165
        %4422 = vst [vmem:[%s1312 + $0xb8] sm:$0xff] %v4166
        %4423 = vst [vmem:[%s1312 + $0xc0] sm:$0xff] %v4167
        %4424 = vst [vmem:[%s1312 + $0xc8] sm:$0xff] %v4168
        %4425 = vst [vmem:[%s1312 + $0xd0] sm:$0xff] %v4169
        %4426 = vst [vmem:[%s1312 + $0xd8] sm:$0xff] %v4170
        %4427 = vst [vmem:[%s1312 + $0xe0] sm:$0xff] %v4171
        %4428 = vst [vmem:[%s1312 + $0xe8] sm:$0xff] %v4172
        %4429 = vst [vmem:[%s1312 + $0xf0] sm:$0xff] %v4173
        %4430 = vst [vmem:[%s1312 + $0xf8] sm:$0xff] %v4174
        %4431 = vst [vmem:[%s1312 + $0x100] sm:$0xff] %v4175
        %4432 = vst [vmem:[%s1312 + $0x108] sm:$0xff] %v4176
        %4433 = vst [vmem:[%s1345 + $0x10] sm:$0xff] %v4337
        %4434 = vst [vmem:[%s1345 + $0x18] sm:$0xff] %v4338
        %4435 = vst [vmem:[%s1345 + $0x20] sm:$0xff] %v4339
        %4436 = vst [vmem:[%s1345 + $0x28] sm:$0xff] %v4340
        %4437 = vst [vmem:[%s1345 + $0x30] sm:$0xff] %v4341
        %4438 = vst [vmem:[%s1345 + $0x38] sm:$0xff] %v4342
        %4439 = vst [vmem:[%s1345 + $0x40] sm:$0xff] %v4343
        %4440 = vst [vmem:[%s1345 + $0x48] sm:$0xff] %v4344
        %4441 = vst [vmem:[%s1345 + $0x50] sm:$0xff] %v4345
        %4442 = vst [vmem:[%s1345 + $0x58] sm:$0xff] %v4346
        %4443 = vst [vmem:[%s1345 + $0x60] sm:$0xff] %v4347
        %4444 = vst [vmem:[%s1345 + $0x68] sm:$0xff] %v4348
        %4445 = vst [vmem:[%s1345 + $0x70] sm:$0xff] %v4349
        %4446 = vst [vmem:[%s1345 + $0x78] sm:$0xff] %v4350
        %4447 = vst [vmem:[%s1345 + $0x80] sm:$0xff] %v4351
        %4448 = vst [vmem:[%s1345 + $0x88] sm:$0xff] %v4352
        %4449 = vst [vmem:[%s1345 + $0x90] sm:$0xff] %v4353
        %4450 = vst [vmem:[%s1345 + $0x98] sm:$0xff] %v4354
        %4451 = vst [vmem:[%s1345 + $0xa0] sm:$0xff] %v4355
        %4452 = vst [vmem:[%s1345 + $0xa8] sm:$0xff] %v4356
        %4453 = vst [vmem:[%s1345 + $0xb0] sm:$0xff] %v4357
        %4454 = vst [vmem:[%s1345 + $0xb8] sm:$0xff] %v4358
        %4455 = vst [vmem:[%s1345 + $0xc0] sm:$0xff] %v4359
        %4456 = vst [vmem:[%s1345 + $0xc8] sm:$0xff] %v4360
        %4457 = vst [vmem:[%s1345 + $0xd0] sm:$0xff] %v4361
        %4458 = vst [vmem:[%s1345 + $0xd8] sm:$0xff] %v4362
        %4459 = vst [vmem:[%s1345 + $0xe0] sm:$0xff] %v4363
        %4460 = vst [vmem:[%s1345 + $0xe8] sm:$0xff] %v4364
        %4461 = vst [vmem:[%s1345 + $0xf0] sm:$0xff] %v4365
        %4462 = vst [vmem:[%s1345 + $0xf8] sm:$0xff] %v4366
        %4463 = vst [vmem:[%s1345 + $0x100] sm:$0xff] %v4367
        %4464 = vst [vmem:[%s1345 + $0x108] sm:$0xff] %v4368
        %v4465 = vld [vmem:[#allocation2] sm:$0xff]
        %v4466 = vld [vmem:[#allocation2 + $0x8] sm:$0xff]
        %v4467 = vld [vmem:[#allocation2 + $0x10] sm:$0xff]
        %v4468 = vld [vmem:[#allocation2 + $0x18] sm:$0xff]
        %v4469 = vld [vmem:[#allocation2 + $0x20] sm:$0xff]
        %v4470 = vld [vmem:[#allocation2 + $0x28] sm:$0xff]
        %v4471 = vld [vmem:[#allocation2 + $0x30] sm:$0xff]
        %v4472 = vld [vmem:[#allocation2 + $0x38] sm:$0xff]
        %v4473 = vld [vmem:[#allocation2 + $0x40] sm:$0xff]
        %v4474 = vld [vmem:[#allocation2 + $0x48] sm:$0xff]
        %v4475 = vld [vmem:[#allocation2 + $0x50] sm:$0xff]
        %v4476 = vld [vmem:[#allocation2 + $0x58] sm:$0xff]
        %v4477 = vld [vmem:[#allocation2 + $0x60] sm:$0xff]
        %v4478 = vld [vmem:[#allocation2 + $0x68] sm:$0xff]
        %v4479 = vld [vmem:[#allocation2 + $0x70] sm:$0xff]
        %v4480 = vld [vmem:[#allocation2 + $0x78] sm:$0xff]
        %v4481 = vld [vmem:[#allocation2 + $0x80] sm:$0xff]
        %v4482 = vld [vmem:[#allocation2 + $0x88] sm:$0xff]
        %v4483 = vld [vmem:[#allocation2 + $0x90] sm:$0xff]
        %v4484 = vld [vmem:[#allocation2 + $0x98] sm:$0xff]
        %v4485 = vld [vmem:[#allocation2 + $0xa0] sm:$0xff]
        %v4486 = vld [vmem:[#allocation2 + $0xa8] sm:$0xff]
        %v4487 = vld [vmem:[#allocation2 + $0xb0] sm:$0xff]
        %v4488 = vld [vmem:[#allocation2 + $0xb8] sm:$0xff]
        %v4489 = vld [vmem:[#allocation2 + $0xc0] sm:$0xff]
        %v4490 = vld [vmem:[#allocation2 + $0xc8] sm:$0xff]
        %v4491 = vld [vmem:[#allocation2 + $0xd0] sm:$0xff]
        %v4492 = vld [vmem:[#allocation2 + $0xd8] sm:$0xff]
        %v4493 = vld [vmem:[#allocation2 + $0xe0] sm:$0xff]
        %v4494 = vld [vmem:[#allocation2 + $0xe8] sm:$0xff]
        %v4495 = vld [vmem:[#allocation2 + $0xf0] sm:$0xff]
        %v4496 = vld [vmem:[#allocation2 + $0xf8] sm:$0xff]
        %v4497 = vld [vmem:[#allocation9] sm:$0xff]
        %v4498 = vld [vmem:[#allocation9 + $0x8] sm:$0xff]
        %v4499 = vld [vmem:[#allocation9 + $0x10] sm:$0xff]
        %v4500 = vld [vmem:[#allocation9 + $0x18] sm:$0xff]
        %v4501 = vld [vmem:[#allocation9 + $0x20] sm:$0xff]
        %v4502 = vld [vmem:[#allocation9 + $0x28] sm:$0xff]
        %v4503 = vld [vmem:[#allocation9 + $0x30] sm:$0xff]
        %v4504 = vld [vmem:[#allocation9 + $0x38] sm:$0xff]
        %v4505 = vld [vmem:[#allocation9 + $0x40] sm:$0xff]
        %v4506 = vld [vmem:[#allocation9 + $0x48] sm:$0xff]
        %v4507 = vld [vmem:[#allocation9 + $0x50] sm:$0xff]
        %v4508 = vld [vmem:[#allocation9 + $0x58] sm:$0xff]
        %v4509 = vld [vmem:[#allocation9 + $0x60] sm:$0xff]
        %v4510 = vld [vmem:[#allocation9 + $0x68] sm:$0xff]
        %v4511 = vld [vmem:[#allocation9 + $0x70] sm:$0xff]
        %v4512 = vld [vmem:[#allocation9 + $0x78] sm:$0xff]
        %v4513 = vld [vmem:[%s1312] sm:$0xff]
        %v4514 = vld [vmem:[%s1312 + $0x8] sm:$0xff]
        %v4515 = vld [vmem:[%s1312 + $0x10] sm:$0xff]
        %v4516 = vld [vmem:[%s1312 + $0x18] sm:$0xff]
        %v4517 = vld [vmem:[%s1312 + $0x20] sm:$0xff]
        %v4518 = vld [vmem:[%s1312 + $0x28] sm:$0xff]
        %v4519 = vld [vmem:[%s1312 + $0x30] sm:$0xff]
        %v4520 = vld [vmem:[%s1312 + $0x38] sm:$0xff]
        %v4521 = vld [vmem:[%s1312 + $0x40] sm:$0xff]
        %v4522 = vld [vmem:[%s1312 + $0x48] sm:$0xff]
        %v4523 = vld [vmem:[%s1312 + $0x50] sm:$0xff]
        %v4524 = vld [vmem:[%s1312 + $0x58] sm:$0xff]
        %v4525 = vld [vmem:[%s1312 + $0x60] sm:$0xff]
        %v4526 = vld [vmem:[%s1312 + $0x68] sm:$0xff]
        %v4527 = vld [vmem:[%s1312 + $0x70] sm:$0xff]
        %v4528 = vld [vmem:[%s1312 + $0x78] sm:$0xff]
        %v4529 = vld [vmem:[%s1312 + $0x80] sm:$0xff]
        %v4530 = vld [vmem:[%s1312 + $0x88] sm:$0xff]
        %v4531 = vld [vmem:[%s1312 + $0x90] sm:$0xff]
        %v4532 = vld [vmem:[%s1312 + $0x98] sm:$0xff]
        %v4533 = vld [vmem:[%s1312 + $0xa0] sm:$0xff]
        %v4534 = vld [vmem:[%s1312 + $0xa8] sm:$0xff]
        %v4535 = vld [vmem:[%s1312 + $0xb0] sm:$0xff]
        %v4536 = vld [vmem:[%s1312 + $0xb8] sm:$0xff]
        %v4537 = vld [vmem:[%s1312 + $0xc0] sm:$0xff]
        %v4538 = vld [vmem:[%s1312 + $0xc8] sm:$0xff]
        %v4539 = vld [vmem:[%s1312 + $0xd0] sm:$0xff]
        %v4540 = vld [vmem:[%s1312 + $0xd8] sm:$0xff]
        %v4541 = vld [vmem:[%s1312 + $0xe0] sm:$0xff]
        %v4542 = vld [vmem:[%s1312 + $0xe8] sm:$0xff]
        %v4543 = vld [vmem:[%s1312 + $0xf0] sm:$0xff]
        %v4544 = vld [vmem:[%s1312 + $0xf8] sm:$0xff]
        %s4545 = scalar_lea.vmem [#allocation9], 128
        %v4546 = vld [vmem:[%s4545] sm:$0xff]
        %v4547 = vld [vmem:[%s4545 + $0x8] sm:$0xff]
        %v4548 = vld [vmem:[%s4545 + $0x10] sm:$0xff]
        %v4549 = vld [vmem:[%s4545 + $0x18] sm:$0xff]
        %v4550 = vld [vmem:[%s4545 + $0x20] sm:$0xff]
        %v4551 = vld [vmem:[%s4545 + $0x28] sm:$0xff]
        %v4552 = vld [vmem:[%s4545 + $0x30] sm:$0xff]
        %v4553 = vld [vmem:[%s4545 + $0x38] sm:$0xff]
        %v4554 = vld [vmem:[%s4545 + $0x40] sm:$0xff]
        %v4555 = vld [vmem:[%s4545 + $0x48] sm:$0xff]
        %v4556 = vld [vmem:[%s4545 + $0x50] sm:$0xff]
        %v4557 = vld [vmem:[%s4545 + $0x58] sm:$0xff]
        %v4558 = vld [vmem:[%s4545 + $0x60] sm:$0xff]
        %v4559 = vld [vmem:[%s4545 + $0x68] sm:$0xff]
        %v4560 = vld [vmem:[%s4545 + $0x70] sm:$0xff]
        %v4561 = vld [vmem:[%s4545 + $0x78] sm:$0xff]
        %4562 = vmatprep.subr.mxu0 0.0
        %4563 = vmatpush1.msra.mxu0 %v4546
        %4564 = vmatprep.subr.mxu0 0.0
        %4565 = vmatpush1.msra.mxu0 %v4547
        %4566 = vmatprep.subr.mxu0 0.0
        %4567 = vmatpush1.msra.mxu0 %v4548
        %4568 = vmatprep.subr.mxu0 0.0
        %4569 = vmatpush1.msra.mxu0 %v4549
        %4570 = vmatprep.subr.mxu0 0.0
        %4571 = vmatpush1.msra.mxu0 %v4550
        %4572 = vmatprep.subr.mxu0 0.0
        %4573 = vmatpush1.msra.mxu0 %v4551
        %4574 = vmatprep.subr.mxu0 0.0
        %4575 = vmatpush1.msra.mxu0 %v4552
        %4576 = vmatprep.subr.mxu0 0.0
        %4577 = vmatpush1.msra.mxu0 %v4553
        %4578 = vmatprep.subr.mxu0 0.0
        %4579 = vmatpush1.msra.mxu0 %v4554
        %4580 = vmatprep.subr.mxu0 0.0
        %4581 = vmatpush1.msra.mxu0 %v4555
        %4582 = vmatprep.subr.mxu0 0.0
        %4583 = vmatpush1.msra.mxu0 %v4556
        %4584 = vmatprep.subr.mxu0 0.0
        %4585 = vmatpush1.msra.mxu0 %v4557
        %4586 = vmatprep.subr.mxu0 0.0
        %4587 = vmatpush1.msra.mxu0 %v4558
        %4588 = vmatprep.subr.mxu0 0.0
        %4589 = vmatpush1.msra.mxu0 %v4559
        %4590 = vmatprep.subr.mxu0 0.0
        %4591 = vmatpush1.msra.mxu0 %v4560
        %4592 = vmatprep.subr.mxu0 0.0
        %4593 = vmatpush1.msra.mxu0 %v4561
        %4594 = vmatprep.subr.mxu0 0.0
        %4595 = vmatpush1.msra.mxu0 0.0
        %4596 = vmatprep.subr.mxu0 0.0
        %4597 = vmatpush1.msra.mxu0 0.0
        %4598 = vmatprep.subr.mxu0 0.0
        %4599 = vmatpush1.msra.mxu0 0.0
        %4600 = vmatprep.subr.mxu0 0.0
        %4601 = vmatpush1.msra.mxu0 0.0
        %4602 = vmatprep.subr.mxu0 0.0
        %4603 = vmatpush1.msra.mxu0 0.0
        %4604 = vmatprep.subr.mxu0 0.0
        %4605 = vmatpush1.msra.mxu0 0.0
        %4606 = vmatprep.subr.mxu0 0.0
        %4607 = vmatpush1.msra.mxu0 0.0
        %4608 = vmatprep.subr.mxu0 0.0
        %4609 = vmatpush1.msra.mxu0 0.0
        %4610 = vmatprep.subr.mxu0 0.0
        %4611 = vmatpush1.msra.mxu0 0.0
        %4612 = vmatprep.subr.mxu0 0.0
        %4613 = vmatpush1.msra.mxu0 0.0
        %4614 = vmatprep.subr.mxu0 0.0
        %4615 = vmatpush1.msra.mxu0 0.0
        %4616 = vmatprep.subr.mxu0 0.0
        %4617 = vmatpush1.msra.mxu0 0.0
        %4618 = vmatprep.subr.mxu0 0.0
        %4619 = vmatpush1.msra.mxu0 0.0
        %4620 = vmatprep.subr.mxu0 0.0
        %4621 = vmatpush1.msra.mxu0 0.0
        %4622 = vmatprep.subr.mxu0 0.0
        %4623 = vmatpush1.msra.mxu0 0.0
        %4624 = vmatprep.subr.mxu0 0.0
        %4625 = vmatpush1.msra.mxu0 0.0
        %4626 = vmatprep.mubr.f32.mxu0 0.0
        %4627 = vmatmul.mubr.f32.gmra.mrb[0].mxu0 %v4513
        %v4628 = vpop.f32.mrb[0].mxu0
        %v4629 = vadd.f32 0.0, %v4628
        %v4630 = vpop.f32.mrb[0].mxu0
        %4631 = vmatprep.mubr.f32.mxu0 0.0
        %4632 = vmatmul.mubr.f32.gmra.mrb[0].mxu0 %v4514
        %v4633 = vpop.f32.mrb[0].mxu0
        %v4634 = vadd.f32 0.0, %v4633
        %v4635 = vpop.f32.mrb[0].mxu0
        %4636 = vmatprep.mubr.f32.mxu0 0.0
        %4637 = vmatmul.mubr.f32.gmra.mrb[0].mxu0 %v4515
        %v4638 = vpop.f32.mrb[0].mxu0
        %v4639 = vadd.f32 0.0, %v4638
        %v4640 = vpop.f32.mrb[0].mxu0
        %4641 = vmatprep.mubr.f32.mxu0 0.0
        %4642 = vmatmul.mubr.f32.gmra.mrb[0].mxu0 %v4516
        %v4643 = vpop.f32.mrb[0].mxu0
        %v4644 = vadd.f32 0.0, %v4643
        %v4645 = vpop.f32.mrb[0].mxu0
        %4646 = vmatprep.mubr.f32.mxu0 0.0
        %4647 = vmatmul.mubr.f32.gmra.mrb[0].mxu0 %v4517
        %v4648 = vpop.f32.mrb[0].mxu0
        %v4649 = vadd.f32 0.0, %v4648
        %v4650 = vpop.f32.mrb[0].mxu0
        %4651 = vmatprep.mubr.f32.mxu0 0.0
        %4652 = vmatmul.mubr.f32.gmra.mrb[0].mxu0 %v4518
        %v4653 = vpop.f32.mrb[0].mxu0
        %v4654 = vadd.f32 0.0, %v4653
        %v4655 = vpop.f32.mrb[0].mxu0
        %4656 = vmatprep.mubr.f32.mxu0 0.0
        %4657 = vmatmul.mubr.f32.gmra.mrb[0].mxu0 %v4519
        %v4658 = vpop.f32.mrb[0].mxu0
        %v4659 = vadd.f32 0.0, %v4658
        %v4660 = vpop.f32.mrb[0].mxu0
        %4661 = vmatprep.mubr.f32.mxu0 0.0
        %4662 = vmatmul.mubr.f32.gmra.mrb[0].mxu0 %v4520
        %v4663 = vpop.f32.mrb[0].mxu0
        %v4664 = vadd.f32 0.0, %v4663
        %v4665 = vpop.f32.mrb[0].mxu0
        %4666 = vmatprep.mubr.f32.mxu0 0.0
        %4667 = vmatmul.mubr.f32.gmra.mrb[0].mxu0 %v4521
        %v4668 = vpop.f32.mrb[0].mxu0
        %v4669 = vadd.f32 0.0, %v4668
        %v4670 = vpop.f32.mrb[0].mxu0
        %4671 = vmatprep.mubr.f32.mxu0 0.0
        %4672 = vmatmul.mubr.f32.gmra.mrb[0].mxu0 %v4522
        %v4673 = vpop.f32.mrb[0].mxu0
        %v4674 = vadd.f32 0.0, %v4673
        %v4675 = vpop.f32.mrb[0].mxu0
        %4676 = vmatprep.mubr.f32.mxu0 0.0
        %4677 = vmatmul.mubr.f32.gmra.mrb[0].mxu0 %v4523
        %v4678 = vpop.f32.mrb[0].mxu0
        %v4679 = vadd.f32 0.0, %v4678
        %v4680 = vpop.f32.mrb[0].mxu0
        %4681 = vmatprep.mubr.f32.mxu0 0.0
        %4682 = vmatmul.mubr.f32.gmra.mrb[0].mxu0 %v4524
        %v4683 = vpop.f32.mrb[0].mxu0
        %v4684 = vadd.f32 0.0, %v4683
        %v4685 = vpop.f32.mrb[0].mxu0
        %4686 = vmatprep.mubr.f32.mxu0 0.0
        %4687 = vmatmul.mubr.f32.gmra.mrb[0].mxu0 %v4525
        %v4688 = vpop.f32.mrb[0].mxu0
        %v4689 = vadd.f32 0.0, %v4688
        %v4690 = vpop.f32.mrb[0].mxu0
        %4691 = vmatprep.mubr.f32.mxu0 0.0
        %4692 = vmatmul.mubr.f32.gmra.mrb[0].mxu0 %v4526
        %v4693 = vpop.f32.mrb[0].mxu0
        %v4694 = vadd.f32 0.0, %v4693
        %v4695 = vpop.f32.mrb[0].mxu0
        %4696 = vmatprep.mubr.f32.mxu0 0.0
        %4697 = vmatmul.mubr.f32.gmra.mrb[0].mxu0 %v4527
        %v4698 = vpop.f32.mrb[0].mxu0
        %v4699 = vadd.f32 0.0, %v4698
        %v4700 = vpop.f32.mrb[0].mxu0
        %4701 = vmatprep.mubr.f32.mxu0 0.0
        %4702 = vmatmul.mubr.f32.gmra.mrb[0].mxu0 %v4528
        %v4703 = vpop.f32.mrb[0].mxu0
        %v4704 = vadd.f32 0.0, %v4703
        %v4705 = vpop.f32.mrb[0].mxu0
        %4706 = vmatprep.mubr.f32.mxu0 0.0
        %4707 = vmatmul.mubr.f32.gmra.mrb[0].mxu0 %v4529
        %v4708 = vpop.f32.mrb[0].mxu0
        %v4709 = vadd.f32 0.0, %v4708
        %v4710 = vpop.f32.mrb[0].mxu0
        %4711 = vmatprep.mubr.f32.mxu0 0.0
        %4712 = vmatmul.mubr.f32.gmra.mrb[0].mxu0 %v4530
        %v4713 = vpop.f32.mrb[0].mxu0
        %v4714 = vadd.f32 0.0, %v4713
        %v4715 = vpop.f32.mrb[0].mxu0
        %4716 = vmatprep.mubr.f32.mxu0 0.0
        %4717 = vmatmul.mubr.f32.gmra.mrb[0].mxu0 %v4531
        %v4718 = vpop.f32.mrb[0].mxu0
        %v4719 = vadd.f32 0.0, %v4718
        %v4720 = vpop.f32.mrb[0].mxu0
        %4721 = vmatprep.mubr.f32.mxu0 0.0
        %4722 = vmatmul.mubr.f32.gmra.mrb[0].mxu0 %v4532
        %v4723 = vpop.f32.mrb[0].mxu0
        %v4724 = vadd.f32 0.0, %v4723
        %v4725 = vpop.f32.mrb[0].mxu0
        %4726 = vmatprep.mubr.f32.mxu0 0.0
        %4727 = vmatmul.mubr.f32.gmra.mrb[0].mxu0 %v4533
        %v4728 = vpop.f32.mrb[0].mxu0
        %v4729 = vadd.f32 0.0, %v4728
        %v4730 = vpop.f32.mrb[0].mxu0
        %4731 = vmatprep.mubr.f32.mxu0 0.0
        %4732 = vmatmul.mubr.f32.gmra.mrb[0].mxu0 %v4534
        %v4733 = vpop.f32.mrb[0].mxu0
        %v4734 = vadd.f32 0.0, %v4733
        %v4735 = vpop.f32.mrb[0].mxu0
        %4736 = vmatprep.mubr.f32.mxu0 0.0
        %4737 = vmatmul.mubr.f32.gmra.mrb[0].mxu0 %v4535
        %v4738 = vpop.f32.mrb[0].mxu0
        %v4739 = vadd.f32 0.0, %v4738
        %v4740 = vpop.f32.mrb[0].mxu0
        %4741 = vmatprep.mubr.f32.mxu0 0.0
        %4742 = vmatmul.mubr.f32.gmra.mrb[0].mxu0 %v4536
        %v4743 = vpop.f32.mrb[0].mxu0
        %v4744 = vadd.f32 0.0, %v4743
        %v4745 = vpop.f32.mrb[0].mxu0
        %4746 = vmatprep.mubr.f32.mxu0 0.0
        %4747 = vmatmul.mubr.f32.gmra.mrb[0].mxu0 %v4537
        %v4748 = vpop.f32.mrb[0].mxu0
        %v4749 = vadd.f32 0.0, %v4748
        %v4750 = vpop.f32.mrb[0].mxu0
        %4751 = vmatprep.mubr.f32.mxu0 0.0
        %4752 = vmatmul.mubr.f32.gmra.mrb[0].mxu0 %v4538
        %v4753 = vpop.f32.mrb[0].mxu0
        %v4754 = vadd.f32 0.0, %v4753
        %v4755 = vpop.f32.mrb[0].mxu0
        %4756 = vmatprep.mubr.f32.mxu0 0.0
        %4757 = vmatmul.mubr.f32.gmra.mrb[0].mxu0 %v4539
        %v4758 = vpop.f32.mrb[0].mxu0
        %v4759 = vadd.f32 0.0, %v4758
        %v4760 = vpop.f32.mrb[0].mxu0
        %4761 = vmatprep.mubr.f32.mxu0 0.0
        %4762 = vmatmul.mubr.f32.gmra.mrb[0].mxu0 %v4540
        %v4763 = vpop.f32.mrb[0].mxu0
        %v4764 = vadd.f32 0.0, %v4763
        %v4765 = vpop.f32.mrb[0].mxu0
        %4766 = vmatprep.mubr.f32.mxu0 0.0
        %4767 = vmatmul.mubr.f32.gmra.mrb[0].mxu0 %v4541
        %v4768 = vpop.f32.mrb[0].mxu0
        %v4769 = vadd.f32 0.0, %v4768
        %v4770 = vpop.f32.mrb[0].mxu0
        %4771 = vmatprep.mubr.f32.mxu0 0.0
        %4772 = vmatmul.mubr.f32.gmra.mrb[0].mxu0 %v4542
        %v4773 = vpop.f32.mrb[0].mxu0
        %v4774 = vadd.f32 0.0, %v4773
        %v4775 = vpop.f32.mrb[0].mxu0
        %4776 = vmatprep.mubr.f32.mxu0 0.0
        %4777 = vmatmul.mubr.f32.gmra.mrb[0].mxu0 %v4543
        %v4778 = vpop.f32.mrb[0].mxu0
        %v4779 = vadd.f32 0.0, %v4778
        %v4780 = vpop.f32.mrb[0].mxu0
        %4781 = vmatprep.mubr.f32.mxu0 0.0
        %4782 = vmatmul.mubr.f32.gmra.mrb[0].mxu0 %v4544
        %v4783 = vpop.f32.mrb[0].mxu0
        %v4784 = vadd.f32 0.0, %v4783
        %v4785 = vpop.f32.mrb[0].mxu0
        %4786 = vdwg.mxu0
        %4787 = vmatprep.subr.mxu0 0.0
        %4788 = vmatpush1.msra.mxu0 %v4497
        %4789 = vmatprep.subr.mxu0 0.0
        %4790 = vmatpush1.msra.mxu0 %v4498
        %4791 = vmatprep.subr.mxu0 0.0
        %4792 = vmatpush1.msra.mxu0 %v4499
        %4793 = vmatprep.subr.mxu0 0.0
        %4794 = vmatpush1.msra.mxu0 %v4500
        %4795 = vmatprep.subr.mxu0 0.0
        %4796 = vmatpush1.msra.mxu0 %v4501
        %4797 = vmatprep.subr.mxu0 0.0
        %4798 = vmatpush1.msra.mxu0 %v4502
        %4799 = vmatprep.subr.mxu0 0.0
        %4800 = vmatpush1.msra.mxu0 %v4503
        %4801 = vmatprep.subr.mxu0 0.0
        %4802 = vmatpush1.msra.mxu0 %v4504
        %4803 = vmatprep.subr.mxu0 0.0
        %4804 = vmatpush1.msra.mxu0 %v4505
        %4805 = vmatprep.subr.mxu0 0.0
        %4806 = vmatpush1.msra.mxu0 %v4506
        %4807 = vmatprep.subr.mxu0 0.0
        %4808 = vmatpush1.msra.mxu0 %v4507
        %4809 = vmatprep.subr.mxu0 0.0
        %4810 = vmatpush1.msra.mxu0 %v4508
        %4811 = vmatprep.subr.mxu0 0.0
        %4812 = vmatpush1.msra.mxu0 %v4509
        %4813 = vmatprep.subr.mxu0 0.0
        %4814 = vmatpush1.msra.mxu0 %v4510
        %4815 = vmatprep.subr.mxu0 0.0
        %4816 = vmatpush1.msra.mxu0 %v4511
        %4817 = vmatprep.subr.mxu0 0.0
        %4818 = vmatpush1.msra.mxu0 %v4512
        %4819 = vmatprep.subr.mxu0 0.0
        %4820 = vmatpush1.msra.mxu0 0.0
        %4821 = vmatprep.subr.mxu0 0.0
        %4822 = vmatpush1.msra.mxu0 0.0
        %4823 = vmatprep.subr.mxu0 0.0
        %4824 = vmatpush1.msra.mxu0 0.0
        %4825 = vmatprep.subr.mxu0 0.0
        %4826 = vmatpush1.msra.mxu0 0.0
        %4827 = vmatprep.subr.mxu0 0.0
        %4828 = vmatpush1.msra.mxu0 0.0
        %4829 = vmatprep.subr.mxu0 0.0
        %4830 = vmatpush1.msra.mxu0 0.0
        %4831 = vmatprep.subr.mxu0 0.0
        %4832 = vmatpush1.msra.mxu0 0.0
        %4833 = vmatprep.subr.mxu0 0.0
        %4834 = vmatpush1.msra.mxu0 0.0
        %4835 = vmatprep.subr.mxu0 0.0
        %4836 = vmatpush1.msra.mxu0 0.0
        %4837 = vmatprep.subr.mxu0 0.0
        %4838 = vmatpush1.msra.mxu0 0.0
        %4839 = vmatprep.subr.mxu0 0.0
        %4840 = vmatpush1.msra.mxu0 0.0
        %4841 = vmatprep.subr.mxu0 0.0
        %4842 = vmatpush1.msra.mxu0 0.0
        %4843 = vmatprep.subr.mxu0 0.0
        %4844 = vmatpush1.msra.mxu0 0.0
        %4845 = vmatprep.subr.mxu0 0.0
        %4846 = vmatpush1.msra.mxu0 0.0
        %4847 = vmatprep.subr.mxu0 0.0
        %4848 = vmatpush1.msra.mxu0 0.0
        %4849 = vmatprep.subr.mxu0 0.0
        %4850 = vmatpush1.msra.mxu0 0.0
        %4851 = vmatprep.mubr.f32.mxu0 0.0
        %4852 = vmatmul.mubr.f32.gmra.mrb[0].mxu0 %v4465
        %v4853 = vpop.f32.mrb[0].mxu0
        %v4854 = vadd.f32 %v4629, %v4853
        %v4855 = vpop.f32.mrb[0].mxu0
        %4856 = vmatprep.mubr.f32.mxu0 0.0
        %4857 = vmatmul.mubr.f32.gmra.mrb[0].mxu0 %v4466
        %v4858 = vpop.f32.mrb[0].mxu0
        %v4859 = vadd.f32 %v4634, %v4858
        %v4860 = vpop.f32.mrb[0].mxu0
        %4861 = vmatprep.mubr.f32.mxu0 0.0
        %4862 = vmatmul.mubr.f32.gmra.mrb[0].mxu0 %v4467
        %v4863 = vpop.f32.mrb[0].mxu0
        %v4864 = vadd.f32 %v4639, %v4863
        %v4865 = vpop.f32.mrb[0].mxu0
        %4866 = vmatprep.mubr.f32.mxu0 0.0
        %4867 = vmatmul.mubr.f32.gmra.mrb[0].mxu0 %v4468
        %v4868 = vpop.f32.mrb[0].mxu0
        %v4869 = vadd.f32 %v4644, %v4868
        %v4870 = vpop.f32.mrb[0].mxu0
        %4871 = vmatprep.mubr.f32.mxu0 0.0
        %4872 = vmatmul.mubr.f32.gmra.mrb[0].mxu0 %v4469
        %v4873 = vpop.f32.mrb[0].mxu0
        %v4874 = vadd.f32 %v4649, %v4873
        %v4875 = vpop.f32.mrb[0].mxu0
        %4876 = vmatprep.mubr.f32.mxu0 0.0
        %4877 = vmatmul.mubr.f32.gmra.mrb[0].mxu0 %v4470
        %v4878 = vpop.f32.mrb[0].mxu0
        %v4879 = vadd.f32 %v4654, %v4878
        %v4880 = vpop.f32.mrb[0].mxu0
        %4881 = vmatprep.mubr.f32.mxu0 0.0
        %4882 = vmatmul.mubr.f32.gmra.mrb[0].mxu0 %v4471
        %v4883 = vpop.f32.mrb[0].mxu0
        %v4884 = vadd.f32 %v4659, %v4883
        %v4885 = vpop.f32.mrb[0].mxu0
        %4886 = vmatprep.mubr.f32.mxu0 0.0
        %4887 = vmatmul.mubr.f32.gmra.mrb[0].mxu0 %v4472
        %v4888 = vpop.f32.mrb[0].mxu0
        %v4889 = vadd.f32 %v4664, %v4888
        %v4890 = vpop.f32.mrb[0].mxu0
        %4891 = vmatprep.mubr.f32.mxu0 0.0
        %4892 = vmatmul.mubr.f32.gmra.mrb[0].mxu0 %v4473
        %v4893 = vpop.f32.mrb[0].mxu0
        %v4894 = vadd.f32 %v4669, %v4893
        %v4895 = vpop.f32.mrb[0].mxu0
        %4896 = vmatprep.mubr.f32.mxu0 0.0
        %4897 = vmatmul.mubr.f32.gmra.mrb[0].mxu0 %v4474
        %v4898 = vpop.f32.mrb[0].mxu0
        %v4899 = vadd.f32 %v4674, %v4898
        %v4900 = vpop.f32.mrb[0].mxu0
        %4901 = vmatprep.mubr.f32.mxu0 0.0
        %4902 = vmatmul.mubr.f32.gmra.mrb[0].mxu0 %v4475
        %v4903 = vpop.f32.mrb[0].mxu0
        %v4904 = vadd.f32 %v4679, %v4903
        %v4905 = vpop.f32.mrb[0].mxu0
        %4906 = vmatprep.mubr.f32.mxu0 0.0
        %4907 = vmatmul.mubr.f32.gmra.mrb[0].mxu0 %v4476
        %v4908 = vpop.f32.mrb[0].mxu0
        %v4909 = vadd.f32 %v4684, %v4908
        %v4910 = vpop.f32.mrb[0].mxu0
        %4911 = vmatprep.mubr.f32.mxu0 0.0
        %4912 = vmatmul.mubr.f32.gmra.mrb[0].mxu0 %v4477
        %v4913 = vpop.f32.mrb[0].mxu0
        %v4914 = vadd.f32 %v4689, %v4913
        %v4915 = vpop.f32.mrb[0].mxu0
        %4916 = vmatprep.mubr.f32.mxu0 0.0
        %4917 = vmatmul.mubr.f32.gmra.mrb[0].mxu0 %v4478
        %v4918 = vpop.f32.mrb[0].mxu0
        %v4919 = vadd.f32 %v4694, %v4918
        %v4920 = vpop.f32.mrb[0].mxu0
        %4921 = vmatprep.mubr.f32.mxu0 0.0
        %4922 = vmatmul.mubr.f32.gmra.mrb[0].mxu0 %v4479
        %v4923 = vpop.f32.mrb[0].mxu0
        %v4924 = vadd.f32 %v4699, %v4923
        %v4925 = vpop.f32.mrb[0].mxu0
        %4926 = vmatprep.mubr.f32.mxu0 0.0
        %4927 = vmatmul.mubr.f32.gmra.mrb[0].mxu0 %v4480
        %v4928 = vpop.f32.mrb[0].mxu0
        %v4929 = vadd.f32 %v4704, %v4928
        %v4930 = vpop.f32.mrb[0].mxu0
        %4931 = vmatprep.mubr.f32.mxu0 0.0
        %4932 = vmatmul.mubr.f32.gmra.mrb[0].mxu0 %v4481
        %v4933 = vpop.f32.mrb[0].mxu0
        %v4934 = vadd.f32 %v4709, %v4933
        %v4935 = vpop.f32.mrb[0].mxu0
        %4936 = vmatprep.mubr.f32.mxu0 0.0
        %4937 = vmatmul.mubr.f32.gmra.mrb[0].mxu0 %v4482
        %v4938 = vpop.f32.mrb[0].mxu0
        %v4939 = vadd.f32 %v4714, %v4938
        %v4940 = vpop.f32.mrb[0].mxu0
        %4941 = vmatprep.mubr.f32.mxu0 0.0
        %4942 = vmatmul.mubr.f32.gmra.mrb[0].mxu0 %v4483
        %v4943 = vpop.f32.mrb[0].mxu0
        %v4944 = vadd.f32 %v4719, %v4943
        %v4945 = vpop.f32.mrb[0].mxu0
        %4946 = vmatprep.mubr.f32.mxu0 0.0
        %4947 = vmatmul.mubr.f32.gmra.mrb[0].mxu0 %v4484
        %v4948 = vpop.f32.mrb[0].mxu0
        %v4949 = vadd.f32 %v4724, %v4948
        %v4950 = vpop.f32.mrb[0].mxu0
        %4951 = vmatprep.mubr.f32.mxu0 0.0
        %4952 = vmatmul.mubr.f32.gmra.mrb[0].mxu0 %v4485
        %v4953 = vpop.f32.mrb[0].mxu0
        %v4954 = vadd.f32 %v4729, %v4953
        %v4955 = vpop.f32.mrb[0].mxu0
        %4956 = vmatprep.mubr.f32.mxu0 0.0
        %4957 = vmatmul.mubr.f32.gmra.mrb[0].mxu0 %v4486
        %v4958 = vpop.f32.mrb[0].mxu0
        %v4959 = vadd.f32 %v4734, %v4958
        %v4960 = vpop.f32.mrb[0].mxu0
        %4961 = vmatprep.mubr.f32.mxu0 0.0
        %4962 = vmatmul.mubr.f32.gmra.mrb[0].mxu0 %v4487
        %v4963 = vpop.f32.mrb[0].mxu0
        %v4964 = vadd.f32 %v4739, %v4963
        %v4965 = vpop.f32.mrb[0].mxu0
        %4966 = vmatprep.mubr.f32.mxu0 0.0
        %4967 = vmatmul.mubr.f32.gmra.mrb[0].mxu0 %v4488
        %v4968 = vpop.f32.mrb[0].mxu0
        %v4969 = vadd.f32 %v4744, %v4968
        %v4970 = vpop.f32.mrb[0].mxu0
        %4971 = vmatprep.mubr.f32.mxu0 0.0
        %4972 = vmatmul.mubr.f32.gmra.mrb[0].mxu0 %v4489
        %v4973 = vpop.f32.mrb[0].mxu0
        %v4974 = vadd.f32 %v4749, %v4973
        %v4975 = vpop.f32.mrb[0].mxu0
        %4976 = vmatprep.mubr.f32.mxu0 0.0
        %4977 = vmatmul.mubr.f32.gmra.mrb[0].mxu0 %v4490
        %v4978 = vpop.f32.mrb[0].mxu0
        %v4979 = vadd.f32 %v4754, %v4978
        %v4980 = vpop.f32.mrb[0].mxu0
        %4981 = vmatprep.mubr.f32.mxu0 0.0
        %4982 = vmatmul.mubr.f32.gmra.mrb[0].mxu0 %v4491
        %v4983 = vpop.f32.mrb[0].mxu0
        %v4984 = vadd.f32 %v4759, %v4983
        %v4985 = vpop.f32.mrb[0].mxu0
        %4986 = vmatprep.mubr.f32.mxu0 0.0
        %4987 = vmatmul.mubr.f32.gmra.mrb[0].mxu0 %v4492
        %v4988 = vpop.f32.mrb[0].mxu0
        %v4989 = vadd.f32 %v4764, %v4988
        %v4990 = vpop.f32.mrb[0].mxu0
        %4991 = vmatprep.mubr.f32.mxu0 0.0
        %4992 = vmatmul.mubr.f32.gmra.mrb[0].mxu0 %v4493
        %v4993 = vpop.f32.mrb[0].mxu0
        %v4994 = vadd.f32 %v4769, %v4993
        %v4995 = vpop.f32.mrb[0].mxu0
        %4996 = vmatprep.mubr.f32.mxu0 0.0
        %4997 = vmatmul.mubr.f32.gmra.mrb[0].mxu0 %v4494
        %v4998 = vpop.f32.mrb[0].mxu0
        %v4999 = vadd.f32 %v4774, %v4998
        %v5000 = vpop.f32.mrb[0].mxu0
        %5001 = vmatprep.mubr.f32.mxu0 0.0
        %5002 = vmatmul.mubr.f32.gmra.mrb[0].mxu0 %v4495
        %v5003 = vpop.f32.mrb[0].mxu0
        %v5004 = vadd.f32 %v4779, %v5003
        %v5005 = vpop.f32.mrb[0].mxu0
        %5006 = vmatprep.mubr.f32.mxu0 0.0
        %5007 = vmatmul.mubr.f32.gmra.mrb[0].mxu0 %v4496
        %v5008 = vpop.f32.mrb[0].mxu0
        %v5009 = vadd.f32 %v4784, %v5008
        %v5010 = vpop.f32.mrb[0].mxu0
        %5011 = vdwg.mxu0
        %v5012 = vld [vmem:[%s1345] sm:$0xff]
        %v5013 = vld [vmem:[%s1345 + $0x8] sm:$0xff]
        %v5014 = vld [vmem:[%s1345 + $0x10] sm:$0xff]
        %v5015 = vld [vmem:[%s1345 + $0x18] sm:$0xff]
        %v5016 = vld [vmem:[%s1345 + $0x20] sm:$0xff]
        %v5017 = vld [vmem:[%s1345 + $0x28] sm:$0xff]
        %v5018 = vld [vmem:[%s1345 + $0x30] sm:$0xff]
        %v5019 = vld [vmem:[%s1345 + $0x38] sm:$0xff]
        %v5020 = vld [vmem:[%s1345 + $0x40] sm:$0xff]
        %v5021 = vld [vmem:[%s1345 + $0x48] sm:$0xff]
        %v5022 = vld [vmem:[%s1345 + $0x50] sm:$0xff]
        %v5023 = vld [vmem:[%s1345 + $0x58] sm:$0xff]
        %v5024 = vld [vmem:[%s1345 + $0x60] sm:$0xff]
        %v5025 = vld [vmem:[%s1345 + $0x68] sm:$0xff]
        %v5026 = vld [vmem:[%s1345 + $0x70] sm:$0xff]
        %v5027 = vld [vmem:[%s1345 + $0x78] sm:$0xff]
        %v5028 = vld [vmem:[%s1345 + $0x80] sm:$0xff]
        %v5029 = vld [vmem:[%s1345 + $0x88] sm:$0xff]
        %v5030 = vld [vmem:[%s1345 + $0x90] sm:$0xff]
        %v5031 = vld [vmem:[%s1345 + $0x98] sm:$0xff]
        %v5032 = vld [vmem:[%s1345 + $0xa0] sm:$0xff]
        %v5033 = vld [vmem:[%s1345 + $0xa8] sm:$0xff]
        %v5034 = vld [vmem:[%s1345 + $0xb0] sm:$0xff]
        %v5035 = vld [vmem:[%s1345 + $0xb8] sm:$0xff]
        %v5036 = vld [vmem:[%s1345 + $0xc0] sm:$0xff]
        %v5037 = vld [vmem:[%s1345 + $0xc8] sm:$0xff]
        %v5038 = vld [vmem:[%s1345 + $0xd0] sm:$0xff]
        %v5039 = vld [vmem:[%s1345 + $0xd8] sm:$0xff]
        %v5040 = vld [vmem:[%s1345 + $0xe0] sm:$0xff]
        %v5041 = vld [vmem:[%s1345 + $0xe8] sm:$0xff]
        %v5042 = vld [vmem:[%s1345 + $0xf0] sm:$0xff]
        %v5043 = vld [vmem:[%s1345 + $0xf8] sm:$0xff]
        %s5044 = scalar_lea.vmem [#allocation9], 256
        %v5045 = vld [vmem:[%s5044] sm:$0xff]
        %v5046 = vld [vmem:[%s5044 + $0x8] sm:$0xff]
        %v5047 = vld [vmem:[%s5044 + $0x10] sm:$0xff]
        %v5048 = vld [vmem:[%s5044 + $0x18] sm:$0xff]
        %v5049 = vld [vmem:[%s5044 + $0x20] sm:$0xff]
        %v5050 = vld [vmem:[%s5044 + $0x28] sm:$0xff]
        %v5051 = vld [vmem:[%s5044 + $0x30] sm:$0xff]
        %v5052 = vld [vmem:[%s5044 + $0x38] sm:$0xff]
        %v5053 = vld [vmem:[%s5044 + $0x40] sm:$0xff]
        %v5054 = vld [vmem:[%s5044 + $0x48] sm:$0xff]
        %v5055 = vld [vmem:[%s5044 + $0x50] sm:$0xff]
        %v5056 = vld [vmem:[%s5044 + $0x58] sm:$0xff]
        %v5057 = vld [vmem:[%s5044 + $0x60] sm:$0xff]
        %v5058 = vld [vmem:[%s5044 + $0x68] sm:$0xff]
        %v5059 = vld [vmem:[%s5044 + $0x70] sm:$0xff]
        %v5060 = vld [vmem:[%s5044 + $0x78] sm:$0xff]
        %5061 = vmatprep.subr.mxu0 0.0
        %5062 = vmatpush1.msra.mxu0 %v5045
        %5063 = vmatprep.subr.mxu0 0.0
        %5064 = vmatpush1.msra.mxu0 %v5046
        %5065 = vmatprep.subr.mxu0 0.0
        %5066 = vmatpush1.msra.mxu0 %v5047
        %5067 = vmatprep.subr.mxu0 0.0
        %5068 = vmatpush1.msra.mxu0 %v5048
        %5069 = vmatprep.subr.mxu0 0.0
        %5070 = vmatpush1.msra.mxu0 %v5049
        %5071 = vmatprep.subr.mxu0 0.0
        %5072 = vmatpush1.msra.mxu0 %v5050
        %5073 = vmatprep.subr.mxu0 0.0
        %5074 = vmatpush1.msra.mxu0 %v5051
        %5075 = vmatprep.subr.mxu0 0.0
        %5076 = vmatpush1.msra.mxu0 %v5052
        %5077 = vmatprep.subr.mxu0 0.0
        %5078 = vmatpush1.msra.mxu0 %v5053
        %5079 = vmatprep.subr.mxu0 0.0
        %5080 = vmatpush1.msra.mxu0 %v5054
        %5081 = vmatprep.subr.mxu0 0.0
        %5082 = vmatpush1.msra.mxu0 %v5055
        %5083 = vmatprep.subr.mxu0 0.0
        %5084 = vmatpush1.msra.mxu0 %v5056
        %5085 = vmatprep.subr.mxu0 0.0
        %5086 = vmatpush1.msra.mxu0 %v5057
        %5087 = vmatprep.subr.mxu0 0.0
        %5088 = vmatpush1.msra.mxu0 %v5058
        %5089 = vmatprep.subr.mxu0 0.0
        %5090 = vmatpush1.msra.mxu0 %v5059
        %5091 = vmatprep.subr.mxu0 0.0
        %5092 = vmatpush1.msra.mxu0 %v5060
        %5093 = vmatprep.subr.mxu0 0.0
        %5094 = vmatpush1.msra.mxu0 0.0
        %5095 = vmatprep.subr.mxu0 0.0
        %5096 = vmatpush1.msra.mxu0 0.0
        %5097 = vmatprep.subr.mxu0 0.0
        %5098 = vmatpush1.msra.mxu0 0.0
        %5099 = vmatprep.subr.mxu0 0.0
        %5100 = vmatpush1.msra.mxu0 0.0
        %5101 = vmatprep.subr.mxu0 0.0
        %5102 = vmatpush1.msra.mxu0 0.0
        %5103 = vmatprep.subr.mxu0 0.0
        %5104 = vmatpush1.msra.mxu0 0.0
        %5105 = vmatprep.subr.mxu0 0.0
        %5106 = vmatpush1.msra.mxu0 0.0
        %5107 = vmatprep.subr.mxu0 0.0
        %5108 = vmatpush1.msra.mxu0 0.0
        %5109 = vmatprep.subr.mxu0 0.0
        %5110 = vmatpush1.msra.mxu0 0.0
        %5111 = vmatprep.subr.mxu0 0.0
        %5112 = vmatpush1.msra.mxu0 0.0
        %5113 = vmatprep.subr.mxu0 0.0
        %5114 = vmatpush1.msra.mxu0 0.0
        %5115 = vmatprep.subr.mxu0 0.0
        %5116 = vmatpush1.msra.mxu0 0.0
        %5117 = vmatprep.subr.mxu0 0.0
        %5118 = vmatpush1.msra.mxu0 0.0
        %5119 = vmatprep.subr.mxu0 0.0
        %5120 = vmatpush1.msra.mxu0 0.0
        %5121 = vmatprep.subr.mxu0 0.0
        %5122 = vmatpush1.msra.mxu0 0.0
        %5123 = vmatprep.subr.mxu0 0.0
        %5124 = vmatpush1.msra.mxu0 0.0
        %5125 = vmatprep.mubr.f32.mxu0 0.0
        %5126 = vmatmul.mubr.f32.gmra.mrb[0].mxu0 %v5012
        %v5127 = vpop.f32.mrb[0].mxu0
        %v5128 = vadd.f32 0.0, %v5127
        %v5129 = vpop.f32.mrb[0].mxu0
        %5130 = vmatprep.mubr.f32.mxu0 0.0
        %5131 = vmatmul.mubr.f32.gmra.mrb[0].mxu0 %v5013
        %v5132 = vpop.f32.mrb[0].mxu0
        %v5133 = vadd.f32 0.0, %v5132
        %v5134 = vpop.f32.mrb[0].mxu0
        %5135 = vmatprep.mubr.f32.mxu0 0.0
        %5136 = vmatmul.mubr.f32.gmra.mrb[0].mxu0 %v5014
        %v5137 = vpop.f32.mrb[0].mxu0
        %v5138 = vadd.f32 0.0, %v5137
        %v5139 = vpop.f32.mrb[0].mxu0
        %5140 = vmatprep.mubr.f32.mxu0 0.0
        %5141 = vmatmul.mubr.f32.gmra.mrb[0].mxu0 %v5015
        %v5142 = vpop.f32.mrb[0].mxu0
        %v5143 = vadd.f32 0.0, %v5142
        %v5144 = vpop.f32.mrb[0].mxu0
        %5145 = vmatprep.mubr.f32.mxu0 0.0
        %5146 = vmatmul.mubr.f32.gmra.mrb[0].mxu0 %v5016
        %v5147 = vpop.f32.mrb[0].mxu0
        %v5148 = vadd.f32 0.0, %v5147
        %v5149 = vpop.f32.mrb[0].mxu0
        %5150 = vmatprep.mubr.f32.mxu0 0.0
        %5151 = vmatmul.mubr.f32.gmra.mrb[0].mxu0 %v5017
        %v5152 = vpop.f32.mrb[0].mxu0
        %v5153 = vadd.f32 0.0, %v5152
        %v5154 = vpop.f32.mrb[0].mxu0
        %5155 = vmatprep.mubr.f32.mxu0 0.0
        %5156 = vmatmul.mubr.f32.gmra.mrb[0].mxu0 %v5018
        %v5157 = vpop.f32.mrb[0].mxu0
        %v5158 = vadd.f32 0.0, %v5157
        %v5159 = vpop.f32.mrb[0].mxu0
        %5160 = vmatprep.mubr.f32.mxu0 0.0
        %5161 = vmatmul.mubr.f32.gmra.mrb[0].mxu0 %v5019
        %v5162 = vpop.f32.mrb[0].mxu0
        %v5163 = vadd.f32 0.0, %v5162
        %v5164 = vpop.f32.mrb[0].mxu0
        %5165 = vmatprep.mubr.f32.mxu0 0.0
        %5166 = vmatmul.mubr.f32.gmra.mrb[0].mxu0 %v5020
        %v5167 = vpop.f32.mrb[0].mxu0
        %v5168 = vadd.f32 0.0, %v5167
        %v5169 = vpop.f32.mrb[0].mxu0
        %5170 = vmatprep.mubr.f32.mxu0 0.0
        %5171 = vmatmul.mubr.f32.gmra.mrb[0].mxu0 %v5021
        %v5172 = vpop.f32.mrb[0].mxu0
        %v5173 = vadd.f32 0.0, %v5172
        %v5174 = vpop.f32.mrb[0].mxu0
        %5175 = vmatprep.mubr.f32.mxu0 0.0
        %5176 = vmatmul.mubr.f32.gmra.mrb[0].mxu0 %v5022
        %v5177 = vpop.f32.mrb[0].mxu0
        %v5178 = vadd.f32 0.0, %v5177
        %v5179 = vpop.f32.mrb[0].mxu0
        %5180 = vmatprep.mubr.f32.mxu0 0.0
        %5181 = vmatmul.mubr.f32.gmra.mrb[0].mxu0 %v5023
        %v5182 = vpop.f32.mrb[0].mxu0
        %v5183 = vadd.f32 0.0, %v5182
        %v5184 = vpop.f32.mrb[0].mxu0
        %5185 = vmatprep.mubr.f32.mxu0 0.0
        %5186 = vmatmul.mubr.f32.gmra.mrb[0].mxu0 %v5024
        %v5187 = vpop.f32.mrb[0].mxu0
        %v5188 = vadd.f32 0.0, %v5187
        %v5189 = vpop.f32.mrb[0].mxu0
        %5190 = vmatprep.mubr.f32.mxu0 0.0
        %5191 = vmatmul.mubr.f32.gmra.mrb[0].mxu0 %v5025
        %v5192 = vpop.f32.mrb[0].mxu0
        %v5193 = vadd.f32 0.0, %v5192
        %v5194 = vpop.f32.mrb[0].mxu0
        %5195 = vmatprep.mubr.f32.mxu0 0.0
        %5196 = vmatmul.mubr.f32.gmra.mrb[0].mxu0 %v5026
        %v5197 = vpop.f32.mrb[0].mxu0
        %v5198 = vadd.f32 0.0, %v5197
        %v5199 = vpop.f32.mrb[0].mxu0
        %5200 = vmatprep.mubr.f32.mxu0 0.0
        %5201 = vmatmul.mubr.f32.gmra.mrb[0].mxu0 %v5027
        %v5202 = vpop.f32.mrb[0].mxu0
        %v5203 = vadd.f32 0.0, %v5202
        %v5204 = vpop.f32.mrb[0].mxu0
        %5205 = vmatprep.mubr.f32.mxu0 0.0
        %5206 = vmatmul.mubr.f32.gmra.mrb[0].mxu0 %v5028
        %v5207 = vpop.f32.mrb[0].mxu0
        %v5208 = vadd.f32 0.0, %v5207
        %v5209 = vpop.f32.mrb[0].mxu0
        %5210 = vmatprep.mubr.f32.mxu0 0.0
        %5211 = vmatmul.mubr.f32.gmra.mrb[0].mxu0 %v5029
        %v5212 = vpop.f32.mrb[0].mxu0
        %v5213 = vadd.f32 0.0, %v5212
        %v5214 = vpop.f32.mrb[0].mxu0
        %5215 = vmatprep.mubr.f32.mxu0 0.0
        %5216 = vmatmul.mubr.f32.gmra.mrb[0].mxu0 %v5030
        %v5217 = vpop.f32.mrb[0].mxu0
        %v5218 = vadd.f32 0.0, %v5217
        %v5219 = vpop.f32.mrb[0].mxu0
        %5220 = vmatprep.mubr.f32.mxu0 0.0
        %5221 = vmatmul.mubr.f32.gmra.mrb[0].mxu0 %v5031
        %v5222 = vpop.f32.mrb[0].mxu0
        %v5223 = vadd.f32 0.0, %v5222
        %v5224 = vpop.f32.mrb[0].mxu0
        %5225 = vmatprep.mubr.f32.mxu0 0.0
        %5226 = vmatmul.mubr.f32.gmra.mrb[0].mxu0 %v5032
        %v5227 = vpop.f32.mrb[0].mxu0
        %v5228 = vadd.f32 0.0, %v5227
        %v5229 = vpop.f32.mrb[0].mxu0
        %5230 = vmatprep.mubr.f32.mxu0 0.0
        %5231 = vmatmul.mubr.f32.gmra.mrb[0].mxu0 %v5033
        %v5232 = vpop.f32.mrb[0].mxu0
        %v5233 = vadd.f32 0.0, %v5232
        %v5234 = vpop.f32.mrb[0].mxu0
        %5235 = vmatprep.mubr.f32.mxu0 0.0
        %5236 = vmatmul.mubr.f32.gmra.mrb[0].mxu0 %v5034
        %v5237 = vpop.f32.mrb[0].mxu0
        %v5238 = vadd.f32 0.0, %v5237
        %v5239 = vpop.f32.mrb[0].mxu0
        %5240 = vmatprep.mubr.f32.mxu0 0.0
        %5241 = vmatmul.mubr.f32.gmra.mrb[0].mxu0 %v5035
        %v5242 = vpop.f32.mrb[0].mxu0
        %v5243 = vadd.f32 0.0, %v5242
        %v5244 = vpop.f32.mrb[0].mxu0
        %5245 = vmatprep.mubr.f32.mxu0 0.0
        %5246 = vmatmul.mubr.f32.gmra.mrb[0].mxu0 %v5036
        %v5247 = vpop.f32.mrb[0].mxu0
        %v5248 = vadd.f32 0.0, %v5247
        %v5249 = vpop.f32.mrb[0].mxu0
        %5250 = vmatprep.mubr.f32.mxu0 0.0
        %5251 = vmatmul.mubr.f32.gmra.mrb[0].mxu0 %v5037
        %v5252 = vpop.f32.mrb[0].mxu0
        %v5253 = vadd.f32 0.0, %v5252
        %v5254 = vpop.f32.mrb[0].mxu0
        %5255 = vmatprep.mubr.f32.mxu0 0.0
        %5256 = vmatmul.mubr.f32.gmra.mrb[0].mxu0 %v5038
        %v5257 = vpop.f32.mrb[0].mxu0
        %v5258 = vadd.f32 0.0, %v5257
        %v5259 = vpop.f32.mrb[0].mxu0
        %5260 = vmatprep.mubr.f32.mxu0 0.0
        %5261 = vmatmul.mubr.f32.gmra.mrb[0].mxu0 %v5039
        %v5262 = vpop.f32.mrb[0].mxu0
        %v5263 = vadd.f32 0.0, %v5262
        %v5264 = vpop.f32.mrb[0].mxu0
        %5265 = vmatprep.mubr.f32.mxu0 0.0
        %5266 = vmatmul.mubr.f32.gmra.mrb[0].mxu0 %v5040
        %v5267 = vpop.f32.mrb[0].mxu0
        %v5268 = vadd.f32 0.0, %v5267
        %v5269 = vpop.f32.mrb[0].mxu0
        %5270 = vmatprep.mubr.f32.mxu0 0.0
        %5271 = vmatmul.mubr.f32.gmra.mrb[0].mxu0 %v5041
        %v5272 = vpop.f32.mrb[0].mxu0
        %v5273 = vadd.f32 0.0, %v5272
        %v5274 = vpop.f32.mrb[0].mxu0
        %5275 = vmatprep.mubr.f32.mxu0 0.0
        %5276 = vmatmul.mubr.f32.gmra.mrb[0].mxu0 %v5042
        %v5277 = vpop.f32.mrb[0].mxu0
        %v5278 = vadd.f32 0.0, %v5277
        %v5279 = vpop.f32.mrb[0].mxu0
        %5280 = vmatprep.mubr.f32.mxu0 0.0
        %5281 = vmatmul.mubr.f32.gmra.mrb[0].mxu0 %v5043
        %v5282 = vpop.f32.mrb[0].mxu0
        %v5283 = vadd.f32 0.0, %v5282
        %v5284 = vpop.f32.mrb[0].mxu0
        %5285 = vdwg.mxu0
        %v5286 = vadd.f32 %v4854, %v5128
        %v5287 = vadd.f32 %v4859, %v5133
        %v5288 = vadd.f32 %v4864, %v5138
        %v5289 = vadd.f32 %v4869, %v5143
        %v5290 = vadd.f32 %v4874, %v5148
        %v5291 = vadd.f32 %v4879, %v5153
        %v5292 = vadd.f32 %v4884, %v5158
        %v5293 = vadd.f32 %v4889, %v5163
        %v5294 = vadd.f32 %v4894, %v5168
        %v5295 = vadd.f32 %v4899, %v5173
        %v5296 = vadd.f32 %v4904, %v5178
        %v5297 = vadd.f32 %v4909, %v5183
        %v5298 = vadd.f32 %v4914, %v5188
        %v5299 = vadd.f32 %v4919, %v5193
        %v5300 = vadd.f32 %v4924, %v5198
        %v5301 = vadd.f32 %v4929, %v5203
        %v5302 = vadd.f32 %v4934, %v5208
        %v5303 = vadd.f32 %v4939, %v5213
        %v5304 = vadd.f32 %v4944, %v5218
        %v5305 = vadd.f32 %v4949, %v5223
        %v5306 = vadd.f32 %v4954, %v5228
        %v5307 = vadd.f32 %v4959, %v5233
        %v5308 = vadd.f32 %v4964, %v5238
        %v5309 = vadd.f32 %v4969, %v5243
        %v5310 = vadd.f32 %v4974, %v5248
        %v5311 = vadd.f32 %v4979, %v5253
        %v5312 = vadd.f32 %v4984, %v5258
        %v5313 = vadd.f32 %v4989, %v5263
        %v5314 = vadd.f32 %v4994, %v5268
        %v5315 = vadd.f32 %v4999, %v5273
        %v5316 = vadd.f32 %v5004, %v5278
        %v5317 = vadd.f32 %v5009, %v5283
        %v5318 = vld [vmem:[#allocation2 + $0x10] sm:$0xff]
        %v5319 = vld [vmem:[#allocation2 + $0x18] sm:$0xff]
        %v5320 = vld [vmem:[#allocation2 + $0x20] sm:$0xff]
        %v5321 = vld [vmem:[#allocation2 + $0x28] sm:$0xff]
        %v5322 = vld [vmem:[#allocation2 + $0x30] sm:$0xff]
        %v5323 = vld [vmem:[#allocation2 + $0x38] sm:$0xff]
        %v5324 = vld [vmem:[#allocation2 + $0x40] sm:$0xff]
        %v5325 = vld [vmem:[#allocation2 + $0x48] sm:$0xff]
        %v5326 = vld [vmem:[#allocation2 + $0x50] sm:$0xff]
        %v5327 = vld [vmem:[#allocation2 + $0x58] sm:$0xff]
        %v5328 = vld [vmem:[#allocation2 + $0x60] sm:$0xff]
        %v5329 = vld [vmem:[#allocation2 + $0x68] sm:$0xff]
        %v5330 = vld [vmem:[#allocation2 + $0x70] sm:$0xff]
        %v5331 = vld [vmem:[#allocation2 + $0x78] sm:$0xff]
        %v5332 = vld [vmem:[#allocation2 + $0x80] sm:$0xff]
        %v5333 = vld [vmem:[#allocation2 + $0x88] sm:$0xff]
        %v5334 = vld [vmem:[#allocation2 + $0x90] sm:$0xff]
        %v5335 = vld [vmem:[#allocation2 + $0x98] sm:$0xff]
        %v5336 = vld [vmem:[#allocation2 + $0xa0] sm:$0xff]
        %v5337 = vld [vmem:[#allocation2 + $0xa8] sm:$0xff]
        %v5338 = vld [vmem:[#allocation2 + $0xb0] sm:$0xff]
        %v5339 = vld [vmem:[#allocation2 + $0xb8] sm:$0xff]
        %v5340 = vld [vmem:[#allocation2 + $0xc0] sm:$0xff]
        %v5341 = vld [vmem:[#allocation2 + $0xc8] sm:$0xff]
        %v5342 = vld [vmem:[#allocation2 + $0xd0] sm:$0xff]
        %v5343 = vld [vmem:[#allocation2 + $0xd8] sm:$0xff]
        %v5344 = vld [vmem:[#allocation2 + $0xe0] sm:$0xff]
        %v5345 = vld [vmem:[#allocation2 + $0xe8] sm:$0xff]
        %v5346 = vld [vmem:[#allocation2 + $0xf0] sm:$0xff]
        %v5347 = vld [vmem:[#allocation2 + $0xf8] sm:$0xff]
        %v5348 = vld [vmem:[#allocation2 + $0x100] sm:$0xff]
        %v5349 = vld [vmem:[#allocation2 + $0x108] sm:$0xff]
        %s5350 = scalar_lea.vmem [#allocation9], 384
        %v5351 = vld [vmem:[%s5350] sm:$0xff]
        %v5352 = vld [vmem:[%s5350 + $0x8] sm:$0xff]
        %v5353 = vld [vmem:[%s5350 + $0x10] sm:$0xff]
        %v5354 = vld [vmem:[%s5350 + $0x18] sm:$0xff]
        %v5355 = vld [vmem:[%s5350 + $0x20] sm:$0xff]
        %v5356 = vld [vmem:[%s5350 + $0x28] sm:$0xff]
        %v5357 = vld [vmem:[%s5350 + $0x30] sm:$0xff]
        %v5358 = vld [vmem:[%s5350 + $0x38] sm:$0xff]
        %v5359 = vld [vmem:[%s5350 + $0x40] sm:$0xff]
        %v5360 = vld [vmem:[%s5350 + $0x48] sm:$0xff]
        %v5361 = vld [vmem:[%s5350 + $0x50] sm:$0xff]
        %v5362 = vld [vmem:[%s5350 + $0x58] sm:$0xff]
        %v5363 = vld [vmem:[%s5350 + $0x60] sm:$0xff]
        %v5364 = vld [vmem:[%s5350 + $0x68] sm:$0xff]
        %v5365 = vld [vmem:[%s5350 + $0x70] sm:$0xff]
        %v5366 = vld [vmem:[%s5350 + $0x78] sm:$0xff]
        %5367 = vmatprep.subr.mxu0 0.0
        %5368 = vmatpush1.msra.mxu0 %v5351
        %5369 = vmatprep.subr.mxu0 0.0
        %5370 = vmatpush1.msra.mxu0 %v5352
        %5371 = vmatprep.subr.mxu0 0.0
        %5372 = vmatpush1.msra.mxu0 %v5353
        %5373 = vmatprep.subr.mxu0 0.0
        %5374 = vmatpush1.msra.mxu0 %v5354
        %5375 = vmatprep.subr.mxu0 0.0
        %5376 = vmatpush1.msra.mxu0 %v5355
        %5377 = vmatprep.subr.mxu0 0.0
        %5378 = vmatpush1.msra.mxu0 %v5356
        %5379 = vmatprep.subr.mxu0 0.0
        %5380 = vmatpush1.msra.mxu0 %v5357
        %5381 = vmatprep.subr.mxu0 0.0
        %5382 = vmatpush1.msra.mxu0 %v5358
        %5383 = vmatprep.subr.mxu0 0.0
        %5384 = vmatpush1.msra.mxu0 %v5359
        %5385 = vmatprep.subr.mxu0 0.0
        %5386 = vmatpush1.msra.mxu0 %v5360
        %5387 = vmatprep.subr.mxu0 0.0
        %5388 = vmatpush1.msra.mxu0 %v5361
        %5389 = vmatprep.subr.mxu0 0.0
        %5390 = vmatpush1.msra.mxu0 %v5362
        %5391 = vmatprep.subr.mxu0 0.0
        %5392 = vmatpush1.msra.mxu0 %v5363
        %5393 = vmatprep.subr.mxu0 0.0
        %5394 = vmatpush1.msra.mxu0 %v5364
        %5395 = vmatprep.subr.mxu0 0.0
        %5396 = vmatpush1.msra.mxu0 %v5365
        %5397 = vmatprep.subr.mxu0 0.0
        %5398 = vmatpush1.msra.mxu0 %v5366
        %5399 = vmatprep.subr.mxu0 0.0
        %5400 = vmatpush1.msra.mxu0 0.0
        %5401 = vmatprep.subr.mxu0 0.0
        %5402 = vmatpush1.msra.mxu0 0.0
        %5403 = vmatprep.subr.mxu0 0.0
        %5404 = vmatpush1.msra.mxu0 0.0
        %5405 = vmatprep.subr.mxu0 0.0
        %5406 = vmatpush1.msra.mxu0 0.0
        %5407 = vmatprep.subr.mxu0 0.0
        %5408 = vmatpush1.msra.mxu0 0.0
        %5409 = vmatprep.subr.mxu0 0.0
        %5410 = vmatpush1.msra.mxu0 0.0
        %5411 = vmatprep.subr.mxu0 0.0
        %5412 = vmatpush1.msra.mxu0 0.0
        %5413 = vmatprep.subr.mxu0 0.0
        %5414 = vmatpush1.msra.mxu0 0.0
        %5415 = vmatprep.subr.mxu0 0.0
        %5416 = vmatpush1.msra.mxu0 0.0
        %5417 = vmatprep.subr.mxu0 0.0
        %5418 = vmatpush1.msra.mxu0 0.0
        %5419 = vmatprep.subr.mxu0 0.0
        %5420 = vmatpush1.msra.mxu0 0.0
        %5421 = vmatprep.subr.mxu0 0.0
        %5422 = vmatpush1.msra.mxu0 0.0
        %5423 = vmatprep.subr.mxu0 0.0
        %5424 = vmatpush1.msra.mxu0 0.0
        %5425 = vmatprep.subr.mxu0 0.0
        %5426 = vmatpush1.msra.mxu0 0.0
        %5427 = vmatprep.subr.mxu0 0.0
        %5428 = vmatpush1.msra.mxu0 0.0
        %5429 = vmatprep.subr.mxu0 0.0
        %5430 = vmatpush1.msra.mxu0 0.0
        %5431 = vmatprep.mubr.f32.mxu0 0.0
        %5432 = vmatmul.mubr.f32.gmra.mrb[0].mxu0 %v5318
        %v5433 = vpop.f32.mrb[0].mxu0
        %v5434 = vadd.f32 0.0, %v5433
        %v5435 = vpop.f32.mrb[0].mxu0
        %5436 = vmatprep.mubr.f32.mxu0 0.0
        %5437 = vmatmul.mubr.f32.gmra.mrb[0].mxu0 %v5319
        %v5438 = vpop.f32.mrb[0].mxu0
        %v5439 = vadd.f32 0.0, %v5438
        %v5440 = vpop.f32.mrb[0].mxu0
        %5441 = vmatprep.mubr.f32.mxu0 0.0
        %5442 = vmatmul.mubr.f32.gmra.mrb[0].mxu0 %v5320
        %v5443 = vpop.f32.mrb[0].mxu0
        %v5444 = vadd.f32 0.0, %v5443
        %v5445 = vpop.f32.mrb[0].mxu0
        %5446 = vmatprep.mubr.f32.mxu0 0.0
        %5447 = vmatmul.mubr.f32.gmra.mrb[0].mxu0 %v5321
        %v5448 = vpop.f32.mrb[0].mxu0
        %v5449 = vadd.f32 0.0, %v5448
        %v5450 = vpop.f32.mrb[0].mxu0
        %5451 = vmatprep.mubr.f32.mxu0 0.0
        %5452 = vmatmul.mubr.f32.gmra.mrb[0].mxu0 %v5322
        %v5453 = vpop.f32.mrb[0].mxu0
        %v5454 = vadd.f32 0.0, %v5453
        %v5455 = vpop.f32.mrb[0].mxu0
        %5456 = vmatprep.mubr.f32.mxu0 0.0
        %5457 = vmatmul.mubr.f32.gmra.mrb[0].mxu0 %v5323
        %v5458 = vpop.f32.mrb[0].mxu0
        %v5459 = vadd.f32 0.0, %v5458
        %v5460 = vpop.f32.mrb[0].mxu0
        %5461 = vmatprep.mubr.f32.mxu0 0.0
        %5462 = vmatmul.mubr.f32.gmra.mrb[0].mxu0 %v5324
        %v5463 = vpop.f32.mrb[0].mxu0
        %v5464 = vadd.f32 0.0, %v5463
        %v5465 = vpop.f32.mrb[0].mxu0
        %5466 = vmatprep.mubr.f32.mxu0 0.0
        %5467 = vmatmul.mubr.f32.gmra.mrb[0].mxu0 %v5325
        %v5468 = vpop.f32.mrb[0].mxu0
        %v5469 = vadd.f32 0.0, %v5468
        %v5470 = vpop.f32.mrb[0].mxu0
        %5471 = vmatprep.mubr.f32.mxu0 0.0
        %5472 = vmatmul.mubr.f32.gmra.mrb[0].mxu0 %v5326
        %v5473 = vpop.f32.mrb[0].mxu0
        %v5474 = vadd.f32 0.0, %v5473
        %v5475 = vpop.f32.mrb[0].mxu0
        %5476 = vmatprep.mubr.f32.mxu0 0.0
        %5477 = vmatmul.mubr.f32.gmra.mrb[0].mxu0 %v5327
        %v5478 = vpop.f32.mrb[0].mxu0
        %v5479 = vadd.f32 0.0, %v5478
        %v5480 = vpop.f32.mrb[0].mxu0
        %5481 = vmatprep.mubr.f32.mxu0 0.0
        %5482 = vmatmul.mubr.f32.gmra.mrb[0].mxu0 %v5328
        %v5483 = vpop.f32.mrb[0].mxu0
        %v5484 = vadd.f32 0.0, %v5483
        %v5485 = vpop.f32.mrb[0].mxu0
        %5486 = vmatprep.mubr.f32.mxu0 0.0
        %5487 = vmatmul.mubr.f32.gmra.mrb[0].mxu0 %v5329
        %v5488 = vpop.f32.mrb[0].mxu0
        %v5489 = vadd.f32 0.0, %v5488
        %v5490 = vpop.f32.mrb[0].mxu0
        %5491 = vmatprep.mubr.f32.mxu0 0.0
        %5492 = vmatmul.mubr.f32.gmra.mrb[0].mxu0 %v5330
        %v5493 = vpop.f32.mrb[0].mxu0
        %v5494 = vadd.f32 0.0, %v5493
        %v5495 = vpop.f32.mrb[0].mxu0
        %5496 = vmatprep.mubr.f32.mxu0 0.0
        %5497 = vmatmul.mubr.f32.gmra.mrb[0].mxu0 %v5331
        %v5498 = vpop.f32.mrb[0].mxu0
        %v5499 = vadd.f32 0.0, %v5498
        %v5500 = vpop.f32.mrb[0].mxu0
        %5501 = vmatprep.mubr.f32.mxu0 0.0
        %5502 = vmatmul.mubr.f32.gmra.mrb[0].mxu0 %v5332
        %v5503 = vpop.f32.mrb[0].mxu0
        %v5504 = vadd.f32 0.0, %v5503
        %v5505 = vpop.f32.mrb[0].mxu0
        %5506 = vmatprep.mubr.f32.mxu0 0.0
        %5507 = vmatmul.mubr.f32.gmra.mrb[0].mxu0 %v5333
        %v5508 = vpop.f32.mrb[0].mxu0
        %v5509 = vadd.f32 0.0, %v5508
        %v5510 = vpop.f32.mrb[0].mxu0
        %5511 = vmatprep.mubr.f32.mxu0 0.0
        %5512 = vmatmul.mubr.f32.gmra.mrb[0].mxu0 %v5334
        %v5513 = vpop.f32.mrb[0].mxu0
        %v5514 = vadd.f32 0.0, %v5513
        %v5515 = vpop.f32.mrb[0].mxu0
        %5516 = vmatprep.mubr.f32.mxu0 0.0
        %5517 = vmatmul.mubr.f32.gmra.mrb[0].mxu0 %v5335
        %v5518 = vpop.f32.mrb[0].mxu0
        %v5519 = vadd.f32 0.0, %v5518
        %v5520 = vpop.f32.mrb[0].mxu0
        %5521 = vmatprep.mubr.f32.mxu0 0.0
        %5522 = vmatmul.mubr.f32.gmra.mrb[0].mxu0 %v5336
        %v5523 = vpop.f32.mrb[0].mxu0
        %v5524 = vadd.f32 0.0, %v5523
        %v5525 = vpop.f32.mrb[0].mxu0
        %5526 = vmatprep.mubr.f32.mxu0 0.0
        %5527 = vmatmul.mubr.f32.gmra.mrb[0].mxu0 %v5337
        %v5528 = vpop.f32.mrb[0].mxu0
        %v5529 = vadd.f32 0.0, %v5528
        %v5530 = vpop.f32.mrb[0].mxu0
        %5531 = vmatprep.mubr.f32.mxu0 0.0
        %5532 = vmatmul.mubr.f32.gmra.mrb[0].mxu0 %v5338
        %v5533 = vpop.f32.mrb[0].mxu0
        %v5534 = vadd.f32 0.0, %v5533
        %v5535 = vpop.f32.mrb[0].mxu0
        %5536 = vmatprep.mubr.f32.mxu0 0.0
        %5537 = vmatmul.mubr.f32.gmra.mrb[0].mxu0 %v5339
        %v5538 = vpop.f32.mrb[0].mxu0
        %v5539 = vadd.f32 0.0, %v5538
        %v5540 = vpop.f32.mrb[0].mxu0
        %5541 = vmatprep.mubr.f32.mxu0 0.0
        %5542 = vmatmul.mubr.f32.gmra.mrb[0].mxu0 %v5340
        %v5543 = vpop.f32.mrb[0].mxu0
        %v5544 = vadd.f32 0.0, %v5543
        %v5545 = vpop.f32.mrb[0].mxu0
        %5546 = vmatprep.mubr.f32.mxu0 0.0
        %5547 = vmatmul.mubr.f32.gmra.mrb[0].mxu0 %v5341
        %v5548 = vpop.f32.mrb[0].mxu0
        %v5549 = vadd.f32 0.0, %v5548
        %v5550 = vpop.f32.mrb[0].mxu0
        %5551 = vmatprep.mubr.f32.mxu0 0.0
        %5552 = vmatmul.mubr.f32.gmra.mrb[0].mxu0 %v5342
        %v5553 = vpop.f32.mrb[0].mxu0
        %v5554 = vadd.f32 0.0, %v5553
        %v5555 = vpop.f32.mrb[0].mxu0
        %5556 = vmatprep.mubr.f32.mxu0 0.0
        %5557 = vmatmul.mubr.f32.gmra.mrb[0].mxu0 %v5343
        %v5558 = vpop.f32.mrb[0].mxu0
        %v5559 = vadd.f32 0.0, %v5558
        %v5560 = vpop.f32.mrb[0].mxu0
        %5561 = vmatprep.mubr.f32.mxu0 0.0
        %5562 = vmatmul.mubr.f32.gmra.mrb[0].mxu0 %v5344
        %v5563 = vpop.f32.mrb[0].mxu0
        %v5564 = vadd.f32 0.0, %v5563
        %v5565 = vpop.f32.mrb[0].mxu0
        %5566 = vmatprep.mubr.f32.mxu0 0.0
        %5567 = vmatmul.mubr.f32.gmra.mrb[0].mxu0 %v5345
        %v5568 = vpop.f32.mrb[0].mxu0
        %v5569 = vadd.f32 0.0, %v5568
        %v5570 = vpop.f32.mrb[0].mxu0
        %5571 = vmatprep.mubr.f32.mxu0 0.0
        %5572 = vmatmul.mubr.f32.gmra.mrb[0].mxu0 %v5346
        %v5573 = vpop.f32.mrb[0].mxu0
        %v5574 = vadd.f32 0.0, %v5573
        %v5575 = vpop.f32.mrb[0].mxu0
        %5576 = vmatprep.mubr.f32.mxu0 0.0
        %5577 = vmatmul.mubr.f32.gmra.mrb[0].mxu0 %v5347
        %v5578 = vpop.f32.mrb[0].mxu0
        %v5579 = vadd.f32 0.0, %v5578
        %v5580 = vpop.f32.mrb[0].mxu0
        %5581 = vmatprep.mubr.f32.mxu0 0.0
        %5582 = vmatmul.mubr.f32.gmra.mrb[0].mxu0 %v5348
        %v5583 = vpop.f32.mrb[0].mxu0
        %v5584 = vadd.f32 0.0, %v5583
        %v5585 = vpop.f32.mrb[0].mxu0
        %5586 = vmatprep.mubr.f32.mxu0 0.0
        %5587 = vmatmul.mubr.f32.gmra.mrb[0].mxu0 %v5349
        %v5588 = vpop.f32.mrb[0].mxu0
        %v5589 = vadd.f32 0.0, %v5588
        %v5590 = vpop.f32.mrb[0].mxu0
        %5591 = vdwg.mxu0
        %v5592 = vadd.f32 %v5286, %v5434
        %v5593 = vadd.f32 %v5287, %v5439
        %v5594 = vadd.f32 %v5288, %v5444
        %v5595 = vadd.f32 %v5289, %v5449
        %v5596 = vadd.f32 %v5290, %v5454
        %v5597 = vadd.f32 %v5291, %v5459
        %v5598 = vadd.f32 %v5292, %v5464
        %v5599 = vadd.f32 %v5293, %v5469
        %v5600 = vadd.f32 %v5294, %v5474
        %v5601 = vadd.f32 %v5295, %v5479
        %v5602 = vadd.f32 %v5296, %v5484
        %v5603 = vadd.f32 %v5297, %v5489
        %v5604 = vadd.f32 %v5298, %v5494
        %v5605 = vadd.f32 %v5299, %v5499
        %v5606 = vadd.f32 %v5300, %v5504
        %v5607 = vadd.f32 %v5301, %v5509
        %v5608 = vadd.f32 %v5302, %v5514
        %v5609 = vadd.f32 %v5303, %v5519
        %v5610 = vadd.f32 %v5304, %v5524
        %v5611 = vadd.f32 %v5305, %v5529
        %v5612 = vadd.f32 %v5306, %v5534
        %v5613 = vadd.f32 %v5307, %v5539
        %v5614 = vadd.f32 %v5308, %v5544
        %v5615 = vadd.f32 %v5309, %v5549
        %v5616 = vadd.f32 %v5310, %v5554
        %v5617 = vadd.f32 %v5311, %v5559
        %v5618 = vadd.f32 %v5312, %v5564
        %v5619 = vadd.f32 %v5313, %v5569
        %v5620 = vadd.f32 %v5314, %v5574
        %v5621 = vadd.f32 %v5315, %v5579
        %v5622 = vadd.f32 %v5316, %v5584
        %v5623 = vadd.f32 %v5317, %v5589
        %v5624 = vld [vmem:[%s1312 + $0x10] sm:$0xff]
        %v5625 = vld [vmem:[%s1312 + $0x18] sm:$0xff]
        %v5626 = vld [vmem:[%s1312 + $0x20] sm:$0xff]
        %v5627 = vld [vmem:[%s1312 + $0x28] sm:$0xff]
        %v5628 = vld [vmem:[%s1312 + $0x30] sm:$0xff]
        %v5629 = vld [vmem:[%s1312 + $0x38] sm:$0xff]
        %v5630 = vld [vmem:[%s1312 + $0x40] sm:$0xff]
        %v5631 = vld [vmem:[%s1312 + $0x48] sm:$0xff]
        %v5632 = vld [vmem:[%s1312 + $0x50] sm:$0xff]
        %v5633 = vld [vmem:[%s1312 + $0x58] sm:$0xff]
        %v5634 = vld [vmem:[%s1312 + $0x60] sm:$0xff]
        %v5635 = vld [vmem:[%s1312 + $0x68] sm:$0xff]
        %v5636 = vld [vmem:[%s1312 + $0x70] sm:$0xff]
        %v5637 = vld [vmem:[%s1312 + $0x78] sm:$0xff]
        %v5638 = vld [vmem:[%s1312 + $0x80] sm:$0xff]
        %v5639 = vld [vmem:[%s1312 + $0x88] sm:$0xff]
        %v5640 = vld [vmem:[%s1312 + $0x90] sm:$0xff]
        %v5641 = vld [vmem:[%s1312 + $0x98] sm:$0xff]
        %v5642 = vld [vmem:[%s1312 + $0xa0] sm:$0xff]
        %v5643 = vld [vmem:[%s1312 + $0xa8] sm:$0xff]
        %v5644 = vld [vmem:[%s1312 + $0xb0] sm:$0xff]
        %v5645 = vld [vmem:[%s1312 + $0xb8] sm:$0xff]
        %v5646 = vld [vmem:[%s1312 + $0xc0] sm:$0xff]
        %v5647 = vld [vmem:[%s1312 + $0xc8] sm:$0xff]
        %v5648 = vld [vmem:[%s1312 + $0xd0] sm:$0xff]
        %v5649 = vld [vmem:[%s1312 + $0xd8] sm:$0xff]
        %v5650 = vld [vmem:[%s1312 + $0xe0] sm:$0xff]
        %v5651 = vld [vmem:[%s1312 + $0xe8] sm:$0xff]
        %v5652 = vld [vmem:[%s1312 + $0xf0] sm:$0xff]
        %v5653 = vld [vmem:[%s1312 + $0xf8] sm:$0xff]
        %v5654 = vld [vmem:[%s1312 + $0x100] sm:$0xff]
        %v5655 = vld [vmem:[%s1312 + $0x108] sm:$0xff]
        %s5656 = scalar_lea.vmem [#allocation9], 512
        %v5657 = vld [vmem:[%s5656] sm:$0xff]
        %v5658 = vld [vmem:[%s5656 + $0x8] sm:$0xff]
        %v5659 = vld [vmem:[%s5656 + $0x10] sm:$0xff]
        %v5660 = vld [vmem:[%s5656 + $0x18] sm:$0xff]
        %v5661 = vld [vmem:[%s5656 + $0x20] sm:$0xff]
        %v5662 = vld [vmem:[%s5656 + $0x28] sm:$0xff]
        %v5663 = vld [vmem:[%s5656 + $0x30] sm:$0xff]
        %v5664 = vld [vmem:[%s5656 + $0x38] sm:$0xff]
        %v5665 = vld [vmem:[%s5656 + $0x40] sm:$0xff]
        %v5666 = vld [vmem:[%s5656 + $0x48] sm:$0xff]
        %v5667 = vld [vmem:[%s5656 + $0x50] sm:$0xff]
        %v5668 = vld [vmem:[%s5656 + $0x58] sm:$0xff]
        %v5669 = vld [vmem:[%s5656 + $0x60] sm:$0xff]
        %v5670 = vld [vmem:[%s5656 + $0x68] sm:$0xff]
        %v5671 = vld [vmem:[%s5656 + $0x70] sm:$0xff]
        %v5672 = vld [vmem:[%s5656 + $0x78] sm:$0xff]
        %5673 = vmatprep.subr.mxu0 0.0
        %5674 = vmatpush1.msra.mxu0 %v5657
        %5675 = vmatprep.subr.mxu0 0.0
        %5676 = vmatpush1.msra.mxu0 %v5658
        %5677 = vmatprep.subr.mxu0 0.0
        %5678 = vmatpush1.msra.mxu0 %v5659
        %5679 = vmatprep.subr.mxu0 0.0
        %5680 = vmatpush1.msra.mxu0 %v5660
        %5681 = vmatprep.subr.mxu0 0.0
        %5682 = vmatpush1.msra.mxu0 %v5661
        %5683 = vmatprep.subr.mxu0 0.0
        %5684 = vmatpush1.msra.mxu0 %v5662
        %5685 = vmatprep.subr.mxu0 0.0
        %5686 = vmatpush1.msra.mxu0 %v5663
        %5687 = vmatprep.subr.mxu0 0.0
        %5688 = vmatpush1.msra.mxu0 %v5664
        %5689 = vmatprep.subr.mxu0 0.0
        %5690 = vmatpush1.msra.mxu0 %v5665
        %5691 = vmatprep.subr.mxu0 0.0
        %5692 = vmatpush1.msra.mxu0 %v5666
        %5693 = vmatprep.subr.mxu0 0.0
        %5694 = vmatpush1.msra.mxu0 %v5667
        %5695 = vmatprep.subr.mxu0 0.0
        %5696 = vmatpush1.msra.mxu0 %v5668
        %5697 = vmatprep.subr.mxu0 0.0
        %5698 = vmatpush1.msra.mxu0 %v5669
        %5699 = vmatprep.subr.mxu0 0.0
        %5700 = vmatpush1.msra.mxu0 %v5670
        %5701 = vmatprep.subr.mxu0 0.0
        %5702 = vmatpush1.msra.mxu0 %v5671
        %5703 = vmatprep.subr.mxu0 0.0
        %5704 = vmatpush1.msra.mxu0 %v5672
        %5705 = vmatprep.subr.mxu0 0.0
        %5706 = vmatpush1.msra.mxu0 0.0
        %5707 = vmatprep.subr.mxu0 0.0
        %5708 = vmatpush1.msra.mxu0 0.0
        %5709 = vmatprep.subr.mxu0 0.0
        %5710 = vmatpush1.msra.mxu0 0.0
        %5711 = vmatprep.subr.mxu0 0.0
        %5712 = vmatpush1.msra.mxu0 0.0
        %5713 = vmatprep.subr.mxu0 0.0
        %5714 = vmatpush1.msra.mxu0 0.0
        %5715 = vmatprep.subr.mxu0 0.0
        %5716 = vmatpush1.msra.mxu0 0.0
        %5717 = vmatprep.subr.mxu0 0.0
        %5718 = vmatpush1.msra.mxu0 0.0
        %5719 = vmatprep.subr.mxu0 0.0
        %5720 = vmatpush1.msra.mxu0 0.0
        %5721 = vmatprep.subr.mxu0 0.0
        %5722 = vmatpush1.msra.mxu0 0.0
        %5723 = vmatprep.subr.mxu0 0.0
        %5724 = vmatpush1.msra.mxu0 0.0
        %5725 = vmatprep.subr.mxu0 0.0
        %5726 = vmatpush1.msra.mxu0 0.0
        %5727 = vmatprep.subr.mxu0 0.0
        %5728 = vmatpush1.msra.mxu0 0.0
        %5729 = vmatprep.subr.mxu0 0.0
        %5730 = vmatpush1.msra.mxu0 0.0
        %5731 = vmatprep.subr.mxu0 0.0
        %5732 = vmatpush1.msra.mxu0 0.0
        %5733 = vmatprep.subr.mxu0 0.0
        %5734 = vmatpush1.msra.mxu0 0.0
        %5735 = vmatprep.subr.mxu0 0.0
        %5736 = vmatpush1.msra.mxu0 0.0
        %5737 = vmatprep.mubr.f32.mxu0 0.0
        %5738 = vmatmul.mubr.f32.gmra.mrb[0].mxu0 %v5624
        %v5739 = vpop.f32.mrb[0].mxu0
        %v5740 = vadd.f32 0.0, %v5739
        %v5741 = vpop.f32.mrb[0].mxu0
        %5742 = vmatprep.mubr.f32.mxu0 0.0
        %5743 = vmatmul.mubr.f32.gmra.mrb[0].mxu0 %v5625
        %v5744 = vpop.f32.mrb[0].mxu0
        %v5745 = vadd.f32 0.0, %v5744
        %v5746 = vpop.f32.mrb[0].mxu0
        %5747 = vmatprep.mubr.f32.mxu0 0.0
        %5748 = vmatmul.mubr.f32.gmra.mrb[0].mxu0 %v5626
        %v5749 = vpop.f32.mrb[0].mxu0
        %v5750 = vadd.f32 0.0, %v5749
        %v5751 = vpop.f32.mrb[0].mxu0
        %5752 = vmatprep.mubr.f32.mxu0 0.0
        %5753 = vmatmul.mubr.f32.gmra.mrb[0].mxu0 %v5627
        %v5754 = vpop.f32.mrb[0].mxu0
        %v5755 = vadd.f32 0.0, %v5754
        %v5756 = vpop.f32.mrb[0].mxu0
        %5757 = vmatprep.mubr.f32.mxu0 0.0
        %5758 = vmatmul.mubr.f32.gmra.mrb[0].mxu0 %v5628
        %v5759 = vpop.f32.mrb[0].mxu0
        %v5760 = vadd.f32 0.0, %v5759
        %v5761 = vpop.f32.mrb[0].mxu0
        %5762 = vmatprep.mubr.f32.mxu0 0.0
        %5763 = vmatmul.mubr.f32.gmra.mrb[0].mxu0 %v5629
        %v5764 = vpop.f32.mrb[0].mxu0
        %v5765 = vadd.f32 0.0, %v5764
        %v5766 = vpop.f32.mrb[0].mxu0
        %5767 = vmatprep.mubr.f32.mxu0 0.0
        %5768 = vmatmul.mubr.f32.gmra.mrb[0].mxu0 %v5630
        %v5769 = vpop.f32.mrb[0].mxu0
        %v5770 = vadd.f32 0.0, %v5769
        %v5771 = vpop.f32.mrb[0].mxu0
        %5772 = vmatprep.mubr.f32.mxu0 0.0
        %5773 = vmatmul.mubr.f32.gmra.mrb[0].mxu0 %v5631
        %v5774 = vpop.f32.mrb[0].mxu0
        %v5775 = vadd.f32 0.0, %v5774
        %v5776 = vpop.f32.mrb[0].mxu0
        %5777 = vmatprep.mubr.f32.mxu0 0.0
        %5778 = vmatmul.mubr.f32.gmra.mrb[0].mxu0 %v5632
        %v5779 = vpop.f32.mrb[0].mxu0
        %v5780 = vadd.f32 0.0, %v5779
        %v5781 = vpop.f32.mrb[0].mxu0
        %5782 = vmatprep.mubr.f32.mxu0 0.0
        %5783 = vmatmul.mubr.f32.gmra.mrb[0].mxu0 %v5633
        %v5784 = vpop.f32.mrb[0].mxu0
        %v5785 = vadd.f32 0.0, %v5784
        %v5786 = vpop.f32.mrb[0].mxu0
        %5787 = vmatprep.mubr.f32.mxu0 0.0
        %5788 = vmatmul.mubr.f32.gmra.mrb[0].mxu0 %v5634
        %v5789 = vpop.f32.mrb[0].mxu0
        %v5790 = vadd.f32 0.0, %v5789
        %v5791 = vpop.f32.mrb[0].mxu0
        %5792 = vmatprep.mubr.f32.mxu0 0.0
        %5793 = vmatmul.mubr.f32.gmra.mrb[0].mxu0 %v5635
        %v5794 = vpop.f32.mrb[0].mxu0
        %v5795 = vadd.f32 0.0, %v5794
        %v5796 = vpop.f32.mrb[0].mxu0
        %5797 = vmatprep.mubr.f32.mxu0 0.0
        %5798 = vmatmul.mubr.f32.gmra.mrb[0].mxu0 %v5636
        %v5799 = vpop.f32.mrb[0].mxu0
        %v5800 = vadd.f32 0.0, %v5799
        %v5801 = vpop.f32.mrb[0].mxu0
        %5802 = vmatprep.mubr.f32.mxu0 0.0
        %5803 = vmatmul.mubr.f32.gmra.mrb[0].mxu0 %v5637
        %v5804 = vpop.f32.mrb[0].mxu0
        %v5805 = vadd.f32 0.0, %v5804
        %v5806 = vpop.f32.mrb[0].mxu0
        %5807 = vmatprep.mubr.f32.mxu0 0.0
        %5808 = vmatmul.mubr.f32.gmra.mrb[0].mxu0 %v5638
        %v5809 = vpop.f32.mrb[0].mxu0
        %v5810 = vadd.f32 0.0, %v5809
        %v5811 = vpop.f32.mrb[0].mxu0
        %5812 = vmatprep.mubr.f32.mxu0 0.0
        %5813 = vmatmul.mubr.f32.gmra.mrb[0].mxu0 %v5639
        %v5814 = vpop.f32.mrb[0].mxu0
        %v5815 = vadd.f32 0.0, %v5814
        %v5816 = vpop.f32.mrb[0].mxu0
        %5817 = vmatprep.mubr.f32.mxu0 0.0
        %5818 = vmatmul.mubr.f32.gmra.mrb[0].mxu0 %v5640
        %v5819 = vpop.f32.mrb[0].mxu0
        %v5820 = vadd.f32 0.0, %v5819
        %v5821 = vpop.f32.mrb[0].mxu0
        %5822 = vmatprep.mubr.f32.mxu0 0.0
        %5823 = vmatmul.mubr.f32.gmra.mrb[0].mxu0 %v5641
        %v5824 = vpop.f32.mrb[0].mxu0
        %v5825 = vadd.f32 0.0, %v5824
        %v5826 = vpop.f32.mrb[0].mxu0
        %5827 = vmatprep.mubr.f32.mxu0 0.0
        %5828 = vmatmul.mubr.f32.gmra.mrb[0].mxu0 %v5642
        %v5829 = vpop.f32.mrb[0].mxu0
        %v5830 = vadd.f32 0.0, %v5829
        %v5831 = vpop.f32.mrb[0].mxu0
        %5832 = vmatprep.mubr.f32.mxu0 0.0
        %5833 = vmatmul.mubr.f32.gmra.mrb[0].mxu0 %v5643
        %v5834 = vpop.f32.mrb[0].mxu0
        %v5835 = vadd.f32 0.0, %v5834
        %v5836 = vpop.f32.mrb[0].mxu0
        %5837 = vmatprep.mubr.f32.mxu0 0.0
        %5838 = vmatmul.mubr.f32.gmra.mrb[0].mxu0 %v5644
        %v5839 = vpop.f32.mrb[0].mxu0
        %v5840 = vadd.f32 0.0, %v5839
        %v5841 = vpop.f32.mrb[0].mxu0
        %5842 = vmatprep.mubr.f32.mxu0 0.0
        %5843 = vmatmul.mubr.f32.gmra.mrb[0].mxu0 %v5645
        %v5844 = vpop.f32.mrb[0].mxu0
        %v5845 = vadd.f32 0.0, %v5844
        %v5846 = vpop.f32.mrb[0].mxu0
        %5847 = vmatprep.mubr.f32.mxu0 0.0
        %5848 = vmatmul.mubr.f32.gmra.mrb[0].mxu0 %v5646
        %v5849 = vpop.f32.mrb[0].mxu0
        %v5850 = vadd.f32 0.0, %v5849
        %v5851 = vpop.f32.mrb[0].mxu0
        %5852 = vmatprep.mubr.f32.mxu0 0.0
        %5853 = vmatmul.mubr.f32.gmra.mrb[0].mxu0 %v5647
        %v5854 = vpop.f32.mrb[0].mxu0
        %v5855 = vadd.f32 0.0, %v5854
        %v5856 = vpop.f32.mrb[0].mxu0
        %5857 = vmatprep.mubr.f32.mxu0 0.0
        %5858 = vmatmul.mubr.f32.gmra.mrb[0].mxu0 %v5648
        %v5859 = vpop.f32.mrb[0].mxu0
        %v5860 = vadd.f32 0.0, %v5859
        %v5861 = vpop.f32.mrb[0].mxu0
        %5862 = vmatprep.mubr.f32.mxu0 0.0
        %5863 = vmatmul.mubr.f32.gmra.mrb[0].mxu0 %v5649
        %v5864 = vpop.f32.mrb[0].mxu0
        %v5865 = vadd.f32 0.0, %v5864
        %v5866 = vpop.f32.mrb[0].mxu0
        %5867 = vmatprep.mubr.f32.mxu0 0.0
        %5868 = vmatmul.mubr.f32.gmra.mrb[0].mxu0 %v5650
        %v5869 = vpop.f32.mrb[0].mxu0
        %v5870 = vadd.f32 0.0, %v5869
        %v5871 = vpop.f32.mrb[0].mxu0
        %5872 = vmatprep.mubr.f32.mxu0 0.0
        %5873 = vmatmul.mubr.f32.gmra.mrb[0].mxu0 %v5651
        %v5874 = vpop.f32.mrb[0].mxu0
        %v5875 = vadd.f32 0.0, %v5874
        %v5876 = vpop.f32.mrb[0].mxu0
        %5877 = vmatprep.mubr.f32.mxu0 0.0
        %5878 = vmatmul.mubr.f32.gmra.mrb[0].mxu0 %v5652
        %v5879 = vpop.f32.mrb[0].mxu0
        %v5880 = vadd.f32 0.0, %v5879
        %v5881 = vpop.f32.mrb[0].mxu0
        %5882 = vmatprep.mubr.f32.mxu0 0.0
        %5883 = vmatmul.mubr.f32.gmra.mrb[0].mxu0 %v5653
        %v5884 = vpop.f32.mrb[0].mxu0
        %v5885 = vadd.f32 0.0, %v5884
        %v5886 = vpop.f32.mrb[0].mxu0
        %5887 = vmatprep.mubr.f32.mxu0 0.0
        %5888 = vmatmul.mubr.f32.gmra.mrb[0].mxu0 %v5654
        %v5889 = vpop.f32.mrb[0].mxu0
        %v5890 = vadd.f32 0.0, %v5889
        %v5891 = vpop.f32.mrb[0].mxu0
        %5892 = vmatprep.mubr.f32.mxu0 0.0
        %5893 = vmatmul.mubr.f32.gmra.mrb[0].mxu0 %v5655
        %v5894 = vpop.f32.mrb[0].mxu0
        %v5895 = vadd.f32 0.0, %v5894
        %v5896 = vpop.f32.mrb[0].mxu0
        %5897 = vdwg.mxu0
        %v5898 = vadd.f32 %v5592, %v5740
        %v5899 = vadd.f32 %v5593, %v5745
        %v5900 = vadd.f32 %v5594, %v5750
        %v5901 = vadd.f32 %v5595, %v5755
        %v5902 = vadd.f32 %v5596, %v5760
        %v5903 = vadd.f32 %v5597, %v5765
        %v5904 = vadd.f32 %v5598, %v5770
        %v5905 = vadd.f32 %v5599, %v5775
        %v5906 = vadd.f32 %v5600, %v5780
        %v5907 = vadd.f32 %v5601, %v5785
        %v5908 = vadd.f32 %v5602, %v5790
        %v5909 = vadd.f32 %v5603, %v5795
        %v5910 = vadd.f32 %v5604, %v5800
        %v5911 = vadd.f32 %v5605, %v5805
        %v5912 = vadd.f32 %v5606, %v5810
        %v5913 = vadd.f32 %v5607, %v5815
        %v5914 = vadd.f32 %v5608, %v5820
        %v5915 = vadd.f32 %v5609, %v5825
        %v5916 = vadd.f32 %v5610, %v5830
        %v5917 = vadd.f32 %v5611, %v5835
        %v5918 = vadd.f32 %v5612, %v5840
        %v5919 = vadd.f32 %v5613, %v5845
        %v5920 = vadd.f32 %v5614, %v5850
        %v5921 = vadd.f32 %v5615, %v5855
        %v5922 = vadd.f32 %v5616, %v5860
        %v5923 = vadd.f32 %v5617, %v5865
        %v5924 = vadd.f32 %v5618, %v5870
        %v5925 = vadd.f32 %v5619, %v5875
        %v5926 = vadd.f32 %v5620, %v5880
        %v5927 = vadd.f32 %v5621, %v5885
        %v5928 = vadd.f32 %v5622, %v5890
        %v5929 = vadd.f32 %v5623, %v5895
        %v5930 = vld [vmem:[%s1345 + $0x10] sm:$0xff]
        %v5931 = vld [vmem:[%s1345 + $0x18] sm:$0xff]
        %v5932 = vld [vmem:[%s1345 + $0x20] sm:$0xff]
        %v5933 = vld [vmem:[%s1345 + $0x28] sm:$0xff]
        %v5934 = vld [vmem:[%s1345 + $0x30] sm:$0xff]
        %v5935 = vld [vmem:[%s1345 + $0x38] sm:$0xff]
        %v5936 = vld [vmem:[%s1345 + $0x40] sm:$0xff]
        %v5937 = vld [vmem:[%s1345 + $0x48] sm:$0xff]
        %v5938 = vld [vmem:[%s1345 + $0x50] sm:$0xff]
        %v5939 = vld [vmem:[%s1345 + $0x58] sm:$0xff]
        %v5940 = vld [vmem:[%s1345 + $0x60] sm:$0xff]
        %v5941 = vld [vmem:[%s1345 + $0x68] sm:$0xff]
        %v5942 = vld [vmem:[%s1345 + $0x70] sm:$0xff]
        %v5943 = vld [vmem:[%s1345 + $0x78] sm:$0xff]
        %v5944 = vld [vmem:[%s1345 + $0x80] sm:$0xff]
        %v5945 = vld [vmem:[%s1345 + $0x88] sm:$0xff]
        %v5946 = vld [vmem:[%s1345 + $0x90] sm:$0xff]
        %v5947 = vld [vmem:[%s1345 + $0x98] sm:$0xff]
        %v5948 = vld [vmem:[%s1345 + $0xa0] sm:$0xff]
        %v5949 = vld [vmem:[%s1345 + $0xa8] sm:$0xff]
        %v5950 = vld [vmem:[%s1345 + $0xb0] sm:$0xff]
        %v5951 = vld [vmem:[%s1345 + $0xb8] sm:$0xff]
        %v5952 = vld [vmem:[%s1345 + $0xc0] sm:$0xff]
        %v5953 = vld [vmem:[%s1345 + $0xc8] sm:$0xff]
        %v5954 = vld [vmem:[%s1345 + $0xd0] sm:$0xff]
        %v5955 = vld [vmem:[%s1345 + $0xd8] sm:$0xff]
        %v5956 = vld [vmem:[%s1345 + $0xe0] sm:$0xff]
        %v5957 = vld [vmem:[%s1345 + $0xe8] sm:$0xff]
        %v5958 = vld [vmem:[%s1345 + $0xf0] sm:$0xff]
        %v5959 = vld [vmem:[%s1345 + $0xf8] sm:$0xff]
        %v5960 = vld [vmem:[%s1345 + $0x100] sm:$0xff]
        %v5961 = vld [vmem:[%s1345 + $0x108] sm:$0xff]
        %s5962 = scalar_lea.vmem [#allocation9], 640
        %v5963 = vld [vmem:[%s5962] sm:$0xff]
        %v5964 = vld [vmem:[%s5962 + $0x8] sm:$0xff]
        %v5965 = vld [vmem:[%s5962 + $0x10] sm:$0xff]
        %v5966 = vld [vmem:[%s5962 + $0x18] sm:$0xff]
        %v5967 = vld [vmem:[%s5962 + $0x20] sm:$0xff]
        %v5968 = vld [vmem:[%s5962 + $0x28] sm:$0xff]
        %v5969 = vld [vmem:[%s5962 + $0x30] sm:$0xff]
        %v5970 = vld [vmem:[%s5962 + $0x38] sm:$0xff]
        %v5971 = vld [vmem:[%s5962 + $0x40] sm:$0xff]
        %v5972 = vld [vmem:[%s5962 + $0x48] sm:$0xff]
        %v5973 = vld [vmem:[%s5962 + $0x50] sm:$0xff]
        %v5974 = vld [vmem:[%s5962 + $0x58] sm:$0xff]
        %v5975 = vld [vmem:[%s5962 + $0x60] sm:$0xff]
        %v5976 = vld [vmem:[%s5962 + $0x68] sm:$0xff]
        %v5977 = vld [vmem:[%s5962 + $0x70] sm:$0xff]
        %v5978 = vld [vmem:[%s5962 + $0x78] sm:$0xff]
        %5979 = vmatprep.subr.mxu0 0.0
        %5980 = vmatpush1.msra.mxu0 %v5963
        %5981 = vmatprep.subr.mxu0 0.0
        %5982 = vmatpush1.msra.mxu0 %v5964
        %5983 = vmatprep.subr.mxu0 0.0
        %5984 = vmatpush1.msra.mxu0 %v5965
        %5985 = vmatprep.subr.mxu0 0.0
        %5986 = vmatpush1.msra.mxu0 %v5966
        %5987 = vmatprep.subr.mxu0 0.0
        %5988 = vmatpush1.msra.mxu0 %v5967
        %5989 = vmatprep.subr.mxu0 0.0
        %5990 = vmatpush1.msra.mxu0 %v5968
        %5991 = vmatprep.subr.mxu0 0.0
        %5992 = vmatpush1.msra.mxu0 %v5969
        %5993 = vmatprep.subr.mxu0 0.0
        %5994 = vmatpush1.msra.mxu0 %v5970
        %5995 = vmatprep.subr.mxu0 0.0
        %5996 = vmatpush1.msra.mxu0 %v5971
        %5997 = vmatprep.subr.mxu0 0.0
        %5998 = vmatpush1.msra.mxu0 %v5972
        %5999 = vmatprep.subr.mxu0 0.0
        %6000 = vmatpush1.msra.mxu0 %v5973
        %6001 = vmatprep.subr.mxu0 0.0
        %6002 = vmatpush1.msra.mxu0 %v5974
        %6003 = vmatprep.subr.mxu0 0.0
        %6004 = vmatpush1.msra.mxu0 %v5975
        %6005 = vmatprep.subr.mxu0 0.0
        %6006 = vmatpush1.msra.mxu0 %v5976
        %6007 = vmatprep.subr.mxu0 0.0
        %6008 = vmatpush1.msra.mxu0 %v5977
        %6009 = vmatprep.subr.mxu0 0.0
        %6010 = vmatpush1.msra.mxu0 %v5978
        %6011 = vmatprep.subr.mxu0 0.0
        %6012 = vmatpush1.msra.mxu0 0.0
        %6013 = vmatprep.subr.mxu0 0.0
        %6014 = vmatpush1.msra.mxu0 0.0
        %6015 = vmatprep.subr.mxu0 0.0
        %6016 = vmatpush1.msra.mxu0 0.0
        %6017 = vmatprep.subr.mxu0 0.0
        %6018 = vmatpush1.msra.mxu0 0.0
        %6019 = vmatprep.subr.mxu0 0.0
        %6020 = vmatpush1.msra.mxu0 0.0
        %6021 = vmatprep.subr.mxu0 0.0
        %6022 = vmatpush1.msra.mxu0 0.0
        %6023 = vmatprep.subr.mxu0 0.0
        %6024 = vmatpush1.msra.mxu0 0.0
        %6025 = vmatprep.subr.mxu0 0.0
        %6026 = vmatpush1.msra.mxu0 0.0
        %6027 = vmatprep.subr.mxu0 0.0
        %6028 = vmatpush1.msra.mxu0 0.0
        %6029 = vmatprep.subr.mxu0 0.0
        %6030 = vmatpush1.msra.mxu0 0.0
        %6031 = vmatprep.subr.mxu0 0.0
        %6032 = vmatpush1.msra.mxu0 0.0
        %6033 = vmatprep.subr.mxu0 0.0
        %6034 = vmatpush1.msra.mxu0 0.0
        %6035 = vmatprep.subr.mxu0 0.0
        %6036 = vmatpush1.msra.mxu0 0.0
        %6037 = vmatprep.subr.mxu0 0.0
        %6038 = vmatpush1.msra.mxu0 0.0
        %6039 = vmatprep.subr.mxu0 0.0
        %6040 = vmatpush1.msra.mxu0 0.0
        %6041 = vmatprep.subr.mxu0 0.0
        %6042 = vmatpush1.msra.mxu0 0.0
        %6043 = vmatprep.mubr.f32.mxu0 0.0
        %6044 = vmatmul.mubr.f32.gmra.mrb[0].mxu0 %v5930
        %v6045 = vpop.f32.mrb[0].mxu0
        %v6046 = vadd.f32 0.0, %v6045
        %v6047 = vpop.f32.mrb[0].mxu0
        %6048 = vmatprep.mubr.f32.mxu0 0.0
        %6049 = vmatmul.mubr.f32.gmra.mrb[0].mxu0 %v5931
        %v6050 = vpop.f32.mrb[0].mxu0
        %v6051 = vadd.f32 0.0, %v6050
        %v6052 = vpop.f32.mrb[0].mxu0
        %6053 = vmatprep.mubr.f32.mxu0 0.0
        %6054 = vmatmul.mubr.f32.gmra.mrb[0].mxu0 %v5932
        %v6055 = vpop.f32.mrb[0].mxu0
        %v6056 = vadd.f32 0.0, %v6055
        %v6057 = vpop.f32.mrb[0].mxu0
        %6058 = vmatprep.mubr.f32.mxu0 0.0
        %6059 = vmatmul.mubr.f32.gmra.mrb[0].mxu0 %v5933
        %v6060 = vpop.f32.mrb[0].mxu0
        %v6061 = vadd.f32 0.0, %v6060
        %v6062 = vpop.f32.mrb[0].mxu0
        %6063 = vmatprep.mubr.f32.mxu0 0.0
        %6064 = vmatmul.mubr.f32.gmra.mrb[0].mxu0 %v5934
        %v6065 = vpop.f32.mrb[0].mxu0
        %v6066 = vadd.f32 0.0, %v6065
        %v6067 = vpop.f32.mrb[0].mxu0
        %6068 = vmatprep.mubr.f32.mxu0 0.0
        %6069 = vmatmul.mubr.f32.gmra.mrb[0].mxu0 %v5935
        %v6070 = vpop.f32.mrb[0].mxu0
        %v6071 = vadd.f32 0.0, %v6070
        %v6072 = vpop.f32.mrb[0].mxu0
        %6073 = vmatprep.mubr.f32.mxu0 0.0
        %6074 = vmatmul.mubr.f32.gmra.mrb[0].mxu0 %v5936
        %v6075 = vpop.f32.mrb[0].mxu0
        %v6076 = vadd.f32 0.0, %v6075
        %v6077 = vpop.f32.mrb[0].mxu0
        %6078 = vmatprep.mubr.f32.mxu0 0.0
        %6079 = vmatmul.mubr.f32.gmra.mrb[0].mxu0 %v5937
        %v6080 = vpop.f32.mrb[0].mxu0
        %v6081 = vadd.f32 0.0, %v6080
        %v6082 = vpop.f32.mrb[0].mxu0
        %6083 = vmatprep.mubr.f32.mxu0 0.0
        %6084 = vmatmul.mubr.f32.gmra.mrb[0].mxu0 %v5938
        %v6085 = vpop.f32.mrb[0].mxu0
        %v6086 = vadd.f32 0.0, %v6085
        %v6087 = vpop.f32.mrb[0].mxu0
        %6088 = vmatprep.mubr.f32.mxu0 0.0
        %6089 = vmatmul.mubr.f32.gmra.mrb[0].mxu0 %v5939
        %v6090 = vpop.f32.mrb[0].mxu0
        %v6091 = vadd.f32 0.0, %v6090
        %v6092 = vpop.f32.mrb[0].mxu0
        %6093 = vmatprep.mubr.f32.mxu0 0.0
        %6094 = vmatmul.mubr.f32.gmra.mrb[0].mxu0 %v5940
        %v6095 = vpop.f32.mrb[0].mxu0
        %v6096 = vadd.f32 0.0, %v6095
        %v6097 = vpop.f32.mrb[0].mxu0
        %6098 = vmatprep.mubr.f32.mxu0 0.0
        %6099 = vmatmul.mubr.f32.gmra.mrb[0].mxu0 %v5941
        %v6100 = vpop.f32.mrb[0].mxu0
        %v6101 = vadd.f32 0.0, %v6100
        %v6102 = vpop.f32.mrb[0].mxu0
        %6103 = vmatprep.mubr.f32.mxu0 0.0
        %6104 = vmatmul.mubr.f32.gmra.mrb[0].mxu0 %v5942
        %v6105 = vpop.f32.mrb[0].mxu0
        %v6106 = vadd.f32 0.0, %v6105
        %v6107 = vpop.f32.mrb[0].mxu0
        %6108 = vmatprep.mubr.f32.mxu0 0.0
        %6109 = vmatmul.mubr.f32.gmra.mrb[0].mxu0 %v5943
        %v6110 = vpop.f32.mrb[0].mxu0
        %v6111 = vadd.f32 0.0, %v6110
        %v6112 = vpop.f32.mrb[0].mxu0
        %6113 = vmatprep.mubr.f32.mxu0 0.0
        %6114 = vmatmul.mubr.f32.gmra.mrb[0].mxu0 %v5944
        %v6115 = vpop.f32.mrb[0].mxu0
        %v6116 = vadd.f32 0.0, %v6115
        %v6117 = vpop.f32.mrb[0].mxu0
        %6118 = vmatprep.mubr.f32.mxu0 0.0
        %6119 = vmatmul.mubr.f32.gmra.mrb[0].mxu0 %v5945
        %v6120 = vpop.f32.mrb[0].mxu0
        %v6121 = vadd.f32 0.0, %v6120
        %v6122 = vpop.f32.mrb[0].mxu0
        %6123 = vmatprep.mubr.f32.mxu0 0.0
        %6124 = vmatmul.mubr.f32.gmra.mrb[0].mxu0 %v5946
        %v6125 = vpop.f32.mrb[0].mxu0
        %v6126 = vadd.f32 0.0, %v6125
        %v6127 = vpop.f32.mrb[0].mxu0
        %6128 = vmatprep.mubr.f32.mxu0 0.0
        %6129 = vmatmul.mubr.f32.gmra.mrb[0].mxu0 %v5947
        %v6130 = vpop.f32.mrb[0].mxu0
        %v6131 = vadd.f32 0.0, %v6130
        %v6132 = vpop.f32.mrb[0].mxu0
        %6133 = vmatprep.mubr.f32.mxu0 0.0
        %6134 = vmatmul.mubr.f32.gmra.mrb[0].mxu0 %v5948
        %v6135 = vpop.f32.mrb[0].mxu0
        %v6136 = vadd.f32 0.0, %v6135
        %v6137 = vpop.f32.mrb[0].mxu0
        %6138 = vmatprep.mubr.f32.mxu0 0.0
        %6139 = vmatmul.mubr.f32.gmra.mrb[0].mxu0 %v5949
        %v6140 = vpop.f32.mrb[0].mxu0
        %v6141 = vadd.f32 0.0, %v6140
        %v6142 = vpop.f32.mrb[0].mxu0
        %6143 = vmatprep.mubr.f32.mxu0 0.0
        %6144 = vmatmul.mubr.f32.gmra.mrb[0].mxu0 %v5950
        %v6145 = vpop.f32.mrb[0].mxu0
        %v6146 = vadd.f32 0.0, %v6145
        %v6147 = vpop.f32.mrb[0].mxu0
        %6148 = vmatprep.mubr.f32.mxu0 0.0
        %6149 = vmatmul.mubr.f32.gmra.mrb[0].mxu0 %v5951
        %v6150 = vpop.f32.mrb[0].mxu0
        %v6151 = vadd.f32 0.0, %v6150
        %v6152 = vpop.f32.mrb[0].mxu0
        %6153 = vmatprep.mubr.f32.mxu0 0.0
        %6154 = vmatmul.mubr.f32.gmra.mrb[0].mxu0 %v5952
        %v6155 = vpop.f32.mrb[0].mxu0
        %v6156 = vadd.f32 0.0, %v6155
        %v6157 = vpop.f32.mrb[0].mxu0
        %6158 = vmatprep.mubr.f32.mxu0 0.0
        %6159 = vmatmul.mubr.f32.gmra.mrb[0].mxu0 %v5953
        %v6160 = vpop.f32.mrb[0].mxu0
        %v6161 = vadd.f32 0.0, %v6160
        %v6162 = vpop.f32.mrb[0].mxu0
        %6163 = vmatprep.mubr.f32.mxu0 0.0
        %6164 = vmatmul.mubr.f32.gmra.mrb[0].mxu0 %v5954
        %v6165 = vpop.f32.mrb[0].mxu0
        %v6166 = vadd.f32 0.0, %v6165
        %v6167 = vpop.f32.mrb[0].mxu0
        %6168 = vmatprep.mubr.f32.mxu0 0.0
        %6169 = vmatmul.mubr.f32.gmra.mrb[0].mxu0 %v5955
        %v6170 = vpop.f32.mrb[0].mxu0
        %v6171 = vadd.f32 0.0, %v6170
        %v6172 = vpop.f32.mrb[0].mxu0
        %6173 = vmatprep.mubr.f32.mxu0 0.0
        %6174 = vmatmul.mubr.f32.gmra.mrb[0].mxu0 %v5956
        %v6175 = vpop.f32.mrb[0].mxu0
        %v6176 = vadd.f32 0.0, %v6175
        %v6177 = vpop.f32.mrb[0].mxu0
        %6178 = vmatprep.mubr.f32.mxu0 0.0
        %6179 = vmatmul.mubr.f32.gmra.mrb[0].mxu0 %v5957
        %v6180 = vpop.f32.mrb[0].mxu0
        %v6181 = vadd.f32 0.0, %v6180
        %v6182 = vpop.f32.mrb[0].mxu0
        %6183 = vmatprep.mubr.f32.mxu0 0.0
        %6184 = vmatmul.mubr.f32.gmra.mrb[0].mxu0 %v5958
        %v6185 = vpop.f32.mrb[0].mxu0
        %v6186 = vadd.f32 0.0, %v6185
        %v6187 = vpop.f32.mrb[0].mxu0
        %6188 = vmatprep.mubr.f32.mxu0 0.0
        %6189 = vmatmul.mubr.f32.gmra.mrb[0].mxu0 %v5959
        %v6190 = vpop.f32.mrb[0].mxu0
        %v6191 = vadd.f32 0.0, %v6190
        %v6192 = vpop.f32.mrb[0].mxu0
        %6193 = vmatprep.mubr.f32.mxu0 0.0
        %6194 = vmatmul.mubr.f32.gmra.mrb[0].mxu0 %v5960
        %v6195 = vpop.f32.mrb[0].mxu0
        %v6196 = vadd.f32 0.0, %v6195
        %v6197 = vpop.f32.mrb[0].mxu0
        %6198 = vmatprep.mubr.f32.mxu0 0.0
        %6199 = vmatmul.mubr.f32.gmra.mrb[0].mxu0 %v5961
        %v6200 = vpop.f32.mrb[0].mxu0
        %v6201 = vadd.f32 0.0, %v6200
        %v6202 = vpop.f32.mrb[0].mxu0
        %6203 = vdwg.mxu0
        %v6204 = vadd.f32 %v5898, %v6046
        %v6205 = vadd.f32 %v5899, %v6051
        %v6206 = vadd.f32 %v5900, %v6056
        %v6207 = vadd.f32 %v5901, %v6061
        %v6208 = vadd.f32 %v5902, %v6066
        %v6209 = vadd.f32 %v5903, %v6071
        %v6210 = vadd.f32 %v5904, %v6076
        %v6211 = vadd.f32 %v5905, %v6081
        %v6212 = vadd.f32 %v5906, %v6086
        %v6213 = vadd.f32 %v5907, %v6091
        %v6214 = vadd.f32 %v5908, %v6096
        %v6215 = vadd.f32 %v5909, %v6101
        %v6216 = vadd.f32 %v5910, %v6106
        %v6217 = vadd.f32 %v5911, %v6111
        %v6218 = vadd.f32 %v5912, %v6116
        %v6219 = vadd.f32 %v5913, %v6121
        %v6220 = vadd.f32 %v5914, %v6126
        %v6221 = vadd.f32 %v5915, %v6131
        %v6222 = vadd.f32 %v5916, %v6136
        %v6223 = vadd.f32 %v5917, %v6141
        %v6224 = vadd.f32 %v5918, %v6146
        %v6225 = vadd.f32 %v5919, %v6151
        %v6226 = vadd.f32 %v5920, %v6156
        %v6227 = vadd.f32 %v5921, %v6161
        %v6228 = vadd.f32 %v5922, %v6166
        %v6229 = vadd.f32 %v5923, %v6171
        %v6230 = vadd.f32 %v5924, %v6176
        %v6231 = vadd.f32 %v5925, %v6181
        %v6232 = vadd.f32 %v5926, %v6186
        %v6233 = vadd.f32 %v5927, %v6191
        %v6234 = vadd.f32 %v5928, %v6196
        %v6235 = vadd.f32 %v5929, %v6201
        %v6236 = vld [vmem:[#allocation2 + $0x20] sm:$0xff]
        %v6237 = vld [vmem:[#allocation2 + $0x28] sm:$0xff]
        %v6238 = vld [vmem:[#allocation2 + $0x30] sm:$0xff]
        %v6239 = vld [vmem:[#allocation2 + $0x38] sm:$0xff]
        %v6240 = vld [vmem:[#allocation2 + $0x40] sm:$0xff]
        %v6241 = vld [vmem:[#allocation2 + $0x48] sm:$0xff]
        %v6242 = vld [vmem:[#allocation2 + $0x50] sm:$0xff]
        %v6243 = vld [vmem:[#allocation2 + $0x58] sm:$0xff]
        %v6244 = vld [vmem:[#allocation2 + $0x60] sm:$0xff]
        %v6245 = vld [vmem:[#allocation2 + $0x68] sm:$0xff]
        %v6246 = vld [vmem:[#allocation2 + $0x70] sm:$0xff]
        %v6247 = vld [vmem:[#allocation2 + $0x78] sm:$0xff]
        %v6248 = vld [vmem:[#allocation2 + $0x80] sm:$0xff]
        %v6249 = vld [vmem:[#allocation2 + $0x88] sm:$0xff]
        %v6250 = vld [vmem:[#allocation2 + $0x90] sm:$0xff]
        %v6251 = vld [vmem:[#allocation2 + $0x98] sm:$0xff]
        %v6252 = vld [vmem:[#allocation2 + $0xa0] sm:$0xff]
        %v6253 = vld [vmem:[#allocation2 + $0xa8] sm:$0xff]
        %v6254 = vld [vmem:[#allocation2 + $0xb0] sm:$0xff]
        %v6255 = vld [vmem:[#allocation2 + $0xb8] sm:$0xff]
        %v6256 = vld [vmem:[#allocation2 + $0xc0] sm:$0xff]
        %v6257 = vld [vmem:[#allocation2 + $0xc8] sm:$0xff]
        %v6258 = vld [vmem:[#allocation2 + $0xd0] sm:$0xff]
        %v6259 = vld [vmem:[#allocation2 + $0xd8] sm:$0xff]
        %v6260 = vld [vmem:[#allocation2 + $0xe0] sm:$0xff]
        %v6261 = vld [vmem:[#allocation2 + $0xe8] sm:$0xff]
        %v6262 = vld [vmem:[#allocation2 + $0xf0] sm:$0xff]
        %v6263 = vld [vmem:[#allocation2 + $0xf8] sm:$0xff]
        %v6264 = vld [vmem:[#allocation2 + $0x100] sm:$0xff]
        %v6265 = vld [vmem:[#allocation2 + $0x108] sm:$0xff]
        %v6266 = vld [vmem:[#allocation2 + $0x110] sm:$0xff]
        %v6267 = vld [vmem:[#allocation2 + $0x118] sm:$0xff]
        %s6268 = scalar_lea.vmem [#allocation9], 768
        %v6269 = vld [vmem:[%s6268] sm:$0xff]
        %v6270 = vld [vmem:[%s6268 + $0x8] sm:$0xff]
        %v6271 = vld [vmem:[%s6268 + $0x10] sm:$0xff]
        %v6272 = vld [vmem:[%s6268 + $0x18] sm:$0xff]
        %v6273 = vld [vmem:[%s6268 + $0x20] sm:$0xff]
        %v6274 = vld [vmem:[%s6268 + $0x28] sm:$0xff]
        %v6275 = vld [vmem:[%s6268 + $0x30] sm:$0xff]
        %v6276 = vld [vmem:[%s6268 + $0x38] sm:$0xff]
        %v6277 = vld [vmem:[%s6268 + $0x40] sm:$0xff]
        %v6278 = vld [vmem:[%s6268 + $0x48] sm:$0xff]
        %v6279 = vld [vmem:[%s6268 + $0x50] sm:$0xff]
        %v6280 = vld [vmem:[%s6268 + $0x58] sm:$0xff]
        %v6281 = vld [vmem:[%s6268 + $0x60] sm:$0xff]
        %v6282 = vld [vmem:[%s6268 + $0x68] sm:$0xff]
        %v6283 = vld [vmem:[%s6268 + $0x70] sm:$0xff]
        %v6284 = vld [vmem:[%s6268 + $0x78] sm:$0xff]
        %6285 = vmatprep.subr.mxu0 0.0
        %6286 = vmatpush1.msra.mxu0 %v6269
        %6287 = vmatprep.subr.mxu0 0.0
        %6288 = vmatpush1.msra.mxu0 %v6270
        %6289 = vmatprep.subr.mxu0 0.0
        %6290 = vmatpush1.msra.mxu0 %v6271
        %6291 = vmatprep.subr.mxu0 0.0
        %6292 = vmatpush1.msra.mxu0 %v6272
        %6293 = vmatprep.subr.mxu0 0.0
        %6294 = vmatpush1.msra.mxu0 %v6273
        %6295 = vmatprep.subr.mxu0 0.0
        %6296 = vmatpush1.msra.mxu0 %v6274
        %6297 = vmatprep.subr.mxu0 0.0
        %6298 = vmatpush1.msra.mxu0 %v6275
        %6299 = vmatprep.subr.mxu0 0.0
        %6300 = vmatpush1.msra.mxu0 %v6276
        %6301 = vmatprep.subr.mxu0 0.0
        %6302 = vmatpush1.msra.mxu0 %v6277
        %6303 = vmatprep.subr.mxu0 0.0
        %6304 = vmatpush1.msra.mxu0 %v6278
        %6305 = vmatprep.subr.mxu0 0.0
        %6306 = vmatpush1.msra.mxu0 %v6279
        %6307 = vmatprep.subr.mxu0 0.0
        %6308 = vmatpush1.msra.mxu0 %v6280
        %6309 = vmatprep.subr.mxu0 0.0
        %6310 = vmatpush1.msra.mxu0 %v6281
        %6311 = vmatprep.subr.mxu0 0.0
        %6312 = vmatpush1.msra.mxu0 %v6282
        %6313 = vmatprep.subr.mxu0 0.0
        %6314 = vmatpush1.msra.mxu0 %v6283
        %6315 = vmatprep.subr.mxu0 0.0
        %6316 = vmatpush1.msra.mxu0 %v6284
        %6317 = vmatprep.subr.mxu0 0.0
        %6318 = vmatpush1.msra.mxu0 0.0
        %6319 = vmatprep.subr.mxu0 0.0
        %6320 = vmatpush1.msra.mxu0 0.0
        %6321 = vmatprep.subr.mxu0 0.0
        %6322 = vmatpush1.msra.mxu0 0.0
        %6323 = vmatprep.subr.mxu0 0.0
        %6324 = vmatpush1.msra.mxu0 0.0
        %6325 = vmatprep.subr.mxu0 0.0
        %6326 = vmatpush1.msra.mxu0 0.0
        %6327 = vmatprep.subr.mxu0 0.0
        %6328 = vmatpush1.msra.mxu0 0.0
        %6329 = vmatprep.subr.mxu0 0.0
        %6330 = vmatpush1.msra.mxu0 0.0
        %6331 = vmatprep.subr.mxu0 0.0
        %6332 = vmatpush1.msra.mxu0 0.0
        %6333 = vmatprep.subr.mxu0 0.0
        %6334 = vmatpush1.msra.mxu0 0.0
        %6335 = vmatprep.subr.mxu0 0.0
        %6336 = vmatpush1.msra.mxu0 0.0
        %6337 = vmatprep.subr.mxu0 0.0
        %6338 = vmatpush1.msra.mxu0 0.0
        %6339 = vmatprep.subr.mxu0 0.0
        %6340 = vmatpush1.msra.mxu0 0.0
        %6341 = vmatprep.subr.mxu0 0.0
        %6342 = vmatpush1.msra.mxu0 0.0
        %6343 = vmatprep.subr.mxu0 0.0
        %6344 = vmatpush1.msra.mxu0 0.0
        %6345 = vmatprep.subr.mxu0 0.0
        %6346 = vmatpush1.msra.mxu0 0.0
        %6347 = vmatprep.subr.mxu0 0.0
        %6348 = vmatpush1.msra.mxu0 0.0
        %6349 = vmatprep.mubr.f32.mxu0 0.0
        %6350 = vmatmul.mubr.f32.gmra.mrb[0].mxu0 %v6236
        %v6351 = vpop.f32.mrb[0].mxu0
        %v6352 = vadd.f32 0.0, %v6351
        %v6353 = vpop.f32.mrb[0].mxu0
        %6354 = vmatprep.mubr.f32.mxu0 0.0
        %6355 = vmatmul.mubr.f32.gmra.mrb[0].mxu0 %v6237
        %v6356 = vpop.f32.mrb[0].mxu0
        %v6357 = vadd.f32 0.0, %v6356
        %v6358 = vpop.f32.mrb[0].mxu0
        %6359 = vmatprep.mubr.f32.mxu0 0.0
        %6360 = vmatmul.mubr.f32.gmra.mrb[0].mxu0 %v6238
        %v6361 = vpop.f32.mrb[0].mxu0
        %v6362 = vadd.f32 0.0, %v6361
        %v6363 = vpop.f32.mrb[0].mxu0
        %6364 = vmatprep.mubr.f32.mxu0 0.0
        %6365 = vmatmul.mubr.f32.gmra.mrb[0].mxu0 %v6239
        %v6366 = vpop.f32.mrb[0].mxu0
        %v6367 = vadd.f32 0.0, %v6366
        %v6368 = vpop.f32.mrb[0].mxu0
        %6369 = vmatprep.mubr.f32.mxu0 0.0
        %6370 = vmatmul.mubr.f32.gmra.mrb[0].mxu0 %v6240
        %v6371 = vpop.f32.mrb[0].mxu0
        %v6372 = vadd.f32 0.0, %v6371
        %v6373 = vpop.f32.mrb[0].mxu0
        %6374 = vmatprep.mubr.f32.mxu0 0.0
        %6375 = vmatmul.mubr.f32.gmra.mrb[0].mxu0 %v6241
        %v6376 = vpop.f32.mrb[0].mxu0
        %v6377 = vadd.f32 0.0, %v6376
        %v6378 = vpop.f32.mrb[0].mxu0
        %6379 = vmatprep.mubr.f32.mxu0 0.0
        %6380 = vmatmul.mubr.f32.gmra.mrb[0].mxu0 %v6242
        %v6381 = vpop.f32.mrb[0].mxu0
        %v6382 = vadd.f32 0.0, %v6381
        %v6383 = vpop.f32.mrb[0].mxu0
        %6384 = vmatprep.mubr.f32.mxu0 0.0
        %6385 = vmatmul.mubr.f32.gmra.mrb[0].mxu0 %v6243
        %v6386 = vpop.f32.mrb[0].mxu0
        %v6387 = vadd.f32 0.0, %v6386
        %v6388 = vpop.f32.mrb[0].mxu0
        %6389 = vmatprep.mubr.f32.mxu0 0.0
        %6390 = vmatmul.mubr.f32.gmra.mrb[0].mxu0 %v6244
        %v6391 = vpop.f32.mrb[0].mxu0
        %v6392 = vadd.f32 0.0, %v6391
        %v6393 = vpop.f32.mrb[0].mxu0
        %6394 = vmatprep.mubr.f32.mxu0 0.0
        %6395 = vmatmul.mubr.f32.gmra.mrb[0].mxu0 %v6245
        %v6396 = vpop.f32.mrb[0].mxu0
        %v6397 = vadd.f32 0.0, %v6396
        %v6398 = vpop.f32.mrb[0].mxu0
        %6399 = vmatprep.mubr.f32.mxu0 0.0
        %6400 = vmatmul.mubr.f32.gmra.mrb[0].mxu0 %v6246
        %v6401 = vpop.f32.mrb[0].mxu0
        %v6402 = vadd.f32 0.0, %v6401
        %v6403 = vpop.f32.mrb[0].mxu0
        %6404 = vmatprep.mubr.f32.mxu0 0.0
        %6405 = vmatmul.mubr.f32.gmra.mrb[0].mxu0 %v6247
        %v6406 = vpop.f32.mrb[0].mxu0
        %v6407 = vadd.f32 0.0, %v6406
        %v6408 = vpop.f32.mrb[0].mxu0
        %6409 = vmatprep.mubr.f32.mxu0 0.0
        %6410 = vmatmul.mubr.f32.gmra.mrb[0].mxu0 %v6248
        %v6411 = vpop.f32.mrb[0].mxu0
        %v6412 = vadd.f32 0.0, %v6411
        %v6413 = vpop.f32.mrb[0].mxu0
        %6414 = vmatprep.mubr.f32.mxu0 0.0
        %6415 = vmatmul.mubr.f32.gmra.mrb[0].mxu0 %v6249
        %v6416 = vpop.f32.mrb[0].mxu0
        %v6417 = vadd.f32 0.0, %v6416
        %v6418 = vpop.f32.mrb[0].mxu0
        %6419 = vmatprep.mubr.f32.mxu0 0.0
        %6420 = vmatmul.mubr.f32.gmra.mrb[0].mxu0 %v6250
        %v6421 = vpop.f32.mrb[0].mxu0
        %v6422 = vadd.f32 0.0, %v6421
        %v6423 = vpop.f32.mrb[0].mxu0
        %6424 = vmatprep.mubr.f32.mxu0 0.0
        %6425 = vmatmul.mubr.f32.gmra.mrb[0].mxu0 %v6251
        %v6426 = vpop.f32.mrb[0].mxu0
        %v6427 = vadd.f32 0.0, %v6426
        %v6428 = vpop.f32.mrb[0].mxu0
        %6429 = vmatprep.mubr.f32.mxu0 0.0
        %6430 = vmatmul.mubr.f32.gmra.mrb[0].mxu0 %v6252
        %v6431 = vpop.f32.mrb[0].mxu0
        %v6432 = vadd.f32 0.0, %v6431
        %v6433 = vpop.f32.mrb[0].mxu0
        %6434 = vmatprep.mubr.f32.mxu0 0.0
        %6435 = vmatmul.mubr.f32.gmra.mrb[0].mxu0 %v6253
        %v6436 = vpop.f32.mrb[0].mxu0
        %v6437 = vadd.f32 0.0, %v6436
        %v6438 = vpop.f32.mrb[0].mxu0
        %6439 = vmatprep.mubr.f32.mxu0 0.0
        %6440 = vmatmul.mubr.f32.gmra.mrb[0].mxu0 %v6254
        %v6441 = vpop.f32.mrb[0].mxu0
        %v6442 = vadd.f32 0.0, %v6441
        %v6443 = vpop.f32.mrb[0].mxu0
        %6444 = vmatprep.mubr.f32.mxu0 0.0
        %6445 = vmatmul.mubr.f32.gmra.mrb[0].mxu0 %v6255
        %v6446 = vpop.f32.mrb[0].mxu0
        %v6447 = vadd.f32 0.0, %v6446
        %v6448 = vpop.f32.mrb[0].mxu0
        %6449 = vmatprep.mubr.f32.mxu0 0.0
        %6450 = vmatmul.mubr.f32.gmra.mrb[0].mxu0 %v6256
        %v6451 = vpop.f32.mrb[0].mxu0
        %v6452 = vadd.f32 0.0, %v6451
        %v6453 = vpop.f32.mrb[0].mxu0
        %6454 = vmatprep.mubr.f32.mxu0 0.0
        %6455 = vmatmul.mubr.f32.gmra.mrb[0].mxu0 %v6257
        %v6456 = vpop.f32.mrb[0].mxu0
        %v6457 = vadd.f32 0.0, %v6456
        %v6458 = vpop.f32.mrb[0].mxu0
        %6459 = vmatprep.mubr.f32.mxu0 0.0
        %6460 = vmatmul.mubr.f32.gmra.mrb[0].mxu0 %v6258
        %v6461 = vpop.f32.mrb[0].mxu0
        %v6462 = vadd.f32 0.0, %v6461
        %v6463 = vpop.f32.mrb[0].mxu0
        %6464 = vmatprep.mubr.f32.mxu0 0.0
        %6465 = vmatmul.mubr.f32.gmra.mrb[0].mxu0 %v6259
        %v6466 = vpop.f32.mrb[0].mxu0
        %v6467 = vadd.f32 0.0, %v6466
        %v6468 = vpop.f32.mrb[0].mxu0
        %6469 = vmatprep.mubr.f32.mxu0 0.0
        %6470 = vmatmul.mubr.f32.gmra.mrb[0].mxu0 %v6260
        %v6471 = vpop.f32.mrb[0].mxu0
        %v6472 = vadd.f32 0.0, %v6471
        %v6473 = vpop.f32.mrb[0].mxu0
        %6474 = vmatprep.mubr.f32.mxu0 0.0
        %6475 = vmatmul.mubr.f32.gmra.mrb[0].mxu0 %v6261
        %v6476 = vpop.f32.mrb[0].mxu0
        %v6477 = vadd.f32 0.0, %v6476
        %v6478 = vpop.f32.mrb[0].mxu0
        %6479 = vmatprep.mubr.f32.mxu0 0.0
        %6480 = vmatmul.mubr.f32.gmra.mrb[0].mxu0 %v6262
        %v6481 = vpop.f32.mrb[0].mxu0
        %v6482 = vadd.f32 0.0, %v6481
        %v6483 = vpop.f32.mrb[0].mxu0
        %6484 = vmatprep.mubr.f32.mxu0 0.0
        %6485 = vmatmul.mubr.f32.gmra.mrb[0].mxu0 %v6263
        %v6486 = vpop.f32.mrb[0].mxu0
        %v6487 = vadd.f32 0.0, %v6486
        %v6488 = vpop.f32.mrb[0].mxu0
        %6489 = vmatprep.mubr.f32.mxu0 0.0
        %6490 = vmatmul.mubr.f32.gmra.mrb[0].mxu0 %v6264
        %v6491 = vpop.f32.mrb[0].mxu0
        %v6492 = vadd.f32 0.0, %v6491
        %v6493 = vpop.f32.mrb[0].mxu0
        %6494 = vmatprep.mubr.f32.mxu0 0.0
        %6495 = vmatmul.mubr.f32.gmra.mrb[0].mxu0 %v6265
        %v6496 = vpop.f32.mrb[0].mxu0
        %v6497 = vadd.f32 0.0, %v6496
        %v6498 = vpop.f32.mrb[0].mxu0
        %6499 = vmatprep.mubr.f32.mxu0 0.0
        %6500 = vmatmul.mubr.f32.gmra.mrb[0].mxu0 %v6266
        %v6501 = vpop.f32.mrb[0].mxu0
        %v6502 = vadd.f32 0.0, %v6501
        %v6503 = vpop.f32.mrb[0].mxu0
        %6504 = vmatprep.mubr.f32.mxu0 0.0
        %6505 = vmatmul.mubr.f32.gmra.mrb[0].mxu0 %v6267
        %v6506 = vpop.f32.mrb[0].mxu0
        %v6507 = vadd.f32 0.0, %v6506
        %v6508 = vpop.f32.mrb[0].mxu0
        %6509 = vdwg.mxu0
        %v6510 = vadd.f32 %v6204, %v6352
        %v6511 = vadd.f32 %v6205, %v6357
        %v6512 = vadd.f32 %v6206, %v6362
        %v6513 = vadd.f32 %v6207, %v6367
        %v6514 = vadd.f32 %v6208, %v6372
        %v6515 = vadd.f32 %v6209, %v6377
        %v6516 = vadd.f32 %v6210, %v6382
        %v6517 = vadd.f32 %v6211, %v6387
        %v6518 = vadd.f32 %v6212, %v6392
        %v6519 = vadd.f32 %v6213, %v6397
        %v6520 = vadd.f32 %v6214, %v6402
        %v6521 = vadd.f32 %v6215, %v6407
        %v6522 = vadd.f32 %v6216, %v6412
        %v6523 = vadd.f32 %v6217, %v6417
        %v6524 = vadd.f32 %v6218, %v6422
        %v6525 = vadd.f32 %v6219, %v6427
        %v6526 = vadd.f32 %v6220, %v6432
        %v6527 = vadd.f32 %v6221, %v6437
        %v6528 = vadd.f32 %v6222, %v6442
        %v6529 = vadd.f32 %v6223, %v6447
        %v6530 = vadd.f32 %v6224, %v6452
        %v6531 = vadd.f32 %v6225, %v6457
        %v6532 = vadd.f32 %v6226, %v6462
        %v6533 = vadd.f32 %v6227, %v6467
        %v6534 = vadd.f32 %v6228, %v6472
        %v6535 = vadd.f32 %v6229, %v6477
        %v6536 = vadd.f32 %v6230, %v6482
        %v6537 = vadd.f32 %v6231, %v6487
        %v6538 = vadd.f32 %v6232, %v6492
        %v6539 = vadd.f32 %v6233, %v6497
        %v6540 = vadd.f32 %v6234, %v6502
        %v6541 = vadd.f32 %v6235, %v6507
        %v6542 = vld [vmem:[%s1312 + $0x20] sm:$0xff]
        %v6543 = vld [vmem:[%s1312 + $0x28] sm:$0xff]
        %v6544 = vld [vmem:[%s1312 + $0x30] sm:$0xff]
        %v6545 = vld [vmem:[%s1312 + $0x38] sm:$0xff]
        %v6546 = vld [vmem:[%s1312 + $0x40] sm:$0xff]
        %v6547 = vld [vmem:[%s1312 + $0x48] sm:$0xff]
        %v6548 = vld [vmem:[%s1312 + $0x50] sm:$0xff]
        %v6549 = vld [vmem:[%s1312 + $0x58] sm:$0xff]
        %v6550 = vld [vmem:[%s1312 + $0x60] sm:$0xff]
        %v6551 = vld [vmem:[%s1312 + $0x68] sm:$0xff]
        %v6552 = vld [vmem:[%s1312 + $0x70] sm:$0xff]
        %v6553 = vld [vmem:[%s1312 + $0x78] sm:$0xff]
        %v6554 = vld [vmem:[%s1312 + $0x80] sm:$0xff]
        %v6555 = vld [vmem:[%s1312 + $0x88] sm:$0xff]
        %v6556 = vld [vmem:[%s1312 + $0x90] sm:$0xff]
        %v6557 = vld [vmem:[%s1312 + $0x98] sm:$0xff]
        %v6558 = vld [vmem:[%s1312 + $0xa0] sm:$0xff]
        %v6559 = vld [vmem:[%s1312 + $0xa8] sm:$0xff]
        %v6560 = vld [vmem:[%s1312 + $0xb0] sm:$0xff]
        %v6561 = vld [vmem:[%s1312 + $0xb8] sm:$0xff]
        %v6562 = vld [vmem:[%s1312 + $0xc0] sm:$0xff]
        %v6563 = vld [vmem:[%s1312 + $0xc8] sm:$0xff]
        %v6564 = vld [vmem:[%s1312 + $0xd0] sm:$0xff]
        %v6565 = vld [vmem:[%s1312 + $0xd8] sm:$0xff]
        %v6566 = vld [vmem:[%s1312 + $0xe0] sm:$0xff]
        %v6567 = vld [vmem:[%s1312 + $0xe8] sm:$0xff]
        %v6568 = vld [vmem:[%s1312 + $0xf0] sm:$0xff]
        %v6569 = vld [vmem:[%s1312 + $0xf8] sm:$0xff]
        %v6570 = vld [vmem:[%s1312 + $0x100] sm:$0xff]
        %v6571 = vld [vmem:[%s1312 + $0x108] sm:$0xff]
        %v6572 = vld [vmem:[%s1312 + $0x110] sm:$0xff]
        %v6573 = vld [vmem:[%s1312 + $0x118] sm:$0xff]
        %s6574 = scalar_lea.vmem [#allocation9], 896
        %v6575 = vld [vmem:[%s6574] sm:$0xff]
        %v6576 = vld [vmem:[%s6574 + $0x8] sm:$0xff]
        %v6577 = vld [vmem:[%s6574 + $0x10] sm:$0xff]
        %v6578 = vld [vmem:[%s6574 + $0x18] sm:$0xff]
        %v6579 = vld [vmem:[%s6574 + $0x20] sm:$0xff]
        %v6580 = vld [vmem:[%s6574 + $0x28] sm:$0xff]
        %v6581 = vld [vmem:[%s6574 + $0x30] sm:$0xff]
        %v6582 = vld [vmem:[%s6574 + $0x38] sm:$0xff]
        %v6583 = vld [vmem:[%s6574 + $0x40] sm:$0xff]
        %v6584 = vld [vmem:[%s6574 + $0x48] sm:$0xff]
        %v6585 = vld [vmem:[%s6574 + $0x50] sm:$0xff]
        %v6586 = vld [vmem:[%s6574 + $0x58] sm:$0xff]
        %v6587 = vld [vmem:[%s6574 + $0x60] sm:$0xff]
        %v6588 = vld [vmem:[%s6574 + $0x68] sm:$0xff]
        %v6589 = vld [vmem:[%s6574 + $0x70] sm:$0xff]
        %v6590 = vld [vmem:[%s6574 + $0x78] sm:$0xff]
        %6591 = vmatprep.subr.mxu0 0.0
        %6592 = vmatpush1.msra.mxu0 %v6575
        %6593 = vmatprep.subr.mxu0 0.0
        %6594 = vmatpush1.msra.mxu0 %v6576
        %6595 = vmatprep.subr.mxu0 0.0
        %6596 = vmatpush1.msra.mxu0 %v6577
        %6597 = vmatprep.subr.mxu0 0.0
        %6598 = vmatpush1.msra.mxu0 %v6578
        %6599 = vmatprep.subr.mxu0 0.0
        %6600 = vmatpush1.msra.mxu0 %v6579
        %6601 = vmatprep.subr.mxu0 0.0
        %6602 = vmatpush1.msra.mxu0 %v6580
        %6603 = vmatprep.subr.mxu0 0.0
        %6604 = vmatpush1.msra.mxu0 %v6581
        %6605 = vmatprep.subr.mxu0 0.0
        %6606 = vmatpush1.msra.mxu0 %v6582
        %6607 = vmatprep.subr.mxu0 0.0
        %6608 = vmatpush1.msra.mxu0 %v6583
        %6609 = vmatprep.subr.mxu0 0.0
        %6610 = vmatpush1.msra.mxu0 %v6584
        %6611 = vmatprep.subr.mxu0 0.0
        %6612 = vmatpush1.msra.mxu0 %v6585
        %6613 = vmatprep.subr.mxu0 0.0
        %6614 = vmatpush1.msra.mxu0 %v6586
        %6615 = vmatprep.subr.mxu0 0.0
        %6616 = vmatpush1.msra.mxu0 %v6587
        %6617 = vmatprep.subr.mxu0 0.0
        %6618 = vmatpush1.msra.mxu0 %v6588
        %6619 = vmatprep.subr.mxu0 0.0
        %6620 = vmatpush1.msra.mxu0 %v6589
        %6621 = vmatprep.subr.mxu0 0.0
        %6622 = vmatpush1.msra.mxu0 %v6590
        %6623 = vmatprep.subr.mxu0 0.0
        %6624 = vmatpush1.msra.mxu0 0.0
        %6625 = vmatprep.subr.mxu0 0.0
        %6626 = vmatpush1.msra.mxu0 0.0
        %6627 = vmatprep.subr.mxu0 0.0
        %6628 = vmatpush1.msra.mxu0 0.0
        %6629 = vmatprep.subr.mxu0 0.0
        %6630 = vmatpush1.msra.mxu0 0.0
        %6631 = vmatprep.subr.mxu0 0.0
        %6632 = vmatpush1.msra.mxu0 0.0
        %6633 = vmatprep.subr.mxu0 0.0
        %6634 = vmatpush1.msra.mxu0 0.0
        %6635 = vmatprep.subr.mxu0 0.0
        %6636 = vmatpush1.msra.mxu0 0.0
        %6637 = vmatprep.subr.mxu0 0.0
        %6638 = vmatpush1.msra.mxu0 0.0
        %6639 = vmatprep.subr.mxu0 0.0
        %6640 = vmatpush1.msra.mxu0 0.0
        %6641 = vmatprep.subr.mxu0 0.0
        %6642 = vmatpush1.msra.mxu0 0.0
        %6643 = vmatprep.subr.mxu0 0.0
        %6644 = vmatpush1.msra.mxu0 0.0
        %6645 = vmatprep.subr.mxu0 0.0
        %6646 = vmatpush1.msra.mxu0 0.0
        %6647 = vmatprep.subr.mxu0 0.0
        %6648 = vmatpush1.msra.mxu0 0.0
        %6649 = vmatprep.subr.mxu0 0.0
        %6650 = vmatpush1.msra.mxu0 0.0
        %6651 = vmatprep.subr.mxu0 0.0
        %6652 = vmatpush1.msra.mxu0 0.0
        %6653 = vmatprep.subr.mxu0 0.0
        %6654 = vmatpush1.msra.mxu0 0.0
        %6655 = vmatprep.mubr.f32.mxu0 0.0
        %6656 = vmatmul.mubr.f32.gmra.mrb[0].mxu0 %v6542
        %v6657 = vpop.f32.mrb[0].mxu0
        %v6658 = vadd.f32 0.0, %v6657
        %v6659 = vpop.f32.mrb[0].mxu0
        %6660 = vmatprep.mubr.f32.mxu0 0.0
        %6661 = vmatmul.mubr.f32.gmra.mrb[0].mxu0 %v6543
        %v6662 = vpop.f32.mrb[0].mxu0
        %v6663 = vadd.f32 0.0, %v6662
        %v6664 = vpop.f32.mrb[0].mxu0
        %6665 = vmatprep.mubr.f32.mxu0 0.0
        %6666 = vmatmul.mubr.f32.gmra.mrb[0].mxu0 %v6544
        %v6667 = vpop.f32.mrb[0].mxu0
        %v6668 = vadd.f32 0.0, %v6667
        %v6669 = vpop.f32.mrb[0].mxu0
        %6670 = vmatprep.mubr.f32.mxu0 0.0
        %6671 = vmatmul.mubr.f32.gmra.mrb[0].mxu0 %v6545
        %v6672 = vpop.f32.mrb[0].mxu0
        %v6673 = vadd.f32 0.0, %v6672
        %v6674 = vpop.f32.mrb[0].mxu0
        %6675 = vmatprep.mubr.f32.mxu0 0.0
        %6676 = vmatmul.mubr.f32.gmra.mrb[0].mxu0 %v6546
        %v6677 = vpop.f32.mrb[0].mxu0
        %v6678 = vadd.f32 0.0, %v6677
        %v6679 = vpop.f32.mrb[0].mxu0
        %6680 = vmatprep.mubr.f32.mxu0 0.0
        %6681 = vmatmul.mubr.f32.gmra.mrb[0].mxu0 %v6547
        %v6682 = vpop.f32.mrb[0].mxu0
        %v6683 = vadd.f32 0.0, %v6682
        %v6684 = vpop.f32.mrb[0].mxu0
        %6685 = vmatprep.mubr.f32.mxu0 0.0
        %6686 = vmatmul.mubr.f32.gmra.mrb[0].mxu0 %v6548
        %v6687 = vpop.f32.mrb[0].mxu0
        %v6688 = vadd.f32 0.0, %v6687
        %v6689 = vpop.f32.mrb[0].mxu0
        %6690 = vmatprep.mubr.f32.mxu0 0.0
        %6691 = vmatmul.mubr.f32.gmra.mrb[0].mxu0 %v6549
        %v6692 = vpop.f32.mrb[0].mxu0
        %v6693 = vadd.f32 0.0, %v6692
        %v6694 = vpop.f32.mrb[0].mxu0
        %6695 = vmatprep.mubr.f32.mxu0 0.0
        %6696 = vmatmul.mubr.f32.gmra.mrb[0].mxu0 %v6550
        %v6697 = vpop.f32.mrb[0].mxu0
        %v6698 = vadd.f32 0.0, %v6697
        %v6699 = vpop.f32.mrb[0].mxu0
        %6700 = vmatprep.mubr.f32.mxu0 0.0
        %6701 = vmatmul.mubr.f32.gmra.mrb[0].mxu0 %v6551
        %v6702 = vpop.f32.mrb[0].mxu0
        %v6703 = vadd.f32 0.0, %v6702
        %v6704 = vpop.f32.mrb[0].mxu0
        %6705 = vmatprep.mubr.f32.mxu0 0.0
        %6706 = vmatmul.mubr.f32.gmra.mrb[0].mxu0 %v6552
        %v6707 = vpop.f32.mrb[0].mxu0
        %v6708 = vadd.f32 0.0, %v6707
        %v6709 = vpop.f32.mrb[0].mxu0
        %6710 = vmatprep.mubr.f32.mxu0 0.0
        %6711 = vmatmul.mubr.f32.gmra.mrb[0].mxu0 %v6553
        %v6712 = vpop.f32.mrb[0].mxu0
        %v6713 = vadd.f32 0.0, %v6712
        %v6714 = vpop.f32.mrb[0].mxu0
        %6715 = vmatprep.mubr.f32.mxu0 0.0
        %6716 = vmatmul.mubr.f32.gmra.mrb[0].mxu0 %v6554
        %v6717 = vpop.f32.mrb[0].mxu0
        %v6718 = vadd.f32 0.0, %v6717
        %v6719 = vpop.f32.mrb[0].mxu0
        %6720 = vmatprep.mubr.f32.mxu0 0.0
        %6721 = vmatmul.mubr.f32.gmra.mrb[0].mxu0 %v6555
        %v6722 = vpop.f32.mrb[0].mxu0
        %v6723 = vadd.f32 0.0, %v6722
        %v6724 = vpop.f32.mrb[0].mxu0
        %6725 = vmatprep.mubr.f32.mxu0 0.0
        %6726 = vmatmul.mubr.f32.gmra.mrb[0].mxu0 %v6556
        %v6727 = vpop.f32.mrb[0].mxu0
        %v6728 = vadd.f32 0.0, %v6727
        %v6729 = vpop.f32.mrb[0].mxu0
        %6730 = vmatprep.mubr.f32.mxu0 0.0
        %6731 = vmatmul.mubr.f32.gmra.mrb[0].mxu0 %v6557
        %v6732 = vpop.f32.mrb[0].mxu0
        %v6733 = vadd.f32 0.0, %v6732
        %v6734 = vpop.f32.mrb[0].mxu0
        %6735 = vmatprep.mubr.f32.mxu0 0.0
        %6736 = vmatmul.mubr.f32.gmra.mrb[0].mxu0 %v6558
        %v6737 = vpop.f32.mrb[0].mxu0
        %v6738 = vadd.f32 0.0, %v6737
        %v6739 = vpop.f32.mrb[0].mxu0
        %6740 = vmatprep.mubr.f32.mxu0 0.0
        %6741 = vmatmul.mubr.f32.gmra.mrb[0].mxu0 %v6559
        %v6742 = vpop.f32.mrb[0].mxu0
        %v6743 = vadd.f32 0.0, %v6742
        %v6744 = vpop.f32.mrb[0].mxu0
        %6745 = vmatprep.mubr.f32.mxu0 0.0
        %6746 = vmatmul.mubr.f32.gmra.mrb[0].mxu0 %v6560
        %v6747 = vpop.f32.mrb[0].mxu0
        %v6748 = vadd.f32 0.0, %v6747
        %v6749 = vpop.f32.mrb[0].mxu0
        %6750 = vmatprep.mubr.f32.mxu0 0.0
        %6751 = vmatmul.mubr.f32.gmra.mrb[0].mxu0 %v6561
        %v6752 = vpop.f32.mrb[0].mxu0
        %v6753 = vadd.f32 0.0, %v6752
        %v6754 = vpop.f32.mrb[0].mxu0
        %6755 = vmatprep.mubr.f32.mxu0 0.0
        %6756 = vmatmul.mubr.f32.gmra.mrb[0].mxu0 %v6562
        %v6757 = vpop.f32.mrb[0].mxu0
        %v6758 = vadd.f32 0.0, %v6757
        %v6759 = vpop.f32.mrb[0].mxu0
        %6760 = vmatprep.mubr.f32.mxu0 0.0
        %6761 = vmatmul.mubr.f32.gmra.mrb[0].mxu0 %v6563
        %v6762 = vpop.f32.mrb[0].mxu0
        %v6763 = vadd.f32 0.0, %v6762
        %v6764 = vpop.f32.mrb[0].mxu0
        %6765 = vmatprep.mubr.f32.mxu0 0.0
        %6766 = vmatmul.mubr.f32.gmra.mrb[0].mxu0 %v6564
        %v6767 = vpop.f32.mrb[0].mxu0
        %v6768 = vadd.f32 0.0, %v6767
        %v6769 = vpop.f32.mrb[0].mxu0
        %6770 = vmatprep.mubr.f32.mxu0 0.0
        %6771 = vmatmul.mubr.f32.gmra.mrb[0].mxu0 %v6565
        %v6772 = vpop.f32.mrb[0].mxu0
        %v6773 = vadd.f32 0.0, %v6772
        %v6774 = vpop.f32.mrb[0].mxu0
        %6775 = vmatprep.mubr.f32.mxu0 0.0
        %6776 = vmatmul.mubr.f32.gmra.mrb[0].mxu0 %v6566
        %v6777 = vpop.f32.mrb[0].mxu0
        %v6778 = vadd.f32 0.0, %v6777
        %v6779 = vpop.f32.mrb[0].mxu0
        %6780 = vmatprep.mubr.f32.mxu0 0.0
        %6781 = vmatmul.mubr.f32.gmra.mrb[0].mxu0 %v6567
        %v6782 = vpop.f32.mrb[0].mxu0
        %v6783 = vadd.f32 0.0, %v6782
        %v6784 = vpop.f32.mrb[0].mxu0
        %6785 = vmatprep.mubr.f32.mxu0 0.0
        %6786 = vmatmul.mubr.f32.gmra.mrb[0].mxu0 %v6568
        %v6787 = vpop.f32.mrb[0].mxu0
        %v6788 = vadd.f32 0.0, %v6787
        %v6789 = vpop.f32.mrb[0].mxu0
        %6790 = vmatprep.mubr.f32.mxu0 0.0
        %6791 = vmatmul.mubr.f32.gmra.mrb[0].mxu0 %v6569
        %v6792 = vpop.f32.mrb[0].mxu0
        %v6793 = vadd.f32 0.0, %v6792
        %v6794 = vpop.f32.mrb[0].mxu0
        %6795 = vmatprep.mubr.f32.mxu0 0.0
        %6796 = vmatmul.mubr.f32.gmra.mrb[0].mxu0 %v6570
        %v6797 = vpop.f32.mrb[0].mxu0
        %v6798 = vadd.f32 0.0, %v6797
        %v6799 = vpop.f32.mrb[0].mxu0
        %6800 = vmatprep.mubr.f32.mxu0 0.0
        %6801 = vmatmul.mubr.f32.gmra.mrb[0].mxu0 %v6571
        %v6802 = vpop.f32.mrb[0].mxu0
        %v6803 = vadd.f32 0.0, %v6802
        %v6804 = vpop.f32.mrb[0].mxu0
        %6805 = vmatprep.mubr.f32.mxu0 0.0
        %6806 = vmatmul.mubr.f32.gmra.mrb[0].mxu0 %v6572
        %v6807 = vpop.f32.mrb[0].mxu0
        %v6808 = vadd.f32 0.0, %v6807
        %v6809 = vpop.f32.mrb[0].mxu0
        %6810 = vmatprep.mubr.f32.mxu0 0.0
        %6811 = vmatmul.mubr.f32.gmra.mrb[0].mxu0 %v6573
        %v6812 = vpop.f32.mrb[0].mxu0
        %v6813 = vadd.f32 0.0, %v6812
        %v6814 = vpop.f32.mrb[0].mxu0
        %6815 = vdwg.mxu0
        %v6816 = vadd.f32 %v6510, %v6658
        %v6817 = vadd.f32 %v6511, %v6663
        %v6818 = vadd.f32 %v6512, %v6668
        %v6819 = vadd.f32 %v6513, %v6673
        %v6820 = vadd.f32 %v6514, %v6678
        %v6821 = vadd.f32 %v6515, %v6683
        %v6822 = vadd.f32 %v6516, %v6688
        %v6823 = vadd.f32 %v6517, %v6693
        %v6824 = vadd.f32 %v6518, %v6698
        %v6825 = vadd.f32 %v6519, %v6703
        %v6826 = vadd.f32 %v6520, %v6708
        %v6827 = vadd.f32 %v6521, %v6713
        %v6828 = vadd.f32 %v6522, %v6718
        %v6829 = vadd.f32 %v6523, %v6723
        %v6830 = vadd.f32 %v6524, %v6728
        %v6831 = vadd.f32 %v6525, %v6733
        %v6832 = vadd.f32 %v6526, %v6738
        %v6833 = vadd.f32 %v6527, %v6743
        %v6834 = vadd.f32 %v6528, %v6748
        %v6835 = vadd.f32 %v6529, %v6753
        %v6836 = vadd.f32 %v6530, %v6758
        %v6837 = vadd.f32 %v6531, %v6763
        %v6838 = vadd.f32 %v6532, %v6768
        %v6839 = vadd.f32 %v6533, %v6773
        %v6840 = vadd.f32 %v6534, %v6778
        %v6841 = vadd.f32 %v6535, %v6783
        %v6842 = vadd.f32 %v6536, %v6788
        %v6843 = vadd.f32 %v6537, %v6793
        %v6844 = vadd.f32 %v6538, %v6798
        %v6845 = vadd.f32 %v6539, %v6803
        %v6846 = vadd.f32 %v6540, %v6808
        %v6847 = vadd.f32 %v6541, %v6813
        %v6848 = vld [vmem:[%s1345 + $0x20] sm:$0xff]
        %v6849 = vld [vmem:[%s1345 + $0x28] sm:$0xff]
        %v6850 = vld [vmem:[%s1345 + $0x30] sm:$0xff]
        %v6851 = vld [vmem:[%s1345 + $0x38] sm:$0xff]
        %v6852 = vld [vmem:[%s1345 + $0x40] sm:$0xff]
        %v6853 = vld [vmem:[%s1345 + $0x48] sm:$0xff]
        %v6854 = vld [vmem:[%s1345 + $0x50] sm:$0xff]
        %v6855 = vld [vmem:[%s1345 + $0x58] sm:$0xff]
        %v6856 = vld [vmem:[%s1345 + $0x60] sm:$0xff]
        %v6857 = vld [vmem:[%s1345 + $0x68] sm:$0xff]
        %v6858 = vld [vmem:[%s1345 + $0x70] sm:$0xff]
        %v6859 = vld [vmem:[%s1345 + $0x78] sm:$0xff]
        %v6860 = vld [vmem:[%s1345 + $0x80] sm:$0xff]
        %v6861 = vld [vmem:[%s1345 + $0x88] sm:$0xff]
        %v6862 = vld [vmem:[%s1345 + $0x90] sm:$0xff]
        %v6863 = vld [vmem:[%s1345 + $0x98] sm:$0xff]
        %v6864 = vld [vmem:[%s1345 + $0xa0] sm:$0xff]
        %v6865 = vld [vmem:[%s1345 + $0xa8] sm:$0xff]
        %v6866 = vld [vmem:[%s1345 + $0xb0] sm:$0xff]
        %v6867 = vld [vmem:[%s1345 + $0xb8] sm:$0xff]
        %v6868 = vld [vmem:[%s1345 + $0xc0] sm:$0xff]
        %v6869 = vld [vmem:[%s1345 + $0xc8] sm:$0xff]
        %v6870 = vld [vmem:[%s1345 + $0xd0] sm:$0xff]
        %v6871 = vld [vmem:[%s1345 + $0xd8] sm:$0xff]
        %v6872 = vld [vmem:[%s1345 + $0xe0] sm:$0xff]
        %v6873 = vld [vmem:[%s1345 + $0xe8] sm:$0xff]
        %v6874 = vld [vmem:[%s1345 + $0xf0] sm:$0xff]
        %v6875 = vld [vmem:[%s1345 + $0xf8] sm:$0xff]
        %v6876 = vld [vmem:[%s1345 + $0x100] sm:$0xff]
        %v6877 = vld [vmem:[%s1345 + $0x108] sm:$0xff]
        %v6878 = vld [vmem:[%s1345 + $0x110] sm:$0xff]
        %v6879 = vld [vmem:[%s1345 + $0x118] sm:$0xff]
        %s6880 = scalar_lea.vmem [#allocation9], 1024
        %v6881 = vld [vmem:[%s6880] sm:$0xff]
        %v6882 = vld [vmem:[%s6880 + $0x8] sm:$0xff]
        %v6883 = vld [vmem:[%s6880 + $0x10] sm:$0xff]
        %v6884 = vld [vmem:[%s6880 + $0x18] sm:$0xff]
        %v6885 = vld [vmem:[%s6880 + $0x20] sm:$0xff]
        %v6886 = vld [vmem:[%s6880 + $0x28] sm:$0xff]
        %v6887 = vld [vmem:[%s6880 + $0x30] sm:$0xff]
        %v6888 = vld [vmem:[%s6880 + $0x38] sm:$0xff]
        %v6889 = vld [vmem:[%s6880 + $0x40] sm:$0xff]
        %v6890 = vld [vmem:[%s6880 + $0x48] sm:$0xff]
        %v6891 = vld [vmem:[%s6880 + $0x50] sm:$0xff]
        %v6892 = vld [vmem:[%s6880 + $0x58] sm:$0xff]
        %v6893 = vld [vmem:[%s6880 + $0x60] sm:$0xff]
        %v6894 = vld [vmem:[%s6880 + $0x68] sm:$0xff]
        %v6895 = vld [vmem:[%s6880 + $0x70] sm:$0xff]
        %v6896 = vld [vmem:[%s6880 + $0x78] sm:$0xff]
        %6897 = vmatprep.subr.mxu0 0.0
        %6898 = vmatpush1.msra.mxu0 %v6881
        %6899 = vmatprep.subr.mxu0 0.0
        %6900 = vmatpush1.msra.mxu0 %v6882
        %6901 = vmatprep.subr.mxu0 0.0
        %6902 = vmatpush1.msra.mxu0 %v6883
        %6903 = vmatprep.subr.mxu0 0.0
        %6904 = vmatpush1.msra.mxu0 %v6884
        %6905 = vmatprep.subr.mxu0 0.0
        %6906 = vmatpush1.msra.mxu0 %v6885
        %6907 = vmatprep.subr.mxu0 0.0
        %6908 = vmatpush1.msra.mxu0 %v6886
        %6909 = vmatprep.subr.mxu0 0.0
        %6910 = vmatpush1.msra.mxu0 %v6887
        %6911 = vmatprep.subr.mxu0 0.0
        %6912 = vmatpush1.msra.mxu0 %v6888
        %6913 = vmatprep.subr.mxu0 0.0
        %6914 = vmatpush1.msra.mxu0 %v6889
        %6915 = vmatprep.subr.mxu0 0.0
        %6916 = vmatpush1.msra.mxu0 %v6890
        %6917 = vmatprep.subr.mxu0 0.0
        %6918 = vmatpush1.msra.mxu0 %v6891
        %6919 = vmatprep.subr.mxu0 0.0
        %6920 = vmatpush1.msra.mxu0 %v6892
        %6921 = vmatprep.subr.mxu0 0.0
        %6922 = vmatpush1.msra.mxu0 %v6893
        %6923 = vmatprep.subr.mxu0 0.0
        %6924 = vmatpush1.msra.mxu0 %v6894
        %6925 = vmatprep.subr.mxu0 0.0
        %6926 = vmatpush1.msra.mxu0 %v6895
        %6927 = vmatprep.subr.mxu0 0.0
        %6928 = vmatpush1.msra.mxu0 %v6896
        %6929 = vmatprep.subr.mxu0 0.0
        %6930 = vmatpush1.msra.mxu0 0.0
        %6931 = vmatprep.subr.mxu0 0.0
        %6932 = vmatpush1.msra.mxu0 0.0
        %6933 = vmatprep.subr.mxu0 0.0
        %6934 = vmatpush1.msra.mxu0 0.0
        %6935 = vmatprep.subr.mxu0 0.0
        %6936 = vmatpush1.msra.mxu0 0.0
        %6937 = vmatprep.subr.mxu0 0.0
        %6938 = vmatpush1.msra.mxu0 0.0
        %6939 = vmatprep.subr.mxu0 0.0
        %6940 = vmatpush1.msra.mxu0 0.0
        %6941 = vmatprep.subr.mxu0 0.0
        %6942 = vmatpush1.msra.mxu0 0.0
        %6943 = vmatprep.subr.mxu0 0.0
        %6944 = vmatpush1.msra.mxu0 0.0
        %6945 = vmatprep.subr.mxu0 0.0
        %6946 = vmatpush1.msra.mxu0 0.0
        %6947 = vmatprep.subr.mxu0 0.0
        %6948 = vmatpush1.msra.mxu0 0.0
        %6949 = vmatprep.subr.mxu0 0.0
        %6950 = vmatpush1.msra.mxu0 0.0
        %6951 = vmatprep.subr.mxu0 0.0
        %6952 = vmatpush1.msra.mxu0 0.0
        %6953 = vmatprep.subr.mxu0 0.0
        %6954 = vmatpush1.msra.mxu0 0.0
        %6955 = vmatprep.subr.mxu0 0.0
        %6956 = vmatpush1.msra.mxu0 0.0
        %6957 = vmatprep.subr.mxu0 0.0
        %6958 = vmatpush1.msra.mxu0 0.0
        %6959 = vmatprep.subr.mxu0 0.0
        %6960 = vmatpush1.msra.mxu0 0.0
        %6961 = vmatprep.mubr.f32.mxu0 0.0
        %6962 = vmatmul.mubr.f32.gmra.mrb[0].mxu0 %v6848
        %v6963 = vpop.f32.mrb[0].mxu0
        %v6964 = vadd.f32 0.0, %v6963
        %v6965 = vpop.f32.mrb[0].mxu0
        %6966 = vmatprep.mubr.f32.mxu0 0.0
        %6967 = vmatmul.mubr.f32.gmra.mrb[0].mxu0 %v6849
        %v6968 = vpop.f32.mrb[0].mxu0
        %v6969 = vadd.f32 0.0, %v6968
        %v6970 = vpop.f32.mrb[0].mxu0
        %6971 = vmatprep.mubr.f32.mxu0 0.0
        %6972 = vmatmul.mubr.f32.gmra.mrb[0].mxu0 %v6850
        %v6973 = vpop.f32.mrb[0].mxu0
        %v6974 = vadd.f32 0.0, %v6973
        %v6975 = vpop.f32.mrb[0].mxu0
        %6976 = vmatprep.mubr.f32.mxu0 0.0
        %6977 = vmatmul.mubr.f32.gmra.mrb[0].mxu0 %v6851
        %v6978 = vpop.f32.mrb[0].mxu0
        %v6979 = vadd.f32 0.0, %v6978
        %v6980 = vpop.f32.mrb[0].mxu0
        %6981 = vmatprep.mubr.f32.mxu0 0.0
        %6982 = vmatmul.mubr.f32.gmra.mrb[0].mxu0 %v6852
        %v6983 = vpop.f32.mrb[0].mxu0
        %v6984 = vadd.f32 0.0, %v6983
        %v6985 = vpop.f32.mrb[0].mxu0
        %6986 = vmatprep.mubr.f32.mxu0 0.0
        %6987 = vmatmul.mubr.f32.gmra.mrb[0].mxu0 %v6853
        %v6988 = vpop.f32.mrb[0].mxu0
        %v6989 = vadd.f32 0.0, %v6988
        %v6990 = vpop.f32.mrb[0].mxu0
        %6991 = vmatprep.mubr.f32.mxu0 0.0
        %6992 = vmatmul.mubr.f32.gmra.mrb[0].mxu0 %v6854
        %v6993 = vpop.f32.mrb[0].mxu0
        %v6994 = vadd.f32 0.0, %v6993
        %v6995 = vpop.f32.mrb[0].mxu0
        %6996 = vmatprep.mubr.f32.mxu0 0.0
        %6997 = vmatmul.mubr.f32.gmra.mrb[0].mxu0 %v6855
        %v6998 = vpop.f32.mrb[0].mxu0
        %v6999 = vadd.f32 0.0, %v6998
        %v7000 = vpop.f32.mrb[0].mxu0
        %7001 = vmatprep.mubr.f32.mxu0 0.0
        %7002 = vmatmul.mubr.f32.gmra.mrb[0].mxu0 %v6856
        %v7003 = vpop.f32.mrb[0].mxu0
        %v7004 = vadd.f32 0.0, %v7003
        %v7005 = vpop.f32.mrb[0].mxu0
        %7006 = vmatprep.mubr.f32.mxu0 0.0
        %7007 = vmatmul.mubr.f32.gmra.mrb[0].mxu0 %v6857
        %v7008 = vpop.f32.mrb[0].mxu0
        %v7009 = vadd.f32 0.0, %v7008
        %v7010 = vpop.f32.mrb[0].mxu0
        %7011 = vmatprep.mubr.f32.mxu0 0.0
        %7012 = vmatmul.mubr.f32.gmra.mrb[0].mxu0 %v6858
        %v7013 = vpop.f32.mrb[0].mxu0
        %v7014 = vadd.f32 0.0, %v7013
        %v7015 = vpop.f32.mrb[0].mxu0
        %7016 = vmatprep.mubr.f32.mxu0 0.0
        %7017 = vmatmul.mubr.f32.gmra.mrb[0].mxu0 %v6859
        %v7018 = vpop.f32.mrb[0].mxu0
        %v7019 = vadd.f32 0.0, %v7018
        %v7020 = vpop.f32.mrb[0].mxu0
        %7021 = vmatprep.mubr.f32.mxu0 0.0
        %7022 = vmatmul.mubr.f32.gmra.mrb[0].mxu0 %v6860
        %v7023 = vpop.f32.mrb[0].mxu0
        %v7024 = vadd.f32 0.0, %v7023
        %v7025 = vpop.f32.mrb[0].mxu0
        %7026 = vmatprep.mubr.f32.mxu0 0.0
        %7027 = vmatmul.mubr.f32.gmra.mrb[0].mxu0 %v6861
        %v7028 = vpop.f32.mrb[0].mxu0
        %v7029 = vadd.f32 0.0, %v7028
        %v7030 = vpop.f32.mrb[0].mxu0
        %7031 = vmatprep.mubr.f32.mxu0 0.0
        %7032 = vmatmul.mubr.f32.gmra.mrb[0].mxu0 %v6862
        %v7033 = vpop.f32.mrb[0].mxu0
        %v7034 = vadd.f32 0.0, %v7033
        %v7035 = vpop.f32.mrb[0].mxu0
        %7036 = vmatprep.mubr.f32.mxu0 0.0
        %7037 = vmatmul.mubr.f32.gmra.mrb[0].mxu0 %v6863
        %v7038 = vpop.f32.mrb[0].mxu0
        %v7039 = vadd.f32 0.0, %v7038
        %v7040 = vpop.f32.mrb[0].mxu0
        %7041 = vmatprep.mubr.f32.mxu0 0.0
        %7042 = vmatmul.mubr.f32.gmra.mrb[0].mxu0 %v6864
        %v7043 = vpop.f32.mrb[0].mxu0
        %v7044 = vadd.f32 0.0, %v7043
        %v7045 = vpop.f32.mrb[0].mxu0
        %7046 = vmatprep.mubr.f32.mxu0 0.0
        %7047 = vmatmul.mubr.f32.gmra.mrb[0].mxu0 %v6865
        %v7048 = vpop.f32.mrb[0].mxu0
        %v7049 = vadd.f32 0.0, %v7048
        %v7050 = vpop.f32.mrb[0].mxu0
        %7051 = vmatprep.mubr.f32.mxu0 0.0
        %7052 = vmatmul.mubr.f32.gmra.mrb[0].mxu0 %v6866
        %v7053 = vpop.f32.mrb[0].mxu0
        %v7054 = vadd.f32 0.0, %v7053
        %v7055 = vpop.f32.mrb[0].mxu0
        %7056 = vmatprep.mubr.f32.mxu0 0.0
        %7057 = vmatmul.mubr.f32.gmra.mrb[0].mxu0 %v6867
        %v7058 = vpop.f32.mrb[0].mxu0
        %v7059 = vadd.f32 0.0, %v7058
        %v7060 = vpop.f32.mrb[0].mxu0
        %7061 = vmatprep.mubr.f32.mxu0 0.0
        %7062 = vmatmul.mubr.f32.gmra.mrb[0].mxu0 %v6868
        %v7063 = vpop.f32.mrb[0].mxu0
        %v7064 = vadd.f32 0.0, %v7063
        %v7065 = vpop.f32.mrb[0].mxu0
        %7066 = vmatprep.mubr.f32.mxu0 0.0
        %7067 = vmatmul.mubr.f32.gmra.mrb[0].mxu0 %v6869
        %v7068 = vpop.f32.mrb[0].mxu0
        %v7069 = vadd.f32 0.0, %v7068
        %v7070 = vpop.f32.mrb[0].mxu0
        %7071 = vmatprep.mubr.f32.mxu0 0.0
        %7072 = vmatmul.mubr.f32.gmra.mrb[0].mxu0 %v6870
        %v7073 = vpop.f32.mrb[0].mxu0
        %v7074 = vadd.f32 0.0, %v7073
        %v7075 = vpop.f32.mrb[0].mxu0
        %7076 = vmatprep.mubr.f32.mxu0 0.0
        %7077 = vmatmul.mubr.f32.gmra.mrb[0].mxu0 %v6871
        %v7078 = vpop.f32.mrb[0].mxu0
        %v7079 = vadd.f32 0.0, %v7078
        %v7080 = vpop.f32.mrb[0].mxu0
        %7081 = vmatprep.mubr.f32.mxu0 0.0
        %7082 = vmatmul.mubr.f32.gmra.mrb[0].mxu0 %v6872
        %v7083 = vpop.f32.mrb[0].mxu0
        %v7084 = vadd.f32 0.0, %v7083
        %v7085 = vpop.f32.mrb[0].mxu0
        %7086 = vmatprep.mubr.f32.mxu0 0.0
        %7087 = vmatmul.mubr.f32.gmra.mrb[0].mxu0 %v6873
        %v7088 = vpop.f32.mrb[0].mxu0
        %v7089 = vadd.f32 0.0, %v7088
        %v7090 = vpop.f32.mrb[0].mxu0
        %7091 = vmatprep.mubr.f32.mxu0 0.0
        %7092 = vmatmul.mubr.f32.gmra.mrb[0].mxu0 %v6874
        %v7093 = vpop.f32.mrb[0].mxu0
        %v7094 = vadd.f32 0.0, %v7093
        %v7095 = vpop.f32.mrb[0].mxu0
        %7096 = vmatprep.mubr.f32.mxu0 0.0
        %7097 = vmatmul.mubr.f32.gmra.mrb[0].mxu0 %v6875
        %v7098 = vpop.f32.mrb[0].mxu0
        %v7099 = vadd.f32 0.0, %v7098
        %v7100 = vpop.f32.mrb[0].mxu0
        %7101 = vmatprep.mubr.f32.mxu0 0.0
        %7102 = vmatmul.mubr.f32.gmra.mrb[0].mxu0 %v6876
        %v7103 = vpop.f32.mrb[0].mxu0
        %v7104 = vadd.f32 0.0, %v7103
        %v7105 = vpop.f32.mrb[0].mxu0
        %7106 = vmatprep.mubr.f32.mxu0 0.0
        %7107 = vmatmul.mubr.f32.gmra.mrb[0].mxu0 %v6877
        %v7108 = vpop.f32.mrb[0].mxu0
        %v7109 = vadd.f32 0.0, %v7108
        %v7110 = vpop.f32.mrb[0].mxu0
        %7111 = vmatprep.mubr.f32.mxu0 0.0
        %7112 = vmatmul.mubr.f32.gmra.mrb[0].mxu0 %v6878
        %v7113 = vpop.f32.mrb[0].mxu0
        %v7114 = vadd.f32 0.0, %v7113
        %v7115 = vpop.f32.mrb[0].mxu0
        %7116 = vmatprep.mubr.f32.mxu0 0.0
        %7117 = vmatmul.mubr.f32.gmra.mrb[0].mxu0 %v6879
        %v7118 = vpop.f32.mrb[0].mxu0
        %v7119 = vadd.f32 0.0, %v7118
        %v7120 = vpop.f32.mrb[0].mxu0
        %7121 = vdwg.mxu0
        %v7122 = vadd.f32 %v6816, %v6964
        %v7123 = vadd.f32 %v6817, %v6969
        %v7124 = vadd.f32 %v6818, %v6974
        %v7125 = vadd.f32 %v6819, %v6979
        %v7126 = vadd.f32 %v6820, %v6984
        %v7127 = vadd.f32 %v6821, %v6989
        %v7128 = vadd.f32 %v6822, %v6994
        %v7129 = vadd.f32 %v6823, %v6999
        %v7130 = vadd.f32 %v6824, %v7004
        %v7131 = vadd.f32 %v6825, %v7009
        %v7132 = vadd.f32 %v6826, %v7014
        %v7133 = vadd.f32 %v6827, %v7019
        %v7134 = vadd.f32 %v6828, %v7024
        %v7135 = vadd.f32 %v6829, %v7029
        %v7136 = vadd.f32 %v6830, %v7034
        %v7137 = vadd.f32 %v6831, %v7039
        %v7138 = vadd.f32 %v6832, %v7044
        %v7139 = vadd.f32 %v6833, %v7049
        %v7140 = vadd.f32 %v6834, %v7054
        %v7141 = vadd.f32 %v6835, %v7059
        %v7142 = vadd.f32 %v6836, %v7064
        %v7143 = vadd.f32 %v6837, %v7069
        %v7144 = vadd.f32 %v6838, %v7074
        %v7145 = vadd.f32 %v6839, %v7079
        %v7146 = vadd.f32 %v6840, %v7084
        %v7147 = vadd.f32 %v6841, %v7089
        %v7148 = vadd.f32 %v6842, %v7094
        %v7149 = vadd.f32 %v6843, %v7099
        %v7150 = vadd.f32 %v6844, %v7104
        %v7151 = vadd.f32 %v6845, %v7109
        %v7152 = vadd.f32 %v6846, %v7114
        %v7153 = vadd.f32 %v6847, %v7119
        %v7154 = vld [vmem:[#allocation3] sm:$0xff]
        %v7155 = vld [vmem:[#allocation3 + $0x8] sm:$0xff]
        %v7156 = vld [vmem:[#allocation3 + $0x10] sm:$0xff]
        %v7157 = vld [vmem:[#allocation3 + $0x18] sm:$0xff]
        %v7158 = vld [vmem:[#allocation3 + $0x20] sm:$0xff]
        %v7159 = vld [vmem:[#allocation3 + $0x28] sm:$0xff]
        %v7160 = vld [vmem:[#allocation3 + $0x30] sm:$0xff]
        %v7161 = vld [vmem:[#allocation3 + $0x38] sm:$0xff]
        %v7162 = vld [vmem:[#allocation3 + $0x40] sm:$0xff]
        %v7163 = vld [vmem:[#allocation3 + $0x48] sm:$0xff]
        %v7164 = vld [vmem:[#allocation3 + $0x50] sm:$0xff]
        %v7165 = vld [vmem:[#allocation3 + $0x58] sm:$0xff]
        %v7166 = vld [vmem:[#allocation3 + $0x60] sm:$0xff]
        %v7167 = vld [vmem:[#allocation3 + $0x68] sm:$0xff]
        %v7168 = vld [vmem:[#allocation3 + $0x70] sm:$0xff]
        %v7169 = vld [vmem:[#allocation3 + $0x78] sm:$0xff]
        %v7170 = vld [vmem:[#allocation3 + $0x80] sm:$0xff]
        %v7171 = vld [vmem:[#allocation3 + $0x88] sm:$0xff]
        %v7172 = vld [vmem:[#allocation3 + $0x90] sm:$0xff]
        %v7173 = vld [vmem:[#allocation3 + $0x98] sm:$0xff]
        %v7174 = vld [vmem:[#allocation3 + $0xa0] sm:$0xff]
        %v7175 = vld [vmem:[#allocation3 + $0xa8] sm:$0xff]
        %v7176 = vld [vmem:[#allocation3 + $0xb0] sm:$0xff]
        %v7177 = vld [vmem:[#allocation3 + $0xb8] sm:$0xff]
        %v7178 = vld [vmem:[#allocation3 + $0xc0] sm:$0xff]
        %v7179 = vld [vmem:[#allocation3 + $0xc8] sm:$0xff]
        %v7180 = vld [vmem:[#allocation3 + $0xd0] sm:$0xff]
        %v7181 = vld [vmem:[#allocation3 + $0xd8] sm:$0xff]
        %v7182 = vld [vmem:[#allocation3 + $0xe0] sm:$0xff]
        %v7183 = vld [vmem:[#allocation3 + $0xe8] sm:$0xff]
        %v7184 = vld [vmem:[#allocation3 + $0xf0] sm:$0xff]
        %v7185 = vld [vmem:[#allocation3 + $0xf8] sm:$0xff]
        %v7186 = vadd.f32 %v7154, %v7122
        %v7187 = vadd.f32 %v7155, %v7123
        %v7188 = vadd.f32 %v7156, %v7124
        %v7189 = vadd.f32 %v7157, %v7125
        %v7190 = vadd.f32 %v7158, %v7126
        %v7191 = vadd.f32 %v7159, %v7127
        %v7192 = vadd.f32 %v7160, %v7128
        %v7193 = vadd.f32 %v7161, %v7129
        %v7194 = vadd.f32 %v7162, %v7130
        %v7195 = vadd.f32 %v7163, %v7131
        %v7196 = vadd.f32 %v7164, %v7132
        %v7197 = vadd.f32 %v7165, %v7133
        %v7198 = vadd.f32 %v7166, %v7134
        %v7199 = vadd.f32 %v7167, %v7135
        %v7200 = vadd.f32 %v7168, %v7136
        %v7201 = vadd.f32 %v7169, %v7137
        %v7202 = vadd.f32 %v7170, %v7138
        %v7203 = vadd.f32 %v7171, %v7139
        %v7204 = vadd.f32 %v7172, %v7140
        %v7205 = vadd.f32 %v7173, %v7141
        %v7206 = vadd.f32 %v7174, %v7142
        %v7207 = vadd.f32 %v7175, %v7143
        %v7208 = vadd.f32 %v7176, %v7144
        %v7209 = vadd.f32 %v7177, %v7145
        %v7210 = vadd.f32 %v7178, %v7146
        %v7211 = vadd.f32 %v7179, %v7147
        %v7212 = vadd.f32 %v7180, %v7148
        %v7213 = vadd.f32 %v7181, %v7149
        %v7214 = vadd.f32 %v7182, %v7150
        %v7215 = vadd.f32 %v7183, %v7151
        %v7216 = vadd.f32 %v7184, %v7152
        %v7217 = vadd.f32 %v7185, %v7153
        %7218 = vst [vmem:[%s394] sm:$0xff] %v7186
        %7219 = vst [vmem:[%s394 + $0x8] sm:$0xff] %v7187
        %7220 = vst [vmem:[%s394 + $0x10] sm:$0xff] %v7188
        %7221 = vst [vmem:[%s394 + $0x18] sm:$0xff] %v7189
        %7222 = vst [vmem:[%s394 + $0x20] sm:$0xff] %v7190
        %7223 = vst [vmem:[%s394 + $0x28] sm:$0xff] %v7191
        %7224 = vst [vmem:[%s394 + $0x30] sm:$0xff] %v7192
        %7225 = vst [vmem:[%s394 + $0x38] sm:$0xff] %v7193
        %7226 = vst [vmem:[%s394 + $0x40] sm:$0xff] %v7194
        %7227 = vst [vmem:[%s394 + $0x48] sm:$0xff] %v7195
        %7228 = vst [vmem:[%s394 + $0x50] sm:$0xff] %v7196
        %7229 = vst [vmem:[%s394 + $0x58] sm:$0xff] %v7197
        %7230 = vst [vmem:[%s394 + $0x60] sm:$0xff] %v7198
        %7231 = vst [vmem:[%s394 + $0x68] sm:$0xff] %v7199
        %7232 = vst [vmem:[%s394 + $0x70] sm:$0xff] %v7200
        %7233 = vst [vmem:[%s394 + $0x78] sm:$0xff] %v7201
        %7234 = vst [vmem:[%s394 + $0x80] sm:$0xff] %v7202
        %7235 = vst [vmem:[%s394 + $0x88] sm:$0xff] %v7203
        %7236 = vst [vmem:[%s394 + $0x90] sm:$0xff] %v7204
        %7237 = vst [vmem:[%s394 + $0x98] sm:$0xff] %v7205
        %7238 = vst [vmem:[%s394 + $0xa0] sm:$0xff] %v7206
        %7239 = vst [vmem:[%s394 + $0xa8] sm:$0xff] %v7207
        %7240 = vst [vmem:[%s394 + $0xb0] sm:$0xff] %v7208
        %7241 = vst [vmem:[%s394 + $0xb8] sm:$0xff] %v7209
        %7242 = vst [vmem:[%s394 + $0xc0] sm:$0xff] %v7210
        %7243 = vst [vmem:[%s394 + $0xc8] sm:$0xff] %v7211
        %7244 = vst [vmem:[%s394 + $0xd0] sm:$0xff] %v7212
        %7245 = vst [vmem:[%s394 + $0xd8] sm:$0xff] %v7213
        %7246 = vst [vmem:[%s394 + $0xe0] sm:$0xff] %v7214
        %7247 = vst [vmem:[%s394 + $0xe8] sm:$0xff] %v7215
        %7248 = vst [vmem:[%s394 + $0xf0] sm:$0xff] %v7216
        %7249 = vst [vmem:[%s394 + $0xf8] sm:$0xff] %v7217
        %s7250 = sand.u32 %s230, 1
        %s7251 = scalar_lea.sflag [#allocation6], %s7250
        %s7252 = sand.u32 %s230, 1
        %s7253 = smul.addr %s7252, 256
        %s7254 = scalar_lea.vmem [#allocation12], %s7253
        // Predicated region
        $region73: #{tpu_custom_call.1} parent=55 // pred_check
          %p7255 = pneg %p240
        $region74: #{tpu_custom_call.1} parent=55 // pred_check_branch
          %7257 = sbr.rel (%p7255) target = $region76
        $region75: #{tpu_custom_call.1} parent=55 // pred_region
          %s7259 = ssub.s32 4096, 4096
          %7260 = vsyncadd %s7251, %s7259
          %s7261 = smul.addr %s28, 32
          %s7262 = smul.addr %s7261, 128
          %s7263 = scalar_lea.hbm %s9, %s7262
          %s7264 = sshll.u32 %s7254, 4
          %s7265 = int_to_ptr.vmem [resolvable:$true] %s7264
          %7270 = dma.vmem_to_hbm [thread:$0]  %s7265, 4096, %s7263, %s7251, 128, 128, 8
        $region76: #{tpu_custom_call.1} parent=55 // pred_fallthru
          _
      $region56: #{tpu_custom_call.1} parent=5 // pred_fallthru
        _
      %p7271 = scmp.le.s32.totalorder 2, %s23
      // Predicated region
      $region77: #{tpu_custom_call.1} parent=5 // pred_check
        %p7272 = pneg %p7271
      $region78: #{tpu_custom_call.1} parent=5 // pred_check_branch
        %7274 = sbr.rel (%p7272) target = $region80
      $region79: #{tpu_custom_call.1} parent=5 // pred_region
        %s7275 = ssub.s32 %s23, 2
        // Predicated region
        $region81: #{tpu_custom_call.1} parent=79 // pred_check
          %p7276 = pneg %p246
        $region82: #{tpu_custom_call.1} parent=79 // pred_check_branch
          %7278 = sbr.rel (%p7276) target = $region84
        $region83: #{tpu_custom_call.1} parent=79 // pred_region
          %s7279 = sand.u32 %s231, 1
          %s7280 = scalar_lea.sflag [#allocation6], %s7279
          %s7281 = sand.u32 %s231, 1
          %s7282 = smul.addr %s7281, 256
          %s7283 = scalar_lea.vmem [#allocation12], %s7282
          %7284 = dma.done %s7280, 4096
        $region84: #{tpu_custom_call.1} parent=79 // pred_fallthru
          _
      $region80: #{tpu_custom_call.1} parent=5 // pred_fallthru
        _
    $region6: #{tpu_custom_call.1} parent=1 // loop_footer
      %s27 = sadd.s32 1, %s23
    $region7: #{tpu_custom_call.1} parent=1 // loop_footer_branch
      %22 = sbr.rel target = $region3
    $region8: #{tpu_custom_call.1} parent=1 // loop_exit
      _
    %7285 = vsyncpa [#allocation5], 1
    %s7286 = scalar_lea.sflag [#allocation5], 1
    %7287 = vsyncpa %s7286, 1
    %7288 = vsyncpa [#allocation8], 1
    %7289 = vsyncpa [#allocation11], 1
    %7290 = vsyncpa [#allocation6], 1
    %s7291 = scalar_lea.sflag [#allocation6], 1
    %7292 = vsyncpa %s7291, 1

</llo_original>
